<compile_context>
chip_gen: v6e
topology: v6e:2x2x1
jax: 0.10.0
libtpu: 0.0.40
codegen_flags: <defaults>
</compile_context>

<pallas_src>
import functools

import numpy as np
import jax
import jax.numpy as jnp
from jax import lax
from jax.experimental import pallas as pl
from jax.experimental.pallas import tpu as pltpu

_BN_EPS = 1e-5


# ----------------------------------------------------------------------------
# Stage 1 kernel: fused Linear(bias=False) + folded BatchNorm1d + GLU
# ----------------------------------------------------------------------------
def _fc_bn_glu_kernel(x_ref, w_ref, b_ref, o_ref, *, half):
    # One fused matmul over the concatenated value|gate weight (fills the
    # 256-wide MXU on v6e/v7x); GLU split at the `half` lane boundary.
    h = jnp.dot(x_ref[...], w_ref[...], preferred_element_type=jnp.float32)
    h = h + b_ref[...]
    o_ref[...] = (h[:, :half] * jax.nn.sigmoid(h[:, half:])).astype(o_ref.dtype)


def fc_bn_glu(x, w, b):
    """GLU((x @ w) + b).  x: (B, K); w: (K, 2F); b: (2F,)  ->  (B, F)."""
    B, _ = x.shape
    f2 = w.shape[1]
    half = f2 // 2
    b2 = jnp.asarray(b, jnp.float32).reshape(1, f2)
    kernel = functools.partial(_fc_bn_glu_kernel, half=half)
    # Tiny problem (B x K x 2F): a single whole-array VMEM block is enough.
    return pl.pallas_call(
        kernel,
        out_shape=jax.ShapeDtypeStruct((B, half), x.dtype),
    )(x, w, b2)


# ----------------------------------------------------------------------------
# Up-block kernel: nearest x2 upsample + conv3x3(pad=1, bias=False)
#                  + folded BatchNorm2d + channel GLU, entirely in VMEM.
# Layout: per batch element activations are (channels, H*W) with the spatial
# axis on lanes (lane-dense), channels on sublanes (contraction side).
# ----------------------------------------------------------------------------
def _upblock_kernel(x_ref, p_ref, w_ref, b_ref, o_ref, *, h2, w2, cout):
    cin = x_ref.shape[0]
    cout2 = w_ref.shape[1]
    npix = h2 * w2

    # Nearest-neighbour x2 upsample as a 0/1 gather matmul (never leaves VMEM).
    x_up = jnp.dot(x_ref[...], p_ref[...],
                   preferred_element_type=jnp.float32).astype(x_ref.dtype)

    # Flattened output-pixel coordinates (hoisted out of the tap loop).
    lane = lax.broadcasted_iota(jnp.int32, (1, npix), 1)
    if (w2 & (w2 - 1)) == 0:                      # power-of-two width: bit ops
        yy = lane >> int(w2.bit_length() - 1)
        xx = lane & (w2 - 1)
    else:
        yy = lane // w2
        xx = lane % w2

    # conv3x3 == 9 shifted tap matmuls accumulated in f32.
    acc = jnp.zeros((cout2, npix), jnp.float32)
    for t in range(9):                            # static, unrolled tap loop
        dy = t // 3 - 1
        dx = t % 3 - 1
        off = dy * w2 + dx
        if off > 0:
            sh = jnp.concatenate(
                [x_up[:, off:], jnp.zeros((cin, off), x_up.dtype)], axis=1)
        elif off < 0:
            sh = jnp.concatenate(
                [jnp.zeros((cin, -off), x_up.dtype), x_up[:, :npix + off]],
                axis=1)
        else:
            sh = x_up
        if off != 0:
            valid = ((xx + dx >= 0) & (xx + dx < w2) &
                     (yy + dy >= 0) & (yy + dy < h2))
            sh = jnp.where(valid, sh, 0.0)
        acc = acc + jnp.dot(w_ref[t], sh, preferred_element_type=jnp.float32)

    acc = acc + b_ref[...]                        # folded BatchNorm2d shift
    # GLU over out-channels (value rows | gate rows).
    o_ref[...] = (acc[:cout, :] * jax.nn.sigmoid(acc[cout:, :])).astype(o_ref.dtype)


def upsample_conv_bn_glu(x, p_mat, w9, b, h2, w2, cout):
    """One fused up-block.  x: (B, Cin, H*W) -> (B, cout, (2H)*(2W))."""
    B, cin, npix_in = x.shape
    cout2 = w9.shape[1]
    npix_out = h2 * w2
    b2 = jnp.asarray(b, jnp.float32).reshape(cout2, 1)
    itemsize = x.dtype.itemsize

    cost = pl.CostEstimate(
        flops=int(2 * B * npix_out * cin * (npix_in + 9 * cout2)),
        transcendentals=int(B * cout * npix_out),
        bytes_accessed=int(itemsize * (x.size + p_mat.size + w9.size
                                       + B * cout * npix_out) + 4 * cout2),
    )
    kernel = functools.partial(_upblock_kernel, h2=h2, w2=w2, cout=cout)
    return pl.pallas_call(
        kernel,
        out_shape=jax.ShapeDtypeStruct((B, cout, npix_out), x.dtype),
        grid=(B,),                                # >= 2 steps -> both v7x TCs
        in_specs=[
            pl.BlockSpec((None, cin, npix_in), lambda i: (i, 0, 0)),
            pl.BlockSpec((npix_in, npix_out), lambda i: (0, 0)),   # resident
            pl.BlockSpec((9, cout2, cin), lambda i: (0, 0, 0)),    # resident
            pl.BlockSpec((cout2, 1), lambda i: (0, 0)),            # resident
        ],
        out_specs=pl.BlockSpec((None, cout, npix_out), lambda i: (i, 0, 0)),
        compiler_params=pltpu.CompilerParams(
            dimension_semantics=("parallel",)),
        cost_estimate=cost,
    )(x, p_mat, w9, b2)


# ----------------------------------------------------------------------------
# Parameter folding (eval-mode BatchNorm -> affine) and upsample matrix
# ----------------------------------------------------------------------------
def _fold_linear_bn_glu(w, gamma, beta, mean, var):
    """w: (2F, K) PyTorch Linear weight.  Returns (w_eff (K, 2F), bias (2F,))."""
    s = gamma / jnp.sqrt(var + _BN_EPS)
    return w.T * s[None, :], beta - s * mean


def _fold_conv_bn_glu(w, gamma, beta, mean, var):
    """w: (2*Cout, Cin, 3, 3).  Returns (w9 (9, 2*Cout, Cin), bias (2*Cout,)).

    Tap t = ky*3 + kx, matching the kernel's static tap loop ordering."""
    s = gamma / jnp.sqrt(var + _BN_EPS)
    t = beta - s * mean
    wf = w * s[:, None, None, None]
    w9 = jnp.transpose(wf, (2, 3, 0, 1)).reshape(9, w.shape[0], w.shape[1])
    return w9, t


def _nearest_upsample_matrix(h, w):
    """(h*w, 4*h*w) 0/1 matrix:  X_up = X @ P  nearest-x2-upsamples the
    row-major-flattened (C, h, w) image X to (C, 2h, 2w)."""
    h2, w2 = 2 * h, 2 * w
    p = np.arange(h2 * w2)
    src = (p // w2 // 2) * w + (p % w2) // 2
    m = np.zeros((h * w, h2 * w2), dtype=np.float32)
    m[src, p] = 1.0
    return m


# ----------------------------------------------------------------------------
# Get_init_code forward (Pallas path)
# ----------------------------------------------------------------------------
def get_init_code_forward(z, c, params, z2w=False, compute_dtype=jnp.float32):
    if z2w:
        # TODO(synk): new_fc (z2w=True) branch has inconsistent layer dims in the
        # source module and would error in PyTorch; not implemented.
        raise NotImplementedError("z2w=True path not supported")

    mc = params["mul_channel"]
    B = z.shape[0]
    cd = compute_dtype

    in_code = jnp.concatenate([c, z], axis=1).astype(cd)            # (B, in_dim)

    w_fc, b_fc = params["fc"]
    y = fc_bn_glu(in_code, w_fc.astype(cd), b_fc)                   # (B, mc*16)

    # view(-1, mc, 4, 4) -> channel-major (B, C, H*W) layout used by the blocks.
    x = y.reshape(B, mc, 16)

    h = w = 4
    for blk in ("up1", "up2", "up3"):
        w9, bias = params[blk]
        cout = w9.shape[1] // 2
        p_mat = jnp.asarray(_nearest_upsample_matrix(h, w), cd)
        h, w = 2 * h, 2 * w
        x = upsample_conv_bn_glu(x, p_mat, w9.astype(cd), bias, h, w, cout)

    return x.reshape(B, x.shape[1], h, w).astype(jnp.float32)       # NCHW


# ----------------------------------------------------------------------------
# Pure-JAX reference (matches PyTorch semantics, eval-mode BN)
# ----------------------------------------------------------------------------
def get_init_code_reference(z, c, raw):
    mc = raw["mul_channel"]
    B = z.shape[0]
    in_code = jnp.concatenate([c, z], axis=1)

    h = jnp.dot(in_code, raw["fc_w"].T, precision=lax.Precision.HIGHEST)
    h = (h - raw["fc_mean"]) / jnp.sqrt(raw["fc_var"] + _BN_EPS) * raw["fc_gamma"] + raw["fc_beta"]
    half = h.shape[1] // 2
    y = h[:, :half] * jax.nn.sigmoid(h[:, half:])

    x = y.reshape(B, mc, 4, 4)
    for blk in ("up1", "up2", "up3"):
        p = raw[blk]
        x = jnp.repeat(jnp.repeat(x, 2, axis=2), 2, axis=3)          # nearest x2
        x = lax.conv_general_dilated(
            x, p["w"], window_strides=(1, 1), padding="SAME",
            dimension_numbers=("NCHW", "OIHW", "NCHW"),
            precision=lax.Precision.HIGHEST)
        g, b_, m, v = p["gamma"], p["beta"], p["mean"], p["var"]
        x = (x - m[None, :, None, None]) / jnp.sqrt(v[None, :, None, None] + _BN_EPS) \
            * g[None, :, None, None] + b_[None, :, None, None]
        half = x.shape[1] // 2
        x = x[:, :half] * jax.nn.sigmoid(x[:, half:])
    return x


# ----------------------------------------------------------------------------
# Demo / self-test
# ----------------------------------------------------------------------------
if __name__ == "__main__":
    # Small synthetic config: Z_DIM=16, EMBEDDING_DIM=16, mul_channel=32, B=2.
    B, Z_DIM, EMB_DIM, MC = 2, 16, 16, 32
    IN_DIM = Z_DIM + EMB_DIM
    F2 = MC * 4 * 4 * 2                           # Linear output features (pre-GLU)

    keys = jax.random.split(jax.random.PRNGKey(0), 8)
    z = jax.random.normal(keys[0], (B, Z_DIM), dtype=jnp.float32)
    c = jax.random.normal(keys[1], (B, EMB_DIM), dtype=jnp.float32)

    # fc: Linear(IN_DIM -> F2, bias=False) weight in PyTorch layout (F2, IN_DIM)
    fc_w = jax.random.normal(keys[2], (F2, IN_DIM), dtype=jnp.float32) / jnp.sqrt(float(IN_DIM))
    k_bn = jax.random.split(keys[3], 4)
    fc_gamma = jax.random.uniform(k_bn[0], (F2,), minval=0.5, maxval=1.5)
    fc_beta = jax.random.normal(k_bn[1], (F2,)) * 0.1
    fc_mean = jax.random.normal(k_bn[2], (F2,)) * 0.1
    fc_var = jax.random.uniform(k_bn[3], (F2,), minval=0.5, maxval=1.5)

    def make_upblock(key, cin, cout):
        k1, k2, k3, k4, k5 = jax.random.split(key, 5)
        return dict(
            w=jax.random.normal(k1, (2 * cout, cin, 3, 3), dtype=jnp.float32)
              / jnp.sqrt(9.0 * cin),
            gamma=jax.random.uniform(k2, (2 * cout,), minval=0.5, maxval=1.5),
            beta=jax.random.normal(k3, (2 * cout,)) * 0.1,
            mean=jax.random.normal(k4, (2 * cout,)) * 0.1,
            var=jax.random.uniform(k5, (2 * cout,), minval=0.5, maxval=1.5),
        )

    raw = dict(
        mul_channel=MC,
        fc_w=fc_w, fc_gamma=fc_gamma, fc_beta=fc_beta, fc_mean=fc_mean, fc_var=fc_var,
        up1=make_upblock(keys[4], MC, MC // 2),
        up2=make_upblock(keys[5], MC // 2, MC // 4),
        up3=make_upblock(keys[6], MC // 4, MC // 8),
    )

    def fold_up(d):
        return _fold_conv_bn_glu(d["w"], d["gamma"], d["beta"], d["mean"], d["var"])

    params = dict(
        mul_channel=MC,
        fc=_fold_linear_bn_glu(fc_w, fc_gamma, fc_beta, fc_mean, fc_var),
        up1=fold_up(raw["up1"]),
        up2=fold_up(raw["up2"]),
        up3=fold_up(raw["up3"]),
    )

    fwd = jax.jit(functools.partial(get_init_code_forward, params=params, z2w=False))
    out = fwd(z, c)
    jax.block_until_ready(out)

    ref = get_init_code_reference(z, c, raw)
    assert out.shape == (B, MC // 8, 32, 32), f"bad output shape {out.shape}"
    max_err = float(jnp.max(jnp.abs(out - ref)))
    assert jnp.allclose(out, ref, atol=2e-3, rtol=2e-3), f"mismatch: max abs err {max_err}"

    print("KERNEL_OK")
</pallas_src>

<mosaic_0001>
module attributes {stable_mosaic.version = 11 : i64} {
  func.func @_fc_bn_glu_kernel(%arg0: memref<2x32xf32, #tpu.memory_space<vmem>>, %arg1: memref<32x1024xf32, #tpu.memory_space<vmem>>, %arg2: memref<1x1024xf32, #tpu.memory_space<vmem>>, %arg3: memref<2x512xf32, #tpu.memory_space<vmem>>) attributes {dimension_semantics = [], scalar_prefetch = 0 : i64, scratch_operands = 0 : i64, tpu.core_type = #tpu.core_type<tc>} {
    %c0 = arith.constant 0 : index
    %c0_0 = arith.constant 0 : index
    %0 = vector.load %arg0[%c0, %c0_0] : memref<2x32xf32, #tpu.memory_space<vmem>>, vector<2x32xf32>
    %c0_1 = arith.constant 0 : index
    %c0_2 = arith.constant 0 : index
    %1 = vector.load %arg1[%c0_1, %c0_2] : memref<32x1024xf32, #tpu.memory_space<vmem>>, vector<32x1024xf32>
    %cst = arith.constant dense<0.000000e+00> : vector<2x1024xf32>
    %2 = tpu.matmul %0, %1, %cst {dimension_numbers = #tpu.dot_dimension_numbers<[1], [0], [0], [1], [0, 0, 1, 1], [], []>} : vector<2x32xf32>, vector<32x1024xf32>, vector<2x1024xf32> -> vector<2x1024xf32>
    %c0_3 = arith.constant 0 : index
    %c0_4 = arith.constant 0 : index
    %3 = vector.load %arg2[%c0_3, %c0_4] : memref<1x1024xf32, #tpu.memory_space<vmem>>, vector<1x1024xf32>
    %4 = vector.broadcast %3 : vector<1x1024xf32> to vector<2x1024xf32>
    %5 = arith.addf %2, %4 : vector<2x1024xf32>
    %6 = vector.extract_strided_slice %5 {offsets = [0, 0], sizes = [2, 512], strides = [1, 1]} : vector<2x1024xf32> to vector<2x512xf32>
    %7 = vector.extract_strided_slice %5 {offsets = [0, 512], sizes = [2, 512], strides = [1, 1]} : vector<2x1024xf32> to vector<2x512xf32>
    %8 = arith.negf %7 : vector<2x512xf32>
    %9 = math.exp %8 : vector<2x512xf32>
    %cst_5 = arith.constant 1.000000e+00 : f32
    %10 = vector.broadcast %cst_5 : f32 to vector<2x512xf32>
    %11 = arith.addf %10, %9 : vector<2x512xf32>
    %12 = arith.divf %10, %11 : vector<2x512xf32>
    %13 = arith.mulf %6, %12 : vector<2x512xf32>
    %c0_6 = arith.constant 0 : index
    %c0_7 = arith.constant 0 : index
    %14 = vector.load %arg3[%c0_6, %c0_7] : memref<2x512xf32, #tpu.memory_space<vmem>>, vector<2x512xf32>
    tpu.vector_store %arg3[%c0_6, %c0_7], %13 {strides = array<i32>} : memref<2x512xf32, #tpu.memory_space<vmem>>, vector<2x512xf32>,
    return
  }
}

module attributes {stable_mosaic.version = 11 : i64} {
  func.func @_upblock_kernel(%arg0: i32, %arg1: memref<1x32x16xf32, #tpu.memory_space<vmem>>, %arg2: memref<16x64xf32, #tpu.memory_space<vmem>>, %arg3: memref<9x32x32xf32, #tpu.memory_space<vmem>>, %arg4: memref<32x1xf32, #tpu.memory_space<vmem>>, %arg5: memref<1x16x64xf32, #tpu.memory_space<vmem>>) attributes {dimension_semantics = [#tpu.dimension_semantics<parallel>], iteration_bounds = array<i64: 2>, scalar_prefetch = 0 : i64, scratch_operands = 0 : i64, tpu.core_type = #tpu.core_type<tc>, window_params = [{transform_indices = @transform_0, window_bounds = array<i64: 1, 32, 16>}, {pipeline_mode = #tpu.pipeline_mode<synchronous>, transform_indices = @transform_1, window_bounds = array<i64: 16, 64>}, {pipeline_mode = #tpu.pipeline_mode<synchronous>, transform_indices = @transform_2, window_bounds = array<i64: 9, 32, 32>}, {pipeline_mode = #tpu.pipeline_mode<synchronous>, transform_indices = @transform_3, window_bounds = array<i64: 32, 1>}, {transform_indices = @transform_4, window_bounds = array<i64: 1, 16, 64>}]} {
    %c0 = arith.constant 0 : index
    %c0_0 = arith.constant 0 : index
    %c0_1 = arith.constant 0 : index
    %0 = vector.load %arg1[%c0, %c0_0, %c0_1] : memref<1x32x16xf32, #tpu.memory_space<vmem>>, vector<1x32x16xf32>
    %1 = vector.shape_cast %0 : vector<1x32x16xf32> to vector<32x16xf32>
    %c0_2 = arith.constant 0 : index
    %c0_3 = arith.constant 0 : index
    %2 = vector.load %arg2[%c0_2, %c0_3] : memref<16x64xf32, #tpu.memory_space<vmem>>, vector<16x64xf32>
    %cst = arith.constant dense<0.000000e+00> : vector<32x64xf32>
    %3 = tpu.matmul %1, %2, %cst {dimension_numbers = #tpu.dot_dimension_numbers<[1], [0], [0], [1], [0, 0, 1, 1], [], []>} : vector<32x16xf32>, vector<16x64xf32>, vector<32x64xf32> -> vector<32x64xf32>
    %4 = tpu.iota {dimensions = array<i32: 1>} : vector<1x64xi32>
    %c3_i32 = arith.constant 3 : i32
    %5 = vector.broadcast %c3_i32 : i32 to vector<1x64xi32>
    %6 = arith.shrsi %4, %5 : vector<1x64xi32>
    %c7_i32 = arith.constant 7 : i32
    %7 = vector.broadcast %c7_i32 : i32 to vector<1x64xi32>
    %8 = arith.andi %4, %7 : vector<1x64xi32>
    %cst_4 = arith.constant 0.000000e+00 : f32
    %9 = vector.broadcast %cst_4 : f32 to vector<32x64xf32>
    %cst_5 = arith.constant 0.000000e+00 : f32
    %10 = vector.broadcast %cst_5 : f32 to vector<32x9xf32>
    %11 = vector.extract_strided_slice %3 {offsets = [0, 0], sizes = [32, 55], strides = [1, 1]} : vector<32x64xf32> to vector<32x55xf32>
    %12 = tpu.concatenate %10, %11 in 1 : vector<32x9xf32>, vector<32x55xf32> -> vector<32x64xf32>
    %c-1_i32 = arith.constant -1 : i32
    %13 = vector.broadcast %c-1_i32 : i32 to vector<1x64xi32>
    %14 = arith.addi %8, %13 : vector<1x64xi32>
    %c0_i32 = arith.constant 0 : i32
    %15 = vector.broadcast %c0_i32 : i32 to vector<1x64xi32>
    %16 = arith.cmpi sge, %14, %15 : vector<1x64xi32>
    %c-1_i32_6 = arith.constant -1 : i32
    %17 = vector.broadcast %c-1_i32_6 : i32 to vector<1x64xi32>
    %18 = arith.addi %8, %17 : vector<1x64xi32>
    %c8_i32 = arith.constant 8 : i32
    %19 = vector.broadcast %c8_i32 : i32 to vector<1x64xi32>
    %20 = arith.cmpi slt, %18, %19 : vector<1x64xi32>
    %21 = arith.andi %16, %20 : vector<1x64xi1>
    %c-1_i32_7 = arith.constant -1 : i32
    %22 = vector.broadcast %c-1_i32_7 : i32 to vector<1x64xi32>
    %23 = arith.addi %6, %22 : vector<1x64xi32>
    %c0_i32_8 = arith.constant 0 : i32
    %24 = vector.broadcast %c0_i32_8 : i32 to vector<1x64xi32>
    %25 = arith.cmpi sge, %23, %24 : vector<1x64xi32>
    %26 = arith.andi %21, %25 : vector<1x64xi1>
    %c-1_i32_9 = arith.constant -1 : i32
    %27 = vector.broadcast %c-1_i32_9 : i32 to vector<1x64xi32>
    %28 = arith.addi %6, %27 : vector<1x64xi32>
    %c8_i32_10 = arith.constant 8 : i32
    %29 = vector.broadcast %c8_i32_10 : i32 to vector<1x64xi32>
    %30 = arith.cmpi slt, %28, %29 : vector<1x64xi32>
    %31 = arith.andi %26, %30 : vector<1x64xi1>
    %cst_11 = arith.constant 0.000000e+00 : f32
    %32 = vector.shape_cast %31 : vector<1x64xi1> to vector<1x64xi1>
    %33 = vector.broadcast %32 : vector<1x64xi1> to vector<32x64xi1>
    %34 = vector.broadcast %cst_11 : f32 to vector<32x64xf32>
    %35 = arith.select %33, %12, %34 : vector<32x64xi1>, vector<32x64xf32>
    %c0_12 = arith.constant 0 : index
    %c0_13 = arith.constant 0 : index
    %c0_14 = arith.constant 0 : index
    %36 = vector.load %arg3[%c0_12, %c0_13, %c0_14] : memref<9x32x32xf32, #tpu.memory_space<vmem>>, vector<1x32x32xf32>
    %37 = vector.shape_cast %36 : vector<1x32x32xf32> to vector<32x32xf32>
    %cst_15 = arith.constant dense<0.000000e+00> : vector<32x64xf32>
    %38 = tpu.matmul %37, %35, %cst_15 {dimension_numbers = #tpu.dot_dimension_numbers<[1], [0], [0], [1], [0, 0, 1, 1], [], []>} : vector<32x32xf32>, vector<32x64xf32>, vector<32x64xf32> -> vector<32x64xf32>
    %39 = arith.addf %9, %38 : vector<32x64xf32>
    %cst_16 = arith.constant 0.000000e+00 : f32
    %40 = vector.broadcast %cst_16 : f32 to vector<32x8xf32>
    %41 = vector.extract_strided_slice %3 {offsets = [0, 0], sizes = [32, 56], strides = [1, 1]} : vector<32x64xf32> to vector<32x56xf32>
    %42 = tpu.concatenate %40, %41 in 1 : vector<32x8xf32>, vector<32x56xf32> -> vector<32x64xf32>
    %c0_i32_17 = arith.constant 0 : i32
    %43 = vector.broadcast %c0_i32_17 : i32 to vector<1x64xi32>
    %44 = arith.addi %8, %43 : vector<1x64xi32>
    %c0_i32_18 = arith.constant 0 : i32
    %45 = vector.broadcast %c0_i32_18 : i32 to vector<1x64xi32>
    %46 = arith.cmpi sge, %44, %45 : vector<1x64xi32>
    %c0_i32_19 = arith.constant 0 : i32
    %47 = vector.broadcast %c0_i32_19 : i32 to vector<1x64xi32>
    %48 = arith.addi %8, %47 : vector<1x64xi32>
    %c8_i32_20 = arith.constant 8 : i32
    %49 = vector.broadcast %c8_i32_20 : i32 to vector<1x64xi32>
    %50 = arith.cmpi slt, %48, %49 : vector<1x64xi32>
    %51 = arith.andi %46, %50 : vector<1x64xi1>
    %c-1_i32_21 = arith.constant -1 : i32
    %52 = vector.broadcast %c-1_i32_21 : i32 to vector<1x64xi32>
    %53 = arith.addi %6, %52 : vector<1x64xi32>
    %c0_i32_22 = arith.constant 0 : i32
    %54 = vector.broadcast %c0_i32_22 : i32 to vector<1x64xi32>
    %55 = arith.cmpi sge, %53, %54 : vector<1x64xi32>
    %56 = arith.andi %51, %55 : vector<1x64xi1>
    %c-1_i32_23 = arith.constant -1 : i32
    %57 = vector.broadcast %c-1_i32_23 : i32 to vector<1x64xi32>
    %58 = arith.addi %6, %57 : vector<1x64xi32>
    %c8_i32_24 = arith.constant 8 : i32
    %59 = vector.broadcast %c8_i32_24 : i32 to vector<1x64xi32>
    %60 = arith.cmpi slt, %58, %59 : vector<1x64xi32>
    %61 = arith.andi %56, %60 : vector<1x64xi1>
    %cst_25 = arith.constant 0.000000e+00 : f32
    %62 = vector.shape_cast %61 : vector<1x64xi1> to vector<1x64xi1>
    %63 = vector.broadcast %62 : vector<1x64xi1> to vector<32x64xi1>
    %64 = vector.broadcast %cst_25 : f32 to vector<32x64xf32>
    %65 = arith.select %63, %42, %64 : vector<32x64xi1>, vector<32x64xf32>
    %c1 = arith.constant 1 : index
    %c0_26 = arith.constant 0 : index
    %c0_27 = arith.constant 0 : index
    %66 = vector.load %arg3[%c1, %c0_26, %c0_27] : memref<9x32x32xf32, #tpu.memory_space<vmem>>, vector<1x32x32xf32>
    %67 = vector.shape_cast %66 : vector<1x32x32xf32> to vector<32x32xf32>
    %cst_28 = arith.constant dense<0.000000e+00> : vector<32x64xf32>
    %68 = tpu.matmul %67, %65, %cst_28 {dimension_numbers = #tpu.dot_dimension_numbers<[1], [0], [0], [1], [0, 0, 1, 1], [], []>} : vector<32x32xf32>, vector<32x64xf32>, vector<32x64xf32> -> vector<32x64xf32>
    %69 = arith.addf %39, %68 : vector<32x64xf32>
    %cst_29 = arith.constant 0.000000e+00 : f32
    %70 = vector.broadcast %cst_29 : f32 to vector<32x7xf32>
    %71 = vector.extract_strided_slice %3 {offsets = [0, 0], sizes = [32, 57], strides = [1, 1]} : vector<32x64xf32> to vector<32x57xf32>
    %72 = tpu.concatenate %70, %71 in 1 : vector<32x7xf32>, vector<32x57xf32> -> vector<32x64xf32>
    %c1_i32 = arith.constant 1 : i32
    %73 = vector.broadcast %c1_i32 : i32 to vector<1x64xi32>
    %74 = arith.addi %8, %73 : vector<1x64xi32>
    %c0_i32_30 = arith.constant 0 : i32
    %75 = vector.broadcast %c0_i32_30 : i32 to vector<1x64xi32>
    %76 = arith.cmpi sge, %74, %75 : vector<1x64xi32>
    %c1_i32_31 = arith.constant 1 : i32
    %77 = vector.broadcast %c1_i32_31 : i32 to vector<1x64xi32>
    %78 = arith.addi %8, %77 : vector<1x64xi32>
    %c8_i32_32 = arith.constant 8 : i32
    %79 = vector.broadcast %c8_i32_32 : i32 to vector<1x64xi32>
    %80 = arith.cmpi slt, %78, %79 : vector<1x64xi32>
    %81 = arith.andi %76, %80 : vector<1x64xi1>
    %c-1_i32_33 = arith.constant -1 : i32
    %82 = vector.broadcast %c-1_i32_33 : i32 to vector<1x64xi32>
    %83 = arith.addi %6, %82 : vector<1x64xi32>
    %c0_i32_34 = arith.constant 0 : i32
    %84 = vector.broadcast %c0_i32_34 : i32 to vector<1x64xi32>
    %85 = arith.cmpi sge, %83, %84 : vector<1x64xi32>
    %86 = arith.andi %81, %85 : vector<1x64xi1>
    %c-1_i32_35 = arith.constant -1 : i32
    %87 = vector.broadcast %c-1_i32_35 : i32 to vector<1x64xi32>
    %88 = arith.addi %6, %87 : vector<1x64xi32>
    %c8_i32_36 = arith.constant 8 : i32
    %89 = vector.broadcast %c8_i32_36 : i32 to vector<1x64xi32>
    %90 = arith.cmpi slt, %88, %89 : vector<1x64xi32>
    %91 = arith.andi %86, %90 : vector<1x64xi1>
    %cst_37 = arith.constant 0.000000e+00 : f32
    %92 = vector.shape_cast %91 : vector<1x64xi1> to vector<1x64xi1>
    %93 = vector.broadcast %92 : vector<1x64xi1> to vector<32x64xi1>
    %94 = vector.broadcast %cst_37 : f32 to vector<32x64xf32>
    %95 = arith.select %93, %72, %94 : vector<32x64xi1>, vector<32x64xf32>
    %c2 = arith.constant 2 : index
    %c0_38 = arith.constant 0 : index
    %c0_39 = arith.constant 0 : index
    %96 = vector.load %arg3[%c2, %c0_38, %c0_39] : memref<9x32x32xf32, #tpu.memory_space<vmem>>, vector<1x32x32xf32>
    %97 = vector.shape_cast %96 : vector<1x32x32xf32> to vector<32x32xf32>
    %cst_40 = arith.constant dense<0.000000e+00> : vector<32x64xf32>
    %98 = tpu.matmul %97, %95, %cst_40 {dimension_numbers = #tpu.dot_dimension_numbers<[1], [0], [0], [1], [0, 0, 1, 1], [], []>} : vector<32x32xf32>, vector<32x64xf32>, vector<32x64xf32> -> vector<32x64xf32>
    %99 = arith.addf %69, %98 : vector<32x64xf32>
    %cst_41 = arith.constant 0.000000e+00 : f32
    %100 = vector.broadcast %cst_41 : f32 to vector<32x1xf32>
    %101 = vector.extract_strided_slice %3 {offsets = [0, 0], sizes = [32, 63], strides = [1, 1]} : vector<32x64xf32> to vector<32x63xf32>
    %102 = tpu.concatenate %100, %101 in 1 : vector<32x1xf32>, vector<32x63xf32> -> vector<32x64xf32>
    %c-1_i32_42 = arith.constant -1 : i32
    %103 = vector.broadcast %c-1_i32_42 : i32 to vector<1x64xi32>
    %104 = arith.addi %8, %103 : vector<1x64xi32>
    %c0_i32_43 = arith.constant 0 : i32
    %105 = vector.broadcast %c0_i32_43 : i32 to vector<1x64xi32>
    %106 = arith.cmpi sge, %104, %105 : vector<1x64xi32>
    %c-1_i32_44 = arith.constant -1 : i32
    %107 = vector.broadcast %c-1_i32_44 : i32 to vector<1x64xi32>
    %108 = arith.addi %8, %107 : vector<1x64xi32>
    %c8_i32_45 = arith.constant 8 : i32
    %109 = vector.broadcast %c8_i32_45 : i32 to vector<1x64xi32>
    %110 = arith.cmpi slt, %108, %109 : vector<1x64xi32>
    %111 = arith.andi %106, %110 : vector<1x64xi1>
    %c0_i32_46 = arith.constant 0 : i32
    %112 = vector.broadcast %c0_i32_46 : i32 to vector<1x64xi32>
    %113 = arith.addi %6, %112 : vector<1x64xi32>
    %c0_i32_47 = arith.constant 0 : i32
    %114 = vector.broadcast %c0_i32_47 : i32 to vector<1x64xi32>
    %115 = arith.cmpi sge, %113, %114 : vector<1x64xi32>
    %116 = arith.andi %111, %115 : vector<1x64xi1>
    %c0_i32_48 = arith.constant 0 : i32
    %117 = vector.broadcast %c0_i32_48 : i32 to vector<1x64xi32>
    %118 = arith.addi %6, %117 : vector<1x64xi32>
    %c8_i32_49 = arith.constant 8 : i32
    %119 = vector.broadcast %c8_i32_49 : i32 to vector<1x64xi32>
    %120 = arith.cmpi slt, %118, %119 : vector<1x64xi32>
    %121 = arith.andi %116, %120 : vector<1x64xi1>
    %cst_50 = arith.constant 0.000000e+00 : f32
    %122 = vector.shape_cast %121 : vector<1x64xi1> to vector<1x64xi1>
    %123 = vector.broadcast %122 : vector<1x64xi1> to vector<32x64xi1>
    %124 = vector.broadcast %cst_50 : f32 to vector<32x64xf32>
    %125 = arith.select %123, %102, %124 : vector<32x64xi1>, vector<32x64xf32>
    %c3 = arith.constant 3 : index
    %c0_51 = arith.constant 0 : index
    %c0_52 = arith.constant 0 : index
    %126 = vector.load %arg3[%c3, %c0_51, %c0_52] : memref<9x32x32xf32, #tpu.memory_space<vmem>>, vector<1x32x32xf32>
    %127 = vector.shape_cast %126 : vector<1x32x32xf32> to vector<32x32xf32>
    %cst_53 = arith.constant dense<0.000000e+00> : vector<32x64xf32>
    %128 = tpu.matmul %127, %125, %cst_53 {dimension_numbers = #tpu.dot_dimension_numbers<[1], [0], [0], [1], [0, 0, 1, 1], [], []>} : vector<32x32xf32>, vector<32x64xf32>, vector<32x64xf32> -> vector<32x64xf32>
    %129 = arith.addf %99, %128 : vector<32x64xf32>
    %c4 = arith.constant 4 : index
    %c0_54 = arith.constant 0 : index
    %c0_55 = arith.constant 0 : index
    %130 = vector.load %arg3[%c4, %c0_54, %c0_55] : memref<9x32x32xf32, #tpu.memory_space<vmem>>, vector<1x32x32xf32>
    %131 = vector.shape_cast %130 : vector<1x32x32xf32> to vector<32x32xf32>
    %cst_56 = arith.constant dense<0.000000e+00> : vector<32x64xf32>
    %132 = tpu.matmul %131, %3, %cst_56 {dimension_numbers = #tpu.dot_dimension_numbers<[1], [0], [0], [1], [0, 0, 1, 1], [], []>} : vector<32x32xf32>, vector<32x64xf32>, vector<32x64xf32> -> vector<32x64xf32>
    %133 = arith.addf %129, %132 : vector<32x64xf32>
    %134 = vector.extract_strided_slice %3 {offsets = [0, 1], sizes = [32, 63], strides = [1, 1]} : vector<32x64xf32> to vector<32x63xf32>
    %cst_57 = arith.constant 0.000000e+00 : f32
    %135 = vector.broadcast %cst_57 : f32 to vector<32x1xf32>
    %136 = tpu.concatenate %134, %135 in 1 : vector<32x63xf32>, vector<32x1xf32> -> vector<32x64xf32>
    %c1_i32_58 = arith.constant 1 : i32
    %137 = vector.broadcast %c1_i32_58 : i32 to vector<1x64xi32>
    %138 = arith.addi %8, %137 : vector<1x64xi32>
    %c0_i32_59 = arith.constant 0 : i32
    %139 = vector.broadcast %c0_i32_59 : i32 to vector<1x64xi32>
    %140 = arith.cmpi sge, %138, %139 : vector<1x64xi32>
    %c1_i32_60 = arith.constant 1 : i32
    %141 = vector.broadcast %c1_i32_60 : i32 to vector<1x64xi32>
    %142 = arith.addi %8, %141 : vector<1x64xi32>
    %c8_i32_61 = arith.constant 8 : i32
    %143 = vector.broadcast %c8_i32_61 : i32 to vector<1x64xi32>
    %144 = arith.cmpi slt, %142, %143 : vector<1x64xi32>
    %145 = arith.andi %140, %144 : vector<1x64xi1>
    %c0_i32_62 = arith.constant 0 : i32
    %146 = vector.broadcast %c0_i32_62 : i32 to vector<1x64xi32>
    %147 = arith.addi %6, %146 : vector<1x64xi32>
    %c0_i32_63 = arith.constant 0 : i32
    %148 = vector.broadcast %c0_i32_63 : i32 to vector<1x64xi32>
    %149 = arith.cmpi sge, %147, %148 : vector<1x64xi32>
    %150 = arith.andi %145, %149 : vector<1x64xi1>
    %c0_i32_64 = arith.constant 0 : i32
    %151 = vector.broadcast %c0_i32_64 : i32 to vector<1x64xi32>
    %152 = arith.addi %6, %151 : vector<1x64xi32>
    %c8_i32_65 = arith.constant 8 : i32
    %153 = vector.broadcast %c8_i32_65 : i32 to vector<1x64xi32>
    %154 = arith.cmpi slt, %152, %153 : vector<1x64xi32>
    %155 = arith.andi %150, %154 : vector<1x64xi1>
    %cst_66 = arith.constant 0.000000e+00 : f32
    %156 = vector.shape_cast %155 : vector<1x64xi1> to vector<1x64xi1>
    %157 = vector.broadcast %156 : vector<1x64xi1> to vector<32x64xi1>
    %158 = vector.broadcast %cst_66 : f32 to vector<32x64xf32>
    %159 = arith.select %157, %136, %158 : vector<32x64xi1>, vector<32x64xf32>
    %c5 = arith.constant 5 : index
    %c0_67 = arith.constant 0 : index
    %c0_68 = arith.constant 0 : index
    %160 = vector.load %arg3[%c5, %c0_67, %c0_68] : memref<9x32x32xf32, #tpu.memory_space<vmem>>, vector<1x32x32xf32>
    %161 = vector.shape_cast %160 : vector<1x32x32xf32> to vector<32x32xf32>
    %cst_69 = arith.constant dense<0.000000e+00> : vector<32x64xf32>
    %162 = tpu.matmul %161, %159, %cst_69 {dimension_numbers = #tpu.dot_dimension_numbers<[1], [0], [0], [1], [0, 0, 1, 1], [], []>} : vector<32x32xf32>, vector<32x64xf32>, vector<32x64xf32> -> vector<32x64xf32>
    %163 = arith.addf %133, %162 : vector<32x64xf32>
    %164 = vector.extract_strided_slice %3 {offsets = [0, 7], sizes = [32, 57], strides = [1, 1]} : vector<32x64xf32> to vector<32x57xf32>
    %cst_70 = arith.constant 0.000000e+00 : f32
    %165 = vector.broadcast %cst_70 : f32 to vector<32x7xf32>
    %166 = tpu.concatenate %164, %165 in 1 : vector<32x57xf32>, vector<32x7xf32> -> vector<32x64xf32>
    %c-1_i32_71 = arith.constant -1 : i32
    %167 = vector.broadcast %c-1_i32_71 : i32 to vector<1x64xi32>
    %168 = arith.addi %8, %167 : vector<1x64xi32>
    %c0_i32_72 = arith.constant 0 : i32
    %169 = vector.broadcast %c0_i32_72 : i32 to vector<1x64xi32>
    %170 = arith.cmpi sge, %168, %169 : vector<1x64xi32>
    %c-1_i32_73 = arith.constant -1 : i32
    %171 = vector.broadcast %c-1_i32_73 : i32 to vector<1x64xi32>
    %172 = arith.addi %8, %171 : vector<1x64xi32>
    %c8_i32_74 = arith.constant 8 : i32
    %173 = vector.broadcast %c8_i32_74 : i32 to vector<1x64xi32>
    %174 = arith.cmpi slt, %172, %173 : vector<1x64xi32>
    %175 = arith.andi %170, %174 : vector<1x64xi1>
    %c1_i32_75 = arith.constant 1 : i32
    %176 = vector.broadcast %c1_i32_75 : i32 to vector<1x64xi32>
    %177 = arith.addi %6, %176 : vector<1x64xi32>
    %c0_i32_76 = arith.constant 0 : i32
    %178 = vector.broadcast %c0_i32_76 : i32 to vector<1x64xi32>
    %179 = arith.cmpi sge, %177, %178 : vector<1x64xi32>
    %180 = arith.andi %175, %179 : vector<1x64xi1>
    %c1_i32_77 = arith.constant 1 : i32
    %181 = vector.broadcast %c1_i32_77 : i32 to vector<1x64xi32>
    %182 = arith.addi %6, %181 : vector<1x64xi32>
    %c8_i32_78 = arith.constant 8 : i32
    %183 = vector.broadcast %c8_i32_78 : i32 to vector<1x64xi32>
    %184 = arith.cmpi slt, %182, %183 : vector<1x64xi32>
    %185 = arith.andi %180, %184 : vector<1x64xi1>
    %cst_79 = arith.constant 0.000000e+00 : f32
    %186 = vector.shape_cast %185 : vector<1x64xi1> to vector<1x64xi1>
    %187 = vector.broadcast %186 : vector<1x64xi1> to vector<32x64xi1>
    %188 = vector.broadcast %cst_79 : f32 to vector<32x64xf32>
    %189 = arith.select %187, %166, %188 : vector<32x64xi1>, vector<32x64xf32>
    %c6 = arith.constant 6 : index
    %c0_80 = arith.constant 0 : index
    %c0_81 = arith.constant 0 : index
    %190 = vector.load %arg3[%c6, %c0_80, %c0_81] : memref<9x32x32xf32, #tpu.memory_space<vmem>>, vector<1x32x32xf32>
    %191 = vector.shape_cast %190 : vector<1x32x32xf32> to vector<32x32xf32>
    %cst_82 = arith.constant dense<0.000000e+00> : vector<32x64xf32>
    %192 = tpu.matmul %191, %189, %cst_82 {dimension_numbers = #tpu.dot_dimension_numbers<[1], [0], [0], [1], [0, 0, 1, 1], [], []>} : vector<32x32xf32>, vector<32x64xf32>, vector<32x64xf32> -> vector<32x64xf32>
    %193 = arith.addf %163, %192 : vector<32x64xf32>
    %194 = vector.extract_strided_slice %3 {offsets = [0, 8], sizes = [32, 56], strides = [1, 1]} : vector<32x64xf32> to vector<32x56xf32>
    %cst_83 = arith.constant 0.000000e+00 : f32
    %195 = vector.broadcast %cst_83 : f32 to vector<32x8xf32>
    %196 = tpu.concatenate %194, %195 in 1 : vector<32x56xf32>, vector<32x8xf32> -> vector<32x64xf32>
    %c0_i32_84 = arith.constant 0 : i32
    %197 = vector.broadcast %c0_i32_84 : i32 to vector<1x64xi32>
    %198 = arith.addi %8, %197 : vector<1x64xi32>
    %c0_i32_85 = arith.constant 0 : i32
    %199 = vector.broadcast %c0_i32_85 : i32 to vector<1x64xi32>
    %200 = arith.cmpi sge, %198, %199 : vector<1x64xi32>
    %c0_i32_86 = arith.constant 0 : i32
    %201 = vector.broadcast %c0_i32_86 : i32 to vector<1x64xi32>
    %202 = arith.addi %8, %201 : vector<1x64xi32>
    %c8_i32_87 = arith.constant 8 : i32
    %203 = vector.broadcast %c8_i32_87 : i32 to vector<1x64xi32>
    %204 = arith.cmpi slt, %202, %203 : vector<1x64xi32>
    %205 = arith.andi %200, %204 : vector<1x64xi1>
    %c1_i32_88 = arith.constant 1 : i32
    %206 = vector.broadcast %c1_i32_88 : i32 to vector<1x64xi32>
    %207 = arith.addi %6, %206 : vector<1x64xi32>
    %c0_i32_89 = arith.constant 0 : i32
    %208 = vector.broadcast %c0_i32_89 : i32 to vector<1x64xi32>
    %209 = arith.cmpi sge, %207, %208 : vector<1x64xi32>
    %210 = arith.andi %205, %209 : vector<1x64xi1>
    %c1_i32_90 = arith.constant 1 : i32
    %211 = vector.broadcast %c1_i32_90 : i32 to vector<1x64xi32>
    %212 = arith.addi %6, %211 : vector<1x64xi32>
    %c8_i32_91 = arith.constant 8 : i32
    %213 = vector.broadcast %c8_i32_91 : i32 to vector<1x64xi32>
    %214 = arith.cmpi slt, %212, %213 : vector<1x64xi32>
    %215 = arith.andi %210, %214 : vector<1x64xi1>
    %cst_92 = arith.constant 0.000000e+00 : f32
    %216 = vector.shape_cast %215 : vector<1x64xi1> to vector<1x64xi1>
    %217 = vector.broadcast %216 : vector<1x64xi1> to vector<32x64xi1>
    %218 = vector.broadcast %cst_92 : f32 to vector<32x64xf32>
    %219 = arith.select %217, %196, %218 : vector<32x64xi1>, vector<32x64xf32>
    %c7 = arith.constant 7 : index
    %c0_93 = arith.constant 0 : index
    %c0_94 = arith.constant 0 : index
    %220 = vector.load %arg3[%c7, %c0_93, %c0_94] : memref<9x32x32xf32, #tpu.memory_space<vmem>>, vector<1x32x32xf32>
    %221 = vector.shape_cast %220 : vector<1x32x32xf32> to vector<32x32xf32>
    %cst_95 = arith.constant dense<0.000000e+00> : vector<32x64xf32>
    %222 = tpu.matmul %221, %219, %cst_95 {dimension_numbers = #tpu.dot_dimension_numbers<[1], [0], [0], [1], [0, 0, 1, 1], [], []>} : vector<32x32xf32>, vector<32x64xf32>, vector<32x64xf32> -> vector<32x64xf32>
    %223 = arith.addf %193, %222 : vector<32x64xf32>
    %224 = vector.extract_strided_slice %3 {offsets = [0, 9], sizes = [32, 55], strides = [1, 1]} : vector<32x64xf32> to vector<32x55xf32>
    %cst_96 = arith.constant 0.000000e+00 : f32
    %225 = vector.broadcast %cst_96 : f32 to vector<32x9xf32>
    %226 = tpu.concatenate %224, %225 in 1 : vector<32x55xf32>, vector<32x9xf32> -> vector<32x64xf32>
    %c1_i32_97 = arith.constant 1 : i32
    %227 = vector.broadcast %c1_i32_97 : i32 to vector<1x64xi32>
    %228 = arith.addi %8, %227 : vector<1x64xi32>
    %c0_i32_98 = arith.constant 0 : i32
    %229 = vector.broadcast %c0_i32_98 : i32 to vector<1x64xi32>
    %230 = arith.cmpi sge, %228, %229 : vector<1x64xi32>
    %c1_i32_99 = arith.constant 1 : i32
    %231 = vector.broadcast %c1_i32_99 : i32 to vector<1x64xi32>
    %232 = arith.addi %8, %231 : vector<1x64xi32>
    %c8_i32_100 = arith.constant 8 : i32
    %233 = vector.broadcast %c8_i32_100 : i32 to vector<1x64xi32>
    %234 = arith.cmpi slt, %232, %233 : vector<1x64xi32>
    %235 = arith.andi %230, %234 : vector<1x64xi1>
    %c1_i32_101 = arith.constant 1 : i32
    %236 = vector.broadcast %c1_i32_101 : i32 to vector<1x64xi32>
    %237 = arith.addi %6, %236 : vector<1x64xi32>
    %c0_i32_102 = arith.constant 0 : i32
    %238 = vector.broadcast %c0_i32_102 : i32 to vector<1x64xi32>
    %239 = arith.cmpi sge, %237, %238 : vector<1x64xi32>
    %240 = arith.andi %235, %239 : vector<1x64xi1>
    %c1_i32_103 = arith.constant 1 : i32
    %241 = vector.broadcast %c1_i32_103 : i32 to vector<1x64xi32>
    %242 = arith.addi %6, %241 : vector<1x64xi32>
    %c8_i32_104 = arith.constant 8 : i32
    %243 = vector.broadcast %c8_i32_104 : i32 to vector<1x64xi32>
    %244 = arith.cmpi slt, %242, %243 : vector<1x64xi32>
    %245 = arith.andi %240, %244 : vector<1x64xi1>
    %cst_105 = arith.constant 0.000000e+00 : f32
    %246 = vector.shape_cast %245 : vector<1x64xi1> to vector<1x64xi1>
    %247 = vector.broadcast %246 : vector<1x64xi1> to vector<32x64xi1>
    %248 = vector.broadcast %cst_105 : f32 to vector<32x64xf32>
    %249 = arith.select %247, %226, %248 : vector<32x64xi1>, vector<32x64xf32>
    %c8 = arith.constant 8 : index
    %c0_106 = arith.constant 0 : index
    %c0_107 = arith.constant 0 : index
    %250 = vector.load %arg3[%c8, %c0_106, %c0_107] : memref<9x32x32xf32, #tpu.memory_space<vmem>>, vector<1x32x32xf32>
    %251 = vector.shape_cast %250 : vector<1x32x32xf32> to vector<32x32xf32>
    %cst_108 = arith.constant dense<0.000000e+00> : vector<32x64xf32>
    %252 = tpu.matmul %251, %249, %cst_108 {dimension_numbers = #tpu.dot_dimension_numbers<[1], [0], [0], [1], [0, 0, 1, 1], [], []>} : vector<32x32xf32>, vector<32x64xf32>, vector<32x64xf32> -> vector<32x64xf32>
    %253 = arith.addf %223, %252 : vector<32x64xf32>
    %c0_109 = arith.constant 0 : index
    %c0_110 = arith.constant 0 : index
    %254 = vector.load %arg4[%c0_109, %c0_110] : memref<32x1xf32, #tpu.memory_space<vmem>>, vector<32x1xf32>
    %255 = vector.broadcast %254 : vector<32x1xf32> to vector<32x64xf32>
    %256 = arith.addf %253, %255 : vector<32x64xf32>
    %257 = vector.extract_strided_slice %256 {offsets = [0, 0], sizes = [16, 64], strides = [1, 1]} : vector<32x64xf32> to vector<16x64xf32>
    %258 = vector.extract_strided_slice %256 {offsets = [16, 0], sizes = [16, 64], strides = [1, 1]} : vector<32x64xf32> to vector<16x64xf32>
    %259 = arith.negf %258 : vector<16x64xf32>
    %260 = math.exp %259 : vector<16x64xf32>
    %cst_111 = arith.constant 1.000000e+00 : f32
    %261 = vector.broadcast %cst_111 : f32 to vector<16x64xf32>
    %262 = arith.addf %261, %260 : vector<16x64xf32>
    %263 = arith.divf %261, %262 : vector<16x64xf32>
    %264 = arith.mulf %257, %263 : vector<16x64xf32>
    %c0_112 = arith.constant 0 : index
    %c0_113 = arith.constant 0 : index
    %c0_114 = arith.constant 0 : index
    %265 = vector.load %arg5[%c0_112, %c0_113, %c0_114] : memref<1x16x64xf32, #tpu.memory_space<vmem>>, vector<1x16x64xf32>
    %266 = vector.shape_cast %265 : vector<1x16x64xf32> to vector<16x64xf32>
    %267 = vector.shape_cast %264 : vector<16x64xf32> to vector<1x16x64xf32>
    tpu.vector_store %arg5[%c0_112, %c0_113, %c0_114], %267 {strides = array<i32>} : memref<1x16x64xf32, #tpu.memory_space<vmem>>, vector<1x16x64xf32>,
    return
  }
  func.func @transform_0(%arg0: i32) -> (i32, i32, i32) {
    %c0_i32 = arith.constant 0 : i32
    %c0_i32_0 = arith.constant 0 : i32
    %c0_i32_1 = arith.constant 0 : i32
    return %arg0, %c0_i32, %c0_i32_0 : i32, i32, i32
  }
  func.func @transform_1(%arg0: i32) -> (i32, i32) {
    %c0_i32 = arith.constant 0 : i32
    %c0_i32_0 = arith.constant 0 : i32
    %c0_i32_1 = arith.constant 0 : i32
    return %c0_i32, %c0_i32_0 : i32, i32
  }
  func.func @transform_2(%arg0: i32) -> (i32, i32, i32) {
    %c0_i32 = arith.constant 0 : i32
    %c0_i32_0 = arith.constant 0 : i32
    %c0_i32_1 = arith.constant 0 : i32
    %c0_i32_2 = arith.constant 0 : i32
    return %c0_i32, %c0_i32_0, %c0_i32_1 : i32, i32, i32
  }
  func.func @transform_3(%arg0: i32) -> (i32, i32) {
    %c0_i32 = arith.constant 0 : i32
    %c0_i32_0 = arith.constant 0 : i32
    %c0_i32_1 = arith.constant 0 : i32
    return %c0_i32, %c0_i32_0 : i32, i32
  }
  func.func @transform_4(%arg0: i32) -> (i32, i32, i32) {
    %c0_i32 = arith.constant 0 : i32
    %c0_i32_0 = arith.constant 0 : i32
    %c0_i32_1 = arith.constant 0 : i32
    return %arg0, %c0_i32, %c0_i32_0 : i32, i32, i32
  }
}

module attributes {stable_mosaic.version = 11 : i64} {
  func.func @_upblock_kernel(%arg0: i32, %arg1: memref<1x8x256xf32, #tpu.memory_space<vmem>>, %arg2: memref<256x1024xf32, #tpu.memory_space<vmem>>, %arg3: memref<9x8x8xf32, #tpu.memory_space<vmem>>, %arg4: memref<8x1xf32, #tpu.memory_space<vmem>>, %arg5: memref<1x4x1024xf32, #tpu.memory_space<vmem>>) attributes {dimension_semantics = [#tpu.dimension_semantics<parallel>], iteration_bounds = array<i64: 2>, scalar_prefetch = 0 : i64, scratch_operands = 0 : i64, tpu.core_type = #tpu.core_type<tc>, window_params = [{transform_indices = @transform_0, window_bounds = array<i64: 1, 8, 256>}, {pipeline_mode = #tpu.pipeline_mode<synchronous>, transform_indices = @transform_1, window_bounds = array<i64: 256, 1024>}, {pipeline_mode = #tpu.pipeline_mode<synchronous>, transform_indices = @transform_2, window_bounds = array<i64: 9, 8, 8>}, {pipeline_mode = #tpu.pipeline_mode<synchronous>, transform_indices = @transform_3, window_bounds = array<i64: 8, 1>}, {transform_indices = @transform_4, window_bounds = array<i64: 1, 4, 1024>}]} {
    %c0 = arith.constant 0 : index
    %c0_0 = arith.constant 0 : index
    %c0_1 = arith.constant 0 : index
    %0 = vector.load %arg1[%c0, %c0_0, %c0_1] : memref<1x8x256xf32, #tpu.memory_space<vmem>>, vector<1x8x256xf32>
    %1 = vector.shape_cast %0 : vector<1x8x256xf32> to vector<8x256xf32>
    %c0_2 = arith.constant 0 : index
    %c0_3 = arith.constant 0 : index
    %2 = vector.load %arg2[%c0_2, %c0_3] : memref<256x1024xf32, #tpu.memory_space<vmem>>, vector<256x1024xf32>
    %cst = arith.constant dense<0.000000e+00> : vector<8x1024xf32>
    %3 = tpu.matmul %1, %2, %cst {dimension_numbers = #tpu.dot_dimension_numbers<[1], [0], [0], [1], [0, 0, 1, 1], [], []>} : vector<8x256xf32>, vector<256x1024xf32>, vector<8x1024xf32> -> vector<8x1024xf32>
    %4 = tpu.iota {dimensions = array<i32: 1>} : vector<1x1024xi32>
    %c5_i32 = arith.constant 5 : i32
    %5 = vector.broadcast %c5_i32 : i32 to vector<1x1024xi32>
    %6 = arith.shrsi %4, %5 : vector<1x1024xi32>
    %c31_i32 = arith.constant 31 : i32
    %7 = vector.broadcast %c31_i32 : i32 to vector<1x1024xi32>
    %8 = arith.andi %4, %7 : vector<1x1024xi32>
    %cst_4 = arith.constant 0.000000e+00 : f32
    %9 = vector.broadcast %cst_4 : f32 to vector<8x1024xf32>
    %cst_5 = arith.constant 0.000000e+00 : f32
    %10 = vector.broadcast %cst_5 : f32 to vector<8x33xf32>
    %11 = vector.extract_strided_slice %3 {offsets = [0, 0], sizes = [8, 991], strides = [1, 1]} : vector<8x1024xf32> to vector<8x991xf32>
    %12 = tpu.concatenate %10, %11 in 1 : vector<8x33xf32>, vector<8x991xf32> -> vector<8x1024xf32>
    %c-1_i32 = arith.constant -1 : i32
    %13 = vector.broadcast %c-1_i32 : i32 to vector<1x1024xi32>
    %14 = arith.addi %8, %13 : vector<1x1024xi32>
    %c0_i32 = arith.constant 0 : i32
    %15 = vector.broadcast %c0_i32 : i32 to vector<1x1024xi32>
    %16 = arith.cmpi sge, %14, %15 : vector<1x1024xi32>
    %c-1_i32_6 = arith.constant -1 : i32
    %17 = vector.broadcast %c-1_i32_6 : i32 to vector<1x1024xi32>
    %18 = arith.addi %8, %17 : vector<1x1024xi32>
    %c32_i32 = arith.constant 32 : i32
    %19 = vector.broadcast %c32_i32 : i32 to vector<1x1024xi32>
    %20 = arith.cmpi slt, %18, %19 : vector<1x1024xi32>
    %21 = arith.andi %16, %20 : vector<1x1024xi1>
    %c-1_i32_7 = arith.constant -1 : i32
    %22 = vector.broadcast %c-1_i32_7 : i32 to vector<1x1024xi32>
    %23 = arith.addi %6, %22 : vector<1x1024xi32>
    %c0_i32_8 = arith.constant 0 : i32
    %24 = vector.broadcast %c0_i32_8 : i32 to vector<1x1024xi32>
    %25 = arith.cmpi sge, %23, %24 : vector<1x1024xi32>
    %26 = arith.andi %21, %25 : vector<1x1024xi1>
    %c-1_i32_9 = arith.constant -1 : i32
    %27 = vector.broadcast %c-1_i32_9 : i32 to vector<1x1024xi32>
    %28 = arith.addi %6, %27 : vector<1x1024xi32>
    %c32_i32_10 = arith.constant 32 : i32
    %29 = vector.broadcast %c32_i32_10 : i32 to vector<1x1024xi32>
    %30 = arith.cmpi slt, %28, %29 : vector<1x1024xi32>
    %31 = arith.andi %26, %30 : vector<1x1024xi1>
    %cst_11 = arith.constant 0.000000e+00 : f32
    %32 = vector.shape_cast %31 : vector<1x1024xi1> to vector<1x1024xi1>
    %33 = vector.broadcast %32 : vector<1x1024xi1> to vector<8x1024xi1>
    %34 = vector.broadcast %cst_11 : f32 to vector<8x1024xf32>
    %35 = arith.select %33, %12, %34 : vector<8x1024xi1>, vector<8x1024xf32>
    %c0_12 = arith.constant 0 : index
    %c0_13 = arith.constant 0 : index
    %c0_14 = arith.constant 0 : index
    %36 = vector.load %arg3[%c0_12, %c0_13, %c0_14] : memref<9x8x8xf32, #tpu.memory_space<vmem>>, vector<1x8x8xf32>
    %37 = vector.shape_cast %36 : vector<1x8x8xf32> to vector<8x8xf32>
    %cst_15 = arith.constant dense<0.000000e+00> : vector<8x1024xf32>
    %38 = tpu.matmul %37, %35, %cst_15 {dimension_numbers = #tpu.dot_dimension_numbers<[1], [0], [0], [1], [0, 0, 1, 1], [], []>} : vector<8x8xf32>, vector<8x1024xf32>, vector<8x1024xf32> -> vector<8x1024xf32>
    %39 = arith.addf %9, %38 : vector<8x1024xf32>
    %cst_16 = arith.constant 0.000000e+00 : f32
    %40 = vector.broadcast %cst_16 : f32 to vector<8x32xf32>
    %41 = vector.extract_strided_slice %3 {offsets = [0, 0], sizes = [8, 992], strides = [1, 1]} : vector<8x1024xf32> to vector<8x992xf32>
    %42 = tpu.concatenate %40, %41 in 1 : vector<8x32xf32>, vector<8x992xf32> -> vector<8x1024xf32>
    %c0_i32_17 = arith.constant 0 : i32
    %43 = vector.broadcast %c0_i32_17 : i32 to vector<1x1024xi32>
    %44 = arith.addi %8, %43 : vector<1x1024xi32>
    %c0_i32_18 = arith.constant 0 : i32
    %45 = vector.broadcast %c0_i32_18 : i32 to vector<1x1024xi32>
    %46 = arith.cmpi sge, %44, %45 : vector<1x1024xi32>
    %c0_i32_19 = arith.constant 0 : i32
    %47 = vector.broadcast %c0_i32_19 : i32 to vector<1x1024xi32>
    %48 = arith.addi %8, %47 : vector<1x1024xi32>
    %c32_i32_20 = arith.constant 32 : i32
    %49 = vector.broadcast %c32_i32_20 : i32 to vector<1x1024xi32>
    %50 = arith.cmpi slt, %48, %49 : vector<1x1024xi32>
    %51 = arith.andi %46, %50 : vector<1x1024xi1>
    %c-1_i32_21 = arith.constant -1 : i32
    %52 = vector.broadcast %c-1_i32_21 : i32 to vector<1x1024xi32>
    %53 = arith.addi %6, %52 : vector<1x1024xi32>
    %c0_i32_22 = arith.constant 0 : i32
    %54 = vector.broadcast %c0_i32_22 : i32 to vector<1x1024xi32>
    %55 = arith.cmpi sge, %53, %54 : vector<1x1024xi32>
    %56 = arith.andi %51, %55 : vector<1x1024xi1>
    %c-1_i32_23 = arith.constant -1 : i32
    %57 = vector.broadcast %c-1_i32_23 : i32 to vector<1x1024xi32>
    %58 = arith.addi %6, %57 : vector<1x1024xi32>
    %c32_i32_24 = arith.constant 32 : i32
    %59 = vector.broadcast %c32_i32_24 : i32 to vector<1x1024xi32>
    %60 = arith.cmpi slt, %58, %59 : vector<1x1024xi32>
    %61 = arith.andi %56, %60 : vector<1x1024xi1>
    %cst_25 = arith.constant 0.000000e+00 : f32
    %62 = vector.shape_cast %61 : vector<1x1024xi1> to vector<1x1024xi1>
    %63 = vector.broadcast %62 : vector<1x1024xi1> to vector<8x1024xi1>
    %64 = vector.broadcast %cst_25 : f32 to vector<8x1024xf32>
    %65 = arith.select %63, %42, %64 : vector<8x1024xi1>, vector<8x1024xf32>
    %c1 = arith.constant 1 : index
    %c0_26 = arith.constant 0 : index
    %c0_27 = arith.constant 0 : index
    %66 = vector.load %arg3[%c1, %c0_26, %c0_27] : memref<9x8x8xf32, #tpu.memory_space<vmem>>, vector<1x8x8xf32>
    %67 = vector.shape_cast %66 : vector<1x8x8xf32> to vector<8x8xf32>
    %cst_28 = arith.constant dense<0.000000e+00> : vector<8x1024xf32>
    %68 = tpu.matmul %67, %65, %cst_28 {dimension_numbers = #tpu.dot_dimension_numbers<[1], [0], [0], [1], [0, 0, 1, 1], [], []>} : vector<8x8xf32>, vector<8x1024xf32>, vector<8x1024xf32> -> vector<8x1024xf32>
    %69 = arith.addf %39, %68 : vector<8x1024xf32>
    %cst_29 = arith.constant 0.000000e+00 : f32
    %70 = vector.broadcast %cst_29 : f32 to vector<8x31xf32>
    %71 = vector.extract_strided_slice %3 {offsets = [0, 0], sizes = [8, 993], strides = [1, 1]} : vector<8x1024xf32> to vector<8x993xf32>
    %72 = tpu.concatenate %70, %71 in 1 : vector<8x31xf32>, vector<8x993xf32> -> vector<8x1024xf32>
    %c1_i32 = arith.constant 1 : i32
    %73 = vector.broadcast %c1_i32 : i32 to vector<1x1024xi32>
    %74 = arith.addi %8, %73 : vector<1x1024xi32>
    %c0_i32_30 = arith.constant 0 : i32
    %75 = vector.broadcast %c0_i32_30 : i32 to vector<1x1024xi32>
    %76 = arith.cmpi sge, %74, %75 : vector<1x1024xi32>
    %c1_i32_31 = arith.constant 1 : i32
    %77 = vector.broadcast %c1_i32_31 : i32 to vector<1x1024xi32>
    %78 = arith.addi %8, %77 : vector<1x1024xi32>
    %c32_i32_32 = arith.constant 32 : i32
    %79 = vector.broadcast %c32_i32_32 : i32 to vector<1x1024xi32>
    %80 = arith.cmpi slt, %78, %79 : vector<1x1024xi32>
    %81 = arith.andi %76, %80 : vector<1x1024xi1>
    %c-1_i32_33 = arith.constant -1 : i32
    %82 = vector.broadcast %c-1_i32_33 : i32 to vector<1x1024xi32>
    %83 = arith.addi %6, %82 : vector<1x1024xi32>
    %c0_i32_34 = arith.constant 0 : i32
    %84 = vector.broadcast %c0_i32_34 : i32 to vector<1x1024xi32>
    %85 = arith.cmpi sge, %83, %84 : vector<1x1024xi32>
    %86 = arith.andi %81, %85 : vector<1x1024xi1>
    %c-1_i32_35 = arith.constant -1 : i32
    %87 = vector.broadcast %c-1_i32_35 : i32 to vector<1x1024xi32>
    %88 = arith.addi %6, %87 : vector<1x1024xi32>
    %c32_i32_36 = arith.constant 32 : i32
    %89 = vector.broadcast %c32_i32_36 : i32 to vector<1x1024xi32>
    %90 = arith.cmpi slt, %88, %89 : vector<1x1024xi32>
    %91 = arith.andi %86, %90 : vector<1x1024xi1>
    %cst_37 = arith.constant 0.000000e+00 : f32
    %92 = vector.shape_cast %91 : vector<1x1024xi1> to vector<1x1024xi1>
    %93 = vector.broadcast %92 : vector<1x1024xi1> to vector<8x1024xi1>
    %94 = vector.broadcast %cst_37 : f32 to vector<8x1024xf32>
    %95 = arith.select %93, %72, %94 : vector<8x1024xi1>, vector<8x1024xf32>
    %c2 = arith.constant 2 : index
    %c0_38 = arith.constant 0 : index
    %c0_39 = arith.constant 0 : index
    %96 = vector.load %arg3[%c2, %c0_38, %c0_39] : memref<9x8x8xf32, #tpu.memory_space<vmem>>, vector<1x8x8xf32>
    %97 = vector.shape_cast %96 : vector<1x8x8xf32> to vector<8x8xf32>
    %cst_40 = arith.constant dense<0.000000e+00> : vector<8x1024xf32>
    %98 = tpu.matmul %97, %95, %cst_40 {dimension_numbers = #tpu.dot_dimension_numbers<[1], [0], [0], [1], [0, 0, 1, 1], [], []>} : vector<8x8xf32>, vector<8x1024xf32>, vector<8x1024xf32> -> vector<8x1024xf32>
    %99 = arith.addf %69, %98 : vector<8x1024xf32>
    %cst_41 = arith.constant 0.000000e+00 : f32
    %100 = vector.broadcast %cst_41 : f32 to vector<8x1xf32>
    %101 = vector.extract_strided_slice %3 {offsets = [0, 0], sizes = [8, 1023], strides = [1, 1]} : vector<8x1024xf32> to vector<8x1023xf32>
    %102 = tpu.concatenate %100, %101 in 1 : vector<8x1xf32>, vector<8x1023xf32> -> vector<8x1024xf32>
    %c-1_i32_42 = arith.constant -1 : i32
    %103 = vector.broadcast %c-1_i32_42 : i32 to vector<1x1024xi32>
    %104 = arith.addi %8, %103 : vector<1x1024xi32>
    %c0_i32_43 = arith.constant 0 : i32
    %105 = vector.broadcast %c0_i32_43 : i32 to vector<1x1024xi32>
    %106 = arith.cmpi sge, %104, %105 : vector<1x1024xi32>
    %c-1_i32_44 = arith.constant -1 : i32
    %107 = vector.broadcast %c-1_i32_44 : i32 to vector<1x1024xi32>
    %108 = arith.addi %8, %107 : vector<1x1024xi32>
    %c32_i32_45 = arith.constant 32 : i32
    %109 = vector.broadcast %c32_i32_45 : i32 to vector<1x1024xi32>
    %110 = arith.cmpi slt, %108, %109 : vector<1x1024xi32>
    %111 = arith.andi %106, %110 : vector<1x1024xi1>
    %c0_i32_46 = arith.constant 0 : i32
    %112 = vector.broadcast %c0_i32_46 : i32 to vector<1x1024xi32>
    %113 = arith.addi %6, %112 : vector<1x1024xi32>
    %c0_i32_47 = arith.constant 0 : i32
    %114 = vector.broadcast %c0_i32_47 : i32 to vector<1x1024xi32>
    %115 = arith.cmpi sge, %113, %114 : vector<1x1024xi32>
    %116 = arith.andi %111, %115 : vector<1x1024xi1>
    %c0_i32_48 = arith.constant 0 : i32
    %117 = vector.broadcast %c0_i32_48 : i32 to vector<1x1024xi32>
    %118 = arith.addi %6, %117 : vector<1x1024xi32>
    %c32_i32_49 = arith.constant 32 : i32
    %119 = vector.broadcast %c32_i32_49 : i32 to vector<1x1024xi32>
    %120 = arith.cmpi slt, %118, %119 : vector<1x1024xi32>
    %121 = arith.andi %116, %120 : vector<1x1024xi1>
    %cst_50 = arith.constant 0.000000e+00 : f32
    %122 = vector.shape_cast %121 : vector<1x1024xi1> to vector<1x1024xi1>
    %123 = vector.broadcast %122 : vector<1x1024xi1> to vector<8x1024xi1>
    %124 = vector.broadcast %cst_50 : f32 to vector<8x1024xf32>
    %125 = arith.select %123, %102, %124 : vector<8x1024xi1>, vector<8x1024xf32>
    %c3 = arith.constant 3 : index
    %c0_51 = arith.constant 0 : index
    %c0_52 = arith.constant 0 : index
    %126 = vector.load %arg3[%c3, %c0_51, %c0_52] : memref<9x8x8xf32, #tpu.memory_space<vmem>>, vector<1x8x8xf32>
    %127 = vector.shape_cast %126 : vector<1x8x8xf32> to vector<8x8xf32>
    %cst_53 = arith.constant dense<0.000000e+00> : vector<8x1024xf32>
    %128 = tpu.matmul %127, %125, %cst_53 {dimension_numbers = #tpu.dot_dimension_numbers<[1], [0], [0], [1], [0, 0, 1, 1], [], []>} : vector<8x8xf32>, vector<8x1024xf32>, vector<8x1024xf32> -> vector<8x1024xf32>
    %129 = arith.addf %99, %128 : vector<8x1024xf32>
    %c4 = arith.constant 4 : index
    %c0_54 = arith.constant 0 : index
    %c0_55 = arith.constant 0 : index
    %130 = vector.load %arg3[%c4, %c0_54, %c0_55] : memref<9x8x8xf32, #tpu.memory_space<vmem>>, vector<1x8x8xf32>
    %131 = vector.shape_cast %130 : vector<1x8x8xf32> to vector<8x8xf32>
    %cst_56 = arith.constant dense<0.000000e+00> : vector<8x1024xf32>
    %132 = tpu.matmul %131, %3, %cst_56 {dimension_numbers = #tpu.dot_dimension_numbers<[1], [0], [0], [1], [0, 0, 1, 1], [], []>} : vector<8x8xf32>, vector<8x1024xf32>, vector<8x1024xf32> -> vector<8x1024xf32>
    %133 = arith.addf %129, %132 : vector<8x1024xf32>
    %134 = vector.extract_strided_slice %3 {offsets = [0, 1], sizes = [8, 1023], strides = [1, 1]} : vector<8x1024xf32> to vector<8x1023xf32>
    %cst_57 = arith.constant 0.000000e+00 : f32
    %135 = vector.broadcast %cst_57 : f32 to vector<8x1xf32>
    %136 = tpu.concatenate %134, %135 in 1 : vector<8x1023xf32>, vector<8x1xf32> -> vector<8x1024xf32>
    %c1_i32_58 = arith.constant 1 : i32
    %137 = vector.broadcast %c1_i32_58 : i32 to vector<1x1024xi32>
    %138 = arith.addi %8, %137 : vector<1x1024xi32>
    %c0_i32_59 = arith.constant 0 : i32
    %139 = vector.broadcast %c0_i32_59 : i32 to vector<1x1024xi32>
    %140 = arith.cmpi sge, %138, %139 : vector<1x1024xi32>
    %c1_i32_60 = arith.constant 1 : i32
    %141 = vector.broadcast %c1_i32_60 : i32 to vector<1x1024xi32>
    %142 = arith.addi %8, %141 : vector<1x1024xi32>
    %c32_i32_61 = arith.constant 32 : i32
    %143 = vector.broadcast %c32_i32_61 : i32 to vector<1x1024xi32>
    %144 = arith.cmpi slt, %142, %143 : vector<1x1024xi32>
    %145 = arith.andi %140, %144 : vector<1x1024xi1>
    %c0_i32_62 = arith.constant 0 : i32
    %146 = vector.broadcast %c0_i32_62 : i32 to vector<1x1024xi32>
    %147 = arith.addi %6, %146 : vector<1x1024xi32>
    %c0_i32_63 = arith.constant 0 : i32
    %148 = vector.broadcast %c0_i32_63 : i32 to vector<1x1024xi32>
    %149 = arith.cmpi sge, %147, %148 : vector<1x1024xi32>
    %150 = arith.andi %145, %149 : vector<1x1024xi1>
    %c0_i32_64 = arith.constant 0 : i32
    %151 = vector.broadcast %c0_i32_64 : i32 to vector<1x1024xi32>
    %152 = arith.addi %6, %151 : vector<1x1024xi32>
    %c32_i32_65 = arith.constant 32 : i32
    %153 = vector.broadcast %c32_i32_65 : i32 to vector<1x1024xi32>
    %154 = arith.cmpi slt, %152, %153 : vector<1x1024xi32>
    %155 = arith.andi %150, %154 : vector<1x1024xi1>
    %cst_66 = arith.constant 0.000000e+00 : f32
    %156 = vector.shape_cast %155 : vector<1x1024xi1> to vector<1x1024xi1>
    %157 = vector.broadcast %156 : vector<1x1024xi1> to vector<8x1024xi1>
    %158 = vector.broadcast %cst_66 : f32 to vector<8x1024xf32>
    %159 = arith.select %157, %136, %158 : vector<8x1024xi1>, vector<8x1024xf32>
    %c5 = arith.constant 5 : index
    %c0_67 = arith.constant 0 : index
    %c0_68 = arith.constant 0 : index
    %160 = vector.load %arg3[%c5, %c0_67, %c0_68] : memref<9x8x8xf32, #tpu.memory_space<vmem>>, vector<1x8x8xf32>
    %161 = vector.shape_cast %160 : vector<1x8x8xf32> to vector<8x8xf32>
    %cst_69 = arith.constant dense<0.000000e+00> : vector<8x1024xf32>
    %162 = tpu.matmul %161, %159, %cst_69 {dimension_numbers = #tpu.dot_dimension_numbers<[1], [0], [0], [1], [0, 0, 1, 1], [], []>} : vector<8x8xf32>, vector<8x1024xf32>, vector<8x1024xf32> -> vector<8x1024xf32>
    %163 = arith.addf %133, %162 : vector<8x1024xf32>
    %164 = vector.extract_strided_slice %3 {offsets = [0, 31], sizes = [8, 993], strides = [1, 1]} : vector<8x1024xf32> to vector<8x993xf32>
    %cst_70 = arith.constant 0.000000e+00 : f32
    %165 = vector.broadcast %cst_70 : f32 to vector<8x31xf32>
    %166 = tpu.concatenate %164, %165 in 1 : vector<8x993xf32>, vector<8x31xf32> -> vector<8x1024xf32>
    %c-1_i32_71 = arith.constant -1 : i32
    %167 = vector.broadcast %c-1_i32_71 : i32 to vector<1x1024xi32>
    %168 = arith.addi %8, %167 : vector<1x1024xi32>
    %c0_i32_72 = arith.constant 0 : i32
    %169 = vector.broadcast %c0_i32_72 : i32 to vector<1x1024xi32>
    %170 = arith.cmpi sge, %168, %169 : vector<1x1024xi32>
    %c-1_i32_73 = arith.constant -1 : i32
    %171 = vector.broadcast %c-1_i32_73 : i32 to vector<1x1024xi32>
    %172 = arith.addi %8, %171 : vector<1x1024xi32>
    %c32_i32_74 = arith.constant 32 : i32
    %173 = vector.broadcast %c32_i32_74 : i32 to vector<1x1024xi32>
    %174 = arith.cmpi slt, %172, %173 : vector<1x1024xi32>
    %175 = arith.andi %170, %174 : vector<1x1024xi1>
    %c1_i32_75 = arith.constant 1 : i32
    %176 = vector.broadcast %c1_i32_75 : i32 to vector<1x1024xi32>
    %177 = arith.addi %6, %176 : vector<1x1024xi32>
    %c0_i32_76 = arith.constant 0 : i32
    %178 = vector.broadcast %c0_i32_76 : i32 to vector<1x1024xi32>
    %179 = arith.cmpi sge, %177, %178 : vector<1x1024xi32>
    %180 = arith.andi %175, %179 : vector<1x1024xi1>
    %c1_i32_77 = arith.constant 1 : i32
    %181 = vector.broadcast %c1_i32_77 : i32 to vector<1x1024xi32>
    %182 = arith.addi %6, %181 : vector<1x1024xi32>
    %c32_i32_78 = arith.constant 32 : i32
    %183 = vector.broadcast %c32_i32_78 : i32 to vector<1x1024xi32>
    %184 = arith.cmpi slt, %182, %183 : vector<1x1024xi32>
    %185 = arith.andi %180, %184 : vector<1x1024xi1>
    %cst_79 = arith.constant 0.000000e+00 : f32
    %186 = vector.shape_cast %185 : vector<1x1024xi1> to vector<1x1024xi1>
    %187 = vector.broadcast %186 : vector<1x1024xi1> to vector<8x1024xi1>
    %188 = vector.broadcast %cst_79 : f32 to vector<8x1024xf32>
    %189 = arith.select %187, %166, %188 : vector<8x1024xi1>, vector<8x1024xf32>
    %c6 = arith.constant 6 : index
    %c0_80 = arith.constant 0 : index
    %c0_81 = arith.constant 0 : index
    %190 = vector.load %arg3[%c6, %c0_80, %c0_81] : memref<9x8x8xf32, #tpu.memory_space<vmem>>, vector<1x8x8xf32>
    %191 = vector.shape_cast %190 : vector<1x8x8xf32> to vector<8x8xf32>
    %cst_82 = arith.constant dense<0.000000e+00> : vector<8x1024xf32>
    %192 = tpu.matmul %191, %189, %cst_82 {dimension_numbers = #tpu.dot_dimension_numbers<[1], [0], [0], [1], [0, 0, 1, 1], [], []>} : vector<8x8xf32>, vector<8x1024xf32>, vector<8x1024xf32> -> vector<8x1024xf32>
    %193 = arith.addf %163, %192 : vector<8x1024xf32>
    %194 = vector.extract_strided_slice %3 {offsets = [0, 32], sizes = [8, 992], strides = [1, 1]} : vector<8x1024xf32> to vector<8x992xf32>
    %cst_83 = arith.constant 0.000000e+00 : f32
    %195 = vector.broadcast %cst_83 : f32 to vector<8x32xf32>
    %196 = tpu.concatenate %194, %195 in 1 : vector<8x992xf32>, vector<8x32xf32> -> vector<8x1024xf32>
    %c0_i32_84 = arith.constant 0 : i32
    %197 = vector.broadcast %c0_i32_84 : i32 to vector<1x1024xi32>
    %198 = arith.addi %8, %197 : vector<1x1024xi32>
    %c0_i32_85 = arith.constant 0 : i32
    %199 = vector.broadcast %c0_i32_85 : i32 to vector<1x1024xi32>
    %200 = arith.cmpi sge, %198, %199 : vector<1x1024xi32>
    %c0_i32_86 = arith.constant 0 : i32
    %201 = vector.broadcast %c0_i32_86 : i32 to vector<1x1024xi32>
    %202 = arith.addi %8, %201 : vector<1x1024xi32>
    %c32_i32_87 = arith.constant 32 : i32
    %203 = vector.broadcast %c32_i32_87 : i32 to vector<1x1024xi32>
    %204 = arith.cmpi slt, %202, %203 : vector<1x1024xi32>
    %205 = arith.andi %200, %204 : vector<1x1024xi1>
    %c1_i32_88 = arith.constant 1 : i32
    %206 = vector.broadcast %c1_i32_88 : i32 to vector<1x1024xi32>
    %207 = arith.addi %6, %206 : vector<1x1024xi32>
    %c0_i32_89 = arith.constant 0 : i32
    %208 = vector.broadcast %c0_i32_89 : i32 to vector<1x1024xi32>
    %209 = arith.cmpi sge, %207, %208 : vector<1x1024xi32>
    %210 = arith.andi %205, %209 : vector<1x1024xi1>
    %c1_i32_90 = arith.constant 1 : i32
    %211 = vector.broadcast %c1_i32_90 : i32 to vector<1x1024xi32>
    %212 = arith.addi %6, %211 : vector<1x1024xi32>
    %c32_i32_91 = arith.constant 32 : i32
    %213 = vector.broadcast %c32_i32_91 : i32 to vector<1x1024xi32>
    %214 = arith.cmpi slt, %212, %213 : vector<1x1024xi32>
    %215 = arith.andi %210, %214 : vector<1x1024xi1>
    %cst_92 = arith.constant 0.000000e+00 : f32
    %216 = vector.shape_cast %215 : vector<1x1024xi1> to vector<1x1024xi1>
    %217 = vector.broadcast %216 : vector<1x1024xi1> to vector<8x1024xi1>
    %218 = vector.broadcast %cst_92 : f32 to vector<8x1024xf32>
    %219 = arith.select %217, %196, %218 : vector<8x1024xi1>, vector<8x1024xf32>
    %c7 = arith.constant 7 : index
    %c0_93 = arith.constant 0 : index
    %c0_94 = arith.constant 0 : index
    %220 = vector.load %arg3[%c7, %c0_93, %c0_94] : memref<9x8x8xf32, #tpu.memory_space<vmem>>, vector<1x8x8xf32>
    %221 = vector.shape_cast %220 : vector<1x8x8xf32> to vector<8x8xf32>
    %cst_95 = arith.constant dense<0.000000e+00> : vector<8x1024xf32>
    %222 = tpu.matmul %221, %219, %cst_95 {dimension_numbers = #tpu.dot_dimension_numbers<[1], [0], [0], [1], [0, 0, 1, 1], [], []>} : vector<8x8xf32>, vector<8x1024xf32>, vector<8x1024xf32> -> vector<8x1024xf32>
    %223 = arith.addf %193, %222 : vector<8x1024xf32>
    %224 = vector.extract_strided_slice %3 {offsets = [0, 33], sizes = [8, 991], strides = [1, 1]} : vector<8x1024xf32> to vector<8x991xf32>
    %cst_96 = arith.constant 0.000000e+00 : f32
    %225 = vector.broadcast %cst_96 : f32 to vector<8x33xf32>
    %226 = tpu.concatenate %224, %225 in 1 : vector<8x991xf32>, vector<8x33xf32> -> vector<8x1024xf32>
    %c1_i32_97 = arith.constant 1 : i32
    %227 = vector.broadcast %c1_i32_97 : i32 to vector<1x1024xi32>
    %228 = arith.addi %8, %227 : vector<1x1024xi32>
    %c0_i32_98 = arith.constant 0 : i32
    %229 = vector.broadcast %c0_i32_98 : i32 to vector<1x1024xi32>
    %230 = arith.cmpi sge, %228, %229 : vector<1x1024xi32>
    %c1_i32_99 = arith.constant 1 : i32
    %231 = vector.broadcast %c1_i32_99 : i32 to vector<1x1024xi32>
    %232 = arith.addi %8, %231 : vector<1x1024xi32>
    %c32_i32_100 = arith.constant 32 : i32
    %233 = vector.broadcast %c32_i32_100 : i32 to vector<1x1024xi32>
    %234 = arith.cmpi slt, %232, %233 : vector<1x1024xi32>
    %235 = arith.andi %230, %234 : vector<1x1024xi1>
    %c1_i32_101 = arith.constant 1 : i32
    %236 = vector.broadcast %c1_i32_101 : i32 to vector<1x1024xi32>
    %237 = arith.addi %6, %236 : vector<1x1024xi32>
    %c0_i32_102 = arith.constant 0 : i32
    %238 = vector.broadcast %c0_i32_102 : i32 to vector<1x1024xi32>
    %239 = arith.cmpi sge, %237, %238 : vector<1x1024xi32>
    %240 = arith.andi %235, %239 : vector<1x1024xi1>
    %c1_i32_103 = arith.constant 1 : i32
    %241 = vector.broadcast %c1_i32_103 : i32 to vector<1x1024xi32>
    %242 = arith.addi %6, %241 : vector<1x1024xi32>
    %c32_i32_104 = arith.constant 32 : i32
    %243 = vector.broadcast %c32_i32_104 : i32 to vector<1x1024xi32>
    %244 = arith.cmpi slt, %242, %243 : vector<1x1024xi32>
    %245 = arith.andi %240, %244 : vector<1x1024xi1>
    %cst_105 = arith.constant 0.000000e+00 : f32
    %246 = vector.shape_cast %245 : vector<1x1024xi1> to vector<1x1024xi1>
    %247 = vector.broadcast %246 : vector<1x1024xi1> to vector<8x1024xi1>
    %248 = vector.broadcast %cst_105 : f32 to vector<8x1024xf32>
    %249 = arith.select %247, %226, %248 : vector<8x1024xi1>, vector<8x1024xf32>
    %c8 = arith.constant 8 : index
    %c0_106 = arith.constant 0 : index
    %c0_107 = arith.constant 0 : index
    %250 = vector.load %arg3[%c8, %c0_106, %c0_107] : memref<9x8x8xf32, #tpu.memory_space<vmem>>, vector<1x8x8xf32>
    %251 = vector.shape_cast %250 : vector<1x8x8xf32> to vector<8x8xf32>
    %cst_108 = arith.constant dense<0.000000e+00> : vector<8x1024xf32>
    %252 = tpu.matmul %251, %249, %cst_108 {dimension_numbers = #tpu.dot_dimension_numbers<[1], [0], [0], [1], [0, 0, 1, 1], [], []>} : vector<8x8xf32>, vector<8x1024xf32>, vector<8x1024xf32> -> vector<8x1024xf32>
    %253 = arith.addf %223, %252 : vector<8x1024xf32>
    %c0_109 = arith.constant 0 : index
    %c0_110 = arith.constant 0 : index
    %254 = vector.load %arg4[%c0_109, %c0_110] : memref<8x1xf32, #tpu.memory_space<vmem>>, vector<8x1xf32>
    %255 = vector.broadcast %254 : vector<8x1xf32> to vector<8x1024xf32>
    %256 = arith.addf %253, %255 : vector<8x1024xf32>
    %257 = vector.extract_strided_slice %256 {offsets = [0, 0], sizes = [4, 1024], strides = [1, 1]} : vector<8x1024xf32> to vector<4x1024xf32>
    %258 = vector.extract_strided_slice %256 {offsets = [4, 0], sizes = [4, 1024], strides = [1, 1]} : vector<8x1024xf32> to vector<4x1024xf32>
    %259 = arith.negf %258 : vector<4x1024xf32>
    %260 = math.exp %259 : vector<4x1024xf32>
    %cst_111 = arith.constant 1.000000e+00 : f32
    %261 = vector.broadcast %cst_111 : f32 to vector<4x1024xf32>
    %262 = arith.addf %261, %260 : vector<4x1024xf32>
    %263 = arith.divf %261, %262 : vector<4x1024xf32>
    %264 = arith.mulf %257, %263 : vector<4x1024xf32>
    %c0_112 = arith.constant 0 : index
    %c0_113 = arith.constant 0 : index
    %c0_114 = arith.constant 0 : index
    %265 = vector.load %arg5[%c0_112, %c0_113, %c0_114] : memref<1x4x1024xf32, #tpu.memory_space<vmem>>, vector<1x4x1024xf32>
    %266 = vector.shape_cast %265 : vector<1x4x1024xf32> to vector<4x1024xf32>
    %267 = vector.shape_cast %264 : vector<4x1024xf32> to vector<1x4x1024xf32>
    tpu.vector_store %arg5[%c0_112, %c0_113, %c0_114], %267 {strides = array<i32>} : memref<1x4x1024xf32, #tpu.memory_space<vmem>>, vector<1x4x1024xf32>,
    return
  }
  func.func @transform_0(%arg0: i32) -> (i32, i32, i32) {
    %c0_i32 = arith.constant 0 : i32
    %c0_i32_0 = arith.constant 0 : i32
    %c0_i32_1 = arith.constant 0 : i32
    return %arg0, %c0_i32, %c0_i32_0 : i32, i32, i32
  }
  func.func @transform_1(%arg0: i32) -> (i32, i32) {
    %c0_i32 = arith.constant 0 : i32
    %c0_i32_0 = arith.constant 0 : i32
    %c0_i32_1 = arith.constant 0 : i32
    return %c0_i32, %c0_i32_0 : i32, i32
  }
  func.func @transform_2(%arg0: i32) -> (i32, i32, i32) {
    %c0_i32 = arith.constant 0 : i32
    %c0_i32_0 = arith.constant 0 : i32
    %c0_i32_1 = arith.constant 0 : i32
    %c0_i32_2 = arith.constant 0 : i32
    return %c0_i32, %c0_i32_0, %c0_i32_1 : i32, i32, i32
  }
  func.func @transform_3(%arg0: i32) -> (i32, i32) {
    %c0_i32 = arith.constant 0 : i32
    %c0_i32_0 = arith.constant 0 : i32
    %c0_i32_1 = arith.constant 0 : i32
    return %c0_i32, %c0_i32_0 : i32, i32
  }
  func.func @transform_4(%arg0: i32) -> (i32, i32, i32) {
    %c0_i32 = arith.constant 0 : i32
    %c0_i32_0 = arith.constant 0 : i32
    %c0_i32_1 = arith.constant 0 : i32
    return %arg0, %c0_i32, %c0_i32_0 : i32, i32, i32
  }
}

module attributes {stable_mosaic.version = 11 : i64} {
  func.func @_upblock_kernel(%arg0: i32, %arg1: memref<1x16x64xf32, #tpu.memory_space<vmem>>, %arg2: memref<64x256xf32, #tpu.memory_space<vmem>>, %arg3: memref<9x16x16xf32, #tpu.memory_space<vmem>>, %arg4: memref<16x1xf32, #tpu.memory_space<vmem>>, %arg5: memref<1x8x256xf32, #tpu.memory_space<vmem>>) attributes {dimension_semantics = [#tpu.dimension_semantics<parallel>], iteration_bounds = array<i64: 2>, scalar_prefetch = 0 : i64, scratch_operands = 0 : i64, tpu.core_type = #tpu.core_type<tc>, window_params = [{transform_indices = @transform_0, window_bounds = array<i64: 1, 16, 64>}, {pipeline_mode = #tpu.pipeline_mode<synchronous>, transform_indices = @transform_1, window_bounds = array<i64: 64, 256>}, {pipeline_mode = #tpu.pipeline_mode<synchronous>, transform_indices = @transform_2, window_bounds = array<i64: 9, 16, 16>}, {pipeline_mode = #tpu.pipeline_mode<synchronous>, transform_indices = @transform_3, window_bounds = array<i64: 16, 1>}, {transform_indices = @transform_4, window_bounds = array<i64: 1, 8, 256>}]} {
    %c0 = arith.constant 0 : index
    %c0_0 = arith.constant 0 : index
    %c0_1 = arith.constant 0 : index
    %0 = vector.load %arg1[%c0, %c0_0, %c0_1] : memref<1x16x64xf32, #tpu.memory_space<vmem>>, vector<1x16x64xf32>
    %1 = vector.shape_cast %0 : vector<1x16x64xf32> to vector<16x64xf32>
    %c0_2 = arith.constant 0 : index
    %c0_3 = arith.constant 0 : index
    %2 = vector.load %arg2[%c0_2, %c0_3] : memref<64x256xf32, #tpu.memory_space<vmem>>, vector<64x256xf32>
    %cst = arith.constant dense<0.000000e+00> : vector<16x256xf32>
    %3 = tpu.matmul %1, %2, %cst {dimension_numbers = #tpu.dot_dimension_numbers<[1], [0], [0], [1], [0, 0, 1, 1], [], []>} : vector<16x64xf32>, vector<64x256xf32>, vector<16x256xf32> -> vector<16x256xf32>
    %4 = tpu.iota {dimensions = array<i32: 1>} : vector<1x256xi32>
    %c4_i32 = arith.constant 4 : i32
    %5 = vector.broadcast %c4_i32 : i32 to vector<1x256xi32>
    %6 = arith.shrsi %4, %5 : vector<1x256xi32>
    %c15_i32 = arith.constant 15 : i32
    %7 = vector.broadcast %c15_i32 : i32 to vector<1x256xi32>
    %8 = arith.andi %4, %7 : vector<1x256xi32>
    %cst_4 = arith.constant 0.000000e+00 : f32
    %9 = vector.broadcast %cst_4 : f32 to vector<16x256xf32>
    %cst_5 = arith.constant 0.000000e+00 : f32
    %10 = vector.broadcast %cst_5 : f32 to vector<16x17xf32>
    %11 = vector.extract_strided_slice %3 {offsets = [0, 0], sizes = [16, 239], strides = [1, 1]} : vector<16x256xf32> to vector<16x239xf32>
    %12 = tpu.concatenate %10, %11 in 1 : vector<16x17xf32>, vector<16x239xf32> -> vector<16x256xf32>
    %c-1_i32 = arith.constant -1 : i32
    %13 = vector.broadcast %c-1_i32 : i32 to vector<1x256xi32>
    %14 = arith.addi %8, %13 : vector<1x256xi32>
    %c0_i32 = arith.constant 0 : i32
    %15 = vector.broadcast %c0_i32 : i32 to vector<1x256xi32>
    %16 = arith.cmpi sge, %14, %15 : vector<1x256xi32>
    %c-1_i32_6 = arith.constant -1 : i32
    %17 = vector.broadcast %c-1_i32_6 : i32 to vector<1x256xi32>
    %18 = arith.addi %8, %17 : vector<1x256xi32>
    %c16_i32 = arith.constant 16 : i32
    %19 = vector.broadcast %c16_i32 : i32 to vector<1x256xi32>
    %20 = arith.cmpi slt, %18, %19 : vector<1x256xi32>
    %21 = arith.andi %16, %20 : vector<1x256xi1>
    %c-1_i32_7 = arith.constant -1 : i32
    %22 = vector.broadcast %c-1_i32_7 : i32 to vector<1x256xi32>
    %23 = arith.addi %6, %22 : vector<1x256xi32>
    %c0_i32_8 = arith.constant 0 : i32
    %24 = vector.broadcast %c0_i32_8 : i32 to vector<1x256xi32>
    %25 = arith.cmpi sge, %23, %24 : vector<1x256xi32>
    %26 = arith.andi %21, %25 : vector<1x256xi1>
    %c-1_i32_9 = arith.constant -1 : i32
    %27 = vector.broadcast %c-1_i32_9 : i32 to vector<1x256xi32>
    %28 = arith.addi %6, %27 : vector<1x256xi32>
    %c16_i32_10 = arith.constant 16 : i32
    %29 = vector.broadcast %c16_i32_10 : i32 to vector<1x256xi32>
    %30 = arith.cmpi slt, %28, %29 : vector<1x256xi32>
    %31 = arith.andi %26, %30 : vector<1x256xi1>
    %cst_11 = arith.constant 0.000000e+00 : f32
    %32 = vector.shape_cast %31 : vector<1x256xi1> to vector<1x256xi1>
    %33 = vector.broadcast %32 : vector<1x256xi1> to vector<16x256xi1>
    %34 = vector.broadcast %cst_11 : f32 to vector<16x256xf32>
    %35 = arith.select %33, %12, %34 : vector<16x256xi1>, vector<16x256xf32>
    %c0_12 = arith.constant 0 : index
    %c0_13 = arith.constant 0 : index
    %c0_14 = arith.constant 0 : index
    %36 = vector.load %arg3[%c0_12, %c0_13, %c0_14] : memref<9x16x16xf32, #tpu.memory_space<vmem>>, vector<1x16x16xf32>
    %37 = vector.shape_cast %36 : vector<1x16x16xf32> to vector<16x16xf32>
    %cst_15 = arith.constant dense<0.000000e+00> : vector<16x256xf32>
    %38 = tpu.matmul %37, %35, %cst_15 {dimension_numbers = #tpu.dot_dimension_numbers<[1], [0], [0], [1], [0, 0, 1, 1], [], []>} : vector<16x16xf32>, vector<16x256xf32>, vector<16x256xf32> -> vector<16x256xf32>
    %39 = arith.addf %9, %38 : vector<16x256xf32>
    %cst_16 = arith.constant 0.000000e+00 : f32
    %40 = vector.broadcast %cst_16 : f32 to vector<16x16xf32>
    %41 = vector.extract_strided_slice %3 {offsets = [0, 0], sizes = [16, 240], strides = [1, 1]} : vector<16x256xf32> to vector<16x240xf32>
    %42 = tpu.concatenate %40, %41 in 1 : vector<16x16xf32>, vector<16x240xf32> -> vector<16x256xf32>
    %c0_i32_17 = arith.constant 0 : i32
    %43 = vector.broadcast %c0_i32_17 : i32 to vector<1x256xi32>
    %44 = arith.addi %8, %43 : vector<1x256xi32>
    %c0_i32_18 = arith.constant 0 : i32
    %45 = vector.broadcast %c0_i32_18 : i32 to vector<1x256xi32>
    %46 = arith.cmpi sge, %44, %45 : vector<1x256xi32>
    %c0_i32_19 = arith.constant 0 : i32
    %47 = vector.broadcast %c0_i32_19 : i32 to vector<1x256xi32>
    %48 = arith.addi %8, %47 : vector<1x256xi32>
    %c16_i32_20 = arith.constant 16 : i32
    %49 = vector.broadcast %c16_i32_20 : i32 to vector<1x256xi32>
    %50 = arith.cmpi slt, %48, %49 : vector<1x256xi32>
    %51 = arith.andi %46, %50 : vector<1x256xi1>
    %c-1_i32_21 = arith.constant -1 : i32
    %52 = vector.broadcast %c-1_i32_21 : i32 to vector<1x256xi32>
    %53 = arith.addi %6, %52 : vector<1x256xi32>
    %c0_i32_22 = arith.constant 0 : i32
    %54 = vector.broadcast %c0_i32_22 : i32 to vector<1x256xi32>
    %55 = arith.cmpi sge, %53, %54 : vector<1x256xi32>
    %56 = arith.andi %51, %55 : vector<1x256xi1>
    %c-1_i32_23 = arith.constant -1 : i32
    %57 = vector.broadcast %c-1_i32_23 : i32 to vector<1x256xi32>
    %58 = arith.addi %6, %57 : vector<1x256xi32>
    %c16_i32_24 = arith.constant 16 : i32
    %59 = vector.broadcast %c16_i32_24 : i32 to vector<1x256xi32>
    %60 = arith.cmpi slt, %58, %59 : vector<1x256xi32>
    %61 = arith.andi %56, %60 : vector<1x256xi1>
    %cst_25 = arith.constant 0.000000e+00 : f32
    %62 = vector.shape_cast %61 : vector<1x256xi1> to vector<1x256xi1>
    %63 = vector.broadcast %62 : vector<1x256xi1> to vector<16x256xi1>
    %64 = vector.broadcast %cst_25 : f32 to vector<16x256xf32>
    %65 = arith.select %63, %42, %64 : vector<16x256xi1>, vector<16x256xf32>
    %c1 = arith.constant 1 : index
    %c0_26 = arith.constant 0 : index
    %c0_27 = arith.constant 0 : index
    %66 = vector.load %arg3[%c1, %c0_26, %c0_27] : memref<9x16x16xf32, #tpu.memory_space<vmem>>, vector<1x16x16xf32>
    %67 = vector.shape_cast %66 : vector<1x16x16xf32> to vector<16x16xf32>
    %cst_28 = arith.constant dense<0.000000e+00> : vector<16x256xf32>
    %68 = tpu.matmul %67, %65, %cst_28 {dimension_numbers = #tpu.dot_dimension_numbers<[1], [0], [0], [1], [0, 0, 1, 1], [], []>} : vector<16x16xf32>, vector<16x256xf32>, vector<16x256xf32> -> vector<16x256xf32>
    %69 = arith.addf %39, %68 : vector<16x256xf32>
    %cst_29 = arith.constant 0.000000e+00 : f32
    %70 = vector.broadcast %cst_29 : f32 to vector<16x15xf32>
    %71 = vector.extract_strided_slice %3 {offsets = [0, 0], sizes = [16, 241], strides = [1, 1]} : vector<16x256xf32> to vector<16x241xf32>
    %72 = tpu.concatenate %70, %71 in 1 : vector<16x15xf32>, vector<16x241xf32> -> vector<16x256xf32>
    %c1_i32 = arith.constant 1 : i32
    %73 = vector.broadcast %c1_i32 : i32 to vector<1x256xi32>
    %74 = arith.addi %8, %73 : vector<1x256xi32>
    %c0_i32_30 = arith.constant 0 : i32
    %75 = vector.broadcast %c0_i32_30 : i32 to vector<1x256xi32>
    %76 = arith.cmpi sge, %74, %75 : vector<1x256xi32>
    %c1_i32_31 = arith.constant 1 : i32
    %77 = vector.broadcast %c1_i32_31 : i32 to vector<1x256xi32>
    %78 = arith.addi %8, %77 : vector<1x256xi32>
    %c16_i32_32 = arith.constant 16 : i32
    %79 = vector.broadcast %c16_i32_32 : i32 to vector<1x256xi32>
    %80 = arith.cmpi slt, %78, %79 : vector<1x256xi32>
    %81 = arith.andi %76, %80 : vector<1x256xi1>
    %c-1_i32_33 = arith.constant -1 : i32
    %82 = vector.broadcast %c-1_i32_33 : i32 to vector<1x256xi32>
    %83 = arith.addi %6, %82 : vector<1x256xi32>
    %c0_i32_34 = arith.constant 0 : i32
    %84 = vector.broadcast %c0_i32_34 : i32 to vector<1x256xi32>
    %85 = arith.cmpi sge, %83, %84 : vector<1x256xi32>
    %86 = arith.andi %81, %85 : vector<1x256xi1>
    %c-1_i32_35 = arith.constant -1 : i32
    %87 = vector.broadcast %c-1_i32_35 : i32 to vector<1x256xi32>
    %88 = arith.addi %6, %87 : vector<1x256xi32>
    %c16_i32_36 = arith.constant 16 : i32
    %89 = vector.broadcast %c16_i32_36 : i32 to vector<1x256xi32>
    %90 = arith.cmpi slt, %88, %89 : vector<1x256xi32>
    %91 = arith.andi %86, %90 : vector<1x256xi1>
    %cst_37 = arith.constant 0.000000e+00 : f32
    %92 = vector.shape_cast %91 : vector<1x256xi1> to vector<1x256xi1>
    %93 = vector.broadcast %92 : vector<1x256xi1> to vector<16x256xi1>
    %94 = vector.broadcast %cst_37 : f32 to vector<16x256xf32>
    %95 = arith.select %93, %72, %94 : vector<16x256xi1>, vector<16x256xf32>
    %c2 = arith.constant 2 : index
    %c0_38 = arith.constant 0 : index
    %c0_39 = arith.constant 0 : index
    %96 = vector.load %arg3[%c2, %c0_38, %c0_39] : memref<9x16x16xf32, #tpu.memory_space<vmem>>, vector<1x16x16xf32>
    %97 = vector.shape_cast %96 : vector<1x16x16xf32> to vector<16x16xf32>
    %cst_40 = arith.constant dense<0.000000e+00> : vector<16x256xf32>
    %98 = tpu.matmul %97, %95, %cst_40 {dimension_numbers = #tpu.dot_dimension_numbers<[1], [0], [0], [1], [0, 0, 1, 1], [], []>} : vector<16x16xf32>, vector<16x256xf32>, vector<16x256xf32> -> vector<16x256xf32>
    %99 = arith.addf %69, %98 : vector<16x256xf32>
    %cst_41 = arith.constant 0.000000e+00 : f32
    %100 = vector.broadcast %cst_41 : f32 to vector<16x1xf32>
    %101 = vector.extract_strided_slice %3 {offsets = [0, 0], sizes = [16, 255], strides = [1, 1]} : vector<16x256xf32> to vector<16x255xf32>
    %102 = tpu.concatenate %100, %101 in 1 : vector<16x1xf32>, vector<16x255xf32> -> vector<16x256xf32>
    %c-1_i32_42 = arith.constant -1 : i32
    %103 = vector.broadcast %c-1_i32_42 : i32 to vector<1x256xi32>
    %104 = arith.addi %8, %103 : vector<1x256xi32>
    %c0_i32_43 = arith.constant 0 : i32
    %105 = vector.broadcast %c0_i32_43 : i32 to vector<1x256xi32>
    %106 = arith.cmpi sge, %104, %105 : vector<1x256xi32>
    %c-1_i32_44 = arith.constant -1 : i32
    %107 = vector.broadcast %c-1_i32_44 : i32 to vector<1x256xi32>
    %108 = arith.addi %8, %107 : vector<1x256xi32>
    %c16_i32_45 = arith.constant 16 : i32
    %109 = vector.broadcast %c16_i32_45 : i32 to vector<1x256xi32>
    %110 = arith.cmpi slt, %108, %109 : vector<1x256xi32>
    %111 = arith.andi %106, %110 : vector<1x256xi1>
    %c0_i32_46 = arith.constant 0 : i32
    %112 = vector.broadcast %c0_i32_46 : i32 to vector<1x256xi32>
    %113 = arith.addi %6, %112 : vector<1x256xi32>
    %c0_i32_47 = arith.constant 0 : i32
    %114 = vector.broadcast %c0_i32_47 : i32 to vector<1x256xi32>
    %115 = arith.cmpi sge, %113, %114 : vector<1x256xi32>
    %116 = arith.andi %111, %115 : vector<1x256xi1>
    %c0_i32_48 = arith.constant 0 : i32
    %117 = vector.broadcast %c0_i32_48 : i32 to vector<1x256xi32>
    %118 = arith.addi %6, %117 : vector<1x256xi32>
    %c16_i32_49 = arith.constant 16 : i32
    %119 = vector.broadcast %c16_i32_49 : i32 to vector<1x256xi32>
    %120 = arith.cmpi slt, %118, %119 : vector<1x256xi32>
    %121 = arith.andi %116, %120 : vector<1x256xi1>
    %cst_50 = arith.constant 0.000000e+00 : f32
    %122 = vector.shape_cast %121 : vector<1x256xi1> to vector<1x256xi1>
    %123 = vector.broadcast %122 : vector<1x256xi1> to vector<16x256xi1>
    %124 = vector.broadcast %cst_50 : f32 to vector<16x256xf32>
    %125 = arith.select %123, %102, %124 : vector<16x256xi1>, vector<16x256xf32>
    %c3 = arith.constant 3 : index
    %c0_51 = arith.constant 0 : index
    %c0_52 = arith.constant 0 : index
    %126 = vector.load %arg3[%c3, %c0_51, %c0_52] : memref<9x16x16xf32, #tpu.memory_space<vmem>>, vector<1x16x16xf32>
    %127 = vector.shape_cast %126 : vector<1x16x16xf32> to vector<16x16xf32>
    %cst_53 = arith.constant dense<0.000000e+00> : vector<16x256xf32>
    %128 = tpu.matmul %127, %125, %cst_53 {dimension_numbers = #tpu.dot_dimension_numbers<[1], [0], [0], [1], [0, 0, 1, 1], [], []>} : vector<16x16xf32>, vector<16x256xf32>, vector<16x256xf32> -> vector<16x256xf32>
    %129 = arith.addf %99, %128 : vector<16x256xf32>
    %c4 = arith.constant 4 : index
    %c0_54 = arith.constant 0 : index
    %c0_55 = arith.constant 0 : index
    %130 = vector.load %arg3[%c4, %c0_54, %c0_55] : memref<9x16x16xf32, #tpu.memory_space<vmem>>, vector<1x16x16xf32>
    %131 = vector.shape_cast %130 : vector<1x16x16xf32> to vector<16x16xf32>
    %cst_56 = arith.constant dense<0.000000e+00> : vector<16x256xf32>
    %132 = tpu.matmul %131, %3, %cst_56 {dimension_numbers = #tpu.dot_dimension_numbers<[1], [0], [0], [1], [0, 0, 1, 1], [], []>} : vector<16x16xf32>, vector<16x256xf32>, vector<16x256xf32> -> vector<16x256xf32>
    %133 = arith.addf %129, %132 : vector<16x256xf32>
    %134 = vector.extract_strided_slice %3 {offsets = [0, 1], sizes = [16, 255], strides = [1, 1]} : vector<16x256xf32> to vector<16x255xf32>
    %cst_57 = arith.constant 0.000000e+00 : f32
    %135 = vector.broadcast %cst_57 : f32 to vector<16x1xf32>
    %136 = tpu.concatenate %134, %135 in 1 : vector<16x255xf32>, vector<16x1xf32> -> vector<16x256xf32>
    %c1_i32_58 = arith.constant 1 : i32
    %137 = vector.broadcast %c1_i32_58 : i32 to vector<1x256xi32>
    %138 = arith.addi %8, %137 : vector<1x256xi32>
    %c0_i32_59 = arith.constant 0 : i32
    %139 = vector.broadcast %c0_i32_59 : i32 to vector<1x256xi32>
    %140 = arith.cmpi sge, %138, %139 : vector<1x256xi32>
    %c1_i32_60 = arith.constant 1 : i32
    %141 = vector.broadcast %c1_i32_60 : i32 to vector<1x256xi32>
    %142 = arith.addi %8, %141 : vector<1x256xi32>
    %c16_i32_61 = arith.constant 16 : i32
    %143 = vector.broadcast %c16_i32_61 : i32 to vector<1x256xi32>
    %144 = arith.cmpi slt, %142, %143 : vector<1x256xi32>
    %145 = arith.andi %140, %144 : vector<1x256xi1>
    %c0_i32_62 = arith.constant 0 : i32
    %146 = vector.broadcast %c0_i32_62 : i32 to vector<1x256xi32>
    %147 = arith.addi %6, %146 : vector<1x256xi32>
    %c0_i32_63 = arith.constant 0 : i32
    %148 = vector.broadcast %c0_i32_63 : i32 to vector<1x256xi32>
    %149 = arith.cmpi sge, %147, %148 : vector<1x256xi32>
    %150 = arith.andi %145, %149 : vector<1x256xi1>
    %c0_i32_64 = arith.constant 0 : i32
    %151 = vector.broadcast %c0_i32_64 : i32 to vector<1x256xi32>
    %152 = arith.addi %6, %151 : vector<1x256xi32>
    %c16_i32_65 = arith.constant 16 : i32
    %153 = vector.broadcast %c16_i32_65 : i32 to vector<1x256xi32>
    %154 = arith.cmpi slt, %152, %153 : vector<1x256xi32>
    %155 = arith.andi %150, %154 : vector<1x256xi1>
    %cst_66 = arith.constant 0.000000e+00 : f32
    %156 = vector.shape_cast %155 : vector<1x256xi1> to vector<1x256xi1>
    %157 = vector.broadcast %156 : vector<1x256xi1> to vector<16x256xi1>
    %158 = vector.broadcast %cst_66 : f32 to vector<16x256xf32>
    %159 = arith.select %157, %136, %158 : vector<16x256xi1>, vector<16x256xf32>
    %c5 = arith.constant 5 : index
    %c0_67 = arith.constant 0 : index
    %c0_68 = arith.constant 0 : index
    %160 = vector.load %arg3[%c5, %c0_67, %c0_68] : memref<9x16x16xf32, #tpu.memory_space<vmem>>, vector<1x16x16xf32>
    %161 = vector.shape_cast %160 : vector<1x16x16xf32> to vector<16x16xf32>
    %cst_69 = arith.constant dense<0.000000e+00> : vector<16x256xf32>
    %162 = tpu.matmul %161, %159, %cst_69 {dimension_numbers = #tpu.dot_dimension_numbers<[1], [0], [0], [1], [0, 0, 1, 1], [], []>} : vector<16x16xf32>, vector<16x256xf32>, vector<16x256xf32> -> vector<16x256xf32>
    %163 = arith.addf %133, %162 : vector<16x256xf32>
    %164 = vector.extract_strided_slice %3 {offsets = [0, 15], sizes = [16, 241], strides = [1, 1]} : vector<16x256xf32> to vector<16x241xf32>
    %cst_70 = arith.constant 0.000000e+00 : f32
    %165 = vector.broadcast %cst_70 : f32 to vector<16x15xf32>
    %166 = tpu.concatenate %164, %165 in 1 : vector<16x241xf32>, vector<16x15xf32> -> vector<16x256xf32>
    %c-1_i32_71 = arith.constant -1 : i32
    %167 = vector.broadcast %c-1_i32_71 : i32 to vector<1x256xi32>
    %168 = arith.addi %8, %167 : vector<1x256xi32>
    %c0_i32_72 = arith.constant 0 : i32
    %169 = vector.broadcast %c0_i32_72 : i32 to vector<1x256xi32>
    %170 = arith.cmpi sge, %168, %169 : vector<1x256xi32>
    %c-1_i32_73 = arith.constant -1 : i32
    %171 = vector.broadcast %c-1_i32_73 : i32 to vector<1x256xi32>
    %172 = arith.addi %8, %171 : vector<1x256xi32>
    %c16_i32_74 = arith.constant 16 : i32
    %173 = vector.broadcast %c16_i32_74 : i32 to vector<1x256xi32>
    %174 = arith.cmpi slt, %172, %173 : vector<1x256xi32>
    %175 = arith.andi %170, %174 : vector<1x256xi1>
    %c1_i32_75 = arith.constant 1 : i32
    %176 = vector.broadcast %c1_i32_75 : i32 to vector<1x256xi32>
    %177 = arith.addi %6, %176 : vector<1x256xi32>
    %c0_i32_76 = arith.constant 0 : i32
    %178 = vector.broadcast %c0_i32_76 : i32 to vector<1x256xi32>
    %179 = arith.cmpi sge, %177, %178 : vector<1x256xi32>
    %180 = arith.andi %175, %179 : vector<1x256xi1>
    %c1_i32_77 = arith.constant 1 : i32
    %181 = vector.broadcast %c1_i32_77 : i32 to vector<1x256xi32>
    %182 = arith.addi %6, %181 : vector<1x256xi32>
    %c16_i32_78 = arith.constant 16 : i32
    %183 = vector.broadcast %c16_i32_78 : i32 to vector<1x256xi32>
    %184 = arith.cmpi slt, %182, %183 : vector<1x256xi32>
    %185 = arith.andi %180, %184 : vector<1x256xi1>
    %cst_79 = arith.constant 0.000000e+00 : f32
    %186 = vector.shape_cast %185 : vector<1x256xi1> to vector<1x256xi1>
    %187 = vector.broadcast %186 : vector<1x256xi1> to vector<16x256xi1>
    %188 = vector.broadcast %cst_79 : f32 to vector<16x256xf32>
    %189 = arith.select %187, %166, %188 : vector<16x256xi1>, vector<16x256xf32>
    %c6 = arith.constant 6 : index
    %c0_80 = arith.constant 0 : index
    %c0_81 = arith.constant 0 : index
    %190 = vector.load %arg3[%c6, %c0_80, %c0_81] : memref<9x16x16xf32, #tpu.memory_space<vmem>>, vector<1x16x16xf32>
    %191 = vector.shape_cast %190 : vector<1x16x16xf32> to vector<16x16xf32>
    %cst_82 = arith.constant dense<0.000000e+00> : vector<16x256xf32>
    %192 = tpu.matmul %191, %189, %cst_82 {dimension_numbers = #tpu.dot_dimension_numbers<[1], [0], [0], [1], [0, 0, 1, 1], [], []>} : vector<16x16xf32>, vector<16x256xf32>, vector<16x256xf32> -> vector<16x256xf32>
    %193 = arith.addf %163, %192 : vector<16x256xf32>
    %194 = vector.extract_strided_slice %3 {offsets = [0, 16], sizes = [16, 240], strides = [1, 1]} : vector<16x256xf32> to vector<16x240xf32>
    %cst_83 = arith.constant 0.000000e+00 : f32
    %195 = vector.broadcast %cst_83 : f32 to vector<16x16xf32>
    %196 = tpu.concatenate %194, %195 in 1 : vector<16x240xf32>, vector<16x16xf32> -> vector<16x256xf32>
    %c0_i32_84 = arith.constant 0 : i32
    %197 = vector.broadcast %c0_i32_84 : i32 to vector<1x256xi32>
    %198 = arith.addi %8, %197 : vector<1x256xi32>
    %c0_i32_85 = arith.constant 0 : i32
    %199 = vector.broadcast %c0_i32_85 : i32 to vector<1x256xi32>
    %200 = arith.cmpi sge, %198, %199 : vector<1x256xi32>
    %c0_i32_86 = arith.constant 0 : i32
    %201 = vector.broadcast %c0_i32_86 : i32 to vector<1x256xi32>
    %202 = arith.addi %8, %201 : vector<1x256xi32>
    %c16_i32_87 = arith.constant 16 : i32
    %203 = vector.broadcast %c16_i32_87 : i32 to vector<1x256xi32>
    %204 = arith.cmpi slt, %202, %203 : vector<1x256xi32>
    %205 = arith.andi %200, %204 : vector<1x256xi1>
    %c1_i32_88 = arith.constant 1 : i32
    %206 = vector.broadcast %c1_i32_88 : i32 to vector<1x256xi32>
    %207 = arith.addi %6, %206 : vector<1x256xi32>
    %c0_i32_89 = arith.constant 0 : i32
    %208 = vector.broadcast %c0_i32_89 : i32 to vector<1x256xi32>
    %209 = arith.cmpi sge, %207, %208 : vector<1x256xi32>
    %210 = arith.andi %205, %209 : vector<1x256xi1>
    %c1_i32_90 = arith.constant 1 : i32
    %211 = vector.broadcast %c1_i32_90 : i32 to vector<1x256xi32>
    %212 = arith.addi %6, %211 : vector<1x256xi32>
    %c16_i32_91 = arith.constant 16 : i32
    %213 = vector.broadcast %c16_i32_91 : i32 to vector<1x256xi32>
    %214 = arith.cmpi slt, %212, %213 : vector<1x256xi32>
    %215 = arith.andi %210, %214 : vector<1x256xi1>
    %cst_92 = arith.constant 0.000000e+00 : f32
    %216 = vector.shape_cast %215 : vector<1x256xi1> to vector<1x256xi1>
    %217 = vector.broadcast %216 : vector<1x256xi1> to vector<16x256xi1>
    %218 = vector.broadcast %cst_92 : f32 to vector<16x256xf32>
    %219 = arith.select %217, %196, %218 : vector<16x256xi1>, vector<16x256xf32>
    %c7 = arith.constant 7 : index
    %c0_93 = arith.constant 0 : index
    %c0_94 = arith.constant 0 : index
    %220 = vector.load %arg3[%c7, %c0_93, %c0_94] : memref<9x16x16xf32, #tpu.memory_space<vmem>>, vector<1x16x16xf32>
    %221 = vector.shape_cast %220 : vector<1x16x16xf32> to vector<16x16xf32>
    %cst_95 = arith.constant dense<0.000000e+00> : vector<16x256xf32>
    %222 = tpu.matmul %221, %219, %cst_95 {dimension_numbers = #tpu.dot_dimension_numbers<[1], [0], [0], [1], [0, 0, 1, 1], [], []>} : vector<16x16xf32>, vector<16x256xf32>, vector<16x256xf32> -> vector<16x256xf32>
    %223 = arith.addf %193, %222 : vector<16x256xf32>
    %224 = vector.extract_strided_slice %3 {offsets = [0, 17], sizes = [16, 239], strides = [1, 1]} : vector<16x256xf32> to vector<16x239xf32>
    %cst_96 = arith.constant 0.000000e+00 : f32
    %225 = vector.broadcast %cst_96 : f32 to vector<16x17xf32>
    %226 = tpu.concatenate %224, %225 in 1 : vector<16x239xf32>, vector<16x17xf32> -> vector<16x256xf32>
    %c1_i32_97 = arith.constant 1 : i32
    %227 = vector.broadcast %c1_i32_97 : i32 to vector<1x256xi32>
    %228 = arith.addi %8, %227 : vector<1x256xi32>
    %c0_i32_98 = arith.constant 0 : i32
    %229 = vector.broadcast %c0_i32_98 : i32 to vector<1x256xi32>
    %230 = arith.cmpi sge, %228, %229 : vector<1x256xi32>
    %c1_i32_99 = arith.constant 1 : i32
    %231 = vector.broadcast %c1_i32_99 : i32 to vector<1x256xi32>
    %232 = arith.addi %8, %231 : vector<1x256xi32>
    %c16_i32_100 = arith.constant 16 : i32
    %233 = vector.broadcast %c16_i32_100 : i32 to vector<1x256xi32>
    %234 = arith.cmpi slt, %232, %233 : vector<1x256xi32>
    %235 = arith.andi %230, %234 : vector<1x256xi1>
    %c1_i32_101 = arith.constant 1 : i32
    %236 = vector.broadcast %c1_i32_101 : i32 to vector<1x256xi32>
    %237 = arith.addi %6, %236 : vector<1x256xi32>
    %c0_i32_102 = arith.constant 0 : i32
    %238 = vector.broadcast %c0_i32_102 : i32 to vector<1x256xi32>
    %239 = arith.cmpi sge, %237, %238 : vector<1x256xi32>
    %240 = arith.andi %235, %239 : vector<1x256xi1>
    %c1_i32_103 = arith.constant 1 : i32
    %241 = vector.broadcast %c1_i32_103 : i32 to vector<1x256xi32>
    %242 = arith.addi %6, %241 : vector<1x256xi32>
    %c16_i32_104 = arith.constant 16 : i32
    %243 = vector.broadcast %c16_i32_104 : i32 to vector<1x256xi32>
    %244 = arith.cmpi slt, %242, %243 : vector<1x256xi32>
    %245 = arith.andi %240, %244 : vector<1x256xi1>
    %cst_105 = arith.constant 0.000000e+00 : f32
    %246 = vector.shape_cast %245 : vector<1x256xi1> to vector<1x256xi1>
    %247 = vector.broadcast %246 : vector<1x256xi1> to vector<16x256xi1>
    %248 = vector.broadcast %cst_105 : f32 to vector<16x256xf32>
    %249 = arith.select %247, %226, %248 : vector<16x256xi1>, vector<16x256xf32>
    %c8 = arith.constant 8 : index
    %c0_106 = arith.constant 0 : index
    %c0_107 = arith.constant 0 : index
    %250 = vector.load %arg3[%c8, %c0_106, %c0_107] : memref<9x16x16xf32, #tpu.memory_space<vmem>>, vector<1x16x16xf32>
    %251 = vector.shape_cast %250 : vector<1x16x16xf32> to vector<16x16xf32>
    %cst_108 = arith.constant dense<0.000000e+00> : vector<16x256xf32>
    %252 = tpu.matmul %251, %249, %cst_108 {dimension_numbers = #tpu.dot_dimension_numbers<[1], [0], [0], [1], [0, 0, 1, 1], [], []>} : vector<16x16xf32>, vector<16x256xf32>, vector<16x256xf32> -> vector<16x256xf32>
    %253 = arith.addf %223, %252 : vector<16x256xf32>
    %c0_109 = arith.constant 0 : index
    %c0_110 = arith.constant 0 : index
    %254 = vector.load %arg4[%c0_109, %c0_110] : memref<16x1xf32, #tpu.memory_space<vmem>>, vector<16x1xf32>
    %255 = vector.broadcast %254 : vector<16x1xf32> to vector<16x256xf32>
    %256 = arith.addf %253, %255 : vector<16x256xf32>
    %257 = vector.extract_strided_slice %256 {offsets = [0, 0], sizes = [8, 256], strides = [1, 1]} : vector<16x256xf32> to vector<8x256xf32>
    %258 = vector.extract_strided_slice %256 {offsets = [8, 0], sizes = [8, 256], strides = [1, 1]} : vector<16x256xf32> to vector<8x256xf32>
    %259 = arith.negf %258 : vector<8x256xf32>
    %260 = math.exp %259 : vector<8x256xf32>
    %cst_111 = arith.constant 1.000000e+00 : f32
    %261 = vector.broadcast %cst_111 : f32 to vector<8x256xf32>
    %262 = arith.addf %261, %260 : vector<8x256xf32>
    %263 = arith.divf %261, %262 : vector<8x256xf32>
    %264 = arith.mulf %257, %263 : vector<8x256xf32>
    %c0_112 = arith.constant 0 : index
    %c0_113 = arith.constant 0 : index
    %c0_114 = arith.constant 0 : index
    %265 = vector.load %arg5[%c0_112, %c0_113, %c0_114] : memref<1x8x256xf32, #tpu.memory_space<vmem>>, vector<1x8x256xf32>
    %266 = vector.shape_cast %265 : vector<1x8x256xf32> to vector<8x256xf32>
    %267 = vector.shape_cast %264 : vector<8x256xf32> to vector<1x8x256xf32>
    tpu.vector_store %arg5[%c0_112, %c0_113, %c0_114], %267 {strides = array<i32>} : memref<1x8x256xf32, #tpu.memory_space<vmem>>, vector<1x8x256xf32>,
    return
  }
  func.func @transform_0(%arg0: i32) -> (i32, i32, i32) {
    %c0_i32 = arith.constant 0 : i32
    %c0_i32_0 = arith.constant 0 : i32
    %c0_i32_1 = arith.constant 0 : i32
    return %arg0, %c0_i32, %c0_i32_0 : i32, i32, i32
  }
  func.func @transform_1(%arg0: i32) -> (i32, i32) {
    %c0_i32 = arith.constant 0 : i32
    %c0_i32_0 = arith.constant 0 : i32
    %c0_i32_1 = arith.constant 0 : i32
    return %c0_i32, %c0_i32_0 : i32, i32
  }
  func.func @transform_2(%arg0: i32) -> (i32, i32, i32) {
    %c0_i32 = arith.constant 0 : i32
    %c0_i32_0 = arith.constant 0 : i32
    %c0_i32_1 = arith.constant 0 : i32
    %c0_i32_2 = arith.constant 0 : i32
    return %c0_i32, %c0_i32_0, %c0_i32_1 : i32, i32, i32
  }
  func.func @transform_3(%arg0: i32) -> (i32, i32) {
    %c0_i32 = arith.constant 0 : i32
    %c0_i32_0 = arith.constant 0 : i32
    %c0_i32_1 = arith.constant 0 : i32
    return %c0_i32, %c0_i32_0 : i32, i32
  }
  func.func @transform_4(%arg0: i32) -> (i32, i32, i32) {
    %c0_i32 = arith.constant 0 : i32
    %c0_i32_0 = arith.constant 0 : i32
    %c0_i32_1 = arith.constant 0 : i32
    return %arg0, %c0_i32, %c0_i32_0 : i32, i32, i32
  }
}

</mosaic_0001>

<llo_original>
// kernel: get_init_code_forward.4
$region0: #{get_init_code_forward.4}
  #allocation0 [shape = 'u32[]', space=smem, size = 0x4, offset = 0x4, fixed_abs, tag = 'smem constant byte address 0x4 - core index']
  #allocation1 [shape = 'u32[144,128]{1,0:T(1,128)}', space=vmem, size = 0x12000, scoped, tag = 'internal scratch']
  %s0 = inlined_call_operand.vmem [shape: f32[2,32], index: 0, kind: input, shape index: {}]
  %s1 = inlined_call_operand.hbm [shape: f32[32,1024], index: 1, kind: input, shape index: {}]
  %s2 = inlined_call_operand.vmem [shape: f32[1,1024], index: 2, kind: input, shape index: {}]
  %s3 = inlined_call_operand.vmem [shape: f32[2,512], index: 3, kind: output, shape index: {}]
  %s4 = sld [smem:[#allocation0]]
  $region26: #{get_init_code_forward.4} parent=0
    _
  %s6 = ssub.s32 1, %s4
  %s7 = scalar_select 0, %s6, %s4
  $region1: #{get_init_code_forward.4} parent=0
    #allocation2 [shape = 'u8[131072]{0}', space=vmem, size = 0x20000, scoped, tag = 'input window, operand 1, single buffered']
    #allocation3 [shape = 's32[1]{0}', space=sflag, size = 0x4, scoped, tag = 'scoped memory for get_init_code_forward.4']
    %8 = vsyncpa [#allocation3], 0
    // Predicated region
    $region2: #{get_init_code_forward.4} parent=1 // pred_check
      _
    $region3: #{get_init_code_forward.4} parent=1 // pred_check_branch
      %10 = sbr.rel (0) target = $region5
    $region4: #{get_init_code_forward.4} parent=1 // pred_region
      _
    $region5: #{get_init_code_forward.4} parent=1 // pred_fallthru
      _
    // Predicated region
    $region6: #{get_init_code_forward.4} parent=1 // pred_check
      _
    $region7: #{get_init_code_forward.4} parent=1 // pred_check_branch
      %12 = sbr.rel (0) target = $region9
    $region8: #{get_init_code_forward.4} parent=1 // pred_region
      %s14 = ssub.s32 4096, 4096
      %15 = vsyncadd [#allocation3], %s14
      %s16 = sshll.u32 [#allocation2], 4
      %s17 = int_to_ptr.vmem [resolvable:$true] %s16
      %22 = dma.hbm_to_vmem [thread:$0]  %s1, 4096, %s17, [#allocation3], 1024, 1024, 64
    $region9: #{get_init_code_forward.4} parent=1 // pred_fallthru
      _
    // Predicated region
    $region10: #{get_init_code_forward.4} parent=1 // pred_check
      _
    $region11: #{get_init_code_forward.4} parent=1 // pred_check_branch
      %24 = sbr.rel (0) target = $region13
    $region12: #{get_init_code_forward.4} parent=1 // pred_region
      _
    $region13: #{get_init_code_forward.4} parent=1 // pred_fallthru
      _
    // Predicated region
    $region14: #{get_init_code_forward.4} parent=1 // pred_check
      _
    $region15: #{get_init_code_forward.4} parent=1 // pred_check_branch
      %26 = sbr.rel (0) target = $region17
    $region16: #{get_init_code_forward.4} parent=1 // pred_region
      %27 = dma.done [#allocation3], 4096
    $region17: #{get_init_code_forward.4} parent=1 // pred_fallthru
      _
    %v28 = vld [vmem:[%s0] sm:$0x3]
    %v29 = vld [vmem:[#allocation2] sm:$0xff]
    %v30 = vld [vmem:[#allocation2 + $0x8] sm:$0xff]
    %v31 = vld [vmem:[#allocation2 + $0x10] sm:$0xff]
    %v32 = vld [vmem:[#allocation2 + $0x18] sm:$0xff]
    %v33 = vld [vmem:[#allocation2 + $0x20] sm:$0xff]
    %v34 = vld [vmem:[#allocation2 + $0x28] sm:$0xff]
    %v35 = vld [vmem:[#allocation2 + $0x30] sm:$0xff]
    %v36 = vld [vmem:[#allocation2 + $0x38] sm:$0xff]
    %v37 = vld [vmem:[#allocation2 + $0x40] sm:$0xff]
    %v38 = vld [vmem:[#allocation2 + $0x48] sm:$0xff]
    %v39 = vld [vmem:[#allocation2 + $0x50] sm:$0xff]
    %v40 = vld [vmem:[#allocation2 + $0x58] sm:$0xff]
    %v41 = vld [vmem:[#allocation2 + $0x60] sm:$0xff]
    %v42 = vld [vmem:[#allocation2 + $0x68] sm:$0xff]
    %v43 = vld [vmem:[#allocation2 + $0x70] sm:$0xff]
    %v44 = vld [vmem:[#allocation2 + $0x78] sm:$0xff]
    %v45 = vld [vmem:[#allocation2 + $0x80] sm:$0xff]
    %v46 = vld [vmem:[#allocation2 + $0x88] sm:$0xff]
    %v47 = vld [vmem:[#allocation2 + $0x90] sm:$0xff]
    %v48 = vld [vmem:[#allocation2 + $0x98] sm:$0xff]
    %v49 = vld [vmem:[#allocation2 + $0xa0] sm:$0xff]
    %v50 = vld [vmem:[#allocation2 + $0xa8] sm:$0xff]
    %v51 = vld [vmem:[#allocation2 + $0xb0] sm:$0xff]
    %v52 = vld [vmem:[#allocation2 + $0xb8] sm:$0xff]
    %v53 = vld [vmem:[#allocation2 + $0xc0] sm:$0xff]
    %v54 = vld [vmem:[#allocation2 + $0xc8] sm:$0xff]
    %v55 = vld [vmem:[#allocation2 + $0xd0] sm:$0xff]
    %v56 = vld [vmem:[#allocation2 + $0xd8] sm:$0xff]
    %v57 = vld [vmem:[#allocation2 + $0xe0] sm:$0xff]
    %v58 = vld [vmem:[#allocation2 + $0xe8] sm:$0xff]
    %v59 = vld [vmem:[#allocation2 + $0xf0] sm:$0xff]
    %v60 = vld [vmem:[#allocation2 + $0xf8] sm:$0xff]
    %v61 = vld [vmem:[%s2] sm:$0xff]
    %v63 = vlaneseq
    %v64 = vshrl.u32 %v63, 7
    %v65 = vsub.s32 0, %v64
    %v66 = vrot.slane %v61, %v65
    %v67 = vlaneseq
    %v68 = vshrl.u32 %v67, 7
    %v69 = vsub.s32 1, %v68
    %v70 = vrot.slane %v61, %v69
    %v71 = vlaneseq
    %v72 = vshrl.u32 %v71, 7
    %v73 = vsub.s32 2, %v72
    %v74 = vrot.slane %v61, %v73
    %v75 = vlaneseq
    %v76 = vshrl.u32 %v75, 7
    %v77 = vsub.s32 3, %v76
    %v78 = vrot.slane %v61, %v77
    %v79 = vlaneseq
    %v80 = vshrl.u32 %v79, 7
    %v81 = vsub.s32 4, %v80
    %v82 = vrot.slane %v61, %v81
    %v83 = vlaneseq
    %v84 = vshrl.u32 %v83, 7
    %v85 = vsub.s32 5, %v84
    %v86 = vrot.slane %v61, %v85
    %v87 = vlaneseq
    %v88 = vshrl.u32 %v87, 7
    %v89 = vsub.s32 6, %v88
    %v90 = vrot.slane %v61, %v89
    %v91 = vlaneseq
    %v92 = vshrl.u32 %v91, 7
    %v93 = vsub.s32 7, %v92
    %v94 = vrot.slane %v61, %v93
    %vm103 = vcmask 261120
    %v105 = vsel %vm103, %v28, 0
    %107 = vmatprep.subr.mxu0 0.0
    %108 = vmatpush1.msra.mxu0 0.0
    %109 = vmatprep.subr.mxu0 0.0
    %110 = vmatpush1.msra.mxu0 0.0
    %111 = vmatprep.subr.mxu0 0.0
    %112 = vmatpush1.msra.mxu0 0.0
    %113 = vmatprep.subr.mxu0 0.0
    %114 = vmatpush1.msra.mxu0 0.0
    %115 = vmatprep.subr.mxu0 0.0
    %116 = vmatpush1.msra.mxu0 0.0
    %117 = vmatprep.subr.mxu0 0.0
    %118 = vmatpush1.msra.mxu0 0.0
    %119 = vmatprep.subr.mxu0 0.0
    %120 = vmatpush1.msra.mxu0 0.0
    %121 = vmatprep.subr.mxu0 0.0
    %122 = vmatpush1.msra.mxu0 0.0
    %123 = vmatprep.subr.mxu0 0.0
    %124 = vmatpush1.msra.mxu0 0.0
    %125 = vmatprep.subr.mxu0 0.0
    %126 = vmatpush1.msra.mxu0 0.0
    %127 = vmatprep.subr.mxu0 0.0
    %128 = vmatpush1.msra.mxu0 0.0
    %129 = vmatprep.subr.mxu0 0.0
    %130 = vmatpush1.msra.mxu0 0.0
    %131 = vmatprep.subr.mxu0 %v54
    %132 = vmatpush1.msra.mxu0 %v53
    %133 = vmatprep.subr.mxu0 %v46
    %134 = vmatpush1.msra.mxu0 %v45
    %135 = vmatprep.subr.mxu0 %v38
    %136 = vmatpush1.msra.mxu0 %v37
    %137 = vmatprep.subr.mxu0 %v30
    %138 = vmatpush1.msra.mxu0 %v29
    %139 = vmatprep.subr.mxu0 0.0
    %140 = vmatpush2.msra.mxu0 0.0
    %141 = vmatprep.subr.mxu0 0.0
    %142 = vmatpush2.msra.mxu0 0.0
    %143 = vmatprep.subr.mxu0 0.0
    %144 = vmatpush2.msra.mxu0 0.0
    %145 = vmatprep.subr.mxu0 0.0
    %146 = vmatpush2.msra.mxu0 0.0
    %147 = vmatprep.subr.mxu0 0.0
    %148 = vmatpush2.msra.mxu0 0.0
    %149 = vmatprep.subr.mxu0 0.0
    %150 = vmatpush2.msra.mxu0 0.0
    %151 = vmatprep.subr.mxu0 0.0
    %152 = vmatpush2.msra.mxu0 0.0
    %153 = vmatprep.subr.mxu0 0.0
    %154 = vmatpush2.msra.mxu0 0.0
    %155 = vmatprep.subr.mxu0 0.0
    %156 = vmatpush2.msra.mxu0 0.0
    %157 = vmatprep.subr.mxu0 0.0
    %158 = vmatpush2.msra.mxu0 0.0
    %159 = vmatprep.subr.mxu0 0.0
    %160 = vmatpush2.msra.mxu0 0.0
    %161 = vmatprep.subr.mxu0 0.0
    %162 = vmatpush2.msra.mxu0 0.0
    %163 = vmatprep.subr.mxu0 0.0
    %164 = vmatpush2.msra.mxu0 0.0
    %165 = vmatprep.subr.mxu0 0.0
    %166 = vmatpush2.msra.mxu0 0.0
    %167 = vmatprep.subr.mxu0 0.0
    %168 = vmatpush2.msra.mxu0 0.0
    %169 = vmatprep.subr.mxu0 0.0
    %170 = vmatpush2.msra.mxu0 0.0
    %171 = vmatprep.mubr.f32.mxu0 0.0
    %172 = vmatmul.mubr.f32.gmra.mxu0 %v105
    %v173 = vpop.f32.mrf.mxu0
    %v174 = vadd.f32 %v66, %v173
    %v175 = vpop.f32.mrf.mxu0
    %v176 = vadd.f32 %v70, %v175
    %177 = vdwg.mxu0
    %178 = vmatprep.subr.mxu0 0.0
    %179 = vmatpush1.msra.mxu0 0.0
    %180 = vmatprep.subr.mxu0 0.0
    %181 = vmatpush1.msra.mxu0 0.0
    %182 = vmatprep.subr.mxu0 0.0
    %183 = vmatpush1.msra.mxu0 0.0
    %184 = vmatprep.subr.mxu0 0.0
    %185 = vmatpush1.msra.mxu0 0.0
    %186 = vmatprep.subr.mxu0 0.0
    %187 = vmatpush1.msra.mxu0 0.0
    %188 = vmatprep.subr.mxu0 0.0
    %189 = vmatpush1.msra.mxu0 0.0
    %190 = vmatprep.subr.mxu0 0.0
    %191 = vmatpush1.msra.mxu0 0.0
    %192 = vmatprep.subr.mxu0 0.0
    %193 = vmatpush1.msra.mxu0 0.0
    %194 = vmatprep.subr.mxu0 0.0
    %195 = vmatpush1.msra.mxu0 0.0
    %196 = vmatprep.subr.mxu0 0.0
    %197 = vmatpush1.msra.mxu0 0.0
    %198 = vmatprep.subr.mxu0 0.0
    %199 = vmatpush1.msra.mxu0 0.0
    %200 = vmatprep.subr.mxu0 0.0
    %201 = vmatpush1.msra.mxu0 0.0
    %202 = vmatprep.subr.mxu0 %v56
    %203 = vmatpush1.msra.mxu0 %v55
    %204 = vmatprep.subr.mxu0 %v48
    %205 = vmatpush1.msra.mxu0 %v47
    %206 = vmatprep.subr.mxu0 %v40
    %207 = vmatpush1.msra.mxu0 %v39
    %208 = vmatprep.subr.mxu0 %v32
    %209 = vmatpush1.msra.mxu0 %v31
    %210 = vmatprep.subr.mxu0 0.0
    %211 = vmatpush2.msra.mxu0 0.0
    %212 = vmatprep.subr.mxu0 0.0
    %213 = vmatpush2.msra.mxu0 0.0
    %214 = vmatprep.subr.mxu0 0.0
    %215 = vmatpush2.msra.mxu0 0.0
    %216 = vmatprep.subr.mxu0 0.0
    %217 = vmatpush2.msra.mxu0 0.0
    %218 = vmatprep.subr.mxu0 0.0
    %219 = vmatpush2.msra.mxu0 0.0
    %220 = vmatprep.subr.mxu0 0.0
    %221 = vmatpush2.msra.mxu0 0.0
    %222 = vmatprep.subr.mxu0 0.0
    %223 = vmatpush2.msra.mxu0 0.0
    %224 = vmatprep.subr.mxu0 0.0
    %225 = vmatpush2.msra.mxu0 0.0
    %226 = vmatprep.subr.mxu0 0.0
    %227 = vmatpush2.msra.mxu0 0.0
    %228 = vmatprep.subr.mxu0 0.0
    %229 = vmatpush2.msra.mxu0 0.0
    %230 = vmatprep.subr.mxu0 0.0
    %231 = vmatpush2.msra.mxu0 0.0
    %232 = vmatprep.subr.mxu0 0.0
    %233 = vmatpush2.msra.mxu0 0.0
    %234 = vmatprep.subr.mxu0 0.0
    %235 = vmatpush2.msra.mxu0 0.0
    %236 = vmatprep.subr.mxu0 0.0
    %237 = vmatpush2.msra.mxu0 0.0
    %238 = vmatprep.subr.mxu0 0.0
    %239 = vmatpush2.msra.mxu0 0.0
    %240 = vmatprep.subr.mxu0 0.0
    %241 = vmatpush2.msra.mxu0 0.0
    %242 = vmatprep.mubr.f32.mxu0 0.0
    %243 = vmatmul.mubr.f32.gmra.mxu0 %v105
    %v244 = vpop.f32.mrf.mxu0
    %v245 = vadd.f32 %v74, %v244
    %v246 = vpop.f32.mrf.mxu0
    %v247 = vadd.f32 %v78, %v246
    %248 = vdwg.mxu0
    %249 = vmatprep.subr.mxu0 0.0
    %250 = vmatpush1.msra.mxu0 0.0
    %251 = vmatprep.subr.mxu0 0.0
    %252 = vmatpush1.msra.mxu0 0.0
    %253 = vmatprep.subr.mxu0 0.0
    %254 = vmatpush1.msra.mxu0 0.0
    %255 = vmatprep.subr.mxu0 0.0
    %256 = vmatpush1.msra.mxu0 0.0
    %257 = vmatprep.subr.mxu0 0.0
    %258 = vmatpush1.msra.mxu0 0.0
    %259 = vmatprep.subr.mxu0 0.0
    %260 = vmatpush1.msra.mxu0 0.0
    %261 = vmatprep.subr.mxu0 0.0
    %262 = vmatpush1.msra.mxu0 0.0
    %263 = vmatprep.subr.mxu0 0.0
    %264 = vmatpush1.msra.mxu0 0.0
    %265 = vmatprep.subr.mxu0 0.0
    %266 = vmatpush1.msra.mxu0 0.0
    %267 = vmatprep.subr.mxu0 0.0
    %268 = vmatpush1.msra.mxu0 0.0
    %269 = vmatprep.subr.mxu0 0.0
    %270 = vmatpush1.msra.mxu0 0.0
    %271 = vmatprep.subr.mxu0 0.0
    %272 = vmatpush1.msra.mxu0 0.0
    %273 = vmatprep.subr.mxu0 %v58
    %274 = vmatpush1.msra.mxu0 %v57
    %275 = vmatprep.subr.mxu0 %v50
    %276 = vmatpush1.msra.mxu0 %v49
    %277 = vmatprep.subr.mxu0 %v42
    %278 = vmatpush1.msra.mxu0 %v41
    %279 = vmatprep.subr.mxu0 %v34
    %280 = vmatpush1.msra.mxu0 %v33
    %281 = vmatprep.subr.mxu0 0.0
    %282 = vmatpush2.msra.mxu0 0.0
    %283 = vmatprep.subr.mxu0 0.0
    %284 = vmatpush2.msra.mxu0 0.0
    %285 = vmatprep.subr.mxu0 0.0
    %286 = vmatpush2.msra.mxu0 0.0
    %287 = vmatprep.subr.mxu0 0.0
    %288 = vmatpush2.msra.mxu0 0.0
    %289 = vmatprep.subr.mxu0 0.0
    %290 = vmatpush2.msra.mxu0 0.0
    %291 = vmatprep.subr.mxu0 0.0
    %292 = vmatpush2.msra.mxu0 0.0
    %293 = vmatprep.subr.mxu0 0.0
    %294 = vmatpush2.msra.mxu0 0.0
    %295 = vmatprep.subr.mxu0 0.0
    %296 = vmatpush2.msra.mxu0 0.0
    %297 = vmatprep.subr.mxu0 0.0
    %298 = vmatpush2.msra.mxu0 0.0
    %299 = vmatprep.subr.mxu0 0.0
    %300 = vmatpush2.msra.mxu0 0.0
    %301 = vmatprep.subr.mxu0 0.0
    %302 = vmatpush2.msra.mxu0 0.0
    %303 = vmatprep.subr.mxu0 0.0
    %304 = vmatpush2.msra.mxu0 0.0
    %305 = vmatprep.subr.mxu0 0.0
    %306 = vmatpush2.msra.mxu0 0.0
    %307 = vmatprep.subr.mxu0 0.0
    %308 = vmatpush2.msra.mxu0 0.0
    %309 = vmatprep.subr.mxu0 0.0
    %310 = vmatpush2.msra.mxu0 0.0
    %311 = vmatprep.subr.mxu0 0.0
    %312 = vmatpush2.msra.mxu0 0.0
    %313 = vmatprep.mubr.f32.mxu0 0.0
    %314 = vmatmul.mubr.f32.gmra.mxu0 %v105
    %v315 = vpop.f32.mrf.mxu0
    %v316 = vadd.f32 %v82, %v315
    %v317 = vpop.f32.mrf.mxu0
    %v318 = vadd.f32 %v86, %v317
    %319 = vdwg.mxu0
    %320 = vmatprep.subr.mxu0 0.0
    %321 = vmatpush1.msra.mxu0 0.0
    %322 = vmatprep.subr.mxu0 0.0
    %323 = vmatpush1.msra.mxu0 0.0
    %324 = vmatprep.subr.mxu0 0.0
    %325 = vmatpush1.msra.mxu0 0.0
    %326 = vmatprep.subr.mxu0 0.0
    %327 = vmatpush1.msra.mxu0 0.0
    %328 = vmatprep.subr.mxu0 0.0
    %329 = vmatpush1.msra.mxu0 0.0
    %330 = vmatprep.subr.mxu0 0.0
    %331 = vmatpush1.msra.mxu0 0.0
    %332 = vmatprep.subr.mxu0 0.0
    %333 = vmatpush1.msra.mxu0 0.0
    %334 = vmatprep.subr.mxu0 0.0
    %335 = vmatpush1.msra.mxu0 0.0
    %336 = vmatprep.subr.mxu0 0.0
    %337 = vmatpush1.msra.mxu0 0.0
    %338 = vmatprep.subr.mxu0 0.0
    %339 = vmatpush1.msra.mxu0 0.0
    %340 = vmatprep.subr.mxu0 0.0
    %341 = vmatpush1.msra.mxu0 0.0
    %342 = vmatprep.subr.mxu0 0.0
    %343 = vmatpush1.msra.mxu0 0.0
    %344 = vmatprep.subr.mxu0 %v60
    %345 = vmatpush1.msra.mxu0 %v59
    %346 = vmatprep.subr.mxu0 %v52
    %347 = vmatpush1.msra.mxu0 %v51
    %348 = vmatprep.subr.mxu0 %v44
    %349 = vmatpush1.msra.mxu0 %v43
    %350 = vmatprep.subr.mxu0 %v36
    %351 = vmatpush1.msra.mxu0 %v35
    %352 = vmatprep.subr.mxu0 0.0
    %353 = vmatpush2.msra.mxu0 0.0
    %354 = vmatprep.subr.mxu0 0.0
    %355 = vmatpush2.msra.mxu0 0.0
    %356 = vmatprep.subr.mxu0 0.0
    %357 = vmatpush2.msra.mxu0 0.0
    %358 = vmatprep.subr.mxu0 0.0
    %359 = vmatpush2.msra.mxu0 0.0
    %360 = vmatprep.subr.mxu0 0.0
    %361 = vmatpush2.msra.mxu0 0.0
    %362 = vmatprep.subr.mxu0 0.0
    %363 = vmatpush2.msra.mxu0 0.0
    %364 = vmatprep.subr.mxu0 0.0
    %365 = vmatpush2.msra.mxu0 0.0
    %366 = vmatprep.subr.mxu0 0.0
    %367 = vmatpush2.msra.mxu0 0.0
    %368 = vmatprep.subr.mxu0 0.0
    %369 = vmatpush2.msra.mxu0 0.0
    %370 = vmatprep.subr.mxu0 0.0
    %371 = vmatpush2.msra.mxu0 0.0
    %372 = vmatprep.subr.mxu0 0.0
    %373 = vmatpush2.msra.mxu0 0.0
    %374 = vmatprep.subr.mxu0 0.0
    %375 = vmatpush2.msra.mxu0 0.0
    %376 = vmatprep.subr.mxu0 0.0
    %377 = vmatpush2.msra.mxu0 0.0
    %378 = vmatprep.subr.mxu0 0.0
    %379 = vmatpush2.msra.mxu0 0.0
    %380 = vmatprep.subr.mxu0 0.0
    %381 = vmatpush2.msra.mxu0 0.0
    %382 = vmatprep.subr.mxu0 0.0
    %383 = vmatpush2.msra.mxu0 0.0
    %384 = vmatprep.mubr.f32.mxu0 0.0
    %385 = vmatmul.mubr.f32.gmra.mxu0 %v105
    %v386 = vpop.f32.mrf.mxu0
    %v387 = vadd.f32 %v90, %v386
    %v388 = vpop.f32.mrf.mxu0
    %v389 = vadd.f32 %v94, %v388
    %390 = vdwg.mxu0
    %v391 = vxor.u32 %v316, 2147483648
    %v392 = vxor.u32 %v318, 2147483648
    %v393 = vxor.u32 %v387, 2147483648
    %v394 = vxor.u32 %v389, 2147483648
    %v395 = vmul.f32 %v391, 1.442695
    %v396 = vpow.pop %v395
    %v397 = vmul.f32 %v392, 1.442695
    %v398 = vpow.pop %v397
    %v399 = vmul.f32 %v393, 1.442695
    %v400 = vpow.pop %v399
    %v401 = vmul.f32 %v394, 1.442695
    %v402 = vpow.pop %v401
    %v403 = vadd.f32 %v396, 1.0
    %v404 = vadd.f32 %v398, 1.0
    %v405 = vadd.f32 %v400, 1.0
    %v406 = vadd.f32 %v402, 1.0
    %v407 = vrcp.pop %v403
    %v408 = vmul.f32 1.0, %v407
    %v409 = vrcp.pop %v404
    %v410 = vmul.f32 1.0, %v409
    %v411 = vrcp.pop %v405
    %v412 = vmul.f32 1.0, %v411
    %v413 = vrcp.pop %v406
    %v414 = vmul.f32 1.0, %v413
    %v415 = vmul.f32 %v174, %v408
    %v416 = vmul.f32 %v176, %v410
    %v417 = vmul.f32 %v245, %v412
    %v418 = vmul.f32 %v247, %v414
    %v423 = vcombine.low %v415, %v416
    %v424 = vcombine.low %v417, %v418
    %v426 = vunpack.c.l.s4 1983009808
    %v427 = vunpack.c.0.s8 %v426
    %v428 = vlaneseq
    %v429 = vshrl.u32 %v428, 7
    %v430 = vsub.s32 %v427, %v429
    %v431 = vrot.slane %v423, %v430
    %v433 = vunpack.c.l.s4 1983009808
    %v434 = vunpack.c.0.s8 %v433
    %v435 = vlaneseq
    %v436 = vshrl.u32 %v435, 7
    %v437 = vsub.s32 %v434, %v436
    %v438 = vrot.slane %v424, %v437
    %v439 = vcombine.low %v431, %v438
    %441 = vst [vmem:[%s3] sm:$0xff] %v439
    // Predicated region
    $region18: #{get_init_code_forward.4} parent=1 // pred_check
      _
    $region19: #{get_init_code_forward.4} parent=1 // pred_check_branch
      %443 = sbr.rel (0) target = $region21
    $region20: #{get_init_code_forward.4} parent=1 // pred_region
      _
    $region21: #{get_init_code_forward.4} parent=1 // pred_fallthru
      _
    // Predicated region
    $region22: #{get_init_code_forward.4} parent=1 // pred_check
      _
    $region23: #{get_init_code_forward.4} parent=1 // pred_check_branch
      %445 = sbr.rel (0) target = $region25
    $region24: #{get_init_code_forward.4} parent=1 // pred_region
      _
    $region25: #{get_init_code_forward.4} parent=1 // pred_fallthru
      _
    %446 = vsyncpa [#allocation3], 1

// kernel: get_init_code_forward.5
$region0: #{get_init_code_forward.5}
  #allocation0 [shape = 'u32[]', space=smem, size = 0x4, offset = 0x4, fixed_abs, tag = 'smem constant byte address 0x4 - core index']
  #allocation1 [shape = 'u32[144,128]{1,0:T(1,128)}', space=vmem, size = 0x12000, scoped, tag = 'internal scratch']
  %s0 = inlined_call_operand.vmem [shape: f32[2,32,16], index: 0, kind: input, shape index: {}]
  %s1 = inlined_call_operand.vmem [shape: f32[16,64], index: 1, kind: input, shape index: {}]
  %s2 = inlined_call_operand.vmem [shape: f32[9,32,32], index: 2, kind: input, shape index: {}]
  %s3 = inlined_call_operand.vmem [shape: f32[32,1], index: 3, kind: input, shape index: {}]
  %s4 = inlined_call_operand.vmem [shape: f32[2,16,64], index: 4, kind: output, shape index: {}]
  %s5 = sld [smem:[#allocation0]]
  $region49: #{get_init_code_forward.5} parent=0
    _
  %s7 = ssub.s32 1, %s5
  %s8 = scalar_select 0, %s7, %s5
  loop: start=0, step=1, limit=4
  $region2: #{get_init_code_forward.5} parent=0 // loop_pre_header
    _
  $region3: #{get_init_code_forward.5} parent=0 // loop_header
    %s10 = sphi 0, %s14
    %p11 = scmp.ge.s32.totalorder %s10, 4
    %s20 = sphi 0, %s22
    %s23 = sphi 0, %s20
    %s24 = sphi 0, %s23
    %s40 = sphi 0, %s24
    %s44 = sphi 0, %s44
    %s46 = sphi 0, %s44
    %s47 = sphi 0, %s46
    %s61 = sphi 0, %s47
    %s65 = sphi 0, %s65
    %s67 = sphi 0, %s65
    %s68 = sphi 0, %s67
    %s82 = sphi 0, %s68
    %s86 = sphi 0, %s86
    %s88 = sphi 0, %s86
    %s89 = sphi 0, %s88
    %s103 = sphi 0, %s89
    %s109 = sphi 0, %s111
    %s112 = sphi 0, %s109
    %s113 = sphi 0, %s112
    %s129 = sphi 0, %s113
  $region4: #{get_init_code_forward.5} parent=0 // loop_header_branch
    %13 = sbr.rel (%p11) target = $region8
  $region5: #{get_init_code_forward.5} parent=0 // loop_body
    %s15 = ssub.s32 %s10, 1
    %s16 = ssub.s32 %s10, 2
    %s17 = sadd.s32 %s10, 1
    %s18 = ssub.s32 %s10, %s17
    %p19 = scmp.eq.s32.totalorder %s18, 0
    %s21 = sadd.s32 %s20, 1
    %s22 = scalar_select %p19, %s20, %s21
    %p25 = pneg %p19
    %p26 = scmp.eq.s32.totalorder %s10, 1
    %p27 = por %p25, %p26
    %p28 = scmp.ne.s32.totalorder %s20, %s23
    %p29 = scmp.eq.s32.totalorder %s10, 0
    %p30 = por %p28, %p29
    %p31 = scmp.ne.s32.totalorder %s20, %s23
    %p32 = scmp.eq.s32.totalorder %s15, 1
    %p33 = por %p31, %p32
    %p34 = scmp.ne.s32.totalorder %s23, %s24
    %p35 = scmp.eq.s32.totalorder %s15, 0
    %p36 = por %p34, %p35
    %p37 = scmp.ne.s32.totalorder %s23, %s24
    %p38 = scmp.eq.s32.totalorder %s16, 1
    %p39 = por %p37, %p38
    %p41 = scmp.ne.s32.totalorder %s24, %s40
    %p42 = scmp.eq.s32.totalorder %s16, 0
    %p43 = por %p41, %p42
    %s45 = sadd.s32 %s44, 1
    %p48 = scmp.eq.s32.totalorder %s10, 1
    %p49 = scmp.ne.s32.totalorder %s44, %s46
    %p50 = scmp.eq.s32.totalorder %s10, 0
    %p51 = por %p49, %p50
    %p52 = scmp.ne.s32.totalorder %s44, %s46
    %p53 = scmp.eq.s32.totalorder %s15, 1
    %p54 = por %p52, %p53
    %p55 = scmp.ne.s32.totalorder %s46, %s47
    %p56 = scmp.eq.s32.totalorder %s15, 0
    %p57 = por %p55, %p56
    %p58 = scmp.ne.s32.totalorder %s46, %s47
    %p59 = scmp.eq.s32.totalorder %s16, 1
    %p60 = por %p58, %p59
    %p62 = scmp.ne.s32.totalorder %s47, %s61
    %p63 = scmp.eq.s32.totalorder %s16, 0
    %p64 = por %p62, %p63
    %s66 = sadd.s32 %s65, 1
    %p69 = scmp.eq.s32.totalorder %s10, 1
    %p70 = scmp.ne.s32.totalorder %s65, %s67
    %p71 = scmp.eq.s32.totalorder %s10, 0
    %p72 = por %p70, %p71
    %p73 = scmp.ne.s32.totalorder %s65, %s67
    %p74 = scmp.eq.s32.totalorder %s15, 1
    %p75 = por %p73, %p74
    %p76 = scmp.ne.s32.totalorder %s67, %s68
    %p77 = scmp.eq.s32.totalorder %s15, 0
    %p78 = por %p76, %p77
    %p79 = scmp.ne.s32.totalorder %s67, %s68
    %p80 = scmp.eq.s32.totalorder %s16, 1
    %p81 = por %p79, %p80
    %p83 = scmp.ne.s32.totalorder %s68, %s82
    %p84 = scmp.eq.s32.totalorder %s16, 0
    %p85 = por %p83, %p84
    %s87 = sadd.s32 %s86, 1
    %p90 = scmp.eq.s32.totalorder %s10, 1
    %p91 = scmp.ne.s32.totalorder %s86, %s88
    %p92 = scmp.eq.s32.totalorder %s10, 0
    %p93 = por %p91, %p92
    %p94 = scmp.ne.s32.totalorder %s86, %s88
    %p95 = scmp.eq.s32.totalorder %s15, 1
    %p96 = por %p94, %p95
    %p97 = scmp.ne.s32.totalorder %s88, %s89
    %p98 = scmp.eq.s32.totalorder %s15, 0
    %p99 = por %p97, %p98
    %p100 = scmp.ne.s32.totalorder %s88, %s89
    %p101 = scmp.eq.s32.totalorder %s16, 1
    %p102 = por %p100, %p101
    %p104 = scmp.ne.s32.totalorder %s89, %s103
    %p105 = scmp.eq.s32.totalorder %s16, 0
    %p106 = por %p104, %p105
    %s107 = ssub.s32 %s10, %s17
    %p108 = scmp.eq.s32.totalorder %s107, 0
    %s110 = sadd.s32 %s109, 1
    %s111 = scalar_select %p108, %s109, %s110
    %p114 = pneg %p108
    %p115 = scmp.eq.s32.totalorder %s10, 1
    %p116 = por %p114, %p115
    %p117 = scmp.ne.s32.totalorder %s109, %s112
    %p118 = scmp.eq.s32.totalorder %s10, 0
    %p119 = por %p117, %p118
    %p120 = scmp.ne.s32.totalorder %s109, %s112
    %p121 = scmp.eq.s32.totalorder %s15, 1
    %p122 = por %p120, %p121
    %p123 = scmp.ne.s32.totalorder %s112, %s113
    %p124 = scmp.eq.s32.totalorder %s15, 0
    %p125 = por %p123, %p124
    %p126 = scmp.ne.s32.totalorder %s112, %s113
    %p127 = scmp.eq.s32.totalorder %s16, 1
    %p128 = por %p126, %p127
    %p130 = scmp.ne.s32.totalorder %s113, %s129
    %p131 = scmp.eq.s32.totalorder %s16, 0
    %p132 = por %p130, %p131
    %p133 = scmp.le.s32.totalorder 1, %s10
    %p134 = scmp.lt.s32.totalorder %s10, 3
    %p135 = pnand %p133, %p134
    %p136 = pneg %p135
    // Predicated region
    $region9: #{get_init_code_forward.5} parent=5 // pred_check
      _
    $region10: #{get_init_code_forward.5} parent=5 // pred_check_branch
      %138 = sbr.rel (%p135) target = $region12
    $region11: #{get_init_code_forward.5} parent=5 // pred_region
      %s139 = ssub.s32 %s10, 1
      // Predicated region
      $region13: #{get_init_code_forward.5} parent=11 // pred_check
        %p140 = pneg %p57
      $region14: #{get_init_code_forward.5} parent=11 // pred_check_branch
        %142 = sbr.rel (%p140) target = $region16
      $region15: #{get_init_code_forward.5} parent=11 // pred_region
        _
      $region16: #{get_init_code_forward.5} parent=11 // pred_fallthru
        _
      // Predicated region
      $region17: #{get_init_code_forward.5} parent=11 // pred_check
        %p143 = pneg %p78
      $region18: #{get_init_code_forward.5} parent=11 // pred_check_branch
        %145 = sbr.rel (%p143) target = $region20
      $region19: #{get_init_code_forward.5} parent=11 // pred_region
        _
      $region20: #{get_init_code_forward.5} parent=11 // pred_fallthru
        _
      // Predicated region
      $region21: #{get_init_code_forward.5} parent=11 // pred_check
        %p146 = pneg %p99
      $region22: #{get_init_code_forward.5} parent=11 // pred_check_branch
        %148 = sbr.rel (%p146) target = $region24
      $region23: #{get_init_code_forward.5} parent=11 // pred_region
        _
      $region24: #{get_init_code_forward.5} parent=11 // pred_fallthru
        _
    $region12: #{get_init_code_forward.5} parent=5 // pred_fallthru
      _
    %p149 = scmp.lt.s32.totalorder %s10, 2
    // Predicated region
    $region25: #{get_init_code_forward.5} parent=5 // pred_check
      %p150 = pneg %p149
    $region26: #{get_init_code_forward.5} parent=5 // pred_check_branch
      %152 = sbr.rel (%p150) target = $region28
    $region27: #{get_init_code_forward.5} parent=5 // pred_region
      // Predicated region
      $region29: #{get_init_code_forward.5} parent=27 // pred_check
        %p153 = pneg %p30
      $region30: #{get_init_code_forward.5} parent=27 // pred_check_branch
        %155 = sbr.rel (%p153) target = $region32
      $region31: #{get_init_code_forward.5} parent=27 // pred_region
        %p156 = scmp.lt.s32.totalorder %s10, 1
        %s157 = scalar_select %p156, %s10, 1
        %s158 = smul.addr %s157, 4
        %s159 = smul.addr %s158, 8
        %s160 = scalar_lea.vmem %s0, %s159
      $region32: #{get_init_code_forward.5} parent=27 // pred_fallthru
        _
    $region28: #{get_init_code_forward.5} parent=5 // pred_fallthru
      _
    %p161 = scmp.le.s32.totalorder 1, %s10
    %p162 = scmp.lt.s32.totalorder %s10, 3
    %p163 = pnand %p161, %p162
    %p164 = pneg %p163
    // Predicated region
    $region33: #{get_init_code_forward.5} parent=5 // pred_check
      _
    $region34: #{get_init_code_forward.5} parent=5 // pred_check_branch
      %166 = sbr.rel (%p163) target = $region36
    $region35: #{get_init_code_forward.5} parent=5 // pred_region
      %s167 = ssub.s32 %s10, 1
      %p168 = scmp.lt.s32.totalorder %s15, 1
      %s169 = scalar_select %p168, %s15, 1
      %s170 = smul.addr %s169, 4
      %s171 = smul.addr %s170, 8
      %s172 = scalar_lea.vmem %s0, %s171
      %p173 = pneg %p36
      %p174 = pneg %p33
      %p175 = pneg %p57
      %p176 = pneg %p54
      %p177 = pneg %p78
      %p178 = pneg %p75
      %p179 = pneg %p99
      %p180 = pneg %p96
      %p181 = pneg %p125
      %p182 = pneg %p122
      %p183 = scmp.lt.s32.totalorder %s15, 1
      %s184 = scalar_select %p183, %s15, 1
      %s185 = smul.addr %s184, 2
      %s186 = smul.addr %s185, 8
      %s187 = scalar_lea.vmem %s4, %s186
      %p188 = scmp.lt.s32.totalorder %s15, 1
      %s189 = scalar_select %p188, %s15, 1
      %s190 = smul.addr %s189, 4
      %s191 = smul.addr %s190, 8
      %s192 = scalar_lea.vmem %s0, %s191
      %p193 = scmp.lt.s32.totalorder %s15, 1
      %s194 = scalar_select %p193, %s15, 1
      %s195 = smul.addr %s194, 2
      %s196 = smul.addr %s195, 8
      %s197 = scalar_lea.vmem %s4, %s196
      %v198 = vld [vmem:[%s192] sm:$0xff]
      %v199 = vld [vmem:[%s192 + $0x8] sm:$0xff]
      %v200 = vld [vmem:[%s192 + $0x10] sm:$0xff]
      %v201 = vld [vmem:[%s192 + $0x18] sm:$0xff]
      %v202 = vld [vmem:[%s1] sm:$0xff]
      %v203 = vld [vmem:[%s1 + $0x8] sm:$0xff]
      %vm204 = vcmask 130048
      %v206 = vsel %vm204, %v198, 0
      %v209 = vsel %vm204, %v199, 0
      %v212 = vsel %vm204, %v200, 0
      %v215 = vsel %vm204, %v201, 0
      %217 = vmatprep.subr.mxu0 0.0
      %218 = vmatpush1.msra.mxu0 0.0
      %219 = vmatprep.subr.mxu0 0.0
      %220 = vmatpush1.msra.mxu0 0.0
      %221 = vmatprep.subr.mxu0 0.0
      %222 = vmatpush1.msra.mxu0 0.0
      %223 = vmatprep.subr.mxu0 0.0
      %224 = vmatpush1.msra.mxu0 0.0
      %225 = vmatprep.subr.mxu0 0.0
      %226 = vmatpush1.msra.mxu0 0.0
      %227 = vmatprep.subr.mxu0 0.0
      %228 = vmatpush1.msra.mxu0 0.0
      %229 = vmatprep.subr.mxu0 0.0
      %230 = vmatpush1.msra.mxu0 0.0
      %231 = vmatprep.subr.mxu0 0.0
      %232 = vmatpush1.msra.mxu0 0.0
      %233 = vmatprep.subr.mxu0 0.0
      %234 = vmatpush1.msra.mxu0 0.0
      %235 = vmatprep.subr.mxu0 0.0
      %236 = vmatpush1.msra.mxu0 0.0
      %237 = vmatprep.subr.mxu0 0.0
      %238 = vmatpush1.msra.mxu0 0.0
      %239 = vmatprep.subr.mxu0 0.0
      %240 = vmatpush1.msra.mxu0 0.0
      %241 = vmatprep.subr.mxu0 0.0
      %242 = vmatpush1.msra.mxu0 0.0
      %243 = vmatprep.subr.mxu0 0.0
      %244 = vmatpush1.msra.mxu0 0.0
      %245 = vmatprep.subr.mxu0 0.0
      %246 = vmatpush1.msra.mxu0 %v203
      %247 = vmatprep.subr.mxu0 0.0
      %248 = vmatpush1.msra.mxu0 %v202
      %249 = vmatprep.subr.mxu0 0.0
      %250 = vmatpush2.msra.mxu0 0.0
      %251 = vmatprep.subr.mxu0 0.0
      %252 = vmatpush2.msra.mxu0 0.0
      %253 = vmatprep.subr.mxu0 0.0
      %254 = vmatpush2.msra.mxu0 0.0
      %255 = vmatprep.subr.mxu0 0.0
      %256 = vmatpush2.msra.mxu0 0.0
      %257 = vmatprep.subr.mxu0 0.0
      %258 = vmatpush2.msra.mxu0 0.0
      %259 = vmatprep.subr.mxu0 0.0
      %260 = vmatpush2.msra.mxu0 0.0
      %261 = vmatprep.subr.mxu0 0.0
      %262 = vmatpush2.msra.mxu0 0.0
      %263 = vmatprep.subr.mxu0 0.0
      %264 = vmatpush2.msra.mxu0 0.0
      %265 = vmatprep.subr.mxu0 0.0
      %266 = vmatpush2.msra.mxu0 0.0
      %267 = vmatprep.subr.mxu0 0.0
      %268 = vmatpush2.msra.mxu0 0.0
      %269 = vmatprep.subr.mxu0 0.0
      %270 = vmatpush2.msra.mxu0 0.0
      %271 = vmatprep.subr.mxu0 0.0
      %272 = vmatpush2.msra.mxu0 0.0
      %273 = vmatprep.subr.mxu0 0.0
      %274 = vmatpush2.msra.mxu0 0.0
      %275 = vmatprep.subr.mxu0 0.0
      %276 = vmatpush2.msra.mxu0 0.0
      %277 = vmatprep.subr.mxu0 0.0
      %278 = vmatpush2.msra.mxu0 0.0
      %279 = vmatprep.subr.mxu0 0.0
      %280 = vmatpush2.msra.mxu0 0.0
      %281 = vmatprep.mubr.f32.mxu0 0.0
      %282 = vmatmul.mubr.f32.gmra.mxu0 %v206
      %v283 = vpop.f32.mrf.mxu0
      %v284 = vadd.f32 0.0, %v283
      %v285 = vpop.f32.mrf.mxu0
      %286 = vmatprep.mubr.f32.mxu0 0.0
      %287 = vmatmul.mubr.f32.gmra.mxu0 %v209
      %v288 = vpop.f32.mrf.mxu0
      %v289 = vadd.f32 0.0, %v288
      %v290 = vpop.f32.mrf.mxu0
      %291 = vmatprep.mubr.f32.mxu0 0.0
      %292 = vmatmul.mubr.f32.gmra.mxu0 %v212
      %v293 = vpop.f32.mrf.mxu0
      %v294 = vadd.f32 0.0, %v293
      %v295 = vpop.f32.mrf.mxu0
      %296 = vmatprep.mubr.f32.mxu0 0.0
      %297 = vmatmul.mubr.f32.gmra.mxu0 %v215
      %v298 = vpop.f32.mrf.mxu0
      %v299 = vadd.f32 0.0, %v298
      %v300 = vpop.f32.mrf.mxu0
      %301 = vdwg.mxu0
      %v302 = vlaneseq
      %v303 = vand.u32 %v302, 127
      %v304 = vshra.s32 %v303, 3
      %v305 = vand.u32 %v303, 7
      %310 = vrot.lane.b32.xlu0 %v284, 9
      %v311 = vpop.permute.xlu0 %310
      %312 = vrot.lane.b32.xlu0 %v289, 9
      %v313 = vpop.permute.xlu0 %312
      %314 = vrot.lane.b32.xlu0 %v294, 9
      %v315 = vpop.permute.xlu0 %314
      %316 = vrot.lane.b32.xlu0 %v299, 9
      %v317 = vpop.permute.xlu0 %316
      %vm322 = vcmask 72704
      %v323 = vsel %vm322, 0.0, %v311
      %v324 = vsel %vm322, 0.0, %v313
      %v325 = vsel %vm322, 0.0, %v315
      %v326 = vsel %vm322, 0.0, %v317
      %v327 = vadd.s32 %v305, 4294967295
      %vm328 = vcmp.ge.s32.totalorder %v327, 0
      %vm329 = vcmp.lt.s32.totalorder %v327, 8
      %vm330 = vmand %vm328, %vm329
      %v331 = vadd.s32 %v304, 4294967295
      %vm332 = vcmp.ge.s32.totalorder %v331, 0
      %vm333 = vmand %vm330, %vm332
      %vm334 = vcmp.lt.s32.totalorder %v331, 8
      %vm335 = vmand %vm333, %vm334
      %v336 = vsel %vm335, 1, 0
      %vm337 = vcmp.eq.s32.totalorder %v336, 1
      %v338 = vsel %vm337, %v323, 0.0
      %v339 = vsel %vm337, %v324, 0.0
      %v340 = vsel %vm337, %v325, 0.0
      %v341 = vsel %vm337, %v326, 0.0
      %v342 = vld [vmem:[%s2] sm:$0xff]
      %v343 = vld [vmem:[%s2 + $0x8] sm:$0xff]
      %v344 = vld [vmem:[%s2 + $0x10] sm:$0xff]
      %v345 = vld [vmem:[%s2 + $0x18] sm:$0xff]
      %346 = vrot.lane.b32.xlu0 %v284, 8
      %v347 = vpop.permute.xlu0 %346
      %348 = vrot.lane.b32.xlu0 %v289, 8
      %v349 = vpop.permute.xlu0 %348
      %350 = vrot.lane.b32.xlu0 %v294, 8
      %v351 = vpop.permute.xlu0 %350
      %352 = vrot.lane.b32.xlu0 %v299, 8
      %v353 = vpop.permute.xlu0 %352
      %vm358 = vcmask 64512
      %v359 = vsel %vm358, 0.0, %v347
      %v360 = vsel %vm358, 0.0, %v349
      %v361 = vsel %vm358, 0.0, %v351
      %v362 = vsel %vm358, 0.0, %v353
      %vm363 = vcmp.ge.s32.totalorder %v305, 0
      %vm364 = vcmp.lt.s32.totalorder %v305, 8
      %vm365 = vmand %vm363, %vm364
      %vm366 = vmand %vm365, %vm332
      %vm367 = vmand %vm366, %vm334
      %v368 = vsel %vm367, 1, 0
      %vm369 = vcmp.eq.s32.totalorder %v368, 1
      %v370 = vsel %vm369, %v359, 0.0
      %v371 = vsel %vm369, %v360, 0.0
      %v372 = vsel %vm369, %v361, 0.0
      %v373 = vsel %vm369, %v362, 0.0
      %s374 = scalar_lea.vmem %s2, 32
      %v375 = vld [vmem:[%s374] sm:$0xff]
      %v376 = vld [vmem:[%s374 + $0x8] sm:$0xff]
      %v377 = vld [vmem:[%s374 + $0x10] sm:$0xff]
      %v378 = vld [vmem:[%s374 + $0x18] sm:$0xff]
      %vm379 = vcmask 261120
      %v381 = vsel %vm379, %v375, 0
      %v384 = vsel %vm379, %v376, 0
      %v387 = vsel %vm379, %v377, 0
      %v390 = vsel %vm379, %v378, 0
      %392 = vmatprep.subr.mxu0 0.0
      %393 = vmatpush1.msra.mxu0 0.0
      %394 = vmatprep.subr.mxu0 0.0
      %395 = vmatpush1.msra.mxu0 0.0
      %396 = vmatprep.subr.mxu0 0.0
      %397 = vmatpush1.msra.mxu0 0.0
      %398 = vmatprep.subr.mxu0 0.0
      %399 = vmatpush1.msra.mxu0 0.0
      %400 = vmatprep.subr.mxu0 0.0
      %401 = vmatpush1.msra.mxu0 0.0
      %402 = vmatprep.subr.mxu0 0.0
      %403 = vmatpush1.msra.mxu0 0.0
      %404 = vmatprep.subr.mxu0 0.0
      %405 = vmatpush1.msra.mxu0 0.0
      %406 = vmatprep.subr.mxu0 0.0
      %407 = vmatpush1.msra.mxu0 0.0
      %408 = vmatprep.subr.mxu0 0.0
      %409 = vmatpush1.msra.mxu0 0.0
      %410 = vmatprep.subr.mxu0 0.0
      %411 = vmatpush1.msra.mxu0 0.0
      %412 = vmatprep.subr.mxu0 0.0
      %413 = vmatpush1.msra.mxu0 0.0
      %414 = vmatprep.subr.mxu0 0.0
      %415 = vmatpush1.msra.mxu0 0.0
      %416 = vmatprep.subr.mxu0 0.0
      %417 = vmatpush1.msra.mxu0 %v373
      %418 = vmatprep.subr.mxu0 0.0
      %419 = vmatpush1.msra.mxu0 %v372
      %420 = vmatprep.subr.mxu0 0.0
      %421 = vmatpush1.msra.mxu0 %v371
      %422 = vmatprep.subr.mxu0 0.0
      %423 = vmatpush1.msra.mxu0 %v370
      %424 = vmatprep.subr.mxu0 0.0
      %425 = vmatpush2.msra.mxu0 0.0
      %426 = vmatprep.subr.mxu0 0.0
      %427 = vmatpush2.msra.mxu0 0.0
      %428 = vmatprep.subr.mxu0 0.0
      %429 = vmatpush2.msra.mxu0 0.0
      %430 = vmatprep.subr.mxu0 0.0
      %431 = vmatpush2.msra.mxu0 0.0
      %432 = vmatprep.subr.mxu0 0.0
      %433 = vmatpush2.msra.mxu0 0.0
      %434 = vmatprep.subr.mxu0 0.0
      %435 = vmatpush2.msra.mxu0 0.0
      %436 = vmatprep.subr.mxu0 0.0
      %437 = vmatpush2.msra.mxu0 0.0
      %438 = vmatprep.subr.mxu0 0.0
      %439 = vmatpush2.msra.mxu0 0.0
      %440 = vmatprep.subr.mxu0 0.0
      %441 = vmatpush2.msra.mxu0 0.0
      %442 = vmatprep.subr.mxu0 0.0
      %443 = vmatpush2.msra.mxu0 0.0
      %444 = vmatprep.subr.mxu0 0.0
      %445 = vmatpush2.msra.mxu0 0.0
      %446 = vmatprep.subr.mxu0 0.0
      %447 = vmatpush2.msra.mxu0 0.0
      %448 = vmatprep.subr.mxu0 0.0
      %449 = vmatpush2.msra.mxu0 0.0
      %450 = vmatprep.subr.mxu0 0.0
      %451 = vmatpush2.msra.mxu0 0.0
      %452 = vmatprep.subr.mxu0 0.0
      %453 = vmatpush2.msra.mxu0 0.0
      %454 = vmatprep.subr.mxu0 0.0
      %455 = vmatpush2.msra.mxu0 0.0
      %456 = vmatprep.mubr.f32.mxu0 0.0
      %457 = vmatmul.mubr.f32.gmra.mxu0 %v381
      %v458 = vpop.f32.mrf.mxu0
      %v459 = vadd.f32 0.0, %v458
      %v460 = vpop.f32.mrf.mxu0
      %461 = vmatprep.mubr.f32.mxu0 0.0
      %462 = vmatmul.mubr.f32.gmra.mxu0 %v384
      %v463 = vpop.f32.mrf.mxu0
      %v464 = vadd.f32 0.0, %v463
      %v465 = vpop.f32.mrf.mxu0
      %466 = vmatprep.mubr.f32.mxu0 0.0
      %467 = vmatmul.mubr.f32.gmra.mxu0 %v387
      %v468 = vpop.f32.mrf.mxu0
      %v469 = vadd.f32 0.0, %v468
      %v470 = vpop.f32.mrf.mxu0
      %471 = vmatprep.mubr.f32.mxu0 0.0
      %472 = vmatmul.mubr.f32.gmra.mxu0 %v390
      %v473 = vpop.f32.mrf.mxu0
      %v474 = vadd.f32 0.0, %v473
      %v475 = vpop.f32.mrf.mxu0
      %476 = vdwg.mxu0
      %v478 = vsel %vm379, %v342, 0
      %v481 = vsel %vm379, %v343, 0
      %v484 = vsel %vm379, %v344, 0
      %v487 = vsel %vm379, %v345, 0
      %489 = vmatprep.subr.mxu0 0.0
      %490 = vmatpush1.msra.mxu0 0.0
      %491 = vmatprep.subr.mxu0 0.0
      %492 = vmatpush1.msra.mxu0 0.0
      %493 = vmatprep.subr.mxu0 0.0
      %494 = vmatpush1.msra.mxu0 0.0
      %495 = vmatprep.subr.mxu0 0.0
      %496 = vmatpush1.msra.mxu0 0.0
      %497 = vmatprep.subr.mxu0 0.0
      %498 = vmatpush1.msra.mxu0 0.0
      %499 = vmatprep.subr.mxu0 0.0
      %500 = vmatpush1.msra.mxu0 0.0
      %501 = vmatprep.subr.mxu0 0.0
      %502 = vmatpush1.msra.mxu0 0.0
      %503 = vmatprep.subr.mxu0 0.0
      %504 = vmatpush1.msra.mxu0 0.0
      %505 = vmatprep.subr.mxu0 0.0
      %506 = vmatpush1.msra.mxu0 0.0
      %507 = vmatprep.subr.mxu0 0.0
      %508 = vmatpush1.msra.mxu0 0.0
      %509 = vmatprep.subr.mxu0 0.0
      %510 = vmatpush1.msra.mxu0 0.0
      %511 = vmatprep.subr.mxu0 0.0
      %512 = vmatpush1.msra.mxu0 0.0
      %513 = vmatprep.subr.mxu0 0.0
      %514 = vmatpush1.msra.mxu0 %v341
      %515 = vmatprep.subr.mxu0 0.0
      %516 = vmatpush1.msra.mxu0 %v340
      %517 = vmatprep.subr.mxu0 0.0
      %518 = vmatpush1.msra.mxu0 %v339
      %519 = vmatprep.subr.mxu0 0.0
      %520 = vmatpush1.msra.mxu0 %v338
      %521 = vmatprep.subr.mxu0 0.0
      %522 = vmatpush2.msra.mxu0 0.0
      %523 = vmatprep.subr.mxu0 0.0
      %524 = vmatpush2.msra.mxu0 0.0
      %525 = vmatprep.subr.mxu0 0.0
      %526 = vmatpush2.msra.mxu0 0.0
      %527 = vmatprep.subr.mxu0 0.0
      %528 = vmatpush2.msra.mxu0 0.0
      %529 = vmatprep.subr.mxu0 0.0
      %530 = vmatpush2.msra.mxu0 0.0
      %531 = vmatprep.subr.mxu0 0.0
      %532 = vmatpush2.msra.mxu0 0.0
      %533 = vmatprep.subr.mxu0 0.0
      %534 = vmatpush2.msra.mxu0 0.0
      %535 = vmatprep.subr.mxu0 0.0
      %536 = vmatpush2.msra.mxu0 0.0
      %537 = vmatprep.subr.mxu0 0.0
      %538 = vmatpush2.msra.mxu0 0.0
      %539 = vmatprep.subr.mxu0 0.0
      %540 = vmatpush2.msra.mxu0 0.0
      %541 = vmatprep.subr.mxu0 0.0
      %542 = vmatpush2.msra.mxu0 0.0
      %543 = vmatprep.subr.mxu0 0.0
      %544 = vmatpush2.msra.mxu0 0.0
      %545 = vmatprep.subr.mxu0 0.0
      %546 = vmatpush2.msra.mxu0 0.0
      %547 = vmatprep.subr.mxu0 0.0
      %548 = vmatpush2.msra.mxu0 0.0
      %549 = vmatprep.subr.mxu0 0.0
      %550 = vmatpush2.msra.mxu0 0.0
      %551 = vmatprep.subr.mxu0 0.0
      %552 = vmatpush2.msra.mxu0 0.0
      %553 = vmatprep.mubr.f32.mxu0 0.0
      %554 = vmatmul.mubr.f32.gmra.mxu0 %v478
      %v555 = vpop.f32.mrf.mxu0
      %v556 = vadd.f32 %v459, %v555
      %v557 = vpop.f32.mrf.mxu0
      %558 = vmatprep.mubr.f32.mxu0 0.0
      %559 = vmatmul.mubr.f32.gmra.mxu0 %v481
      %v560 = vpop.f32.mrf.mxu0
      %v561 = vadd.f32 %v464, %v560
      %v562 = vpop.f32.mrf.mxu0
      %563 = vmatprep.mubr.f32.mxu0 0.0
      %564 = vmatmul.mubr.f32.gmra.mxu0 %v484
      %v565 = vpop.f32.mrf.mxu0
      %v566 = vadd.f32 %v469, %v565
      %v567 = vpop.f32.mrf.mxu0
      %568 = vmatprep.mubr.f32.mxu0 0.0
      %569 = vmatmul.mubr.f32.gmra.mxu0 %v487
      %v570 = vpop.f32.mrf.mxu0
      %v571 = vadd.f32 %v474, %v570
      %v572 = vpop.f32.mrf.mxu0
      %573 = vdwg.mxu0
      %574 = vrot.lane.b32.xlu0 %v284, 7
      %v575 = vpop.permute.xlu0 %574
      %576 = vrot.lane.b32.xlu0 %v289, 7
      %v577 = vpop.permute.xlu0 %576
      %578 = vrot.lane.b32.xlu0 %v294, 7
      %v579 = vpop.permute.xlu0 %578
      %580 = vrot.lane.b32.xlu0 %v299, 7
      %v581 = vpop.permute.xlu0 %580
      %vm586 = vcmask 56320
      %v587 = vsel %vm586, 0.0, %v575
      %v588 = vsel %vm586, 0.0, %v577
      %v589 = vsel %vm586, 0.0, %v579
      %v590 = vsel %vm586, 0.0, %v581
      %v591 = vadd.s32 %v305, 1
      %vm592 = vcmp.ge.s32.totalorder %v591, 0
      %vm593 = vcmp.lt.s32.totalorder %v591, 8
      %vm594 = vmand %vm592, %vm593
      %vm595 = vmand %vm594, %vm332
      %vm596 = vmand %vm595, %vm334
      %v597 = vsel %vm596, 1, 0
      %vm598 = vcmp.eq.s32.totalorder %v597, 1
      %v599 = vsel %vm598, %v587, 0.0
      %v600 = vsel %vm598, %v588, 0.0
      %v601 = vsel %vm598, %v589, 0.0
      %v602 = vsel %vm598, %v590, 0.0
      %s603 = scalar_lea.vmem %s2, 64
      %v604 = vld [vmem:[%s603] sm:$0xff]
      %v605 = vld [vmem:[%s603 + $0x8] sm:$0xff]
      %v606 = vld [vmem:[%s603 + $0x10] sm:$0xff]
      %v607 = vld [vmem:[%s603 + $0x18] sm:$0xff]
      %v609 = vsel %vm379, %v604, 0
      %v612 = vsel %vm379, %v605, 0
      %v615 = vsel %vm379, %v606, 0
      %v618 = vsel %vm379, %v607, 0
      %620 = vmatprep.subr.mxu0 0.0
      %621 = vmatpush1.msra.mxu0 0.0
      %622 = vmatprep.subr.mxu0 0.0
      %623 = vmatpush1.msra.mxu0 0.0
      %624 = vmatprep.subr.mxu0 0.0
      %625 = vmatpush1.msra.mxu0 0.0
      %626 = vmatprep.subr.mxu0 0.0
      %627 = vmatpush1.msra.mxu0 0.0
      %628 = vmatprep.subr.mxu0 0.0
      %629 = vmatpush1.msra.mxu0 0.0
      %630 = vmatprep.subr.mxu0 0.0
      %631 = vmatpush1.msra.mxu0 0.0
      %632 = vmatprep.subr.mxu0 0.0
      %633 = vmatpush1.msra.mxu0 0.0
      %634 = vmatprep.subr.mxu0 0.0
      %635 = vmatpush1.msra.mxu0 0.0
      %636 = vmatprep.subr.mxu0 0.0
      %637 = vmatpush1.msra.mxu0 0.0
      %638 = vmatprep.subr.mxu0 0.0
      %639 = vmatpush1.msra.mxu0 0.0
      %640 = vmatprep.subr.mxu0 0.0
      %641 = vmatpush1.msra.mxu0 0.0
      %642 = vmatprep.subr.mxu0 0.0
      %643 = vmatpush1.msra.mxu0 0.0
      %644 = vmatprep.subr.mxu0 0.0
      %645 = vmatpush1.msra.mxu0 %v602
      %646 = vmatprep.subr.mxu0 0.0
      %647 = vmatpush1.msra.mxu0 %v601
      %648 = vmatprep.subr.mxu0 0.0
      %649 = vmatpush1.msra.mxu0 %v600
      %650 = vmatprep.subr.mxu0 0.0
      %651 = vmatpush1.msra.mxu0 %v599
      %652 = vmatprep.subr.mxu0 0.0
      %653 = vmatpush2.msra.mxu0 0.0
      %654 = vmatprep.subr.mxu0 0.0
      %655 = vmatpush2.msra.mxu0 0.0
      %656 = vmatprep.subr.mxu0 0.0
      %657 = vmatpush2.msra.mxu0 0.0
      %658 = vmatprep.subr.mxu0 0.0
      %659 = vmatpush2.msra.mxu0 0.0
      %660 = vmatprep.subr.mxu0 0.0
      %661 = vmatpush2.msra.mxu0 0.0
      %662 = vmatprep.subr.mxu0 0.0
      %663 = vmatpush2.msra.mxu0 0.0
      %664 = vmatprep.subr.mxu0 0.0
      %665 = vmatpush2.msra.mxu0 0.0
      %666 = vmatprep.subr.mxu0 0.0
      %667 = vmatpush2.msra.mxu0 0.0
      %668 = vmatprep.subr.mxu0 0.0
      %669 = vmatpush2.msra.mxu0 0.0
      %670 = vmatprep.subr.mxu0 0.0
      %671 = vmatpush2.msra.mxu0 0.0
      %672 = vmatprep.subr.mxu0 0.0
      %673 = vmatpush2.msra.mxu0 0.0
      %674 = vmatprep.subr.mxu0 0.0
      %675 = vmatpush2.msra.mxu0 0.0
      %676 = vmatprep.subr.mxu0 0.0
      %677 = vmatpush2.msra.mxu0 0.0
      %678 = vmatprep.subr.mxu0 0.0
      %679 = vmatpush2.msra.mxu0 0.0
      %680 = vmatprep.subr.mxu0 0.0
      %681 = vmatpush2.msra.mxu0 0.0
      %682 = vmatprep.subr.mxu0 0.0
      %683 = vmatpush2.msra.mxu0 0.0
      %684 = vmatprep.mubr.f32.mxu0 0.0
      %685 = vmatmul.mubr.f32.gmra.mxu0 %v609
      %v686 = vpop.f32.mrf.mxu0
      %v687 = vadd.f32 0.0, %v686
      %v688 = vpop.f32.mrf.mxu0
      %689 = vmatprep.mubr.f32.mxu0 0.0
      %690 = vmatmul.mubr.f32.gmra.mxu0 %v612
      %v691 = vpop.f32.mrf.mxu0
      %v692 = vadd.f32 0.0, %v691
      %v693 = vpop.f32.mrf.mxu0
      %694 = vmatprep.mubr.f32.mxu0 0.0
      %695 = vmatmul.mubr.f32.gmra.mxu0 %v615
      %v696 = vpop.f32.mrf.mxu0
      %v697 = vadd.f32 0.0, %v696
      %v698 = vpop.f32.mrf.mxu0
      %699 = vmatprep.mubr.f32.mxu0 0.0
      %700 = vmatmul.mubr.f32.gmra.mxu0 %v618
      %v701 = vpop.f32.mrf.mxu0
      %v702 = vadd.f32 0.0, %v701
      %v703 = vpop.f32.mrf.mxu0
      %704 = vdwg.mxu0
      %v705 = vadd.f32 %v556, %v687
      %v706 = vadd.f32 %v561, %v692
      %v707 = vadd.f32 %v566, %v697
      %v708 = vadd.f32 %v571, %v702
      %709 = vrot.lane.b32.xlu0 %v284, 1
      %v710 = vpop.permute.xlu0 %709
      %711 = vrot.lane.b32.xlu0 %v289, 1
      %v712 = vpop.permute.xlu0 %711
      %713 = vrot.lane.b32.xlu0 %v294, 1
      %v714 = vpop.permute.xlu0 %713
      %715 = vrot.lane.b32.xlu0 %v299, 1
      %v716 = vpop.permute.xlu0 %715
      %vm721 = vcmask 7168
      %v722 = vsel %vm721, 0.0, %v710
      %v723 = vsel %vm721, 0.0, %v712
      %v724 = vsel %vm721, 0.0, %v714
      %v725 = vsel %vm721, 0.0, %v716
      %vm726 = vcmp.ge.s32.totalorder %v304, 0
      %vm727 = vmand %vm330, %vm726
      %vm728 = vcmp.lt.s32.totalorder %v304, 8
      %vm729 = vmand %vm727, %vm728
      %v730 = vsel %vm729, 1, 0
      %vm731 = vcmp.eq.s32.totalorder %v730, 1
      %v732 = vsel %vm731, %v722, 0.0
      %v733 = vsel %vm731, %v723, 0.0
      %v734 = vsel %vm731, %v724, 0.0
      %v735 = vsel %vm731, %v725, 0.0
      %s736 = scalar_lea.vmem %s2, 96
      %v737 = vld [vmem:[%s736] sm:$0xff]
      %v738 = vld [vmem:[%s736 + $0x8] sm:$0xff]
      %v739 = vld [vmem:[%s736 + $0x10] sm:$0xff]
      %v740 = vld [vmem:[%s736 + $0x18] sm:$0xff]
      %v742 = vsel %vm379, %v737, 0
      %v745 = vsel %vm379, %v738, 0
      %v748 = vsel %vm379, %v739, 0
      %v751 = vsel %vm379, %v740, 0
      %753 = vmatprep.subr.mxu0 0.0
      %754 = vmatpush1.msra.mxu0 0.0
      %755 = vmatprep.subr.mxu0 0.0
      %756 = vmatpush1.msra.mxu0 0.0
      %757 = vmatprep.subr.mxu0 0.0
      %758 = vmatpush1.msra.mxu0 0.0
      %759 = vmatprep.subr.mxu0 0.0
      %760 = vmatpush1.msra.mxu0 0.0
      %761 = vmatprep.subr.mxu0 0.0
      %762 = vmatpush1.msra.mxu0 0.0
      %763 = vmatprep.subr.mxu0 0.0
      %764 = vmatpush1.msra.mxu0 0.0
      %765 = vmatprep.subr.mxu0 0.0
      %766 = vmatpush1.msra.mxu0 0.0
      %767 = vmatprep.subr.mxu0 0.0
      %768 = vmatpush1.msra.mxu0 0.0
      %769 = vmatprep.subr.mxu0 0.0
      %770 = vmatpush1.msra.mxu0 0.0
      %771 = vmatprep.subr.mxu0 0.0
      %772 = vmatpush1.msra.mxu0 0.0
      %773 = vmatprep.subr.mxu0 0.0
      %774 = vmatpush1.msra.mxu0 0.0
      %775 = vmatprep.subr.mxu0 0.0
      %776 = vmatpush1.msra.mxu0 0.0
      %777 = vmatprep.subr.mxu0 0.0
      %778 = vmatpush1.msra.mxu0 %v735
      %779 = vmatprep.subr.mxu0 0.0
      %780 = vmatpush1.msra.mxu0 %v734
      %781 = vmatprep.subr.mxu0 0.0
      %782 = vmatpush1.msra.mxu0 %v733
      %783 = vmatprep.subr.mxu0 0.0
      %784 = vmatpush1.msra.mxu0 %v732
      %785 = vmatprep.subr.mxu0 0.0
      %786 = vmatpush2.msra.mxu0 0.0
      %787 = vmatprep.subr.mxu0 0.0
      %788 = vmatpush2.msra.mxu0 0.0
      %789 = vmatprep.subr.mxu0 0.0
      %790 = vmatpush2.msra.mxu0 0.0
      %791 = vmatprep.subr.mxu0 0.0
      %792 = vmatpush2.msra.mxu0 0.0
      %793 = vmatprep.subr.mxu0 0.0
      %794 = vmatpush2.msra.mxu0 0.0
      %795 = vmatprep.subr.mxu0 0.0
      %796 = vmatpush2.msra.mxu0 0.0
      %797 = vmatprep.subr.mxu0 0.0
      %798 = vmatpush2.msra.mxu0 0.0
      %799 = vmatprep.subr.mxu0 0.0
      %800 = vmatpush2.msra.mxu0 0.0
      %801 = vmatprep.subr.mxu0 0.0
      %802 = vmatpush2.msra.mxu0 0.0
      %803 = vmatprep.subr.mxu0 0.0
      %804 = vmatpush2.msra.mxu0 0.0
      %805 = vmatprep.subr.mxu0 0.0
      %806 = vmatpush2.msra.mxu0 0.0
      %807 = vmatprep.subr.mxu0 0.0
      %808 = vmatpush2.msra.mxu0 0.0
      %809 = vmatprep.subr.mxu0 0.0
      %810 = vmatpush2.msra.mxu0 0.0
      %811 = vmatprep.subr.mxu0 0.0
      %812 = vmatpush2.msra.mxu0 0.0
      %813 = vmatprep.subr.mxu0 0.0
      %814 = vmatpush2.msra.mxu0 0.0
      %815 = vmatprep.subr.mxu0 0.0
      %816 = vmatpush2.msra.mxu0 0.0
      %817 = vmatprep.mubr.f32.mxu0 0.0
      %818 = vmatmul.mubr.f32.gmra.mxu0 %v742
      %v819 = vpop.f32.mrf.mxu0
      %v820 = vadd.f32 0.0, %v819
      %v821 = vpop.f32.mrf.mxu0
      %822 = vmatprep.mubr.f32.mxu0 0.0
      %823 = vmatmul.mubr.f32.gmra.mxu0 %v745
      %v824 = vpop.f32.mrf.mxu0
      %v825 = vadd.f32 0.0, %v824
      %v826 = vpop.f32.mrf.mxu0
      %827 = vmatprep.mubr.f32.mxu0 0.0
      %828 = vmatmul.mubr.f32.gmra.mxu0 %v748
      %v829 = vpop.f32.mrf.mxu0
      %v830 = vadd.f32 0.0, %v829
      %v831 = vpop.f32.mrf.mxu0
      %832 = vmatprep.mubr.f32.mxu0 0.0
      %833 = vmatmul.mubr.f32.gmra.mxu0 %v751
      %v834 = vpop.f32.mrf.mxu0
      %v835 = vadd.f32 0.0, %v834
      %v836 = vpop.f32.mrf.mxu0
      %837 = vdwg.mxu0
      %v838 = vadd.f32 %v705, %v820
      %v839 = vadd.f32 %v706, %v825
      %v840 = vadd.f32 %v707, %v830
      %v841 = vadd.f32 %v708, %v835
      %s842 = scalar_lea.vmem %s2, 128
      %v843 = vld [vmem:[%s842] sm:$0xff]
      %v844 = vld [vmem:[%s842 + $0x8] sm:$0xff]
      %v845 = vld [vmem:[%s842 + $0x10] sm:$0xff]
      %v846 = vld [vmem:[%s842 + $0x18] sm:$0xff]
      %v848 = vsel %vm379, %v843, 0
      %v851 = vsel %vm379, %v844, 0
      %v854 = vsel %vm379, %v845, 0
      %v857 = vsel %vm379, %v846, 0
      %859 = vmatprep.subr.mxu0 0.0
      %860 = vmatpush1.msra.mxu0 0.0
      %861 = vmatprep.subr.mxu0 0.0
      %862 = vmatpush1.msra.mxu0 0.0
      %863 = vmatprep.subr.mxu0 0.0
      %864 = vmatpush1.msra.mxu0 0.0
      %865 = vmatprep.subr.mxu0 0.0
      %866 = vmatpush1.msra.mxu0 0.0
      %867 = vmatprep.subr.mxu0 0.0
      %868 = vmatpush1.msra.mxu0 0.0
      %869 = vmatprep.subr.mxu0 0.0
      %870 = vmatpush1.msra.mxu0 0.0
      %871 = vmatprep.subr.mxu0 0.0
      %872 = vmatpush1.msra.mxu0 0.0
      %873 = vmatprep.subr.mxu0 0.0
      %874 = vmatpush1.msra.mxu0 0.0
      %875 = vmatprep.subr.mxu0 0.0
      %876 = vmatpush1.msra.mxu0 0.0
      %877 = vmatprep.subr.mxu0 0.0
      %878 = vmatpush1.msra.mxu0 0.0
      %879 = vmatprep.subr.mxu0 0.0
      %880 = vmatpush1.msra.mxu0 0.0
      %881 = vmatprep.subr.mxu0 0.0
      %882 = vmatpush1.msra.mxu0 0.0
      %883 = vmatprep.subr.mxu0 0.0
      %884 = vmatpush1.msra.mxu0 %v299
      %885 = vmatprep.subr.mxu0 0.0
      %886 = vmatpush1.msra.mxu0 %v294
      %887 = vmatprep.subr.mxu0 0.0
      %888 = vmatpush1.msra.mxu0 %v289
      %889 = vmatprep.subr.mxu0 0.0
      %890 = vmatpush1.msra.mxu0 %v284
      %891 = vmatprep.subr.mxu0 0.0
      %892 = vmatpush2.msra.mxu0 0.0
      %893 = vmatprep.subr.mxu0 0.0
      %894 = vmatpush2.msra.mxu0 0.0
      %895 = vmatprep.subr.mxu0 0.0
      %896 = vmatpush2.msra.mxu0 0.0
      %897 = vmatprep.subr.mxu0 0.0
      %898 = vmatpush2.msra.mxu0 0.0
      %899 = vmatprep.subr.mxu0 0.0
      %900 = vmatpush2.msra.mxu0 0.0
      %901 = vmatprep.subr.mxu0 0.0
      %902 = vmatpush2.msra.mxu0 0.0
      %903 = vmatprep.subr.mxu0 0.0
      %904 = vmatpush2.msra.mxu0 0.0
      %905 = vmatprep.subr.mxu0 0.0
      %906 = vmatpush2.msra.mxu0 0.0
      %907 = vmatprep.subr.mxu0 0.0
      %908 = vmatpush2.msra.mxu0 0.0
      %909 = vmatprep.subr.mxu0 0.0
      %910 = vmatpush2.msra.mxu0 0.0
      %911 = vmatprep.subr.mxu0 0.0
      %912 = vmatpush2.msra.mxu0 0.0
      %913 = vmatprep.subr.mxu0 0.0
      %914 = vmatpush2.msra.mxu0 0.0
      %915 = vmatprep.subr.mxu0 0.0
      %916 = vmatpush2.msra.mxu0 0.0
      %917 = vmatprep.subr.mxu0 0.0
      %918 = vmatpush2.msra.mxu0 0.0
      %919 = vmatprep.subr.mxu0 0.0
      %920 = vmatpush2.msra.mxu0 0.0
      %921 = vmatprep.subr.mxu0 0.0
      %922 = vmatpush2.msra.mxu0 0.0
      %923 = vmatprep.mubr.f32.mxu0 0.0
      %924 = vmatmul.mubr.f32.gmra.mxu0 %v848
      %v925 = vpop.f32.mrf.mxu0
      %v926 = vadd.f32 0.0, %v925
      %v927 = vpop.f32.mrf.mxu0
      %928 = vmatprep.mubr.f32.mxu0 0.0
      %929 = vmatmul.mubr.f32.gmra.mxu0 %v851
      %v930 = vpop.f32.mrf.mxu0
      %v931 = vadd.f32 0.0, %v930
      %v932 = vpop.f32.mrf.mxu0
      %933 = vmatprep.mubr.f32.mxu0 0.0
      %934 = vmatmul.mubr.f32.gmra.mxu0 %v854
      %v935 = vpop.f32.mrf.mxu0
      %v936 = vadd.f32 0.0, %v935
      %v937 = vpop.f32.mrf.mxu0
      %938 = vmatprep.mubr.f32.mxu0 0.0
      %939 = vmatmul.mubr.f32.gmra.mxu0 %v857
      %v940 = vpop.f32.mrf.mxu0
      %v941 = vadd.f32 0.0, %v940
      %v942 = vpop.f32.mrf.mxu0
      %943 = vdwg.mxu0
      %v944 = vadd.f32 %v838, %v926
      %v945 = vadd.f32 %v839, %v931
      %v946 = vadd.f32 %v840, %v936
      %v947 = vadd.f32 %v841, %v941
      %948 = vrot.lane.b32.xlu0 %v284, 127
      %v949 = vpop.permute.xlu0 %948
      %950 = vrot.lane.b32.xlu0 %v289, 127
      %v951 = vpop.permute.xlu0 %950
      %952 = vrot.lane.b32.xlu0 %v294, 127
      %v953 = vpop.permute.xlu0 %952
      %954 = vrot.lane.b32.xlu0 %v299, 127
      %v955 = vpop.permute.xlu0 %954
      %vm960 = vcmask 515072
      %v961 = vsel %vm960, %v949, 0.0
      %v962 = vsel %vm960, %v951, 0.0
      %v963 = vsel %vm960, %v953, 0.0
      %v964 = vsel %vm960, %v955, 0.0
      %vm965 = vmand %vm594, %vm726
      %vm966 = vmand %vm965, %vm728
      %v967 = vsel %vm966, 1, 0
      %vm968 = vcmp.eq.s32.totalorder %v967, 1
      %v969 = vsel %vm968, %v961, 0.0
      %v970 = vsel %vm968, %v962, 0.0
      %v971 = vsel %vm968, %v963, 0.0
      %v972 = vsel %vm968, %v964, 0.0
      %s973 = scalar_lea.vmem %s2, 160
      %v974 = vld [vmem:[%s973] sm:$0xff]
      %v975 = vld [vmem:[%s973 + $0x8] sm:$0xff]
      %v976 = vld [vmem:[%s973 + $0x10] sm:$0xff]
      %v977 = vld [vmem:[%s973 + $0x18] sm:$0xff]
      %v979 = vsel %vm379, %v974, 0
      %v982 = vsel %vm379, %v975, 0
      %v985 = vsel %vm379, %v976, 0
      %v988 = vsel %vm379, %v977, 0
      %990 = vmatprep.subr.mxu0 0.0
      %991 = vmatpush1.msra.mxu0 0.0
      %992 = vmatprep.subr.mxu0 0.0
      %993 = vmatpush1.msra.mxu0 0.0
      %994 = vmatprep.subr.mxu0 0.0
      %995 = vmatpush1.msra.mxu0 0.0
      %996 = vmatprep.subr.mxu0 0.0
      %997 = vmatpush1.msra.mxu0 0.0
      %998 = vmatprep.subr.mxu0 0.0
      %999 = vmatpush1.msra.mxu0 0.0
      %1000 = vmatprep.subr.mxu0 0.0
      %1001 = vmatpush1.msra.mxu0 0.0
      %1002 = vmatprep.subr.mxu0 0.0
      %1003 = vmatpush1.msra.mxu0 0.0
      %1004 = vmatprep.subr.mxu0 0.0
      %1005 = vmatpush1.msra.mxu0 0.0
      %1006 = vmatprep.subr.mxu0 0.0
      %1007 = vmatpush1.msra.mxu0 0.0
      %1008 = vmatprep.subr.mxu0 0.0
      %1009 = vmatpush1.msra.mxu0 0.0
      %1010 = vmatprep.subr.mxu0 0.0
      %1011 = vmatpush1.msra.mxu0 0.0
      %1012 = vmatprep.subr.mxu0 0.0
      %1013 = vmatpush1.msra.mxu0 0.0
      %1014 = vmatprep.subr.mxu0 0.0
      %1015 = vmatpush1.msra.mxu0 %v972
      %1016 = vmatprep.subr.mxu0 0.0
      %1017 = vmatpush1.msra.mxu0 %v971
      %1018 = vmatprep.subr.mxu0 0.0
      %1019 = vmatpush1.msra.mxu0 %v970
      %1020 = vmatprep.subr.mxu0 0.0
      %1021 = vmatpush1.msra.mxu0 %v969
      %1022 = vmatprep.subr.mxu0 0.0
      %1023 = vmatpush2.msra.mxu0 0.0
      %1024 = vmatprep.subr.mxu0 0.0
      %1025 = vmatpush2.msra.mxu0 0.0
      %1026 = vmatprep.subr.mxu0 0.0
      %1027 = vmatpush2.msra.mxu0 0.0
      %1028 = vmatprep.subr.mxu0 0.0
      %1029 = vmatpush2.msra.mxu0 0.0
      %1030 = vmatprep.subr.mxu0 0.0
      %1031 = vmatpush2.msra.mxu0 0.0
      %1032 = vmatprep.subr.mxu0 0.0
      %1033 = vmatpush2.msra.mxu0 0.0
      %1034 = vmatprep.subr.mxu0 0.0
      %1035 = vmatpush2.msra.mxu0 0.0
      %1036 = vmatprep.subr.mxu0 0.0
      %1037 = vmatpush2.msra.mxu0 0.0
      %1038 = vmatprep.subr.mxu0 0.0
      %1039 = vmatpush2.msra.mxu0 0.0
      %1040 = vmatprep.subr.mxu0 0.0
      %1041 = vmatpush2.msra.mxu0 0.0
      %1042 = vmatprep.subr.mxu0 0.0
      %1043 = vmatpush2.msra.mxu0 0.0
      %1044 = vmatprep.subr.mxu0 0.0
      %1045 = vmatpush2.msra.mxu0 0.0
      %1046 = vmatprep.subr.mxu0 0.0
      %1047 = vmatpush2.msra.mxu0 0.0
      %1048 = vmatprep.subr.mxu0 0.0
      %1049 = vmatpush2.msra.mxu0 0.0
      %1050 = vmatprep.subr.mxu0 0.0
      %1051 = vmatpush2.msra.mxu0 0.0
      %1052 = vmatprep.subr.mxu0 0.0
      %1053 = vmatpush2.msra.mxu0 0.0
      %1054 = vmatprep.mubr.f32.mxu0 0.0
      %1055 = vmatmul.mubr.f32.gmra.mxu0 %v979
      %v1056 = vpop.f32.mrf.mxu0
      %v1057 = vadd.f32 0.0, %v1056
      %v1058 = vpop.f32.mrf.mxu0
      %1059 = vmatprep.mubr.f32.mxu0 0.0
      %1060 = vmatmul.mubr.f32.gmra.mxu0 %v982
      %v1061 = vpop.f32.mrf.mxu0
      %v1062 = vadd.f32 0.0, %v1061
      %v1063 = vpop.f32.mrf.mxu0
      %1064 = vmatprep.mubr.f32.mxu0 0.0
      %1065 = vmatmul.mubr.f32.gmra.mxu0 %v985
      %v1066 = vpop.f32.mrf.mxu0
      %v1067 = vadd.f32 0.0, %v1066
      %v1068 = vpop.f32.mrf.mxu0
      %1069 = vmatprep.mubr.f32.mxu0 0.0
      %1070 = vmatmul.mubr.f32.gmra.mxu0 %v988
      %v1071 = vpop.f32.mrf.mxu0
      %v1072 = vadd.f32 0.0, %v1071
      %v1073 = vpop.f32.mrf.mxu0
      %1074 = vdwg.mxu0
      %v1075 = vadd.f32 %v944, %v1057
      %v1076 = vadd.f32 %v945, %v1062
      %v1077 = vadd.f32 %v946, %v1067
      %v1078 = vadd.f32 %v947, %v1072
      %1079 = vrot.lane.b32.xlu0 %v284, 121
      %v1080 = vpop.permute.xlu0 %1079
      %1081 = vrot.lane.b32.xlu0 %v289, 121
      %v1082 = vpop.permute.xlu0 %1081
      %1083 = vrot.lane.b32.xlu0 %v294, 121
      %v1084 = vpop.permute.xlu0 %1083
      %1085 = vrot.lane.b32.xlu0 %v299, 121
      %v1086 = vpop.permute.xlu0 %1085
      %vm1091 = vcmask 465920
      %v1092 = vsel %vm1091, %v1080, 0.0
      %v1093 = vsel %vm1091, %v1082, 0.0
      %v1094 = vsel %vm1091, %v1084, 0.0
      %v1095 = vsel %vm1091, %v1086, 0.0
      %v1096 = vadd.s32 %v304, 1
      %vm1097 = vcmp.ge.s32.totalorder %v1096, 0
      %vm1098 = vmand %vm330, %vm1097
      %vm1099 = vcmp.lt.s32.totalorder %v1096, 8
      %vm1100 = vmand %vm1098, %vm1099
      %v1101 = vsel %vm1100, 1, 0
      %vm1102 = vcmp.eq.s32.totalorder %v1101, 1
      %v1103 = vsel %vm1102, %v1092, 0.0
      %v1104 = vsel %vm1102, %v1093, 0.0
      %v1105 = vsel %vm1102, %v1094, 0.0
      %v1106 = vsel %vm1102, %v1095, 0.0
      %s1107 = scalar_lea.vmem %s2, 192
      %v1108 = vld [vmem:[%s1107] sm:$0xff]
      %v1109 = vld [vmem:[%s1107 + $0x8] sm:$0xff]
      %v1110 = vld [vmem:[%s1107 + $0x10] sm:$0xff]
      %v1111 = vld [vmem:[%s1107 + $0x18] sm:$0xff]
      %v1113 = vsel %vm379, %v1108, 0
      %v1116 = vsel %vm379, %v1109, 0
      %v1119 = vsel %vm379, %v1110, 0
      %v1122 = vsel %vm379, %v1111, 0
      %1124 = vmatprep.subr.mxu0 0.0
      %1125 = vmatpush1.msra.mxu0 0.0
      %1126 = vmatprep.subr.mxu0 0.0
      %1127 = vmatpush1.msra.mxu0 0.0
      %1128 = vmatprep.subr.mxu0 0.0
      %1129 = vmatpush1.msra.mxu0 0.0
      %1130 = vmatprep.subr.mxu0 0.0
      %1131 = vmatpush1.msra.mxu0 0.0
      %1132 = vmatprep.subr.mxu0 0.0
      %1133 = vmatpush1.msra.mxu0 0.0
      %1134 = vmatprep.subr.mxu0 0.0
      %1135 = vmatpush1.msra.mxu0 0.0
      %1136 = vmatprep.subr.mxu0 0.0
      %1137 = vmatpush1.msra.mxu0 0.0
      %1138 = vmatprep.subr.mxu0 0.0
      %1139 = vmatpush1.msra.mxu0 0.0
      %1140 = vmatprep.subr.mxu0 0.0
      %1141 = vmatpush1.msra.mxu0 0.0
      %1142 = vmatprep.subr.mxu0 0.0
      %1143 = vmatpush1.msra.mxu0 0.0
      %1144 = vmatprep.subr.mxu0 0.0
      %1145 = vmatpush1.msra.mxu0 0.0
      %1146 = vmatprep.subr.mxu0 0.0
      %1147 = vmatpush1.msra.mxu0 0.0
      %1148 = vmatprep.subr.mxu0 0.0
      %1149 = vmatpush1.msra.mxu0 %v1106
      %1150 = vmatprep.subr.mxu0 0.0
      %1151 = vmatpush1.msra.mxu0 %v1105
      %1152 = vmatprep.subr.mxu0 0.0
      %1153 = vmatpush1.msra.mxu0 %v1104
      %1154 = vmatprep.subr.mxu0 0.0
      %1155 = vmatpush1.msra.mxu0 %v1103
      %1156 = vmatprep.subr.mxu0 0.0
      %1157 = vmatpush2.msra.mxu0 0.0
      %1158 = vmatprep.subr.mxu0 0.0
      %1159 = vmatpush2.msra.mxu0 0.0
      %1160 = vmatprep.subr.mxu0 0.0
      %1161 = vmatpush2.msra.mxu0 0.0
      %1162 = vmatprep.subr.mxu0 0.0
      %1163 = vmatpush2.msra.mxu0 0.0
      %1164 = vmatprep.subr.mxu0 0.0
      %1165 = vmatpush2.msra.mxu0 0.0
      %1166 = vmatprep.subr.mxu0 0.0
      %1167 = vmatpush2.msra.mxu0 0.0
      %1168 = vmatprep.subr.mxu0 0.0
      %1169 = vmatpush2.msra.mxu0 0.0
      %1170 = vmatprep.subr.mxu0 0.0
      %1171 = vmatpush2.msra.mxu0 0.0
      %1172 = vmatprep.subr.mxu0 0.0
      %1173 = vmatpush2.msra.mxu0 0.0
      %1174 = vmatprep.subr.mxu0 0.0
      %1175 = vmatpush2.msra.mxu0 0.0
      %1176 = vmatprep.subr.mxu0 0.0
      %1177 = vmatpush2.msra.mxu0 0.0
      %1178 = vmatprep.subr.mxu0 0.0
      %1179 = vmatpush2.msra.mxu0 0.0
      %1180 = vmatprep.subr.mxu0 0.0
      %1181 = vmatpush2.msra.mxu0 0.0
      %1182 = vmatprep.subr.mxu0 0.0
      %1183 = vmatpush2.msra.mxu0 0.0
      %1184 = vmatprep.subr.mxu0 0.0
      %1185 = vmatpush2.msra.mxu0 0.0
      %1186 = vmatprep.subr.mxu0 0.0
      %1187 = vmatpush2.msra.mxu0 0.0
      %1188 = vmatprep.mubr.f32.mxu0 0.0
      %1189 = vmatmul.mubr.f32.gmra.mxu0 %v1113
      %v1190 = vpop.f32.mrf.mxu0
      %v1191 = vadd.f32 0.0, %v1190
      %v1192 = vpop.f32.mrf.mxu0
      %1193 = vmatprep.mubr.f32.mxu0 0.0
      %1194 = vmatmul.mubr.f32.gmra.mxu0 %v1116
      %v1195 = vpop.f32.mrf.mxu0
      %v1196 = vadd.f32 0.0, %v1195
      %v1197 = vpop.f32.mrf.mxu0
      %1198 = vmatprep.mubr.f32.mxu0 0.0
      %1199 = vmatmul.mubr.f32.gmra.mxu0 %v1119
      %v1200 = vpop.f32.mrf.mxu0
      %v1201 = vadd.f32 0.0, %v1200
      %v1202 = vpop.f32.mrf.mxu0
      %1203 = vmatprep.mubr.f32.mxu0 0.0
      %1204 = vmatmul.mubr.f32.gmra.mxu0 %v1122
      %v1205 = vpop.f32.mrf.mxu0
      %v1206 = vadd.f32 0.0, %v1205
      %v1207 = vpop.f32.mrf.mxu0
      %1208 = vdwg.mxu0
      %v1209 = vadd.f32 %v1075, %v1191
      %v1210 = vadd.f32 %v1076, %v1196
      %v1211 = vadd.f32 %v1077, %v1201
      %v1212 = vadd.f32 %v1078, %v1206
      %1213 = vrot.lane.b32.xlu0 %v284, 120
      %v1214 = vpop.permute.xlu0 %1213
      %1215 = vrot.lane.b32.xlu0 %v289, 120
      %v1216 = vpop.permute.xlu0 %1215
      %1217 = vrot.lane.b32.xlu0 %v294, 120
      %v1218 = vpop.permute.xlu0 %1217
      %1219 = vrot.lane.b32.xlu0 %v299, 120
      %v1220 = vpop.permute.xlu0 %1219
      %vm1225 = vcmask 457728
      %v1226 = vsel %vm1225, %v1214, 0.0
      %v1227 = vsel %vm1225, %v1216, 0.0
      %v1228 = vsel %vm1225, %v1218, 0.0
      %v1229 = vsel %vm1225, %v1220, 0.0
      %vm1230 = vmand %vm365, %vm1097
      %vm1231 = vmand %vm1230, %vm1099
      %v1232 = vsel %vm1231, 1, 0
      %vm1233 = vcmp.eq.s32.totalorder %v1232, 1
      %v1234 = vsel %vm1233, %v1226, 0.0
      %v1235 = vsel %vm1233, %v1227, 0.0
      %v1236 = vsel %vm1233, %v1228, 0.0
      %v1237 = vsel %vm1233, %v1229, 0.0
      %s1238 = scalar_lea.vmem %s2, 224
      %v1239 = vld [vmem:[%s1238] sm:$0xff]
      %v1240 = vld [vmem:[%s1238 + $0x8] sm:$0xff]
      %v1241 = vld [vmem:[%s1238 + $0x10] sm:$0xff]
      %v1242 = vld [vmem:[%s1238 + $0x18] sm:$0xff]
      %v1244 = vsel %vm379, %v1239, 0
      %v1247 = vsel %vm379, %v1240, 0
      %v1250 = vsel %vm379, %v1241, 0
      %v1253 = vsel %vm379, %v1242, 0
      %1255 = vmatprep.subr.mxu0 0.0
      %1256 = vmatpush1.msra.mxu0 0.0
      %1257 = vmatprep.subr.mxu0 0.0
      %1258 = vmatpush1.msra.mxu0 0.0
      %1259 = vmatprep.subr.mxu0 0.0
      %1260 = vmatpush1.msra.mxu0 0.0
      %1261 = vmatprep.subr.mxu0 0.0
      %1262 = vmatpush1.msra.mxu0 0.0
      %1263 = vmatprep.subr.mxu0 0.0
      %1264 = vmatpush1.msra.mxu0 0.0
      %1265 = vmatprep.subr.mxu0 0.0
      %1266 = vmatpush1.msra.mxu0 0.0
      %1267 = vmatprep.subr.mxu0 0.0
      %1268 = vmatpush1.msra.mxu0 0.0
      %1269 = vmatprep.subr.mxu0 0.0
      %1270 = vmatpush1.msra.mxu0 0.0
      %1271 = vmatprep.subr.mxu0 0.0
      %1272 = vmatpush1.msra.mxu0 0.0
      %1273 = vmatprep.subr.mxu0 0.0
      %1274 = vmatpush1.msra.mxu0 0.0
      %1275 = vmatprep.subr.mxu0 0.0
      %1276 = vmatpush1.msra.mxu0 0.0
      %1277 = vmatprep.subr.mxu0 0.0
      %1278 = vmatpush1.msra.mxu0 0.0
      %1279 = vmatprep.subr.mxu0 0.0
      %1280 = vmatpush1.msra.mxu0 %v1237
      %1281 = vmatprep.subr.mxu0 0.0
      %1282 = vmatpush1.msra.mxu0 %v1236
      %1283 = vmatprep.subr.mxu0 0.0
      %1284 = vmatpush1.msra.mxu0 %v1235
      %1285 = vmatprep.subr.mxu0 0.0
      %1286 = vmatpush1.msra.mxu0 %v1234
      %1287 = vmatprep.subr.mxu0 0.0
      %1288 = vmatpush2.msra.mxu0 0.0
      %1289 = vmatprep.subr.mxu0 0.0
      %1290 = vmatpush2.msra.mxu0 0.0
      %1291 = vmatprep.subr.mxu0 0.0
      %1292 = vmatpush2.msra.mxu0 0.0
      %1293 = vmatprep.subr.mxu0 0.0
      %1294 = vmatpush2.msra.mxu0 0.0
      %1295 = vmatprep.subr.mxu0 0.0
      %1296 = vmatpush2.msra.mxu0 0.0
      %1297 = vmatprep.subr.mxu0 0.0
      %1298 = vmatpush2.msra.mxu0 0.0
      %1299 = vmatprep.subr.mxu0 0.0
      %1300 = vmatpush2.msra.mxu0 0.0
      %1301 = vmatprep.subr.mxu0 0.0
      %1302 = vmatpush2.msra.mxu0 0.0
      %1303 = vmatprep.subr.mxu0 0.0
      %1304 = vmatpush2.msra.mxu0 0.0
      %1305 = vmatprep.subr.mxu0 0.0
      %1306 = vmatpush2.msra.mxu0 0.0
      %1307 = vmatprep.subr.mxu0 0.0
      %1308 = vmatpush2.msra.mxu0 0.0
      %1309 = vmatprep.subr.mxu0 0.0
      %1310 = vmatpush2.msra.mxu0 0.0
      %1311 = vmatprep.subr.mxu0 0.0
      %1312 = vmatpush2.msra.mxu0 0.0
      %1313 = vmatprep.subr.mxu0 0.0
      %1314 = vmatpush2.msra.mxu0 0.0
      %1315 = vmatprep.subr.mxu0 0.0
      %1316 = vmatpush2.msra.mxu0 0.0
      %1317 = vmatprep.subr.mxu0 0.0
      %1318 = vmatpush2.msra.mxu0 0.0
      %1319 = vmatprep.mubr.f32.mxu0 0.0
      %1320 = vmatmul.mubr.f32.gmra.mxu0 %v1244
      %v1321 = vpop.f32.mrf.mxu0
      %v1322 = vadd.f32 0.0, %v1321
      %v1323 = vpop.f32.mrf.mxu0
      %1324 = vmatprep.mubr.f32.mxu0 0.0
      %1325 = vmatmul.mubr.f32.gmra.mxu0 %v1247
      %v1326 = vpop.f32.mrf.mxu0
      %v1327 = vadd.f32 0.0, %v1326
      %v1328 = vpop.f32.mrf.mxu0
      %1329 = vmatprep.mubr.f32.mxu0 0.0
      %1330 = vmatmul.mubr.f32.gmra.mxu0 %v1250
      %v1331 = vpop.f32.mrf.mxu0
      %v1332 = vadd.f32 0.0, %v1331
      %v1333 = vpop.f32.mrf.mxu0
      %1334 = vmatprep.mubr.f32.mxu0 0.0
      %1335 = vmatmul.mubr.f32.gmra.mxu0 %v1253
      %v1336 = vpop.f32.mrf.mxu0
      %v1337 = vadd.f32 0.0, %v1336
      %v1338 = vpop.f32.mrf.mxu0
      %1339 = vdwg.mxu0
      %v1340 = vadd.f32 %v1209, %v1322
      %v1341 = vadd.f32 %v1210, %v1327
      %v1342 = vadd.f32 %v1211, %v1332
      %v1343 = vadd.f32 %v1212, %v1337
      %1344 = vrot.lane.b32.xlu0 %v284, 119
      %v1345 = vpop.permute.xlu0 %1344
      %1346 = vrot.lane.b32.xlu0 %v289, 119
      %v1347 = vpop.permute.xlu0 %1346
      %1348 = vrot.lane.b32.xlu0 %v294, 119
      %v1349 = vpop.permute.xlu0 %1348
      %1350 = vrot.lane.b32.xlu0 %v299, 119
      %v1351 = vpop.permute.xlu0 %1350
      %vm1356 = vcmask 449536
      %v1357 = vsel %vm1356, %v1345, 0.0
      %v1358 = vsel %vm1356, %v1347, 0.0
      %v1359 = vsel %vm1356, %v1349, 0.0
      %v1360 = vsel %vm1356, %v1351, 0.0
      %vm1361 = vmand %vm594, %vm1097
      %vm1362 = vmand %vm1361, %vm1099
      %v1363 = vsel %vm1362, 1, 0
      %vm1364 = vcmp.eq.s32.totalorder %v1363, 1
      %v1365 = vsel %vm1364, %v1357, 0.0
      %v1366 = vsel %vm1364, %v1358, 0.0
      %v1367 = vsel %vm1364, %v1359, 0.0
      %v1368 = vsel %vm1364, %v1360, 0.0
      %s1369 = scalar_lea.vmem %s2, 256
      %v1370 = vld [vmem:[%s1369] sm:$0xff]
      %v1371 = vld [vmem:[%s1369 + $0x8] sm:$0xff]
      %v1372 = vld [vmem:[%s1369 + $0x10] sm:$0xff]
      %v1373 = vld [vmem:[%s1369 + $0x18] sm:$0xff]
      %v1375 = vsel %vm379, %v1370, 0
      %v1378 = vsel %vm379, %v1371, 0
      %v1381 = vsel %vm379, %v1372, 0
      %v1384 = vsel %vm379, %v1373, 0
      %1386 = vmatprep.subr.mxu0 0.0
      %1387 = vmatpush1.msra.mxu0 0.0
      %1388 = vmatprep.subr.mxu0 0.0
      %1389 = vmatpush1.msra.mxu0 0.0
      %1390 = vmatprep.subr.mxu0 0.0
      %1391 = vmatpush1.msra.mxu0 0.0
      %1392 = vmatprep.subr.mxu0 0.0
      %1393 = vmatpush1.msra.mxu0 0.0
      %1394 = vmatprep.subr.mxu0 0.0
      %1395 = vmatpush1.msra.mxu0 0.0
      %1396 = vmatprep.subr.mxu0 0.0
      %1397 = vmatpush1.msra.mxu0 0.0
      %1398 = vmatprep.subr.mxu0 0.0
      %1399 = vmatpush1.msra.mxu0 0.0
      %1400 = vmatprep.subr.mxu0 0.0
      %1401 = vmatpush1.msra.mxu0 0.0
      %1402 = vmatprep.subr.mxu0 0.0
      %1403 = vmatpush1.msra.mxu0 0.0
      %1404 = vmatprep.subr.mxu0 0.0
      %1405 = vmatpush1.msra.mxu0 0.0
      %1406 = vmatprep.subr.mxu0 0.0
      %1407 = vmatpush1.msra.mxu0 0.0
      %1408 = vmatprep.subr.mxu0 0.0
      %1409 = vmatpush1.msra.mxu0 0.0
      %1410 = vmatprep.subr.mxu0 0.0
      %1411 = vmatpush1.msra.mxu0 %v1368
      %1412 = vmatprep.subr.mxu0 0.0
      %1413 = vmatpush1.msra.mxu0 %v1367
      %1414 = vmatprep.subr.mxu0 0.0
      %1415 = vmatpush1.msra.mxu0 %v1366
      %1416 = vmatprep.subr.mxu0 0.0
      %1417 = vmatpush1.msra.mxu0 %v1365
      %1418 = vmatprep.subr.mxu0 0.0
      %1419 = vmatpush2.msra.mxu0 0.0
      %1420 = vmatprep.subr.mxu0 0.0
      %1421 = vmatpush2.msra.mxu0 0.0
      %1422 = vmatprep.subr.mxu0 0.0
      %1423 = vmatpush2.msra.mxu0 0.0
      %1424 = vmatprep.subr.mxu0 0.0
      %1425 = vmatpush2.msra.mxu0 0.0
      %1426 = vmatprep.subr.mxu0 0.0
      %1427 = vmatpush2.msra.mxu0 0.0
      %1428 = vmatprep.subr.mxu0 0.0
      %1429 = vmatpush2.msra.mxu0 0.0
      %1430 = vmatprep.subr.mxu0 0.0
      %1431 = vmatpush2.msra.mxu0 0.0
      %1432 = vmatprep.subr.mxu0 0.0
      %1433 = vmatpush2.msra.mxu0 0.0
      %1434 = vmatprep.subr.mxu0 0.0
      %1435 = vmatpush2.msra.mxu0 0.0
      %1436 = vmatprep.subr.mxu0 0.0
      %1437 = vmatpush2.msra.mxu0 0.0
      %1438 = vmatprep.subr.mxu0 0.0
      %1439 = vmatpush2.msra.mxu0 0.0
      %1440 = vmatprep.subr.mxu0 0.0
      %1441 = vmatpush2.msra.mxu0 0.0
      %1442 = vmatprep.subr.mxu0 0.0
      %1443 = vmatpush2.msra.mxu0 0.0
      %1444 = vmatprep.subr.mxu0 0.0
      %1445 = vmatpush2.msra.mxu0 0.0
      %1446 = vmatprep.subr.mxu0 0.0
      %1447 = vmatpush2.msra.mxu0 0.0
      %1448 = vmatprep.subr.mxu0 0.0
      %1449 = vmatpush2.msra.mxu0 0.0
      %1450 = vmatprep.mubr.f32.mxu0 0.0
      %1451 = vmatmul.mubr.f32.gmra.mxu0 %v1375
      %v1452 = vpop.f32.mrf.mxu0
      %v1453 = vadd.f32 0.0, %v1452
      %v1454 = vpop.f32.mrf.mxu0
      %1455 = vmatprep.mubr.f32.mxu0 0.0
      %1456 = vmatmul.mubr.f32.gmra.mxu0 %v1378
      %v1457 = vpop.f32.mrf.mxu0
      %v1458 = vadd.f32 0.0, %v1457
      %v1459 = vpop.f32.mrf.mxu0
      %1460 = vmatprep.mubr.f32.mxu0 0.0
      %1461 = vmatmul.mubr.f32.gmra.mxu0 %v1381
      %v1462 = vpop.f32.mrf.mxu0
      %v1463 = vadd.f32 0.0, %v1462
      %v1464 = vpop.f32.mrf.mxu0
      %1465 = vmatprep.mubr.f32.mxu0 0.0
      %1466 = vmatmul.mubr.f32.gmra.mxu0 %v1384
      %v1467 = vpop.f32.mrf.mxu0
      %v1468 = vadd.f32 0.0, %v1467
      %v1469 = vpop.f32.mrf.mxu0
      %1470 = vdwg.mxu0
      %v1471 = vadd.f32 %v1340, %v1453
      %v1472 = vadd.f32 %v1341, %v1458
      %v1473 = vadd.f32 %v1342, %v1463
      %v1474 = vadd.f32 %v1343, %v1468
      %v1475 = vld [vmem:[%s3] sm:$0xff]
      %v1476 = vld [vmem:[%s3 + $0x8] sm:$0xff]
      %v1477 = vld [vmem:[%s3 + $0x10] sm:$0xff]
      %v1478 = vld [vmem:[%s3 + $0x18] sm:$0xff]
      %1480 = vset.pattern.permute.xlu0 0
      %1481 = vperm.xlu0 %1480, %v1475
      %v1482 = vpop.permute.xlu0 %1481
      %1485 = vset.pattern.permute.xlu0 0
      %1486 = vperm.xlu0 %1485, %v1476
      %v1487 = vpop.permute.xlu0 %1486
      %1490 = vset.pattern.permute.xlu0 0
      %1491 = vperm.xlu0 %1490, %v1477
      %v1492 = vpop.permute.xlu0 %1491
      %1495 = vset.pattern.permute.xlu0 0
      %1496 = vperm.xlu0 %1495, %v1478
      %v1497 = vpop.permute.xlu0 %1496
      %v1499 = vadd.f32 %v1471, %v1482
      %v1500 = vadd.f32 %v1472, %v1487
      %v1501 = vadd.f32 %v1473, %v1492
      %v1502 = vadd.f32 %v1474, %v1497
      %v1503 = vxor.u32 %v1501, 2147483648
      %v1504 = vxor.u32 %v1502, 2147483648
      %v1505 = vmul.f32 %v1503, 1.442695
      %v1506 = vpow.pop %v1505
      %v1507 = vmul.f32 %v1504, 1.442695
      %v1508 = vpow.pop %v1507
      %v1509 = vadd.f32 %v1506, 1.0
      %v1510 = vadd.f32 %v1508, 1.0
      %v1511 = vrcp.pop %v1509
      %v1512 = vmul.f32 1.0, %v1511
      %v1513 = vrcp.pop %v1510
      %v1514 = vmul.f32 1.0, %v1513
      %v1515 = vmul.f32 %v1499, %v1512
      %v1516 = vmul.f32 %v1500, %v1514
      %vm1517 = vcmask 523264
      %1518 = vst.msk [vmem:[%s197] sm:$0xff] %vm1517, %v1515
      %1519 = vst.msk [vmem:[%s197 + $0x8] sm:$0xff] %vm1517, %v1516
      %p1520 = scmp.lt.s32.totalorder %s15, 1
      %s1521 = scalar_select %p1520, %s15, 1
      %s1522 = smul.addr %s1521, 2
      %s1523 = smul.addr %s1522, 8
      %s1524 = scalar_lea.vmem %s4, %s1523
      // Predicated region
      $region37: #{get_init_code_forward.5} parent=35 // pred_check
        %p1525 = pneg %p122
      $region38: #{get_init_code_forward.5} parent=35 // pred_check_branch
        %1527 = sbr.rel (%p1525) target = $region40
      $region39: #{get_init_code_forward.5} parent=35 // pred_region
        _
      $region40: #{get_init_code_forward.5} parent=35 // pred_fallthru
        _
    $region36: #{get_init_code_forward.5} parent=5 // pred_fallthru
      _
    %p1528 = scmp.le.s32.totalorder 2, %s10
    // Predicated region
    $region41: #{get_init_code_forward.5} parent=5 // pred_check
      %p1529 = pneg %p1528
    $region42: #{get_init_code_forward.5} parent=5 // pred_check_branch
      %1531 = sbr.rel (%p1529) target = $region44
    $region43: #{get_init_code_forward.5} parent=5 // pred_region
      %s1532 = ssub.s32 %s10, 2
      // Predicated region
      $region45: #{get_init_code_forward.5} parent=43 // pred_check
        %p1533 = pneg %p128
      $region46: #{get_init_code_forward.5} parent=43 // pred_check_branch
        %1535 = sbr.rel (%p1533) target = $region48
      $region47: #{get_init_code_forward.5} parent=43 // pred_region
        %p1536 = scmp.lt.s32.totalorder %s16, 1
        %s1537 = scalar_select %p1536, %s16, 1
        %s1538 = smul.addr %s1537, 2
        %s1539 = smul.addr %s1538, 8
        %s1540 = scalar_lea.vmem %s4, %s1539
      $region48: #{get_init_code_forward.5} parent=43 // pred_fallthru
        _
    $region44: #{get_init_code_forward.5} parent=5 // pred_fallthru
      _
  $region6: #{get_init_code_forward.5} parent=0 // loop_footer
    %s14 = sadd.s32 1, %s10
  $region7: #{get_init_code_forward.5} parent=0 // loop_footer_branch
    %9 = sbr.rel target = $region3
  $region8: #{get_init_code_forward.5} parent=0 // loop_exit
    _

// kernel: get_init_code_forward.6
$region0: #{get_init_code_forward.6}
  #allocation0 [shape = 'u32[]', space=smem, size = 0x4, offset = 0x4, fixed_abs, tag = 'smem constant byte address 0x4 - core index']
  #allocation1 [shape = 'u32[144,128]{1,0:T(1,128)}', space=vmem, size = 0x12000, scoped, tag = 'internal scratch']
  %s0 = inlined_call_operand.vmem [shape: f32[2,16,64], index: 0, kind: input, shape index: {}]
  %s1 = inlined_call_operand.vmem [shape: f32[64,256], index: 1, kind: input, shape index: {}]
  %s2 = inlined_call_operand.vmem [shape: f32[9,16,16], index: 2, kind: input, shape index: {}]
  %s3 = inlined_call_operand.vmem [shape: f32[16,1], index: 3, kind: input, shape index: {}]
  %s4 = inlined_call_operand.vmem [shape: f32[2,8,256], index: 4, kind: output, shape index: {}]
  %s5 = sld [smem:[#allocation0]]
  $region49: #{get_init_code_forward.6} parent=0
    _
  %s7 = ssub.s32 1, %s5
  %s8 = scalar_select 0, %s7, %s5
  loop: start=0, step=1, limit=4
  $region2: #{get_init_code_forward.6} parent=0 // loop_pre_header
    _
  $region3: #{get_init_code_forward.6} parent=0 // loop_header
    %s10 = sphi 0, %s14
    %p11 = scmp.ge.s32.totalorder %s10, 4
    %s20 = sphi 0, %s22
    %s23 = sphi 0, %s20
    %s24 = sphi 0, %s23
    %s40 = sphi 0, %s24
    %s44 = sphi 0, %s44
    %s46 = sphi 0, %s44
    %s47 = sphi 0, %s46
    %s61 = sphi 0, %s47
    %s65 = sphi 0, %s65
    %s67 = sphi 0, %s65
    %s68 = sphi 0, %s67
    %s82 = sphi 0, %s68
    %s86 = sphi 0, %s86
    %s88 = sphi 0, %s86
    %s89 = sphi 0, %s88
    %s103 = sphi 0, %s89
    %s109 = sphi 0, %s111
    %s112 = sphi 0, %s109
    %s113 = sphi 0, %s112
    %s129 = sphi 0, %s113
  $region4: #{get_init_code_forward.6} parent=0 // loop_header_branch
    %13 = sbr.rel (%p11) target = $region8
  $region5: #{get_init_code_forward.6} parent=0 // loop_body
    %s15 = ssub.s32 %s10, 1
    %s16 = ssub.s32 %s10, 2
    %s17 = sadd.s32 %s10, 1
    %s18 = ssub.s32 %s10, %s17
    %p19 = scmp.eq.s32.totalorder %s18, 0
    %s21 = sadd.s32 %s20, 1
    %s22 = scalar_select %p19, %s20, %s21
    %p25 = pneg %p19
    %p26 = scmp.eq.s32.totalorder %s10, 1
    %p27 = por %p25, %p26
    %p28 = scmp.ne.s32.totalorder %s20, %s23
    %p29 = scmp.eq.s32.totalorder %s10, 0
    %p30 = por %p28, %p29
    %p31 = scmp.ne.s32.totalorder %s20, %s23
    %p32 = scmp.eq.s32.totalorder %s15, 1
    %p33 = por %p31, %p32
    %p34 = scmp.ne.s32.totalorder %s23, %s24
    %p35 = scmp.eq.s32.totalorder %s15, 0
    %p36 = por %p34, %p35
    %p37 = scmp.ne.s32.totalorder %s23, %s24
    %p38 = scmp.eq.s32.totalorder %s16, 1
    %p39 = por %p37, %p38
    %p41 = scmp.ne.s32.totalorder %s24, %s40
    %p42 = scmp.eq.s32.totalorder %s16, 0
    %p43 = por %p41, %p42
    %s45 = sadd.s32 %s44, 1
    %p48 = scmp.eq.s32.totalorder %s10, 1
    %p49 = scmp.ne.s32.totalorder %s44, %s46
    %p50 = scmp.eq.s32.totalorder %s10, 0
    %p51 = por %p49, %p50
    %p52 = scmp.ne.s32.totalorder %s44, %s46
    %p53 = scmp.eq.s32.totalorder %s15, 1
    %p54 = por %p52, %p53
    %p55 = scmp.ne.s32.totalorder %s46, %s47
    %p56 = scmp.eq.s32.totalorder %s15, 0
    %p57 = por %p55, %p56
    %p58 = scmp.ne.s32.totalorder %s46, %s47
    %p59 = scmp.eq.s32.totalorder %s16, 1
    %p60 = por %p58, %p59
    %p62 = scmp.ne.s32.totalorder %s47, %s61
    %p63 = scmp.eq.s32.totalorder %s16, 0
    %p64 = por %p62, %p63
    %s66 = sadd.s32 %s65, 1
    %p69 = scmp.eq.s32.totalorder %s10, 1
    %p70 = scmp.ne.s32.totalorder %s65, %s67
    %p71 = scmp.eq.s32.totalorder %s10, 0
    %p72 = por %p70, %p71
    %p73 = scmp.ne.s32.totalorder %s65, %s67
    %p74 = scmp.eq.s32.totalorder %s15, 1
    %p75 = por %p73, %p74
    %p76 = scmp.ne.s32.totalorder %s67, %s68
    %p77 = scmp.eq.s32.totalorder %s15, 0
    %p78 = por %p76, %p77
    %p79 = scmp.ne.s32.totalorder %s67, %s68
    %p80 = scmp.eq.s32.totalorder %s16, 1
    %p81 = por %p79, %p80
    %p83 = scmp.ne.s32.totalorder %s68, %s82
    %p84 = scmp.eq.s32.totalorder %s16, 0
    %p85 = por %p83, %p84
    %s87 = sadd.s32 %s86, 1
    %p90 = scmp.eq.s32.totalorder %s10, 1
    %p91 = scmp.ne.s32.totalorder %s86, %s88
    %p92 = scmp.eq.s32.totalorder %s10, 0
    %p93 = por %p91, %p92
    %p94 = scmp.ne.s32.totalorder %s86, %s88
    %p95 = scmp.eq.s32.totalorder %s15, 1
    %p96 = por %p94, %p95
    %p97 = scmp.ne.s32.totalorder %s88, %s89
    %p98 = scmp.eq.s32.totalorder %s15, 0
    %p99 = por %p97, %p98
    %p100 = scmp.ne.s32.totalorder %s88, %s89
    %p101 = scmp.eq.s32.totalorder %s16, 1
    %p102 = por %p100, %p101
    %p104 = scmp.ne.s32.totalorder %s89, %s103
    %p105 = scmp.eq.s32.totalorder %s16, 0
    %p106 = por %p104, %p105
    %s107 = ssub.s32 %s10, %s17
    %p108 = scmp.eq.s32.totalorder %s107, 0
    %s110 = sadd.s32 %s109, 1
    %s111 = scalar_select %p108, %s109, %s110
    %p114 = pneg %p108
    %p115 = scmp.eq.s32.totalorder %s10, 1
    %p116 = por %p114, %p115
    %p117 = scmp.ne.s32.totalorder %s109, %s112
    %p118 = scmp.eq.s32.totalorder %s10, 0
    %p119 = por %p117, %p118
    %p120 = scmp.ne.s32.totalorder %s109, %s112
    %p121 = scmp.eq.s32.totalorder %s15, 1
    %p122 = por %p120, %p121
    %p123 = scmp.ne.s32.totalorder %s112, %s113
    %p124 = scmp.eq.s32.totalorder %s15, 0
    %p125 = por %p123, %p124
    %p126 = scmp.ne.s32.totalorder %s112, %s113
    %p127 = scmp.eq.s32.totalorder %s16, 1
    %p128 = por %p126, %p127
    %p130 = scmp.ne.s32.totalorder %s113, %s129
    %p131 = scmp.eq.s32.totalorder %s16, 0
    %p132 = por %p130, %p131
    %p133 = scmp.le.s32.totalorder 1, %s10
    %p134 = scmp.lt.s32.totalorder %s10, 3
    %p135 = pnand %p133, %p134
    %p136 = pneg %p135
    // Predicated region
    $region9: #{get_init_code_forward.6} parent=5 // pred_check
      _
    $region10: #{get_init_code_forward.6} parent=5 // pred_check_branch
      %138 = sbr.rel (%p135) target = $region12
    $region11: #{get_init_code_forward.6} parent=5 // pred_region
      %s139 = ssub.s32 %s10, 1
      // Predicated region
      $region13: #{get_init_code_forward.6} parent=11 // pred_check
        %p140 = pneg %p57
      $region14: #{get_init_code_forward.6} parent=11 // pred_check_branch
        %142 = sbr.rel (%p140) target = $region16
      $region15: #{get_init_code_forward.6} parent=11 // pred_region
        _
      $region16: #{get_init_code_forward.6} parent=11 // pred_fallthru
        _
      // Predicated region
      $region17: #{get_init_code_forward.6} parent=11 // pred_check
        %p143 = pneg %p78
      $region18: #{get_init_code_forward.6} parent=11 // pred_check_branch
        %145 = sbr.rel (%p143) target = $region20
      $region19: #{get_init_code_forward.6} parent=11 // pred_region
        _
      $region20: #{get_init_code_forward.6} parent=11 // pred_fallthru
        _
      // Predicated region
      $region21: #{get_init_code_forward.6} parent=11 // pred_check
        %p146 = pneg %p99
      $region22: #{get_init_code_forward.6} parent=11 // pred_check_branch
        %148 = sbr.rel (%p146) target = $region24
      $region23: #{get_init_code_forward.6} parent=11 // pred_region
        _
      $region24: #{get_init_code_forward.6} parent=11 // pred_fallthru
        _
    $region12: #{get_init_code_forward.6} parent=5 // pred_fallthru
      _
    %p149 = scmp.lt.s32.totalorder %s10, 2
    // Predicated region
    $region25: #{get_init_code_forward.6} parent=5 // pred_check
      %p150 = pneg %p149
    $region26: #{get_init_code_forward.6} parent=5 // pred_check_branch
      %152 = sbr.rel (%p150) target = $region28
    $region27: #{get_init_code_forward.6} parent=5 // pred_region
      // Predicated region
      $region29: #{get_init_code_forward.6} parent=27 // pred_check
        %p153 = pneg %p30
      $region30: #{get_init_code_forward.6} parent=27 // pred_check_branch
        %155 = sbr.rel (%p153) target = $region32
      $region31: #{get_init_code_forward.6} parent=27 // pred_region
        %p156 = scmp.lt.s32.totalorder %s10, 1
        %s157 = scalar_select %p156, %s10, 1
        %s158 = smul.addr %s157, 2
        %s159 = smul.addr %s158, 8
        %s160 = scalar_lea.vmem %s0, %s159
      $region32: #{get_init_code_forward.6} parent=27 // pred_fallthru
        _
    $region28: #{get_init_code_forward.6} parent=5 // pred_fallthru
      _
    %p161 = scmp.le.s32.totalorder 1, %s10
    %p162 = scmp.lt.s32.totalorder %s10, 3
    %p163 = pnand %p161, %p162
    %p164 = pneg %p163
    // Predicated region
    $region33: #{get_init_code_forward.6} parent=5 // pred_check
      _
    $region34: #{get_init_code_forward.6} parent=5 // pred_check_branch
      %166 = sbr.rel (%p163) target = $region36
    $region35: #{get_init_code_forward.6} parent=5 // pred_region
      %s167 = ssub.s32 %s10, 1
      %p168 = scmp.lt.s32.totalorder %s15, 1
      %s169 = scalar_select %p168, %s15, 1
      %s170 = smul.addr %s169, 2
      %s171 = smul.addr %s170, 8
      %s172 = scalar_lea.vmem %s0, %s171
      %p173 = pneg %p36
      %p174 = pneg %p33
      %p175 = pneg %p57
      %p176 = pneg %p54
      %p177 = pneg %p78
      %p178 = pneg %p75
      %p179 = pneg %p99
      %p180 = pneg %p96
      %p181 = pneg %p125
      %p182 = pneg %p122
      %p183 = scmp.lt.s32.totalorder %s15, 1
      %s184 = scalar_select %p183, %s15, 1
      %s185 = smul.addr %s184, 2
      %s186 = smul.addr %s185, 8
      %s187 = scalar_lea.vmem %s4, %s186
      %p188 = scmp.lt.s32.totalorder %s15, 1
      %s189 = scalar_select %p188, %s15, 1
      %s190 = smul.addr %s189, 2
      %s191 = smul.addr %s190, 8
      %s192 = scalar_lea.vmem %s0, %s191
      %p193 = scmp.lt.s32.totalorder %s15, 1
      %s194 = scalar_select %p193, %s15, 1
      %s195 = smul.addr %s194, 2
      %s196 = smul.addr %s195, 8
      %s197 = scalar_lea.vmem %s4, %s196
      %v198 = vld [vmem:[%s192] sm:$0xff]
      %v199 = vld [vmem:[%s192 + $0x8] sm:$0xff]
      %v200 = vld [vmem:[%s1] sm:$0xff]
      %v201 = vld [vmem:[%s1 + $0x8] sm:$0xff]
      %v202 = vld [vmem:[%s1 + $0x10] sm:$0xff]
      %v203 = vld [vmem:[%s1 + $0x18] sm:$0xff]
      %v204 = vld [vmem:[%s1 + $0x20] sm:$0xff]
      %v205 = vld [vmem:[%s1 + $0x28] sm:$0xff]
      %v206 = vld [vmem:[%s1 + $0x30] sm:$0xff]
      %v207 = vld [vmem:[%s1 + $0x38] sm:$0xff]
      %v208 = vld [vmem:[%s1 + $0x40] sm:$0xff]
      %v209 = vld [vmem:[%s1 + $0x48] sm:$0xff]
      %v210 = vld [vmem:[%s1 + $0x50] sm:$0xff]
      %v211 = vld [vmem:[%s1 + $0x58] sm:$0xff]
      %v212 = vld [vmem:[%s1 + $0x60] sm:$0xff]
      %v213 = vld [vmem:[%s1 + $0x68] sm:$0xff]
      %v214 = vld [vmem:[%s1 + $0x70] sm:$0xff]
      %v215 = vld [vmem:[%s1 + $0x78] sm:$0xff]
      %vm216 = vcmask 523264
      %v218 = vsel %vm216, %v198, 0
      %v221 = vsel %vm216, %v199, 0
      %223 = vmatprep.subr.mxu0 0.0
      %224 = vmatpush1.msra.mxu0 0.0
      %225 = vmatprep.subr.mxu0 0.0
      %226 = vmatpush1.msra.mxu0 0.0
      %227 = vmatprep.subr.mxu0 0.0
      %228 = vmatpush1.msra.mxu0 0.0
      %229 = vmatprep.subr.mxu0 0.0
      %230 = vmatpush1.msra.mxu0 0.0
      %231 = vmatprep.subr.mxu0 0.0
      %232 = vmatpush1.msra.mxu0 0.0
      %233 = vmatprep.subr.mxu0 0.0
      %234 = vmatpush1.msra.mxu0 0.0
      %235 = vmatprep.subr.mxu0 0.0
      %236 = vmatpush1.msra.mxu0 0.0
      %237 = vmatprep.subr.mxu0 0.0
      %238 = vmatpush1.msra.mxu0 0.0
      %239 = vmatprep.subr.mxu0 %v215
      %240 = vmatpush1.msra.mxu0 %v214
      %241 = vmatprep.subr.mxu0 %v213
      %242 = vmatpush1.msra.mxu0 %v212
      %243 = vmatprep.subr.mxu0 %v211
      %244 = vmatpush1.msra.mxu0 %v210
      %245 = vmatprep.subr.mxu0 %v209
      %246 = vmatpush1.msra.mxu0 %v208
      %247 = vmatprep.subr.mxu0 %v207
      %248 = vmatpush1.msra.mxu0 %v206
      %249 = vmatprep.subr.mxu0 %v205
      %250 = vmatpush1.msra.mxu0 %v204
      %251 = vmatprep.subr.mxu0 %v203
      %252 = vmatpush1.msra.mxu0 %v202
      %253 = vmatprep.subr.mxu0 %v201
      %254 = vmatpush1.msra.mxu0 %v200
      %255 = vmatprep.subr.mxu0 0.0
      %256 = vmatpush2.msra.mxu0 0.0
      %257 = vmatprep.subr.mxu0 0.0
      %258 = vmatpush2.msra.mxu0 0.0
      %259 = vmatprep.subr.mxu0 0.0
      %260 = vmatpush2.msra.mxu0 0.0
      %261 = vmatprep.subr.mxu0 0.0
      %262 = vmatpush2.msra.mxu0 0.0
      %263 = vmatprep.subr.mxu0 0.0
      %264 = vmatpush2.msra.mxu0 0.0
      %265 = vmatprep.subr.mxu0 0.0
      %266 = vmatpush2.msra.mxu0 0.0
      %267 = vmatprep.subr.mxu0 0.0
      %268 = vmatpush2.msra.mxu0 0.0
      %269 = vmatprep.subr.mxu0 0.0
      %270 = vmatpush2.msra.mxu0 0.0
      %271 = vmatprep.subr.mxu0 0.0
      %272 = vmatpush2.msra.mxu0 0.0
      %273 = vmatprep.subr.mxu0 0.0
      %274 = vmatpush2.msra.mxu0 0.0
      %275 = vmatprep.subr.mxu0 0.0
      %276 = vmatpush2.msra.mxu0 0.0
      %277 = vmatprep.subr.mxu0 0.0
      %278 = vmatpush2.msra.mxu0 0.0
      %279 = vmatprep.subr.mxu0 0.0
      %280 = vmatpush2.msra.mxu0 0.0
      %281 = vmatprep.subr.mxu0 0.0
      %282 = vmatpush2.msra.mxu0 0.0
      %283 = vmatprep.subr.mxu0 0.0
      %284 = vmatpush2.msra.mxu0 0.0
      %285 = vmatprep.subr.mxu0 0.0
      %286 = vmatpush2.msra.mxu0 0.0
      %287 = vmatprep.mubr.f32.mxu0 0.0
      %288 = vmatmul.mubr.f32.gmra.mxu0 %v218
      %v289 = vpop.f32.mrf.mxu0
      %v290 = vadd.f32 0.0, %v289
      %v291 = vpop.f32.mrf.mxu0
      %v292 = vadd.f32 0.0, %v291
      %293 = vmatprep.mubr.f32.mxu0 0.0
      %294 = vmatmul.mubr.f32.gmra.mxu0 %v221
      %v295 = vpop.f32.mrf.mxu0
      %v296 = vadd.f32 0.0, %v295
      %v297 = vpop.f32.mrf.mxu0
      %v298 = vadd.f32 0.0, %v297
      %299 = vdwg.mxu0
      %v300 = vlaneseq
      %v301 = vand.u32 %v300, 127
      %v302 = vadd.s32 %v301, 128
      %v303 = vshra.s32 %v301, 4
      %v304 = vshra.s32 %v302, 4
      %v305 = vand.u32 %v301, 15
      %v306 = vand.u32 %v302, 15
      %311 = vrot.lane.b32.xlu0 %v290, 17
      %v312 = vpop.permute.xlu0 %311
      %313 = vrot.lane.b32.xlu0 %v292, 17
      %v314 = vpop.permute.xlu0 %313
      %315 = vrot.lane.b32.xlu0 %v296, 17
      %v316 = vpop.permute.xlu0 %315
      %317 = vrot.lane.b32.xlu0 %v298, 17
      %v318 = vpop.permute.xlu0 %317
      %vm319 = vcmask 138240
      %v320 = vsel %vm319, %v312, %v314
      %v321 = vsel %vm319, %v316, %v318
      %v326 = vsel %vm319, 0.0, %v312
      %v327 = vsel %vm319, 0.0, %v316
      %v328 = vadd.s32 %v305, 4294967295
      %v329 = vadd.s32 %v306, 4294967295
      %vm330 = vcmp.ge.s32.totalorder %v328, 0
      %vm331 = vcmp.ge.s32.totalorder %v329, 0
      %vm332 = vcmp.lt.s32.totalorder %v328, 16
      %vm333 = vcmp.lt.s32.totalorder %v329, 16
      %vm334 = vmand %vm330, %vm332
      %vm335 = vmand %vm331, %vm333
      %v336 = vadd.s32 %v303, 4294967295
      %v337 = vadd.s32 %v304, 4294967295
      %vm338 = vcmp.ge.s32.totalorder %v336, 0
      %vm339 = vcmp.ge.s32.totalorder %v337, 0
      %vm340 = vmand %vm334, %vm338
      %vm341 = vmand %vm335, %vm339
      %vm342 = vcmp.lt.s32.totalorder %v336, 16
      %vm343 = vcmp.lt.s32.totalorder %v337, 16
      %vm344 = vmand %vm340, %vm342
      %vm345 = vmand %vm341, %vm343
      %v346 = vsel %vm344, 1, 0
      %v347 = vsel %vm345, 1, 0
      %vm348 = vcmp.eq.s32.totalorder %v346, 1
      %vm349 = vcmp.eq.s32.totalorder %v347, 1
      %v350 = vsel %vm348, %v326, 0.0
      %v351 = vsel %vm349, %v320, 0.0
      %v352 = vsel %vm348, %v327, 0.0
      %v353 = vsel %vm349, %v321, 0.0
      %v354 = vld [vmem:[%s2] sm:$0xff]
      %v355 = vld [vmem:[%s2 + $0x8] sm:$0xff]
      %356 = vrot.lane.b32.xlu0 %v290, 16
      %v357 = vpop.permute.xlu0 %356
      %358 = vrot.lane.b32.xlu0 %v292, 16
      %v359 = vpop.permute.xlu0 %358
      %360 = vrot.lane.b32.xlu0 %v296, 16
      %v361 = vpop.permute.xlu0 %360
      %362 = vrot.lane.b32.xlu0 %v298, 16
      %v363 = vpop.permute.xlu0 %362
      %vm364 = vcmask 130048
      %v365 = vsel %vm364, %v357, %v359
      %v366 = vsel %vm364, %v361, %v363
      %v371 = vsel %vm364, 0.0, %v357
      %v372 = vsel %vm364, 0.0, %v361
      %vm373 = vcmp.ge.s32.totalorder %v305, 0
      %vm374 = vcmp.ge.s32.totalorder %v306, 0
      %vm375 = vcmp.lt.s32.totalorder %v305, 16
      %vm376 = vcmp.lt.s32.totalorder %v306, 16
      %vm377 = vmand %vm373, %vm375
      %vm378 = vmand %vm374, %vm376
      %vm379 = vmand %vm377, %vm338
      %vm380 = vmand %vm378, %vm339
      %vm381 = vmand %vm379, %vm342
      %vm382 = vmand %vm380, %vm343
      %v383 = vsel %vm381, 1, 0
      %v384 = vsel %vm382, 1, 0
      %vm385 = vcmp.eq.s32.totalorder %v383, 1
      %vm386 = vcmp.eq.s32.totalorder %v384, 1
      %v387 = vsel %vm385, %v371, 0.0
      %v388 = vsel %vm386, %v365, 0.0
      %v389 = vsel %vm385, %v372, 0.0
      %v390 = vsel %vm386, %v366, 0.0
      %s391 = scalar_lea.vmem %s2, 16
      %v392 = vld [vmem:[%s391] sm:$0xff]
      %v393 = vld [vmem:[%s391 + $0x8] sm:$0xff]
      %v395 = vsel %vm364, %v392, 0
      %v398 = vsel %vm364, %v393, 0
      %400 = vmatprep.subr.mxu0 0.0
      %401 = vmatpush1.msra.mxu0 0.0
      %402 = vmatprep.subr.mxu0 0.0
      %403 = vmatpush1.msra.mxu0 0.0
      %404 = vmatprep.subr.mxu0 0.0
      %405 = vmatpush1.msra.mxu0 0.0
      %406 = vmatprep.subr.mxu0 0.0
      %407 = vmatpush1.msra.mxu0 0.0
      %408 = vmatprep.subr.mxu0 0.0
      %409 = vmatpush1.msra.mxu0 0.0
      %410 = vmatprep.subr.mxu0 0.0
      %411 = vmatpush1.msra.mxu0 0.0
      %412 = vmatprep.subr.mxu0 0.0
      %413 = vmatpush1.msra.mxu0 0.0
      %414 = vmatprep.subr.mxu0 0.0
      %415 = vmatpush1.msra.mxu0 0.0
      %416 = vmatprep.subr.mxu0 0.0
      %417 = vmatpush1.msra.mxu0 0.0
      %418 = vmatprep.subr.mxu0 0.0
      %419 = vmatpush1.msra.mxu0 0.0
      %420 = vmatprep.subr.mxu0 0.0
      %421 = vmatpush1.msra.mxu0 0.0
      %422 = vmatprep.subr.mxu0 0.0
      %423 = vmatpush1.msra.mxu0 0.0
      %424 = vmatprep.subr.mxu0 0.0
      %425 = vmatpush1.msra.mxu0 0.0
      %426 = vmatprep.subr.mxu0 0.0
      %427 = vmatpush1.msra.mxu0 0.0
      %428 = vmatprep.subr.mxu0 %v390
      %429 = vmatpush1.msra.mxu0 %v389
      %430 = vmatprep.subr.mxu0 %v388
      %431 = vmatpush1.msra.mxu0 %v387
      %432 = vmatprep.subr.mxu0 0.0
      %433 = vmatpush2.msra.mxu0 0.0
      %434 = vmatprep.subr.mxu0 0.0
      %435 = vmatpush2.msra.mxu0 0.0
      %436 = vmatprep.subr.mxu0 0.0
      %437 = vmatpush2.msra.mxu0 0.0
      %438 = vmatprep.subr.mxu0 0.0
      %439 = vmatpush2.msra.mxu0 0.0
      %440 = vmatprep.subr.mxu0 0.0
      %441 = vmatpush2.msra.mxu0 0.0
      %442 = vmatprep.subr.mxu0 0.0
      %443 = vmatpush2.msra.mxu0 0.0
      %444 = vmatprep.subr.mxu0 0.0
      %445 = vmatpush2.msra.mxu0 0.0
      %446 = vmatprep.subr.mxu0 0.0
      %447 = vmatpush2.msra.mxu0 0.0
      %448 = vmatprep.subr.mxu0 0.0
      %449 = vmatpush2.msra.mxu0 0.0
      %450 = vmatprep.subr.mxu0 0.0
      %451 = vmatpush2.msra.mxu0 0.0
      %452 = vmatprep.subr.mxu0 0.0
      %453 = vmatpush2.msra.mxu0 0.0
      %454 = vmatprep.subr.mxu0 0.0
      %455 = vmatpush2.msra.mxu0 0.0
      %456 = vmatprep.subr.mxu0 0.0
      %457 = vmatpush2.msra.mxu0 0.0
      %458 = vmatprep.subr.mxu0 0.0
      %459 = vmatpush2.msra.mxu0 0.0
      %460 = vmatprep.subr.mxu0 0.0
      %461 = vmatpush2.msra.mxu0 0.0
      %462 = vmatprep.subr.mxu0 0.0
      %463 = vmatpush2.msra.mxu0 0.0
      %464 = vmatprep.mubr.f32.mxu0 0.0
      %465 = vmatmul.mubr.f32.gmra.mxu0 %v395
      %v466 = vpop.f32.mrf.mxu0
      %v467 = vadd.f32 0.0, %v466
      %v468 = vpop.f32.mrf.mxu0
      %v469 = vadd.f32 0.0, %v468
      %470 = vmatprep.mubr.f32.mxu0 0.0
      %471 = vmatmul.mubr.f32.gmra.mxu0 %v398
      %v472 = vpop.f32.mrf.mxu0
      %v473 = vadd.f32 0.0, %v472
      %v474 = vpop.f32.mrf.mxu0
      %v475 = vadd.f32 0.0, %v474
      %476 = vdwg.mxu0
      %v478 = vsel %vm364, %v354, 0
      %v481 = vsel %vm364, %v355, 0
      %483 = vmatprep.subr.mxu0 0.0
      %484 = vmatpush1.msra.mxu0 0.0
      %485 = vmatprep.subr.mxu0 0.0
      %486 = vmatpush1.msra.mxu0 0.0
      %487 = vmatprep.subr.mxu0 0.0
      %488 = vmatpush1.msra.mxu0 0.0
      %489 = vmatprep.subr.mxu0 0.0
      %490 = vmatpush1.msra.mxu0 0.0
      %491 = vmatprep.subr.mxu0 0.0
      %492 = vmatpush1.msra.mxu0 0.0
      %493 = vmatprep.subr.mxu0 0.0
      %494 = vmatpush1.msra.mxu0 0.0
      %495 = vmatprep.subr.mxu0 0.0
      %496 = vmatpush1.msra.mxu0 0.0
      %497 = vmatprep.subr.mxu0 0.0
      %498 = vmatpush1.msra.mxu0 0.0
      %499 = vmatprep.subr.mxu0 0.0
      %500 = vmatpush1.msra.mxu0 0.0
      %501 = vmatprep.subr.mxu0 0.0
      %502 = vmatpush1.msra.mxu0 0.0
      %503 = vmatprep.subr.mxu0 0.0
      %504 = vmatpush1.msra.mxu0 0.0
      %505 = vmatprep.subr.mxu0 0.0
      %506 = vmatpush1.msra.mxu0 0.0
      %507 = vmatprep.subr.mxu0 0.0
      %508 = vmatpush1.msra.mxu0 0.0
      %509 = vmatprep.subr.mxu0 0.0
      %510 = vmatpush1.msra.mxu0 0.0
      %511 = vmatprep.subr.mxu0 %v353
      %512 = vmatpush1.msra.mxu0 %v352
      %513 = vmatprep.subr.mxu0 %v351
      %514 = vmatpush1.msra.mxu0 %v350
      %515 = vmatprep.subr.mxu0 0.0
      %516 = vmatpush2.msra.mxu0 0.0
      %517 = vmatprep.subr.mxu0 0.0
      %518 = vmatpush2.msra.mxu0 0.0
      %519 = vmatprep.subr.mxu0 0.0
      %520 = vmatpush2.msra.mxu0 0.0
      %521 = vmatprep.subr.mxu0 0.0
      %522 = vmatpush2.msra.mxu0 0.0
      %523 = vmatprep.subr.mxu0 0.0
      %524 = vmatpush2.msra.mxu0 0.0
      %525 = vmatprep.subr.mxu0 0.0
      %526 = vmatpush2.msra.mxu0 0.0
      %527 = vmatprep.subr.mxu0 0.0
      %528 = vmatpush2.msra.mxu0 0.0
      %529 = vmatprep.subr.mxu0 0.0
      %530 = vmatpush2.msra.mxu0 0.0
      %531 = vmatprep.subr.mxu0 0.0
      %532 = vmatpush2.msra.mxu0 0.0
      %533 = vmatprep.subr.mxu0 0.0
      %534 = vmatpush2.msra.mxu0 0.0
      %535 = vmatprep.subr.mxu0 0.0
      %536 = vmatpush2.msra.mxu0 0.0
      %537 = vmatprep.subr.mxu0 0.0
      %538 = vmatpush2.msra.mxu0 0.0
      %539 = vmatprep.subr.mxu0 0.0
      %540 = vmatpush2.msra.mxu0 0.0
      %541 = vmatprep.subr.mxu0 0.0
      %542 = vmatpush2.msra.mxu0 0.0
      %543 = vmatprep.subr.mxu0 0.0
      %544 = vmatpush2.msra.mxu0 0.0
      %545 = vmatprep.subr.mxu0 0.0
      %546 = vmatpush2.msra.mxu0 0.0
      %547 = vmatprep.mubr.f32.mxu0 0.0
      %548 = vmatmul.mubr.f32.gmra.mxu0 %v478
      %v549 = vpop.f32.mrf.mxu0
      %v550 = vadd.f32 %v467, %v549
      %v551 = vpop.f32.mrf.mxu0
      %v552 = vadd.f32 %v469, %v551
      %553 = vmatprep.mubr.f32.mxu0 0.0
      %554 = vmatmul.mubr.f32.gmra.mxu0 %v481
      %v555 = vpop.f32.mrf.mxu0
      %v556 = vadd.f32 %v473, %v555
      %v557 = vpop.f32.mrf.mxu0
      %v558 = vadd.f32 %v475, %v557
      %559 = vdwg.mxu0
      %560 = vrot.lane.b32.xlu0 %v290, 15
      %v561 = vpop.permute.xlu0 %560
      %562 = vrot.lane.b32.xlu0 %v292, 15
      %v563 = vpop.permute.xlu0 %562
      %564 = vrot.lane.b32.xlu0 %v296, 15
      %v565 = vpop.permute.xlu0 %564
      %566 = vrot.lane.b32.xlu0 %v298, 15
      %v567 = vpop.permute.xlu0 %566
      %vm568 = vcmask 121856
      %v569 = vsel %vm568, %v561, %v563
      %v570 = vsel %vm568, %v565, %v567
      %v575 = vsel %vm568, 0.0, %v561
      %v576 = vsel %vm568, 0.0, %v565
      %v577 = vadd.s32 %v305, 1
      %v578 = vadd.s32 %v306, 1
      %vm579 = vcmp.ge.s32.totalorder %v577, 0
      %vm580 = vcmp.ge.s32.totalorder %v578, 0
      %vm581 = vcmp.lt.s32.totalorder %v577, 16
      %vm582 = vcmp.lt.s32.totalorder %v578, 16
      %vm583 = vmand %vm579, %vm581
      %vm584 = vmand %vm580, %vm582
      %vm585 = vmand %vm583, %vm338
      %vm586 = vmand %vm584, %vm339
      %vm587 = vmand %vm585, %vm342
      %vm588 = vmand %vm586, %vm343
      %v589 = vsel %vm587, 1, 0
      %v590 = vsel %vm588, 1, 0
      %vm591 = vcmp.eq.s32.totalorder %v589, 1
      %vm592 = vcmp.eq.s32.totalorder %v590, 1
      %v593 = vsel %vm591, %v575, 0.0
      %v594 = vsel %vm592, %v569, 0.0
      %v595 = vsel %vm591, %v576, 0.0
      %v596 = vsel %vm592, %v570, 0.0
      %s597 = scalar_lea.vmem %s2, 32
      %v598 = vld [vmem:[%s597] sm:$0xff]
      %v599 = vld [vmem:[%s597 + $0x8] sm:$0xff]
      %v601 = vsel %vm364, %v598, 0
      %v604 = vsel %vm364, %v599, 0
      %606 = vmatprep.subr.mxu0 0.0
      %607 = vmatpush1.msra.mxu0 0.0
      %608 = vmatprep.subr.mxu0 0.0
      %609 = vmatpush1.msra.mxu0 0.0
      %610 = vmatprep.subr.mxu0 0.0
      %611 = vmatpush1.msra.mxu0 0.0
      %612 = vmatprep.subr.mxu0 0.0
      %613 = vmatpush1.msra.mxu0 0.0
      %614 = vmatprep.subr.mxu0 0.0
      %615 = vmatpush1.msra.mxu0 0.0
      %616 = vmatprep.subr.mxu0 0.0
      %617 = vmatpush1.msra.mxu0 0.0
      %618 = vmatprep.subr.mxu0 0.0
      %619 = vmatpush1.msra.mxu0 0.0
      %620 = vmatprep.subr.mxu0 0.0
      %621 = vmatpush1.msra.mxu0 0.0
      %622 = vmatprep.subr.mxu0 0.0
      %623 = vmatpush1.msra.mxu0 0.0
      %624 = vmatprep.subr.mxu0 0.0
      %625 = vmatpush1.msra.mxu0 0.0
      %626 = vmatprep.subr.mxu0 0.0
      %627 = vmatpush1.msra.mxu0 0.0
      %628 = vmatprep.subr.mxu0 0.0
      %629 = vmatpush1.msra.mxu0 0.0
      %630 = vmatprep.subr.mxu0 0.0
      %631 = vmatpush1.msra.mxu0 0.0
      %632 = vmatprep.subr.mxu0 0.0
      %633 = vmatpush1.msra.mxu0 0.0
      %634 = vmatprep.subr.mxu0 %v596
      %635 = vmatpush1.msra.mxu0 %v595
      %636 = vmatprep.subr.mxu0 %v594
      %637 = vmatpush1.msra.mxu0 %v593
      %638 = vmatprep.subr.mxu0 0.0
      %639 = vmatpush2.msra.mxu0 0.0
      %640 = vmatprep.subr.mxu0 0.0
      %641 = vmatpush2.msra.mxu0 0.0
      %642 = vmatprep.subr.mxu0 0.0
      %643 = vmatpush2.msra.mxu0 0.0
      %644 = vmatprep.subr.mxu0 0.0
      %645 = vmatpush2.msra.mxu0 0.0
      %646 = vmatprep.subr.mxu0 0.0
      %647 = vmatpush2.msra.mxu0 0.0
      %648 = vmatprep.subr.mxu0 0.0
      %649 = vmatpush2.msra.mxu0 0.0
      %650 = vmatprep.subr.mxu0 0.0
      %651 = vmatpush2.msra.mxu0 0.0
      %652 = vmatprep.subr.mxu0 0.0
      %653 = vmatpush2.msra.mxu0 0.0
      %654 = vmatprep.subr.mxu0 0.0
      %655 = vmatpush2.msra.mxu0 0.0
      %656 = vmatprep.subr.mxu0 0.0
      %657 = vmatpush2.msra.mxu0 0.0
      %658 = vmatprep.subr.mxu0 0.0
      %659 = vmatpush2.msra.mxu0 0.0
      %660 = vmatprep.subr.mxu0 0.0
      %661 = vmatpush2.msra.mxu0 0.0
      %662 = vmatprep.subr.mxu0 0.0
      %663 = vmatpush2.msra.mxu0 0.0
      %664 = vmatprep.subr.mxu0 0.0
      %665 = vmatpush2.msra.mxu0 0.0
      %666 = vmatprep.subr.mxu0 0.0
      %667 = vmatpush2.msra.mxu0 0.0
      %668 = vmatprep.subr.mxu0 0.0
      %669 = vmatpush2.msra.mxu0 0.0
      %670 = vmatprep.mubr.f32.mxu0 0.0
      %671 = vmatmul.mubr.f32.gmra.mxu0 %v601
      %v672 = vpop.f32.mrf.mxu0
      %v673 = vadd.f32 0.0, %v672
      %v674 = vpop.f32.mrf.mxu0
      %v675 = vadd.f32 0.0, %v674
      %676 = vmatprep.mubr.f32.mxu0 0.0
      %677 = vmatmul.mubr.f32.gmra.mxu0 %v604
      %v678 = vpop.f32.mrf.mxu0
      %v679 = vadd.f32 0.0, %v678
      %v680 = vpop.f32.mrf.mxu0
      %v681 = vadd.f32 0.0, %v680
      %682 = vdwg.mxu0
      %v683 = vadd.f32 %v550, %v673
      %v684 = vadd.f32 %v552, %v675
      %v685 = vadd.f32 %v556, %v679
      %v686 = vadd.f32 %v558, %v681
      %687 = vrot.lane.b32.xlu0 %v290, 1
      %v688 = vpop.permute.xlu0 %687
      %689 = vrot.lane.b32.xlu0 %v292, 1
      %v690 = vpop.permute.xlu0 %689
      %691 = vrot.lane.b32.xlu0 %v296, 1
      %v692 = vpop.permute.xlu0 %691
      %693 = vrot.lane.b32.xlu0 %v298, 1
      %v694 = vpop.permute.xlu0 %693
      %vm695 = vcmask 7168
      %v696 = vsel %vm695, %v688, %v690
      %v697 = vsel %vm695, %v692, %v694
      %v702 = vsel %vm695, 0.0, %v688
      %v703 = vsel %vm695, 0.0, %v692
      %vm704 = vcmp.ge.s32.totalorder %v303, 0
      %vm705 = vcmp.ge.s32.totalorder %v304, 0
      %vm706 = vmand %vm334, %vm704
      %vm707 = vmand %vm335, %vm705
      %vm708 = vcmp.lt.s32.totalorder %v303, 16
      %vm709 = vcmp.lt.s32.totalorder %v304, 16
      %vm710 = vmand %vm706, %vm708
      %vm711 = vmand %vm707, %vm709
      %v712 = vsel %vm710, 1, 0
      %v713 = vsel %vm711, 1, 0
      %vm714 = vcmp.eq.s32.totalorder %v712, 1
      %vm715 = vcmp.eq.s32.totalorder %v713, 1
      %v716 = vsel %vm714, %v702, 0.0
      %v717 = vsel %vm715, %v696, 0.0
      %v718 = vsel %vm714, %v703, 0.0
      %v719 = vsel %vm715, %v697, 0.0
      %s720 = scalar_lea.vmem %s2, 48
      %v721 = vld [vmem:[%s720] sm:$0xff]
      %v722 = vld [vmem:[%s720 + $0x8] sm:$0xff]
      %v724 = vsel %vm364, %v721, 0
      %v727 = vsel %vm364, %v722, 0
      %729 = vmatprep.subr.mxu0 0.0
      %730 = vmatpush1.msra.mxu0 0.0
      %731 = vmatprep.subr.mxu0 0.0
      %732 = vmatpush1.msra.mxu0 0.0
      %733 = vmatprep.subr.mxu0 0.0
      %734 = vmatpush1.msra.mxu0 0.0
      %735 = vmatprep.subr.mxu0 0.0
      %736 = vmatpush1.msra.mxu0 0.0
      %737 = vmatprep.subr.mxu0 0.0
      %738 = vmatpush1.msra.mxu0 0.0
      %739 = vmatprep.subr.mxu0 0.0
      %740 = vmatpush1.msra.mxu0 0.0
      %741 = vmatprep.subr.mxu0 0.0
      %742 = vmatpush1.msra.mxu0 0.0
      %743 = vmatprep.subr.mxu0 0.0
      %744 = vmatpush1.msra.mxu0 0.0
      %745 = vmatprep.subr.mxu0 0.0
      %746 = vmatpush1.msra.mxu0 0.0
      %747 = vmatprep.subr.mxu0 0.0
      %748 = vmatpush1.msra.mxu0 0.0
      %749 = vmatprep.subr.mxu0 0.0
      %750 = vmatpush1.msra.mxu0 0.0
      %751 = vmatprep.subr.mxu0 0.0
      %752 = vmatpush1.msra.mxu0 0.0
      %753 = vmatprep.subr.mxu0 0.0
      %754 = vmatpush1.msra.mxu0 0.0
      %755 = vmatprep.subr.mxu0 0.0
      %756 = vmatpush1.msra.mxu0 0.0
      %757 = vmatprep.subr.mxu0 %v719
      %758 = vmatpush1.msra.mxu0 %v718
      %759 = vmatprep.subr.mxu0 %v717
      %760 = vmatpush1.msra.mxu0 %v716
      %761 = vmatprep.subr.mxu0 0.0
      %762 = vmatpush2.msra.mxu0 0.0
      %763 = vmatprep.subr.mxu0 0.0
      %764 = vmatpush2.msra.mxu0 0.0
      %765 = vmatprep.subr.mxu0 0.0
      %766 = vmatpush2.msra.mxu0 0.0
      %767 = vmatprep.subr.mxu0 0.0
      %768 = vmatpush2.msra.mxu0 0.0
      %769 = vmatprep.subr.mxu0 0.0
      %770 = vmatpush2.msra.mxu0 0.0
      %771 = vmatprep.subr.mxu0 0.0
      %772 = vmatpush2.msra.mxu0 0.0
      %773 = vmatprep.subr.mxu0 0.0
      %774 = vmatpush2.msra.mxu0 0.0
      %775 = vmatprep.subr.mxu0 0.0
      %776 = vmatpush2.msra.mxu0 0.0
      %777 = vmatprep.subr.mxu0 0.0
      %778 = vmatpush2.msra.mxu0 0.0
      %779 = vmatprep.subr.mxu0 0.0
      %780 = vmatpush2.msra.mxu0 0.0
      %781 = vmatprep.subr.mxu0 0.0
      %782 = vmatpush2.msra.mxu0 0.0
      %783 = vmatprep.subr.mxu0 0.0
      %784 = vmatpush2.msra.mxu0 0.0
      %785 = vmatprep.subr.mxu0 0.0
      %786 = vmatpush2.msra.mxu0 0.0
      %787 = vmatprep.subr.mxu0 0.0
      %788 = vmatpush2.msra.mxu0 0.0
      %789 = vmatprep.subr.mxu0 0.0
      %790 = vmatpush2.msra.mxu0 0.0
      %791 = vmatprep.subr.mxu0 0.0
      %792 = vmatpush2.msra.mxu0 0.0
      %793 = vmatprep.mubr.f32.mxu0 0.0
      %794 = vmatmul.mubr.f32.gmra.mxu0 %v724
      %v795 = vpop.f32.mrf.mxu0
      %v796 = vadd.f32 0.0, %v795
      %v797 = vpop.f32.mrf.mxu0
      %v798 = vadd.f32 0.0, %v797
      %799 = vmatprep.mubr.f32.mxu0 0.0
      %800 = vmatmul.mubr.f32.gmra.mxu0 %v727
      %v801 = vpop.f32.mrf.mxu0
      %v802 = vadd.f32 0.0, %v801
      %v803 = vpop.f32.mrf.mxu0
      %v804 = vadd.f32 0.0, %v803
      %805 = vdwg.mxu0
      %v806 = vadd.f32 %v683, %v796
      %v807 = vadd.f32 %v684, %v798
      %v808 = vadd.f32 %v685, %v802
      %v809 = vadd.f32 %v686, %v804
      %s810 = scalar_lea.vmem %s2, 64
      %v811 = vld [vmem:[%s810] sm:$0xff]
      %v812 = vld [vmem:[%s810 + $0x8] sm:$0xff]
      %v814 = vsel %vm364, %v811, 0
      %v817 = vsel %vm364, %v812, 0
      %819 = vmatprep.subr.mxu0 0.0
      %820 = vmatpush1.msra.mxu0 0.0
      %821 = vmatprep.subr.mxu0 0.0
      %822 = vmatpush1.msra.mxu0 0.0
      %823 = vmatprep.subr.mxu0 0.0
      %824 = vmatpush1.msra.mxu0 0.0
      %825 = vmatprep.subr.mxu0 0.0
      %826 = vmatpush1.msra.mxu0 0.0
      %827 = vmatprep.subr.mxu0 0.0
      %828 = vmatpush1.msra.mxu0 0.0
      %829 = vmatprep.subr.mxu0 0.0
      %830 = vmatpush1.msra.mxu0 0.0
      %831 = vmatprep.subr.mxu0 0.0
      %832 = vmatpush1.msra.mxu0 0.0
      %833 = vmatprep.subr.mxu0 0.0
      %834 = vmatpush1.msra.mxu0 0.0
      %835 = vmatprep.subr.mxu0 0.0
      %836 = vmatpush1.msra.mxu0 0.0
      %837 = vmatprep.subr.mxu0 0.0
      %838 = vmatpush1.msra.mxu0 0.0
      %839 = vmatprep.subr.mxu0 0.0
      %840 = vmatpush1.msra.mxu0 0.0
      %841 = vmatprep.subr.mxu0 0.0
      %842 = vmatpush1.msra.mxu0 0.0
      %843 = vmatprep.subr.mxu0 0.0
      %844 = vmatpush1.msra.mxu0 0.0
      %845 = vmatprep.subr.mxu0 0.0
      %846 = vmatpush1.msra.mxu0 0.0
      %847 = vmatprep.subr.mxu0 %v298
      %848 = vmatpush1.msra.mxu0 %v296
      %849 = vmatprep.subr.mxu0 %v292
      %850 = vmatpush1.msra.mxu0 %v290
      %851 = vmatprep.subr.mxu0 0.0
      %852 = vmatpush2.msra.mxu0 0.0
      %853 = vmatprep.subr.mxu0 0.0
      %854 = vmatpush2.msra.mxu0 0.0
      %855 = vmatprep.subr.mxu0 0.0
      %856 = vmatpush2.msra.mxu0 0.0
      %857 = vmatprep.subr.mxu0 0.0
      %858 = vmatpush2.msra.mxu0 0.0
      %859 = vmatprep.subr.mxu0 0.0
      %860 = vmatpush2.msra.mxu0 0.0
      %861 = vmatprep.subr.mxu0 0.0
      %862 = vmatpush2.msra.mxu0 0.0
      %863 = vmatprep.subr.mxu0 0.0
      %864 = vmatpush2.msra.mxu0 0.0
      %865 = vmatprep.subr.mxu0 0.0
      %866 = vmatpush2.msra.mxu0 0.0
      %867 = vmatprep.subr.mxu0 0.0
      %868 = vmatpush2.msra.mxu0 0.0
      %869 = vmatprep.subr.mxu0 0.0
      %870 = vmatpush2.msra.mxu0 0.0
      %871 = vmatprep.subr.mxu0 0.0
      %872 = vmatpush2.msra.mxu0 0.0
      %873 = vmatprep.subr.mxu0 0.0
      %874 = vmatpush2.msra.mxu0 0.0
      %875 = vmatprep.subr.mxu0 0.0
      %876 = vmatpush2.msra.mxu0 0.0
      %877 = vmatprep.subr.mxu0 0.0
      %878 = vmatpush2.msra.mxu0 0.0
      %879 = vmatprep.subr.mxu0 0.0
      %880 = vmatpush2.msra.mxu0 0.0
      %881 = vmatprep.subr.mxu0 0.0
      %882 = vmatpush2.msra.mxu0 0.0
      %883 = vmatprep.mubr.f32.mxu0 0.0
      %884 = vmatmul.mubr.f32.gmra.mxu0 %v814
      %v885 = vpop.f32.mrf.mxu0
      %v886 = vadd.f32 0.0, %v885
      %v887 = vpop.f32.mrf.mxu0
      %v888 = vadd.f32 0.0, %v887
      %889 = vmatprep.mubr.f32.mxu0 0.0
      %890 = vmatmul.mubr.f32.gmra.mxu0 %v817
      %v891 = vpop.f32.mrf.mxu0
      %v892 = vadd.f32 0.0, %v891
      %v893 = vpop.f32.mrf.mxu0
      %v894 = vadd.f32 0.0, %v893
      %895 = vdwg.mxu0
      %v896 = vadd.f32 %v806, %v886
      %v897 = vadd.f32 %v807, %v888
      %v898 = vadd.f32 %v808, %v892
      %v899 = vadd.f32 %v809, %v894
      %900 = vrot.lane.b32.xlu0 %v290, 127
      %v901 = vpop.permute.xlu0 %900
      %902 = vrot.lane.b32.xlu0 %v292, 127
      %v903 = vpop.permute.xlu0 %902
      %904 = vrot.lane.b32.xlu0 %v296, 127
      %v905 = vpop.permute.xlu0 %904
      %906 = vrot.lane.b32.xlu0 %v298, 127
      %v907 = vpop.permute.xlu0 %906
      %vm908 = vcmask 1039360
      %v909 = vsel %vm908, %v901, %v903
      %v910 = vsel %vm908, %v905, %v907
      %v915 = vsel %vm908, %v903, 0.0
      %v916 = vsel %vm908, %v907, 0.0
      %vm917 = vmand %vm583, %vm704
      %vm918 = vmand %vm584, %vm705
      %vm919 = vmand %vm917, %vm708
      %vm920 = vmand %vm918, %vm709
      %v921 = vsel %vm919, 1, 0
      %v922 = vsel %vm920, 1, 0
      %vm923 = vcmp.eq.s32.totalorder %v921, 1
      %vm924 = vcmp.eq.s32.totalorder %v922, 1
      %v925 = vsel %vm923, %v909, 0.0
      %v926 = vsel %vm924, %v915, 0.0
      %v927 = vsel %vm923, %v910, 0.0
      %v928 = vsel %vm924, %v916, 0.0
      %s929 = scalar_lea.vmem %s2, 80
      %v930 = vld [vmem:[%s929] sm:$0xff]
      %v931 = vld [vmem:[%s929 + $0x8] sm:$0xff]
      %v933 = vsel %vm364, %v930, 0
      %v936 = vsel %vm364, %v931, 0
      %938 = vmatprep.subr.mxu0 0.0
      %939 = vmatpush1.msra.mxu0 0.0
      %940 = vmatprep.subr.mxu0 0.0
      %941 = vmatpush1.msra.mxu0 0.0
      %942 = vmatprep.subr.mxu0 0.0
      %943 = vmatpush1.msra.mxu0 0.0
      %944 = vmatprep.subr.mxu0 0.0
      %945 = vmatpush1.msra.mxu0 0.0
      %946 = vmatprep.subr.mxu0 0.0
      %947 = vmatpush1.msra.mxu0 0.0
      %948 = vmatprep.subr.mxu0 0.0
      %949 = vmatpush1.msra.mxu0 0.0
      %950 = vmatprep.subr.mxu0 0.0
      %951 = vmatpush1.msra.mxu0 0.0
      %952 = vmatprep.subr.mxu0 0.0
      %953 = vmatpush1.msra.mxu0 0.0
      %954 = vmatprep.subr.mxu0 0.0
      %955 = vmatpush1.msra.mxu0 0.0
      %956 = vmatprep.subr.mxu0 0.0
      %957 = vmatpush1.msra.mxu0 0.0
      %958 = vmatprep.subr.mxu0 0.0
      %959 = vmatpush1.msra.mxu0 0.0
      %960 = vmatprep.subr.mxu0 0.0
      %961 = vmatpush1.msra.mxu0 0.0
      %962 = vmatprep.subr.mxu0 0.0
      %963 = vmatpush1.msra.mxu0 0.0
      %964 = vmatprep.subr.mxu0 0.0
      %965 = vmatpush1.msra.mxu0 0.0
      %966 = vmatprep.subr.mxu0 %v928
      %967 = vmatpush1.msra.mxu0 %v927
      %968 = vmatprep.subr.mxu0 %v926
      %969 = vmatpush1.msra.mxu0 %v925
      %970 = vmatprep.subr.mxu0 0.0
      %971 = vmatpush2.msra.mxu0 0.0
      %972 = vmatprep.subr.mxu0 0.0
      %973 = vmatpush2.msra.mxu0 0.0
      %974 = vmatprep.subr.mxu0 0.0
      %975 = vmatpush2.msra.mxu0 0.0
      %976 = vmatprep.subr.mxu0 0.0
      %977 = vmatpush2.msra.mxu0 0.0
      %978 = vmatprep.subr.mxu0 0.0
      %979 = vmatpush2.msra.mxu0 0.0
      %980 = vmatprep.subr.mxu0 0.0
      %981 = vmatpush2.msra.mxu0 0.0
      %982 = vmatprep.subr.mxu0 0.0
      %983 = vmatpush2.msra.mxu0 0.0
      %984 = vmatprep.subr.mxu0 0.0
      %985 = vmatpush2.msra.mxu0 0.0
      %986 = vmatprep.subr.mxu0 0.0
      %987 = vmatpush2.msra.mxu0 0.0
      %988 = vmatprep.subr.mxu0 0.0
      %989 = vmatpush2.msra.mxu0 0.0
      %990 = vmatprep.subr.mxu0 0.0
      %991 = vmatpush2.msra.mxu0 0.0
      %992 = vmatprep.subr.mxu0 0.0
      %993 = vmatpush2.msra.mxu0 0.0
      %994 = vmatprep.subr.mxu0 0.0
      %995 = vmatpush2.msra.mxu0 0.0
      %996 = vmatprep.subr.mxu0 0.0
      %997 = vmatpush2.msra.mxu0 0.0
      %998 = vmatprep.subr.mxu0 0.0
      %999 = vmatpush2.msra.mxu0 0.0
      %1000 = vmatprep.subr.mxu0 0.0
      %1001 = vmatpush2.msra.mxu0 0.0
      %1002 = vmatprep.mubr.f32.mxu0 0.0
      %1003 = vmatmul.mubr.f32.gmra.mxu0 %v933
      %v1004 = vpop.f32.mrf.mxu0
      %v1005 = vadd.f32 0.0, %v1004
      %v1006 = vpop.f32.mrf.mxu0
      %v1007 = vadd.f32 0.0, %v1006
      %1008 = vmatprep.mubr.f32.mxu0 0.0
      %1009 = vmatmul.mubr.f32.gmra.mxu0 %v936
      %v1010 = vpop.f32.mrf.mxu0
      %v1011 = vadd.f32 0.0, %v1010
      %v1012 = vpop.f32.mrf.mxu0
      %v1013 = vadd.f32 0.0, %v1012
      %1014 = vdwg.mxu0
      %v1015 = vadd.f32 %v896, %v1005
      %v1016 = vadd.f32 %v897, %v1007
      %v1017 = vadd.f32 %v898, %v1011
      %v1018 = vadd.f32 %v899, %v1013
      %1019 = vrot.lane.b32.xlu0 %v290, 113
      %v1020 = vpop.permute.xlu0 %1019
      %1021 = vrot.lane.b32.xlu0 %v292, 113
      %v1022 = vpop.permute.xlu0 %1021
      %1023 = vrot.lane.b32.xlu0 %v296, 113
      %v1024 = vpop.permute.xlu0 %1023
      %1025 = vrot.lane.b32.xlu0 %v298, 113
      %v1026 = vpop.permute.xlu0 %1025
      %vm1027 = vcmask 924672
      %v1028 = vsel %vm1027, %v1020, %v1022
      %v1029 = vsel %vm1027, %v1024, %v1026
      %v1034 = vsel %vm1027, %v1022, 0.0
      %v1035 = vsel %vm1027, %v1026, 0.0
      %v1036 = vadd.s32 %v303, 1
      %v1037 = vadd.s32 %v304, 1
      %vm1038 = vcmp.ge.s32.totalorder %v1036, 0
      %vm1039 = vcmp.ge.s32.totalorder %v1037, 0
      %vm1040 = vmand %vm334, %vm1038
      %vm1041 = vmand %vm335, %vm1039
      %vm1042 = vcmp.lt.s32.totalorder %v1036, 16
      %vm1043 = vcmp.lt.s32.totalorder %v1037, 16
      %vm1044 = vmand %vm1040, %vm1042
      %vm1045 = vmand %vm1041, %vm1043
      %v1046 = vsel %vm1044, 1, 0
      %v1047 = vsel %vm1045, 1, 0
      %vm1048 = vcmp.eq.s32.totalorder %v1046, 1
      %vm1049 = vcmp.eq.s32.totalorder %v1047, 1
      %v1050 = vsel %vm1048, %v1028, 0.0
      %v1051 = vsel %vm1049, %v1034, 0.0
      %v1052 = vsel %vm1048, %v1029, 0.0
      %v1053 = vsel %vm1049, %v1035, 0.0
      %s1054 = scalar_lea.vmem %s2, 96
      %v1055 = vld [vmem:[%s1054] sm:$0xff]
      %v1056 = vld [vmem:[%s1054 + $0x8] sm:$0xff]
      %v1058 = vsel %vm364, %v1055, 0
      %v1061 = vsel %vm364, %v1056, 0
      %1063 = vmatprep.subr.mxu0 0.0
      %1064 = vmatpush1.msra.mxu0 0.0
      %1065 = vmatprep.subr.mxu0 0.0
      %1066 = vmatpush1.msra.mxu0 0.0
      %1067 = vmatprep.subr.mxu0 0.0
      %1068 = vmatpush1.msra.mxu0 0.0
      %1069 = vmatprep.subr.mxu0 0.0
      %1070 = vmatpush1.msra.mxu0 0.0
      %1071 = vmatprep.subr.mxu0 0.0
      %1072 = vmatpush1.msra.mxu0 0.0
      %1073 = vmatprep.subr.mxu0 0.0
      %1074 = vmatpush1.msra.mxu0 0.0
      %1075 = vmatprep.subr.mxu0 0.0
      %1076 = vmatpush1.msra.mxu0 0.0
      %1077 = vmatprep.subr.mxu0 0.0
      %1078 = vmatpush1.msra.mxu0 0.0
      %1079 = vmatprep.subr.mxu0 0.0
      %1080 = vmatpush1.msra.mxu0 0.0
      %1081 = vmatprep.subr.mxu0 0.0
      %1082 = vmatpush1.msra.mxu0 0.0
      %1083 = vmatprep.subr.mxu0 0.0
      %1084 = vmatpush1.msra.mxu0 0.0
      %1085 = vmatprep.subr.mxu0 0.0
      %1086 = vmatpush1.msra.mxu0 0.0
      %1087 = vmatprep.subr.mxu0 0.0
      %1088 = vmatpush1.msra.mxu0 0.0
      %1089 = vmatprep.subr.mxu0 0.0
      %1090 = vmatpush1.msra.mxu0 0.0
      %1091 = vmatprep.subr.mxu0 %v1053
      %1092 = vmatpush1.msra.mxu0 %v1052
      %1093 = vmatprep.subr.mxu0 %v1051
      %1094 = vmatpush1.msra.mxu0 %v1050
      %1095 = vmatprep.subr.mxu0 0.0
      %1096 = vmatpush2.msra.mxu0 0.0
      %1097 = vmatprep.subr.mxu0 0.0
      %1098 = vmatpush2.msra.mxu0 0.0
      %1099 = vmatprep.subr.mxu0 0.0
      %1100 = vmatpush2.msra.mxu0 0.0
      %1101 = vmatprep.subr.mxu0 0.0
      %1102 = vmatpush2.msra.mxu0 0.0
      %1103 = vmatprep.subr.mxu0 0.0
      %1104 = vmatpush2.msra.mxu0 0.0
      %1105 = vmatprep.subr.mxu0 0.0
      %1106 = vmatpush2.msra.mxu0 0.0
      %1107 = vmatprep.subr.mxu0 0.0
      %1108 = vmatpush2.msra.mxu0 0.0
      %1109 = vmatprep.subr.mxu0 0.0
      %1110 = vmatpush2.msra.mxu0 0.0
      %1111 = vmatprep.subr.mxu0 0.0
      %1112 = vmatpush2.msra.mxu0 0.0
      %1113 = vmatprep.subr.mxu0 0.0
      %1114 = vmatpush2.msra.mxu0 0.0
      %1115 = vmatprep.subr.mxu0 0.0
      %1116 = vmatpush2.msra.mxu0 0.0
      %1117 = vmatprep.subr.mxu0 0.0
      %1118 = vmatpush2.msra.mxu0 0.0
      %1119 = vmatprep.subr.mxu0 0.0
      %1120 = vmatpush2.msra.mxu0 0.0
      %1121 = vmatprep.subr.mxu0 0.0
      %1122 = vmatpush2.msra.mxu0 0.0
      %1123 = vmatprep.subr.mxu0 0.0
      %1124 = vmatpush2.msra.mxu0 0.0
      %1125 = vmatprep.subr.mxu0 0.0
      %1126 = vmatpush2.msra.mxu0 0.0
      %1127 = vmatprep.mubr.f32.mxu0 0.0
      %1128 = vmatmul.mubr.f32.gmra.mxu0 %v1058
      %v1129 = vpop.f32.mrf.mxu0
      %v1130 = vadd.f32 0.0, %v1129
      %v1131 = vpop.f32.mrf.mxu0
      %v1132 = vadd.f32 0.0, %v1131
      %1133 = vmatprep.mubr.f32.mxu0 0.0
      %1134 = vmatmul.mubr.f32.gmra.mxu0 %v1061
      %v1135 = vpop.f32.mrf.mxu0
      %v1136 = vadd.f32 0.0, %v1135
      %v1137 = vpop.f32.mrf.mxu0
      %v1138 = vadd.f32 0.0, %v1137
      %1139 = vdwg.mxu0
      %v1140 = vadd.f32 %v1015, %v1130
      %v1141 = vadd.f32 %v1016, %v1132
      %v1142 = vadd.f32 %v1017, %v1136
      %v1143 = vadd.f32 %v1018, %v1138
      %1144 = vrot.lane.b32.xlu0 %v290, 112
      %v1145 = vpop.permute.xlu0 %1144
      %1146 = vrot.lane.b32.xlu0 %v292, 112
      %v1147 = vpop.permute.xlu0 %1146
      %1148 = vrot.lane.b32.xlu0 %v296, 112
      %v1149 = vpop.permute.xlu0 %1148
      %1150 = vrot.lane.b32.xlu0 %v298, 112
      %v1151 = vpop.permute.xlu0 %1150
      %vm1152 = vcmask 916480
      %v1153 = vsel %vm1152, %v1145, %v1147
      %v1154 = vsel %vm1152, %v1149, %v1151
      %v1159 = vsel %vm1152, %v1147, 0.0
      %v1160 = vsel %vm1152, %v1151, 0.0
      %vm1161 = vmand %vm377, %vm1038
      %vm1162 = vmand %vm378, %vm1039
      %vm1163 = vmand %vm1161, %vm1042
      %vm1164 = vmand %vm1162, %vm1043
      %v1165 = vsel %vm1163, 1, 0
      %v1166 = vsel %vm1164, 1, 0
      %vm1167 = vcmp.eq.s32.totalorder %v1165, 1
      %vm1168 = vcmp.eq.s32.totalorder %v1166, 1
      %v1169 = vsel %vm1167, %v1153, 0.0
      %v1170 = vsel %vm1168, %v1159, 0.0
      %v1171 = vsel %vm1167, %v1154, 0.0
      %v1172 = vsel %vm1168, %v1160, 0.0
      %s1173 = scalar_lea.vmem %s2, 112
      %v1174 = vld [vmem:[%s1173] sm:$0xff]
      %v1175 = vld [vmem:[%s1173 + $0x8] sm:$0xff]
      %v1177 = vsel %vm364, %v1174, 0
      %v1180 = vsel %vm364, %v1175, 0
      %1182 = vmatprep.subr.mxu0 0.0
      %1183 = vmatpush1.msra.mxu0 0.0
      %1184 = vmatprep.subr.mxu0 0.0
      %1185 = vmatpush1.msra.mxu0 0.0
      %1186 = vmatprep.subr.mxu0 0.0
      %1187 = vmatpush1.msra.mxu0 0.0
      %1188 = vmatprep.subr.mxu0 0.0
      %1189 = vmatpush1.msra.mxu0 0.0
      %1190 = vmatprep.subr.mxu0 0.0
      %1191 = vmatpush1.msra.mxu0 0.0
      %1192 = vmatprep.subr.mxu0 0.0
      %1193 = vmatpush1.msra.mxu0 0.0
      %1194 = vmatprep.subr.mxu0 0.0
      %1195 = vmatpush1.msra.mxu0 0.0
      %1196 = vmatprep.subr.mxu0 0.0
      %1197 = vmatpush1.msra.mxu0 0.0
      %1198 = vmatprep.subr.mxu0 0.0
      %1199 = vmatpush1.msra.mxu0 0.0
      %1200 = vmatprep.subr.mxu0 0.0
      %1201 = vmatpush1.msra.mxu0 0.0
      %1202 = vmatprep.subr.mxu0 0.0
      %1203 = vmatpush1.msra.mxu0 0.0
      %1204 = vmatprep.subr.mxu0 0.0
      %1205 = vmatpush1.msra.mxu0 0.0
      %1206 = vmatprep.subr.mxu0 0.0
      %1207 = vmatpush1.msra.mxu0 0.0
      %1208 = vmatprep.subr.mxu0 0.0
      %1209 = vmatpush1.msra.mxu0 0.0
      %1210 = vmatprep.subr.mxu0 %v1172
      %1211 = vmatpush1.msra.mxu0 %v1171
      %1212 = vmatprep.subr.mxu0 %v1170
      %1213 = vmatpush1.msra.mxu0 %v1169
      %1214 = vmatprep.subr.mxu0 0.0
      %1215 = vmatpush2.msra.mxu0 0.0
      %1216 = vmatprep.subr.mxu0 0.0
      %1217 = vmatpush2.msra.mxu0 0.0
      %1218 = vmatprep.subr.mxu0 0.0
      %1219 = vmatpush2.msra.mxu0 0.0
      %1220 = vmatprep.subr.mxu0 0.0
      %1221 = vmatpush2.msra.mxu0 0.0
      %1222 = vmatprep.subr.mxu0 0.0
      %1223 = vmatpush2.msra.mxu0 0.0
      %1224 = vmatprep.subr.mxu0 0.0
      %1225 = vmatpush2.msra.mxu0 0.0
      %1226 = vmatprep.subr.mxu0 0.0
      %1227 = vmatpush2.msra.mxu0 0.0
      %1228 = vmatprep.subr.mxu0 0.0
      %1229 = vmatpush2.msra.mxu0 0.0
      %1230 = vmatprep.subr.mxu0 0.0
      %1231 = vmatpush2.msra.mxu0 0.0
      %1232 = vmatprep.subr.mxu0 0.0
      %1233 = vmatpush2.msra.mxu0 0.0
      %1234 = vmatprep.subr.mxu0 0.0
      %1235 = vmatpush2.msra.mxu0 0.0
      %1236 = vmatprep.subr.mxu0 0.0
      %1237 = vmatpush2.msra.mxu0 0.0
      %1238 = vmatprep.subr.mxu0 0.0
      %1239 = vmatpush2.msra.mxu0 0.0
      %1240 = vmatprep.subr.mxu0 0.0
      %1241 = vmatpush2.msra.mxu0 0.0
      %1242 = vmatprep.subr.mxu0 0.0
      %1243 = vmatpush2.msra.mxu0 0.0
      %1244 = vmatprep.subr.mxu0 0.0
      %1245 = vmatpush2.msra.mxu0 0.0
      %1246 = vmatprep.mubr.f32.mxu0 0.0
      %1247 = vmatmul.mubr.f32.gmra.mxu0 %v1177
      %v1248 = vpop.f32.mrf.mxu0
      %v1249 = vadd.f32 0.0, %v1248
      %v1250 = vpop.f32.mrf.mxu0
      %v1251 = vadd.f32 0.0, %v1250
      %1252 = vmatprep.mubr.f32.mxu0 0.0
      %1253 = vmatmul.mubr.f32.gmra.mxu0 %v1180
      %v1254 = vpop.f32.mrf.mxu0
      %v1255 = vadd.f32 0.0, %v1254
      %v1256 = vpop.f32.mrf.mxu0
      %v1257 = vadd.f32 0.0, %v1256
      %1258 = vdwg.mxu0
      %v1259 = vadd.f32 %v1140, %v1249
      %v1260 = vadd.f32 %v1141, %v1251
      %v1261 = vadd.f32 %v1142, %v1255
      %v1262 = vadd.f32 %v1143, %v1257
      %1263 = vrot.lane.b32.xlu0 %v290, 111
      %v1264 = vpop.permute.xlu0 %1263
      %1265 = vrot.lane.b32.xlu0 %v292, 111
      %v1266 = vpop.permute.xlu0 %1265
      %1267 = vrot.lane.b32.xlu0 %v296, 111
      %v1268 = vpop.permute.xlu0 %1267
      %1269 = vrot.lane.b32.xlu0 %v298, 111
      %v1270 = vpop.permute.xlu0 %1269
      %vm1271 = vcmask 908288
      %v1272 = vsel %vm1271, %v1264, %v1266
      %v1273 = vsel %vm1271, %v1268, %v1270
      %v1278 = vsel %vm1271, %v1266, 0.0
      %v1279 = vsel %vm1271, %v1270, 0.0
      %vm1280 = vmand %vm583, %vm1038
      %vm1281 = vmand %vm584, %vm1039
      %vm1282 = vmand %vm1280, %vm1042
      %vm1283 = vmand %vm1281, %vm1043
      %v1284 = vsel %vm1282, 1, 0
      %v1285 = vsel %vm1283, 1, 0
      %vm1286 = vcmp.eq.s32.totalorder %v1284, 1
      %vm1287 = vcmp.eq.s32.totalorder %v1285, 1
      %v1288 = vsel %vm1286, %v1272, 0.0
      %v1289 = vsel %vm1287, %v1278, 0.0
      %v1290 = vsel %vm1286, %v1273, 0.0
      %v1291 = vsel %vm1287, %v1279, 0.0
      %s1292 = scalar_lea.vmem %s2, 128
      %v1293 = vld [vmem:[%s1292] sm:$0xff]
      %v1294 = vld [vmem:[%s1292 + $0x8] sm:$0xff]
      %v1296 = vsel %vm364, %v1293, 0
      %v1299 = vsel %vm364, %v1294, 0
      %1301 = vmatprep.subr.mxu0 0.0
      %1302 = vmatpush1.msra.mxu0 0.0
      %1303 = vmatprep.subr.mxu0 0.0
      %1304 = vmatpush1.msra.mxu0 0.0
      %1305 = vmatprep.subr.mxu0 0.0
      %1306 = vmatpush1.msra.mxu0 0.0
      %1307 = vmatprep.subr.mxu0 0.0
      %1308 = vmatpush1.msra.mxu0 0.0
      %1309 = vmatprep.subr.mxu0 0.0
      %1310 = vmatpush1.msra.mxu0 0.0
      %1311 = vmatprep.subr.mxu0 0.0
      %1312 = vmatpush1.msra.mxu0 0.0
      %1313 = vmatprep.subr.mxu0 0.0
      %1314 = vmatpush1.msra.mxu0 0.0
      %1315 = vmatprep.subr.mxu0 0.0
      %1316 = vmatpush1.msra.mxu0 0.0
      %1317 = vmatprep.subr.mxu0 0.0
      %1318 = vmatpush1.msra.mxu0 0.0
      %1319 = vmatprep.subr.mxu0 0.0
      %1320 = vmatpush1.msra.mxu0 0.0
      %1321 = vmatprep.subr.mxu0 0.0
      %1322 = vmatpush1.msra.mxu0 0.0
      %1323 = vmatprep.subr.mxu0 0.0
      %1324 = vmatpush1.msra.mxu0 0.0
      %1325 = vmatprep.subr.mxu0 0.0
      %1326 = vmatpush1.msra.mxu0 0.0
      %1327 = vmatprep.subr.mxu0 0.0
      %1328 = vmatpush1.msra.mxu0 0.0
      %1329 = vmatprep.subr.mxu0 %v1291
      %1330 = vmatpush1.msra.mxu0 %v1290
      %1331 = vmatprep.subr.mxu0 %v1289
      %1332 = vmatpush1.msra.mxu0 %v1288
      %1333 = vmatprep.subr.mxu0 0.0
      %1334 = vmatpush2.msra.mxu0 0.0
      %1335 = vmatprep.subr.mxu0 0.0
      %1336 = vmatpush2.msra.mxu0 0.0
      %1337 = vmatprep.subr.mxu0 0.0
      %1338 = vmatpush2.msra.mxu0 0.0
      %1339 = vmatprep.subr.mxu0 0.0
      %1340 = vmatpush2.msra.mxu0 0.0
      %1341 = vmatprep.subr.mxu0 0.0
      %1342 = vmatpush2.msra.mxu0 0.0
      %1343 = vmatprep.subr.mxu0 0.0
      %1344 = vmatpush2.msra.mxu0 0.0
      %1345 = vmatprep.subr.mxu0 0.0
      %1346 = vmatpush2.msra.mxu0 0.0
      %1347 = vmatprep.subr.mxu0 0.0
      %1348 = vmatpush2.msra.mxu0 0.0
      %1349 = vmatprep.subr.mxu0 0.0
      %1350 = vmatpush2.msra.mxu0 0.0
      %1351 = vmatprep.subr.mxu0 0.0
      %1352 = vmatpush2.msra.mxu0 0.0
      %1353 = vmatprep.subr.mxu0 0.0
      %1354 = vmatpush2.msra.mxu0 0.0
      %1355 = vmatprep.subr.mxu0 0.0
      %1356 = vmatpush2.msra.mxu0 0.0
      %1357 = vmatprep.subr.mxu0 0.0
      %1358 = vmatpush2.msra.mxu0 0.0
      %1359 = vmatprep.subr.mxu0 0.0
      %1360 = vmatpush2.msra.mxu0 0.0
      %1361 = vmatprep.subr.mxu0 0.0
      %1362 = vmatpush2.msra.mxu0 0.0
      %1363 = vmatprep.subr.mxu0 0.0
      %1364 = vmatpush2.msra.mxu0 0.0
      %1365 = vmatprep.mubr.f32.mxu0 0.0
      %1366 = vmatmul.mubr.f32.gmra.mxu0 %v1296
      %v1367 = vpop.f32.mrf.mxu0
      %v1368 = vadd.f32 0.0, %v1367
      %v1369 = vpop.f32.mrf.mxu0
      %v1370 = vadd.f32 0.0, %v1369
      %1371 = vmatprep.mubr.f32.mxu0 0.0
      %1372 = vmatmul.mubr.f32.gmra.mxu0 %v1299
      %v1373 = vpop.f32.mrf.mxu0
      %v1374 = vadd.f32 0.0, %v1373
      %v1375 = vpop.f32.mrf.mxu0
      %v1376 = vadd.f32 0.0, %v1375
      %1377 = vdwg.mxu0
      %v1378 = vadd.f32 %v1259, %v1368
      %v1379 = vadd.f32 %v1260, %v1370
      %v1380 = vadd.f32 %v1261, %v1374
      %v1381 = vadd.f32 %v1262, %v1376
      %v1382 = vld [vmem:[%s3] sm:$0xff]
      %v1383 = vld [vmem:[%s3 + $0x8] sm:$0xff]
      %1385 = vset.pattern.permute.xlu0 0
      %1386 = vperm.xlu0 %1385, %v1382
      %v1387 = vpop.permute.xlu0 %1386
      %1390 = vset.pattern.permute.xlu0 0
      %1391 = vperm.xlu0 %1390, %v1383
      %v1392 = vpop.permute.xlu0 %1391
      %v1394 = vadd.f32 %v1378, %v1387
      %v1395 = vadd.f32 %v1379, %v1387
      %v1396 = vadd.f32 %v1380, %v1392
      %v1397 = vadd.f32 %v1381, %v1392
      %v1398 = vxor.u32 %v1396, 2147483648
      %v1399 = vxor.u32 %v1397, 2147483648
      %v1400 = vmul.f32 %v1398, 1.442695
      %v1401 = vpow.pop %v1400
      %v1402 = vmul.f32 %v1399, 1.442695
      %v1403 = vpow.pop %v1402
      %v1404 = vadd.f32 %v1401, 1.0
      %v1405 = vadd.f32 %v1403, 1.0
      %v1406 = vrcp.pop %v1404
      %v1407 = vmul.f32 1.0, %v1406
      %v1408 = vrcp.pop %v1405
      %v1409 = vmul.f32 1.0, %v1408
      %v1410 = vmul.f32 %v1394, %v1407
      %v1411 = vmul.f32 %v1395, %v1409
      %1412 = vst [vmem:[%s197] sm:$0xff] %v1410
      %1413 = vst [vmem:[%s197 + $0x8] sm:$0xff] %v1411
      %p1414 = scmp.lt.s32.totalorder %s15, 1
      %s1415 = scalar_select %p1414, %s15, 1
      %s1416 = smul.addr %s1415, 2
      %s1417 = smul.addr %s1416, 8
      %s1418 = scalar_lea.vmem %s4, %s1417
      // Predicated region
      $region37: #{get_init_code_forward.6} parent=35 // pred_check
        %p1419 = pneg %p122
      $region38: #{get_init_code_forward.6} parent=35 // pred_check_branch
        %1421 = sbr.rel (%p1419) target = $region40
      $region39: #{get_init_code_forward.6} parent=35 // pred_region
        _
      $region40: #{get_init_code_forward.6} parent=35 // pred_fallthru
        _
    $region36: #{get_init_code_forward.6} parent=5 // pred_fallthru
      _
    %p1422 = scmp.le.s32.totalorder 2, %s10
    // Predicated region
    $region41: #{get_init_code_forward.6} parent=5 // pred_check
      %p1423 = pneg %p1422
    $region42: #{get_init_code_forward.6} parent=5 // pred_check_branch
      %1425 = sbr.rel (%p1423) target = $region44
    $region43: #{get_init_code_forward.6} parent=5 // pred_region
      %s1426 = ssub.s32 %s10, 2
      // Predicated region
      $region45: #{get_init_code_forward.6} parent=43 // pred_check
        %p1427 = pneg %p128
      $region46: #{get_init_code_forward.6} parent=43 // pred_check_branch
        %1429 = sbr.rel (%p1427) target = $region48
      $region47: #{get_init_code_forward.6} parent=43 // pred_region
        %p1430 = scmp.lt.s32.totalorder %s16, 1
        %s1431 = scalar_select %p1430, %s16, 1
        %s1432 = smul.addr %s1431, 2
        %s1433 = smul.addr %s1432, 8
        %s1434 = scalar_lea.vmem %s4, %s1433
      $region48: #{get_init_code_forward.6} parent=43 // pred_fallthru
        _
    $region44: #{get_init_code_forward.6} parent=5 // pred_fallthru
      _
  $region6: #{get_init_code_forward.6} parent=0 // loop_footer
    %s14 = sadd.s32 1, %s10
  $region7: #{get_init_code_forward.6} parent=0 // loop_footer_branch
    %9 = sbr.rel target = $region3
  $region8: #{get_init_code_forward.6} parent=0 // loop_exit
    _

// kernel: get_init_code_forward.7
$region0: #{get_init_code_forward.7}
  #allocation0 [shape = 'u32[]', space=smem, size = 0x4, offset = 0x4, fixed_abs, tag = 'smem constant byte address 0x4 - core index']
  #allocation1 [shape = 'u32[144,128]{1,0:T(1,128)}', space=vmem, size = 0x12000, scoped, tag = 'internal scratch']
  %s0 = inlined_call_operand.vmem [shape: f32[2,8,256], index: 0, kind: input, shape index: {}]
  %s1 = inlined_call_operand.hbm [shape: f32[256,1024], index: 1, kind: input, shape index: {}]
  %s2 = inlined_call_operand.vmem [shape: f32[9,8,8], index: 2, kind: input, shape index: {}]
  %s3 = inlined_call_operand.vmem [shape: f32[8,1], index: 3, kind: input, shape index: {}]
  %s4 = inlined_call_operand.vmem [shape: f32[2,4,1024], index: 4, kind: output, shape index: {}]
  %s5 = sld [smem:[#allocation0]]
  $region53: #{get_init_code_forward.7} parent=0
    _
  %s7 = ssub.s32 1, %s5
  %s8 = scalar_select 0, %s7, %s5
  $region1: #{get_init_code_forward.7} parent=0
    #allocation2 [shape = 'u8[1048576]{0}', space=vmem, size = 0x100000, scoped, tag = 'input window, operand 1, single buffered']
    #allocation3 [shape = 's32[2]{0}', space=sflag, size = 0x8, scoped, tag = 'scoped memory for get_init_code_forward.7']
    %9 = vsyncpa [#allocation3], 0
    loop: start=0, step=1, limit=4
    $region2: #{get_init_code_forward.7} parent=1 // loop_pre_header
      _
    $region3: #{get_init_code_forward.7} parent=1 // loop_header
      %s11 = sphi 0, %s15
      %p12 = scmp.ge.s32.totalorder %s11, 4
      %s21 = sphi 0, %s23
      %s24 = sphi 0, %s21
      %s25 = sphi 0, %s24
      %s41 = sphi 0, %s25
      %s45 = sphi 0, %s45
      %s47 = sphi 0, %s45
      %s48 = sphi 0, %s47
      %s62 = sphi 0, %s48
      %s66 = sphi 0, %s66
      %s68 = sphi 0, %s66
      %s69 = sphi 0, %s68
      %s83 = sphi 0, %s69
      %s87 = sphi 0, %s87
      %s89 = sphi 0, %s87
      %s90 = sphi 0, %s89
      %s104 = sphi 0, %s90
      %s110 = sphi 0, %s112
      %s113 = sphi 0, %s110
      %s114 = sphi 0, %s113
      %s130 = sphi 0, %s114
    $region4: #{get_init_code_forward.7} parent=1 // loop_header_branch
      %14 = sbr.rel (%p12) target = $region8
    $region5: #{get_init_code_forward.7} parent=1 // loop_body
      %s16 = ssub.s32 %s11, 1
      %s17 = ssub.s32 %s11, 2
      %s18 = sadd.s32 %s11, 1
      %s19 = ssub.s32 %s11, %s18
      %p20 = scmp.eq.s32.totalorder %s19, 0
      %s22 = sadd.s32 %s21, 1
      %s23 = scalar_select %p20, %s21, %s22
      %p26 = pneg %p20
      %p27 = scmp.eq.s32.totalorder %s11, 1
      %p28 = por %p26, %p27
      %p29 = scmp.ne.s32.totalorder %s21, %s24
      %p30 = scmp.eq.s32.totalorder %s11, 0
      %p31 = por %p29, %p30
      %p32 = scmp.ne.s32.totalorder %s21, %s24
      %p33 = scmp.eq.s32.totalorder %s16, 1
      %p34 = por %p32, %p33
      %p35 = scmp.ne.s32.totalorder %s24, %s25
      %p36 = scmp.eq.s32.totalorder %s16, 0
      %p37 = por %p35, %p36
      %p38 = scmp.ne.s32.totalorder %s24, %s25
      %p39 = scmp.eq.s32.totalorder %s17, 1
      %p40 = por %p38, %p39
      %p42 = scmp.ne.s32.totalorder %s25, %s41
      %p43 = scmp.eq.s32.totalorder %s17, 0
      %p44 = por %p42, %p43
      %s46 = sadd.s32 %s45, 1
      %p49 = scmp.eq.s32.totalorder %s11, 1
      %p50 = scmp.ne.s32.totalorder %s45, %s47
      %p51 = scmp.eq.s32.totalorder %s11, 0
      %p52 = por %p50, %p51
      %p53 = scmp.ne.s32.totalorder %s45, %s47
      %p54 = scmp.eq.s32.totalorder %s16, 1
      %p55 = por %p53, %p54
      %p56 = scmp.ne.s32.totalorder %s47, %s48
      %p57 = scmp.eq.s32.totalorder %s16, 0
      %p58 = por %p56, %p57
      %p59 = scmp.ne.s32.totalorder %s47, %s48
      %p60 = scmp.eq.s32.totalorder %s17, 1
      %p61 = por %p59, %p60
      %p63 = scmp.ne.s32.totalorder %s48, %s62
      %p64 = scmp.eq.s32.totalorder %s17, 0
      %p65 = por %p63, %p64
      %s67 = sadd.s32 %s66, 1
      %p70 = scmp.eq.s32.totalorder %s11, 1
      %p71 = scmp.ne.s32.totalorder %s66, %s68
      %p72 = scmp.eq.s32.totalorder %s11, 0
      %p73 = por %p71, %p72
      %p74 = scmp.ne.s32.totalorder %s66, %s68
      %p75 = scmp.eq.s32.totalorder %s16, 1
      %p76 = por %p74, %p75
      %p77 = scmp.ne.s32.totalorder %s68, %s69
      %p78 = scmp.eq.s32.totalorder %s16, 0
      %p79 = por %p77, %p78
      %p80 = scmp.ne.s32.totalorder %s68, %s69
      %p81 = scmp.eq.s32.totalorder %s17, 1
      %p82 = por %p80, %p81
      %p84 = scmp.ne.s32.totalorder %s69, %s83
      %p85 = scmp.eq.s32.totalorder %s17, 0
      %p86 = por %p84, %p85
      %s88 = sadd.s32 %s87, 1
      %p91 = scmp.eq.s32.totalorder %s11, 1
      %p92 = scmp.ne.s32.totalorder %s87, %s89
      %p93 = scmp.eq.s32.totalorder %s11, 0
      %p94 = por %p92, %p93
      %p95 = scmp.ne.s32.totalorder %s87, %s89
      %p96 = scmp.eq.s32.totalorder %s16, 1
      %p97 = por %p95, %p96
      %p98 = scmp.ne.s32.totalorder %s89, %s90
      %p99 = scmp.eq.s32.totalorder %s16, 0
      %p100 = por %p98, %p99
      %p101 = scmp.ne.s32.totalorder %s89, %s90
      %p102 = scmp.eq.s32.totalorder %s17, 1
      %p103 = por %p101, %p102
      %p105 = scmp.ne.s32.totalorder %s90, %s104
      %p106 = scmp.eq.s32.totalorder %s17, 0
      %p107 = por %p105, %p106
      %s108 = ssub.s32 %s11, %s18
      %p109 = scmp.eq.s32.totalorder %s108, 0
      %s111 = sadd.s32 %s110, 1
      %s112 = scalar_select %p109, %s110, %s111
      %p115 = pneg %p109
      %p116 = scmp.eq.s32.totalorder %s11, 1
      %p117 = por %p115, %p116
      %p118 = scmp.ne.s32.totalorder %s110, %s113
      %p119 = scmp.eq.s32.totalorder %s11, 0
      %p120 = por %p118, %p119
      %p121 = scmp.ne.s32.totalorder %s110, %s113
      %p122 = scmp.eq.s32.totalorder %s16, 1
      %p123 = por %p121, %p122
      %p124 = scmp.ne.s32.totalorder %s113, %s114
      %p125 = scmp.eq.s32.totalorder %s16, 0
      %p126 = por %p124, %p125
      %p127 = scmp.ne.s32.totalorder %s113, %s114
      %p128 = scmp.eq.s32.totalorder %s17, 1
      %p129 = por %p127, %p128
      %p131 = scmp.ne.s32.totalorder %s114, %s130
      %p132 = scmp.eq.s32.totalorder %s17, 0
      %p133 = por %p131, %p132
      %p134 = scmp.le.s32.totalorder 1, %s11
      %p135 = scmp.lt.s32.totalorder %s11, 3
      %p136 = pnand %p134, %p135
      %p137 = pneg %p136
      // Predicated region
      $region9: #{get_init_code_forward.7} parent=5 // pred_check
        _
      $region10: #{get_init_code_forward.7} parent=5 // pred_check_branch
        %139 = sbr.rel (%p136) target = $region12
      $region11: #{get_init_code_forward.7} parent=5 // pred_region
        %s140 = ssub.s32 %s11, 1
        // Predicated region
        $region13: #{get_init_code_forward.7} parent=11 // pred_check
          %p141 = pneg %p58
        $region14: #{get_init_code_forward.7} parent=11 // pred_check_branch
          %143 = sbr.rel (%p141) target = $region16
        $region15: #{get_init_code_forward.7} parent=11 // pred_region
          %s145 = ssub.s32 32768, 32768
          %146 = vsyncadd [#allocation3], %s145
          %s147 = sshll.u32 [#allocation2], 4
          %s148 = int_to_ptr.vmem [resolvable:$true] %s147
          %153 = dma.hbm_to_vmem [thread:$0]  %s1, 32768, %s148, [#allocation3], 1024, 1024, 64
        $region16: #{get_init_code_forward.7} parent=11 // pred_fallthru
          _
        // Predicated region
        $region17: #{get_init_code_forward.7} parent=11 // pred_check
          %p154 = pneg %p79
        $region18: #{get_init_code_forward.7} parent=11 // pred_check_branch
          %156 = sbr.rel (%p154) target = $region20
        $region19: #{get_init_code_forward.7} parent=11 // pred_region
          _
        $region20: #{get_init_code_forward.7} parent=11 // pred_fallthru
          _
        // Predicated region
        $region21: #{get_init_code_forward.7} parent=11 // pred_check
          %p157 = pneg %p100
        $region22: #{get_init_code_forward.7} parent=11 // pred_check_branch
          %159 = sbr.rel (%p157) target = $region24
        $region23: #{get_init_code_forward.7} parent=11 // pred_region
          _
        $region24: #{get_init_code_forward.7} parent=11 // pred_fallthru
          _
      $region12: #{get_init_code_forward.7} parent=5 // pred_fallthru
        _
      %p160 = scmp.lt.s32.totalorder %s11, 2
      // Predicated region
      $region25: #{get_init_code_forward.7} parent=5 // pred_check
        %p161 = pneg %p160
      $region26: #{get_init_code_forward.7} parent=5 // pred_check_branch
        %163 = sbr.rel (%p161) target = $region28
      $region27: #{get_init_code_forward.7} parent=5 // pred_region
        // Predicated region
        $region29: #{get_init_code_forward.7} parent=27 // pred_check
          %p164 = pneg %p31
        $region30: #{get_init_code_forward.7} parent=27 // pred_check_branch
          %166 = sbr.rel (%p164) target = $region32
        $region31: #{get_init_code_forward.7} parent=27 // pred_region
          %p167 = scmp.lt.s32.totalorder %s11, 1
          %s168 = scalar_select %p167, %s11, 1
          %s169 = smul.addr %s168, 2
          %s170 = smul.addr %s169, 8
          %s171 = scalar_lea.vmem %s0, %s170
        $region32: #{get_init_code_forward.7} parent=27 // pred_fallthru
          _
      $region28: #{get_init_code_forward.7} parent=5 // pred_fallthru
        _
      %p172 = scmp.le.s32.totalorder 1, %s11
      %p173 = scmp.lt.s32.totalorder %s11, 3
      %p174 = pnand %p172, %p173
      %p175 = pneg %p174
      // Predicated region
      $region33: #{get_init_code_forward.7} parent=5 // pred_check
        _
      $region34: #{get_init_code_forward.7} parent=5 // pred_check_branch
        %177 = sbr.rel (%p174) target = $region36
      $region35: #{get_init_code_forward.7} parent=5 // pred_region
        %s178 = ssub.s32 %s11, 1
        // Predicated region
        $region37: #{get_init_code_forward.7} parent=35 // pred_check
          %p179 = pneg %p58
        $region38: #{get_init_code_forward.7} parent=35 // pred_check_branch
          %181 = sbr.rel (%p179) target = $region40
        $region39: #{get_init_code_forward.7} parent=35 // pred_region
          %182 = dma.done [#allocation3], 32768
        $region40: #{get_init_code_forward.7} parent=35 // pred_fallthru
          _
        %p183 = scmp.lt.s32.totalorder %s16, 1
        %s184 = scalar_select %p183, %s16, 1
        %s185 = smul.addr %s184, 2
        %s186 = smul.addr %s185, 8
        %s187 = scalar_lea.vmem %s0, %s186
        %p188 = pneg %p37
        %p189 = pneg %p34
        %p190 = pneg %p58
        %p191 = pneg %p55
        %p192 = pneg %p79
        %p193 = pneg %p76
        %p194 = pneg %p100
        %p195 = pneg %p97
        %p196 = pneg %p126
        %p197 = pneg %p123
        %p198 = scmp.lt.s32.totalorder %s16, 1
        %s199 = scalar_select %p198, %s16, 1
        %s200 = smul.addr %s199, 8
        %s201 = smul.addr %s200, 4
        %s202 = scalar_lea.vmem %s4, %s201
        %p203 = scmp.lt.s32.totalorder %s16, 1
        %s204 = scalar_select %p203, %s16, 1
        %s205 = smul.addr %s204, 2
        %s206 = smul.addr %s205, 8
        %s207 = scalar_lea.vmem %s0, %s206
        %p208 = scmp.lt.s32.totalorder %s16, 1
        %s209 = scalar_select %p208, %s16, 1
        %s210 = smul.addr %s209, 8
        %s211 = smul.addr %s210, 4
        %s212 = scalar_lea.vmem %s4, %s211
        %v213 = vld [vmem:[%s207] sm:$0xff]
        %v214 = vld [vmem:[%s207 + $0x8] sm:$0xff]
        %v215 = vld [vmem:[#allocation2] sm:$0xff]
        %v216 = vld [vmem:[#allocation2 + $0x8] sm:$0xff]
        %v217 = vld [vmem:[#allocation2 + $0x10] sm:$0xff]
        %v218 = vld [vmem:[#allocation2 + $0x18] sm:$0xff]
        %v219 = vld [vmem:[#allocation2 + $0x20] sm:$0xff]
        %v220 = vld [vmem:[#allocation2 + $0x28] sm:$0xff]
        %v221 = vld [vmem:[#allocation2 + $0x30] sm:$0xff]
        %v222 = vld [vmem:[#allocation2 + $0x38] sm:$0xff]
        %v223 = vld [vmem:[#allocation2 + $0x40] sm:$0xff]
        %v224 = vld [vmem:[#allocation2 + $0x48] sm:$0xff]
        %v225 = vld [vmem:[#allocation2 + $0x50] sm:$0xff]
        %v226 = vld [vmem:[#allocation2 + $0x58] sm:$0xff]
        %v227 = vld [vmem:[#allocation2 + $0x60] sm:$0xff]
        %v228 = vld [vmem:[#allocation2 + $0x68] sm:$0xff]
        %v229 = vld [vmem:[#allocation2 + $0x70] sm:$0xff]
        %v230 = vld [vmem:[#allocation2 + $0x78] sm:$0xff]
        %v231 = vld [vmem:[#allocation2 + $0x80] sm:$0xff]
        %v232 = vld [vmem:[#allocation2 + $0x88] sm:$0xff]
        %v233 = vld [vmem:[#allocation2 + $0x90] sm:$0xff]
        %v234 = vld [vmem:[#allocation2 + $0x98] sm:$0xff]
        %v235 = vld [vmem:[#allocation2 + $0xa0] sm:$0xff]
        %v236 = vld [vmem:[#allocation2 + $0xa8] sm:$0xff]
        %v237 = vld [vmem:[#allocation2 + $0xb0] sm:$0xff]
        %v238 = vld [vmem:[#allocation2 + $0xb8] sm:$0xff]
        %v239 = vld [vmem:[#allocation2 + $0xc0] sm:$0xff]
        %v240 = vld [vmem:[#allocation2 + $0xc8] sm:$0xff]
        %v241 = vld [vmem:[#allocation2 + $0xd0] sm:$0xff]
        %v242 = vld [vmem:[#allocation2 + $0xd8] sm:$0xff]
        %v243 = vld [vmem:[#allocation2 + $0xe0] sm:$0xff]
        %v244 = vld [vmem:[#allocation2 + $0xe8] sm:$0xff]
        %v245 = vld [vmem:[#allocation2 + $0xf0] sm:$0xff]
        %v246 = vld [vmem:[#allocation2 + $0xf8] sm:$0xff]
        %v247 = vld [vmem:[#allocation2 + $0x100] sm:$0xff]
        %v248 = vld [vmem:[#allocation2 + $0x108] sm:$0xff]
        %v249 = vld [vmem:[#allocation2 + $0x110] sm:$0xff]
        %v250 = vld [vmem:[#allocation2 + $0x118] sm:$0xff]
        %v251 = vld [vmem:[#allocation2 + $0x120] sm:$0xff]
        %v252 = vld [vmem:[#allocation2 + $0x128] sm:$0xff]
        %v253 = vld [vmem:[#allocation2 + $0x130] sm:$0xff]
        %v254 = vld [vmem:[#allocation2 + $0x138] sm:$0xff]
        %v255 = vld [vmem:[#allocation2 + $0x140] sm:$0xff]
        %v256 = vld [vmem:[#allocation2 + $0x148] sm:$0xff]
        %v257 = vld [vmem:[#allocation2 + $0x150] sm:$0xff]
        %v258 = vld [vmem:[#allocation2 + $0x158] sm:$0xff]
        %v259 = vld [vmem:[#allocation2 + $0x160] sm:$0xff]
        %v260 = vld [vmem:[#allocation2 + $0x168] sm:$0xff]
        %v261 = vld [vmem:[#allocation2 + $0x170] sm:$0xff]
        %v262 = vld [vmem:[#allocation2 + $0x178] sm:$0xff]
        %v263 = vld [vmem:[#allocation2 + $0x180] sm:$0xff]
        %v264 = vld [vmem:[#allocation2 + $0x188] sm:$0xff]
        %v265 = vld [vmem:[#allocation2 + $0x190] sm:$0xff]
        %v266 = vld [vmem:[#allocation2 + $0x198] sm:$0xff]
        %v267 = vld [vmem:[#allocation2 + $0x1a0] sm:$0xff]
        %v268 = vld [vmem:[#allocation2 + $0x1a8] sm:$0xff]
        %v269 = vld [vmem:[#allocation2 + $0x1b0] sm:$0xff]
        %v270 = vld [vmem:[#allocation2 + $0x1b8] sm:$0xff]
        %v271 = vld [vmem:[#allocation2 + $0x1c0] sm:$0xff]
        %v272 = vld [vmem:[#allocation2 + $0x1c8] sm:$0xff]
        %v273 = vld [vmem:[#allocation2 + $0x1d0] sm:$0xff]
        %v274 = vld [vmem:[#allocation2 + $0x1d8] sm:$0xff]
        %v275 = vld [vmem:[#allocation2 + $0x1e0] sm:$0xff]
        %v276 = vld [vmem:[#allocation2 + $0x1e8] sm:$0xff]
        %v277 = vld [vmem:[#allocation2 + $0x1f0] sm:$0xff]
        %v278 = vld [vmem:[#allocation2 + $0x1f8] sm:$0xff]
        %v279 = vld [vmem:[#allocation2 + $0x200] sm:$0xff]
        %v280 = vld [vmem:[#allocation2 + $0x208] sm:$0xff]
        %v281 = vld [vmem:[#allocation2 + $0x210] sm:$0xff]
        %v282 = vld [vmem:[#allocation2 + $0x218] sm:$0xff]
        %v283 = vld [vmem:[#allocation2 + $0x220] sm:$0xff]
        %v284 = vld [vmem:[#allocation2 + $0x228] sm:$0xff]
        %v285 = vld [vmem:[#allocation2 + $0x230] sm:$0xff]
        %v286 = vld [vmem:[#allocation2 + $0x238] sm:$0xff]
        %v287 = vld [vmem:[#allocation2 + $0x240] sm:$0xff]
        %v288 = vld [vmem:[#allocation2 + $0x248] sm:$0xff]
        %v289 = vld [vmem:[#allocation2 + $0x250] sm:$0xff]
        %v290 = vld [vmem:[#allocation2 + $0x258] sm:$0xff]
        %v291 = vld [vmem:[#allocation2 + $0x260] sm:$0xff]
        %v292 = vld [vmem:[#allocation2 + $0x268] sm:$0xff]
        %v293 = vld [vmem:[#allocation2 + $0x270] sm:$0xff]
        %v294 = vld [vmem:[#allocation2 + $0x278] sm:$0xff]
        %v295 = vld [vmem:[#allocation2 + $0x280] sm:$0xff]
        %v296 = vld [vmem:[#allocation2 + $0x288] sm:$0xff]
        %v297 = vld [vmem:[#allocation2 + $0x290] sm:$0xff]
        %v298 = vld [vmem:[#allocation2 + $0x298] sm:$0xff]
        %v299 = vld [vmem:[#allocation2 + $0x2a0] sm:$0xff]
        %v300 = vld [vmem:[#allocation2 + $0x2a8] sm:$0xff]
        %v301 = vld [vmem:[#allocation2 + $0x2b0] sm:$0xff]
        %v302 = vld [vmem:[#allocation2 + $0x2b8] sm:$0xff]
        %v303 = vld [vmem:[#allocation2 + $0x2c0] sm:$0xff]
        %v304 = vld [vmem:[#allocation2 + $0x2c8] sm:$0xff]
        %v305 = vld [vmem:[#allocation2 + $0x2d0] sm:$0xff]
        %v306 = vld [vmem:[#allocation2 + $0x2d8] sm:$0xff]
        %v307 = vld [vmem:[#allocation2 + $0x2e0] sm:$0xff]
        %v308 = vld [vmem:[#allocation2 + $0x2e8] sm:$0xff]
        %v309 = vld [vmem:[#allocation2 + $0x2f0] sm:$0xff]
        %v310 = vld [vmem:[#allocation2 + $0x2f8] sm:$0xff]
        %v311 = vld [vmem:[#allocation2 + $0x300] sm:$0xff]
        %v312 = vld [vmem:[#allocation2 + $0x308] sm:$0xff]
        %v313 = vld [vmem:[#allocation2 + $0x310] sm:$0xff]
        %v314 = vld [vmem:[#allocation2 + $0x318] sm:$0xff]
        %v315 = vld [vmem:[#allocation2 + $0x320] sm:$0xff]
        %v316 = vld [vmem:[#allocation2 + $0x328] sm:$0xff]
        %v317 = vld [vmem:[#allocation2 + $0x330] sm:$0xff]
        %v318 = vld [vmem:[#allocation2 + $0x338] sm:$0xff]
        %v319 = vld [vmem:[#allocation2 + $0x340] sm:$0xff]
        %v320 = vld [vmem:[#allocation2 + $0x348] sm:$0xff]
        %v321 = vld [vmem:[#allocation2 + $0x350] sm:$0xff]
        %v322 = vld [vmem:[#allocation2 + $0x358] sm:$0xff]
        %v323 = vld [vmem:[#allocation2 + $0x360] sm:$0xff]
        %v324 = vld [vmem:[#allocation2 + $0x368] sm:$0xff]
        %v325 = vld [vmem:[#allocation2 + $0x370] sm:$0xff]
        %v326 = vld [vmem:[#allocation2 + $0x378] sm:$0xff]
        %v327 = vld [vmem:[#allocation2 + $0x380] sm:$0xff]
        %v328 = vld [vmem:[#allocation2 + $0x388] sm:$0xff]
        %v329 = vld [vmem:[#allocation2 + $0x390] sm:$0xff]
        %v330 = vld [vmem:[#allocation2 + $0x398] sm:$0xff]
        %v331 = vld [vmem:[#allocation2 + $0x3a0] sm:$0xff]
        %v332 = vld [vmem:[#allocation2 + $0x3a8] sm:$0xff]
        %v333 = vld [vmem:[#allocation2 + $0x3b0] sm:$0xff]
        %v334 = vld [vmem:[#allocation2 + $0x3b8] sm:$0xff]
        %v335 = vld [vmem:[#allocation2 + $0x3c0] sm:$0xff]
        %v336 = vld [vmem:[#allocation2 + $0x3c8] sm:$0xff]
        %v337 = vld [vmem:[#allocation2 + $0x3d0] sm:$0xff]
        %v338 = vld [vmem:[#allocation2 + $0x3d8] sm:$0xff]
        %v339 = vld [vmem:[#allocation2 + $0x3e0] sm:$0xff]
        %v340 = vld [vmem:[#allocation2 + $0x3e8] sm:$0xff]
        %v341 = vld [vmem:[#allocation2 + $0x3f0] sm:$0xff]
        %v342 = vld [vmem:[#allocation2 + $0x3f8] sm:$0xff]
        %v343 = vld [vmem:[#allocation2 + $0x400] sm:$0xff]
        %v344 = vld [vmem:[#allocation2 + $0x408] sm:$0xff]
        %v345 = vld [vmem:[#allocation2 + $0x410] sm:$0xff]
        %v346 = vld [vmem:[#allocation2 + $0x418] sm:$0xff]
        %v347 = vld [vmem:[#allocation2 + $0x420] sm:$0xff]
        %v348 = vld [vmem:[#allocation2 + $0x428] sm:$0xff]
        %v349 = vld [vmem:[#allocation2 + $0x430] sm:$0xff]
        %v350 = vld [vmem:[#allocation2 + $0x438] sm:$0xff]
        %v351 = vld [vmem:[#allocation2 + $0x440] sm:$0xff]
        %v352 = vld [vmem:[#allocation2 + $0x448] sm:$0xff]
        %v353 = vld [vmem:[#allocation2 + $0x450] sm:$0xff]
        %v354 = vld [vmem:[#allocation2 + $0x458] sm:$0xff]
        %v355 = vld [vmem:[#allocation2 + $0x460] sm:$0xff]
        %v356 = vld [vmem:[#allocation2 + $0x468] sm:$0xff]
        %v357 = vld [vmem:[#allocation2 + $0x470] sm:$0xff]
        %v358 = vld [vmem:[#allocation2 + $0x478] sm:$0xff]
        %v359 = vld [vmem:[#allocation2 + $0x480] sm:$0xff]
        %v360 = vld [vmem:[#allocation2 + $0x488] sm:$0xff]
        %v361 = vld [vmem:[#allocation2 + $0x490] sm:$0xff]
        %v362 = vld [vmem:[#allocation2 + $0x498] sm:$0xff]
        %v363 = vld [vmem:[#allocation2 + $0x4a0] sm:$0xff]
        %v364 = vld [vmem:[#allocation2 + $0x4a8] sm:$0xff]
        %v365 = vld [vmem:[#allocation2 + $0x4b0] sm:$0xff]
        %v366 = vld [vmem:[#allocation2 + $0x4b8] sm:$0xff]
        %v367 = vld [vmem:[#allocation2 + $0x4c0] sm:$0xff]
        %v368 = vld [vmem:[#allocation2 + $0x4c8] sm:$0xff]
        %v369 = vld [vmem:[#allocation2 + $0x4d0] sm:$0xff]
        %v370 = vld [vmem:[#allocation2 + $0x4d8] sm:$0xff]
        %v371 = vld [vmem:[#allocation2 + $0x4e0] sm:$0xff]
        %v372 = vld [vmem:[#allocation2 + $0x4e8] sm:$0xff]
        %v373 = vld [vmem:[#allocation2 + $0x4f0] sm:$0xff]
        %v374 = vld [vmem:[#allocation2 + $0x4f8] sm:$0xff]
        %v375 = vld [vmem:[#allocation2 + $0x500] sm:$0xff]
        %v376 = vld [vmem:[#allocation2 + $0x508] sm:$0xff]
        %v377 = vld [vmem:[#allocation2 + $0x510] sm:$0xff]
        %v378 = vld [vmem:[#allocation2 + $0x518] sm:$0xff]
        %v379 = vld [vmem:[#allocation2 + $0x520] sm:$0xff]
        %v380 = vld [vmem:[#allocation2 + $0x528] sm:$0xff]
        %v381 = vld [vmem:[#allocation2 + $0x530] sm:$0xff]
        %v382 = vld [vmem:[#allocation2 + $0x538] sm:$0xff]
        %v383 = vld [vmem:[#allocation2 + $0x540] sm:$0xff]
        %v384 = vld [vmem:[#allocation2 + $0x548] sm:$0xff]
        %v385 = vld [vmem:[#allocation2 + $0x550] sm:$0xff]
        %v386 = vld [vmem:[#allocation2 + $0x558] sm:$0xff]
        %v387 = vld [vmem:[#allocation2 + $0x560] sm:$0xff]
        %v388 = vld [vmem:[#allocation2 + $0x568] sm:$0xff]
        %v389 = vld [vmem:[#allocation2 + $0x570] sm:$0xff]
        %v390 = vld [vmem:[#allocation2 + $0x578] sm:$0xff]
        %v391 = vld [vmem:[#allocation2 + $0x580] sm:$0xff]
        %v392 = vld [vmem:[#allocation2 + $0x588] sm:$0xff]
        %v393 = vld [vmem:[#allocation2 + $0x590] sm:$0xff]
        %v394 = vld [vmem:[#allocation2 + $0x598] sm:$0xff]
        %v395 = vld [vmem:[#allocation2 + $0x5a0] sm:$0xff]
        %v396 = vld [vmem:[#allocation2 + $0x5a8] sm:$0xff]
        %v397 = vld [vmem:[#allocation2 + $0x5b0] sm:$0xff]
        %v398 = vld [vmem:[#allocation2 + $0x5b8] sm:$0xff]
        %v399 = vld [vmem:[#allocation2 + $0x5c0] sm:$0xff]
        %v400 = vld [vmem:[#allocation2 + $0x5c8] sm:$0xff]
        %v401 = vld [vmem:[#allocation2 + $0x5d0] sm:$0xff]
        %v402 = vld [vmem:[#allocation2 + $0x5d8] sm:$0xff]
        %v403 = vld [vmem:[#allocation2 + $0x5e0] sm:$0xff]
        %v404 = vld [vmem:[#allocation2 + $0x5e8] sm:$0xff]
        %v405 = vld [vmem:[#allocation2 + $0x5f0] sm:$0xff]
        %v406 = vld [vmem:[#allocation2 + $0x5f8] sm:$0xff]
        %v407 = vld [vmem:[#allocation2 + $0x600] sm:$0xff]
        %v408 = vld [vmem:[#allocation2 + $0x608] sm:$0xff]
        %v409 = vld [vmem:[#allocation2 + $0x610] sm:$0xff]
        %v410 = vld [vmem:[#allocation2 + $0x618] sm:$0xff]
        %v411 = vld [vmem:[#allocation2 + $0x620] sm:$0xff]
        %v412 = vld [vmem:[#allocation2 + $0x628] sm:$0xff]
        %v413 = vld [vmem:[#allocation2 + $0x630] sm:$0xff]
        %v414 = vld [vmem:[#allocation2 + $0x638] sm:$0xff]
        %v415 = vld [vmem:[#allocation2 + $0x640] sm:$0xff]
        %v416 = vld [vmem:[#allocation2 + $0x648] sm:$0xff]
        %v417 = vld [vmem:[#allocation2 + $0x650] sm:$0xff]
        %v418 = vld [vmem:[#allocation2 + $0x658] sm:$0xff]
        %v419 = vld [vmem:[#allocation2 + $0x660] sm:$0xff]
        %v420 = vld [vmem:[#allocation2 + $0x668] sm:$0xff]
        %v421 = vld [vmem:[#allocation2 + $0x670] sm:$0xff]
        %v422 = vld [vmem:[#allocation2 + $0x678] sm:$0xff]
        %v423 = vld [vmem:[#allocation2 + $0x680] sm:$0xff]
        %v424 = vld [vmem:[#allocation2 + $0x688] sm:$0xff]
        %v425 = vld [vmem:[#allocation2 + $0x690] sm:$0xff]
        %v426 = vld [vmem:[#allocation2 + $0x698] sm:$0xff]
        %v427 = vld [vmem:[#allocation2 + $0x6a0] sm:$0xff]
        %v428 = vld [vmem:[#allocation2 + $0x6a8] sm:$0xff]
        %v429 = vld [vmem:[#allocation2 + $0x6b0] sm:$0xff]
        %v430 = vld [vmem:[#allocation2 + $0x6b8] sm:$0xff]
        %v431 = vld [vmem:[#allocation2 + $0x6c0] sm:$0xff]
        %v432 = vld [vmem:[#allocation2 + $0x6c8] sm:$0xff]
        %v433 = vld [vmem:[#allocation2 + $0x6d0] sm:$0xff]
        %v434 = vld [vmem:[#allocation2 + $0x6d8] sm:$0xff]
        %v435 = vld [vmem:[#allocation2 + $0x6e0] sm:$0xff]
        %v436 = vld [vmem:[#allocation2 + $0x6e8] sm:$0xff]
        %v437 = vld [vmem:[#allocation2 + $0x6f0] sm:$0xff]
        %v438 = vld [vmem:[#allocation2 + $0x6f8] sm:$0xff]
        %v439 = vld [vmem:[#allocation2 + $0x700] sm:$0xff]
        %v440 = vld [vmem:[#allocation2 + $0x708] sm:$0xff]
        %v441 = vld [vmem:[#allocation2 + $0x710] sm:$0xff]
        %v442 = vld [vmem:[#allocation2 + $0x718] sm:$0xff]
        %v443 = vld [vmem:[#allocation2 + $0x720] sm:$0xff]
        %v444 = vld [vmem:[#allocation2 + $0x728] sm:$0xff]
        %v445 = vld [vmem:[#allocation2 + $0x730] sm:$0xff]
        %v446 = vld [vmem:[#allocation2 + $0x738] sm:$0xff]
        %v447 = vld [vmem:[#allocation2 + $0x740] sm:$0xff]
        %v448 = vld [vmem:[#allocation2 + $0x748] sm:$0xff]
        %v449 = vld [vmem:[#allocation2 + $0x750] sm:$0xff]
        %v450 = vld [vmem:[#allocation2 + $0x758] sm:$0xff]
        %v451 = vld [vmem:[#allocation2 + $0x760] sm:$0xff]
        %v452 = vld [vmem:[#allocation2 + $0x768] sm:$0xff]
        %v453 = vld [vmem:[#allocation2 + $0x770] sm:$0xff]
        %v454 = vld [vmem:[#allocation2 + $0x778] sm:$0xff]
        %v455 = vld [vmem:[#allocation2 + $0x780] sm:$0xff]
        %v456 = vld [vmem:[#allocation2 + $0x788] sm:$0xff]
        %v457 = vld [vmem:[#allocation2 + $0x790] sm:$0xff]
        %v458 = vld [vmem:[#allocation2 + $0x798] sm:$0xff]
        %v459 = vld [vmem:[#allocation2 + $0x7a0] sm:$0xff]
        %v460 = vld [vmem:[#allocation2 + $0x7a8] sm:$0xff]
        %v461 = vld [vmem:[#allocation2 + $0x7b0] sm:$0xff]
        %v462 = vld [vmem:[#allocation2 + $0x7b8] sm:$0xff]
        %v463 = vld [vmem:[#allocation2 + $0x7c0] sm:$0xff]
        %v464 = vld [vmem:[#allocation2 + $0x7c8] sm:$0xff]
        %v465 = vld [vmem:[#allocation2 + $0x7d0] sm:$0xff]
        %v466 = vld [vmem:[#allocation2 + $0x7d8] sm:$0xff]
        %v467 = vld [vmem:[#allocation2 + $0x7e0] sm:$0xff]
        %v468 = vld [vmem:[#allocation2 + $0x7e8] sm:$0xff]
        %v469 = vld [vmem:[#allocation2 + $0x7f0] sm:$0xff]
        %v470 = vld [vmem:[#allocation2 + $0x7f8] sm:$0xff]
        %471 = vmatprep.subr.mxu0 %v336
        %472 = vmatpush1.msra.mxu0 %v335
        %473 = vmatprep.subr.mxu0 %v328
        %474 = vmatpush1.msra.mxu0 %v327
        %475 = vmatprep.subr.mxu0 %v320
        %476 = vmatpush1.msra.mxu0 %v319
        %477 = vmatprep.subr.mxu0 %v312
        %478 = vmatpush1.msra.mxu0 %v311
        %479 = vmatprep.subr.mxu0 %v304
        %480 = vmatpush1.msra.mxu0 %v303
        %481 = vmatprep.subr.mxu0 %v296
        %482 = vmatpush1.msra.mxu0 %v295
        %483 = vmatprep.subr.mxu0 %v288
        %484 = vmatpush1.msra.mxu0 %v287
        %485 = vmatprep.subr.mxu0 %v280
        %486 = vmatpush1.msra.mxu0 %v279
        %487 = vmatprep.subr.mxu0 %v272
        %488 = vmatpush1.msra.mxu0 %v271
        %489 = vmatprep.subr.mxu0 %v264
        %490 = vmatpush1.msra.mxu0 %v263
        %491 = vmatprep.subr.mxu0 %v256
        %492 = vmatpush1.msra.mxu0 %v255
        %493 = vmatprep.subr.mxu0 %v248
        %494 = vmatpush1.msra.mxu0 %v247
        %495 = vmatprep.subr.mxu0 %v240
        %496 = vmatpush1.msra.mxu0 %v239
        %497 = vmatprep.subr.mxu0 %v232
        %498 = vmatpush1.msra.mxu0 %v231
        %499 = vmatprep.subr.mxu0 %v224
        %500 = vmatpush1.msra.mxu0 %v223
        %501 = vmatprep.subr.mxu0 %v216
        %502 = vmatpush1.msra.mxu0 %v215
        %503 = vmatprep.subr.mxu0 %v464
        %504 = vmatpush2.msra.mxu0 %v463
        %505 = vmatprep.subr.mxu0 %v456
        %506 = vmatpush2.msra.mxu0 %v455
        %507 = vmatprep.subr.mxu0 %v448
        %508 = vmatpush2.msra.mxu0 %v447
        %509 = vmatprep.subr.mxu0 %v440
        %510 = vmatpush2.msra.mxu0 %v439
        %511 = vmatprep.subr.mxu0 %v432
        %512 = vmatpush2.msra.mxu0 %v431
        %513 = vmatprep.subr.mxu0 %v424
        %514 = vmatpush2.msra.mxu0 %v423
        %515 = vmatprep.subr.mxu0 %v416
        %516 = vmatpush2.msra.mxu0 %v415
        %517 = vmatprep.subr.mxu0 %v408
        %518 = vmatpush2.msra.mxu0 %v407
        %519 = vmatprep.subr.mxu0 %v400
        %520 = vmatpush2.msra.mxu0 %v399
        %521 = vmatprep.subr.mxu0 %v392
        %522 = vmatpush2.msra.mxu0 %v391
        %523 = vmatprep.subr.mxu0 %v384
        %524 = vmatpush2.msra.mxu0 %v383
        %525 = vmatprep.subr.mxu0 %v376
        %526 = vmatpush2.msra.mxu0 %v375
        %527 = vmatprep.subr.mxu0 %v368
        %528 = vmatpush2.msra.mxu0 %v367
        %529 = vmatprep.subr.mxu0 %v360
        %530 = vmatpush2.msra.mxu0 %v359
        %531 = vmatprep.subr.mxu0 %v352
        %532 = vmatpush2.msra.mxu0 %v351
        %533 = vmatprep.subr.mxu0 %v344
        %534 = vmatpush2.msra.mxu0 %v343
        %535 = vmatprep.mubr.f32.mxu0 %v214
        %536 = vmatmul.mubr.f32.gmra.mxu0 %v213
        %v537 = vpop.f32.mrf.mxu0
        %v538 = vadd.f32 0.0, %v537
        %v539 = vpop.f32.mrf.mxu0
        %v540 = vadd.f32 0.0, %v539
        %541 = vdwg.mxu0
        %542 = vmatprep.subr.mxu0 %v338
        %543 = vmatpush1.msra.mxu0 %v337
        %544 = vmatprep.subr.mxu0 %v330
        %545 = vmatpush1.msra.mxu0 %v329
        %546 = vmatprep.subr.mxu0 %v322
        %547 = vmatpush1.msra.mxu0 %v321
        %548 = vmatprep.subr.mxu0 %v314
        %549 = vmatpush1.msra.mxu0 %v313
        %550 = vmatprep.subr.mxu0 %v306
        %551 = vmatpush1.msra.mxu0 %v305
        %552 = vmatprep.subr.mxu0 %v298
        %553 = vmatpush1.msra.mxu0 %v297
        %554 = vmatprep.subr.mxu0 %v290
        %555 = vmatpush1.msra.mxu0 %v289
        %556 = vmatprep.subr.mxu0 %v282
        %557 = vmatpush1.msra.mxu0 %v281
        %558 = vmatprep.subr.mxu0 %v274
        %559 = vmatpush1.msra.mxu0 %v273
        %560 = vmatprep.subr.mxu0 %v266
        %561 = vmatpush1.msra.mxu0 %v265
        %562 = vmatprep.subr.mxu0 %v258
        %563 = vmatpush1.msra.mxu0 %v257
        %564 = vmatprep.subr.mxu0 %v250
        %565 = vmatpush1.msra.mxu0 %v249
        %566 = vmatprep.subr.mxu0 %v242
        %567 = vmatpush1.msra.mxu0 %v241
        %568 = vmatprep.subr.mxu0 %v234
        %569 = vmatpush1.msra.mxu0 %v233
        %570 = vmatprep.subr.mxu0 %v226
        %571 = vmatpush1.msra.mxu0 %v225
        %572 = vmatprep.subr.mxu0 %v218
        %573 = vmatpush1.msra.mxu0 %v217
        %574 = vmatprep.subr.mxu0 %v466
        %575 = vmatpush2.msra.mxu0 %v465
        %576 = vmatprep.subr.mxu0 %v458
        %577 = vmatpush2.msra.mxu0 %v457
        %578 = vmatprep.subr.mxu0 %v450
        %579 = vmatpush2.msra.mxu0 %v449
        %580 = vmatprep.subr.mxu0 %v442
        %581 = vmatpush2.msra.mxu0 %v441
        %582 = vmatprep.subr.mxu0 %v434
        %583 = vmatpush2.msra.mxu0 %v433
        %584 = vmatprep.subr.mxu0 %v426
        %585 = vmatpush2.msra.mxu0 %v425
        %586 = vmatprep.subr.mxu0 %v418
        %587 = vmatpush2.msra.mxu0 %v417
        %588 = vmatprep.subr.mxu0 %v410
        %589 = vmatpush2.msra.mxu0 %v409
        %590 = vmatprep.subr.mxu0 %v402
        %591 = vmatpush2.msra.mxu0 %v401
        %592 = vmatprep.subr.mxu0 %v394
        %593 = vmatpush2.msra.mxu0 %v393
        %594 = vmatprep.subr.mxu0 %v386
        %595 = vmatpush2.msra.mxu0 %v385
        %596 = vmatprep.subr.mxu0 %v378
        %597 = vmatpush2.msra.mxu0 %v377
        %598 = vmatprep.subr.mxu0 %v370
        %599 = vmatpush2.msra.mxu0 %v369
        %600 = vmatprep.subr.mxu0 %v362
        %601 = vmatpush2.msra.mxu0 %v361
        %602 = vmatprep.subr.mxu0 %v354
        %603 = vmatpush2.msra.mxu0 %v353
        %604 = vmatprep.subr.mxu0 %v346
        %605 = vmatpush2.msra.mxu0 %v345
        %606 = vmatprep.mubr.f32.mxu0 %v214
        %607 = vmatmul.mubr.f32.gmra.mxu0 %v213
        %v608 = vpop.f32.mrf.mxu0
        %v609 = vadd.f32 0.0, %v608
        %v610 = vpop.f32.mrf.mxu0
        %v611 = vadd.f32 0.0, %v610
        %612 = vdwg.mxu0
        %613 = vmatprep.subr.mxu0 %v340
        %614 = vmatpush1.msra.mxu0 %v339
        %615 = vmatprep.subr.mxu0 %v332
        %616 = vmatpush1.msra.mxu0 %v331
        %617 = vmatprep.subr.mxu0 %v324
        %618 = vmatpush1.msra.mxu0 %v323
        %619 = vmatprep.subr.mxu0 %v316
        %620 = vmatpush1.msra.mxu0 %v315
        %621 = vmatprep.subr.mxu0 %v308
        %622 = vmatpush1.msra.mxu0 %v307
        %623 = vmatprep.subr.mxu0 %v300
        %624 = vmatpush1.msra.mxu0 %v299
        %625 = vmatprep.subr.mxu0 %v292
        %626 = vmatpush1.msra.mxu0 %v291
        %627 = vmatprep.subr.mxu0 %v284
        %628 = vmatpush1.msra.mxu0 %v283
        %629 = vmatprep.subr.mxu0 %v276
        %630 = vmatpush1.msra.mxu0 %v275
        %631 = vmatprep.subr.mxu0 %v268
        %632 = vmatpush1.msra.mxu0 %v267
        %633 = vmatprep.subr.mxu0 %v260
        %634 = vmatpush1.msra.mxu0 %v259
        %635 = vmatprep.subr.mxu0 %v252
        %636 = vmatpush1.msra.mxu0 %v251
        %637 = vmatprep.subr.mxu0 %v244
        %638 = vmatpush1.msra.mxu0 %v243
        %639 = vmatprep.subr.mxu0 %v236
        %640 = vmatpush1.msra.mxu0 %v235
        %641 = vmatprep.subr.mxu0 %v228
        %642 = vmatpush1.msra.mxu0 %v227
        %643 = vmatprep.subr.mxu0 %v220
        %644 = vmatpush1.msra.mxu0 %v219
        %645 = vmatprep.subr.mxu0 %v468
        %646 = vmatpush2.msra.mxu0 %v467
        %647 = vmatprep.subr.mxu0 %v460
        %648 = vmatpush2.msra.mxu0 %v459
        %649 = vmatprep.subr.mxu0 %v452
        %650 = vmatpush2.msra.mxu0 %v451
        %651 = vmatprep.subr.mxu0 %v444
        %652 = vmatpush2.msra.mxu0 %v443
        %653 = vmatprep.subr.mxu0 %v436
        %654 = vmatpush2.msra.mxu0 %v435
        %655 = vmatprep.subr.mxu0 %v428
        %656 = vmatpush2.msra.mxu0 %v427
        %657 = vmatprep.subr.mxu0 %v420
        %658 = vmatpush2.msra.mxu0 %v419
        %659 = vmatprep.subr.mxu0 %v412
        %660 = vmatpush2.msra.mxu0 %v411
        %661 = vmatprep.subr.mxu0 %v404
        %662 = vmatpush2.msra.mxu0 %v403
        %663 = vmatprep.subr.mxu0 %v396
        %664 = vmatpush2.msra.mxu0 %v395
        %665 = vmatprep.subr.mxu0 %v388
        %666 = vmatpush2.msra.mxu0 %v387
        %667 = vmatprep.subr.mxu0 %v380
        %668 = vmatpush2.msra.mxu0 %v379
        %669 = vmatprep.subr.mxu0 %v372
        %670 = vmatpush2.msra.mxu0 %v371
        %671 = vmatprep.subr.mxu0 %v364
        %672 = vmatpush2.msra.mxu0 %v363
        %673 = vmatprep.subr.mxu0 %v356
        %674 = vmatpush2.msra.mxu0 %v355
        %675 = vmatprep.subr.mxu0 %v348
        %676 = vmatpush2.msra.mxu0 %v347
        %677 = vmatprep.mubr.f32.mxu0 %v214
        %678 = vmatmul.mubr.f32.gmra.mxu0 %v213
        %v679 = vpop.f32.mrf.mxu0
        %v680 = vadd.f32 0.0, %v679
        %v681 = vpop.f32.mrf.mxu0
        %v682 = vadd.f32 0.0, %v681
        %683 = vdwg.mxu0
        %684 = vmatprep.subr.mxu0 %v342
        %685 = vmatpush1.msra.mxu0 %v341
        %686 = vmatprep.subr.mxu0 %v334
        %687 = vmatpush1.msra.mxu0 %v333
        %688 = vmatprep.subr.mxu0 %v326
        %689 = vmatpush1.msra.mxu0 %v325
        %690 = vmatprep.subr.mxu0 %v318
        %691 = vmatpush1.msra.mxu0 %v317
        %692 = vmatprep.subr.mxu0 %v310
        %693 = vmatpush1.msra.mxu0 %v309
        %694 = vmatprep.subr.mxu0 %v302
        %695 = vmatpush1.msra.mxu0 %v301
        %696 = vmatprep.subr.mxu0 %v294
        %697 = vmatpush1.msra.mxu0 %v293
        %698 = vmatprep.subr.mxu0 %v286
        %699 = vmatpush1.msra.mxu0 %v285
        %700 = vmatprep.subr.mxu0 %v278
        %701 = vmatpush1.msra.mxu0 %v277
        %702 = vmatprep.subr.mxu0 %v270
        %703 = vmatpush1.msra.mxu0 %v269
        %704 = vmatprep.subr.mxu0 %v262
        %705 = vmatpush1.msra.mxu0 %v261
        %706 = vmatprep.subr.mxu0 %v254
        %707 = vmatpush1.msra.mxu0 %v253
        %708 = vmatprep.subr.mxu0 %v246
        %709 = vmatpush1.msra.mxu0 %v245
        %710 = vmatprep.subr.mxu0 %v238
        %711 = vmatpush1.msra.mxu0 %v237
        %712 = vmatprep.subr.mxu0 %v230
        %713 = vmatpush1.msra.mxu0 %v229
        %714 = vmatprep.subr.mxu0 %v222
        %715 = vmatpush1.msra.mxu0 %v221
        %716 = vmatprep.subr.mxu0 %v470
        %717 = vmatpush2.msra.mxu0 %v469
        %718 = vmatprep.subr.mxu0 %v462
        %719 = vmatpush2.msra.mxu0 %v461
        %720 = vmatprep.subr.mxu0 %v454
        %721 = vmatpush2.msra.mxu0 %v453
        %722 = vmatprep.subr.mxu0 %v446
        %723 = vmatpush2.msra.mxu0 %v445
        %724 = vmatprep.subr.mxu0 %v438
        %725 = vmatpush2.msra.mxu0 %v437
        %726 = vmatprep.subr.mxu0 %v430
        %727 = vmatpush2.msra.mxu0 %v429
        %728 = vmatprep.subr.mxu0 %v422
        %729 = vmatpush2.msra.mxu0 %v421
        %730 = vmatprep.subr.mxu0 %v414
        %731 = vmatpush2.msra.mxu0 %v413
        %732 = vmatprep.subr.mxu0 %v406
        %733 = vmatpush2.msra.mxu0 %v405
        %734 = vmatprep.subr.mxu0 %v398
        %735 = vmatpush2.msra.mxu0 %v397
        %736 = vmatprep.subr.mxu0 %v390
        %737 = vmatpush2.msra.mxu0 %v389
        %738 = vmatprep.subr.mxu0 %v382
        %739 = vmatpush2.msra.mxu0 %v381
        %740 = vmatprep.subr.mxu0 %v374
        %741 = vmatpush2.msra.mxu0 %v373
        %742 = vmatprep.subr.mxu0 %v366
        %743 = vmatpush2.msra.mxu0 %v365
        %744 = vmatprep.subr.mxu0 %v358
        %745 = vmatpush2.msra.mxu0 %v357
        %746 = vmatprep.subr.mxu0 %v350
        %747 = vmatpush2.msra.mxu0 %v349
        %748 = vmatprep.mubr.f32.mxu0 %v214
        %749 = vmatmul.mubr.f32.gmra.mxu0 %v213
        %v750 = vpop.f32.mrf.mxu0
        %v751 = vadd.f32 0.0, %v750
        %v752 = vpop.f32.mrf.mxu0
        %v753 = vadd.f32 0.0, %v752
        %754 = vdwg.mxu0
        %v755 = vlaneseq
        %v756 = vand.u32 %v755, 127
        %v757 = vadd.s32 %v756, 128
        %v758 = vadd.s32 %v756, 256
        %v759 = vadd.s32 %v756, 384
        %v760 = vadd.s32 %v756, 512
        %v761 = vadd.s32 %v756, 640
        %v762 = vadd.s32 %v756, 768
        %v763 = vadd.s32 %v756, 896
        %v764 = vshra.s32 %v756, 5
        %v765 = vshra.s32 %v757, 5
        %v766 = vshra.s32 %v758, 5
        %v767 = vshra.s32 %v759, 5
        %v768 = vshra.s32 %v760, 5
        %v769 = vshra.s32 %v761, 5
        %v770 = vshra.s32 %v762, 5
        %v771 = vshra.s32 %v763, 5
        %v772 = vand.u32 %v756, 31
        %v773 = vand.u32 %v757, 31
        %v774 = vand.u32 %v758, 31
        %v775 = vand.u32 %v759, 31
        %v776 = vand.u32 %v760, 31
        %v777 = vand.u32 %v761, 31
        %v778 = vand.u32 %v762, 31
        %v779 = vand.u32 %v763, 31
        %788 = vrot.lane.b32.xlu0 %v538, 33
        %v789 = vpop.permute.xlu0 %788
        %790 = vrot.lane.b32.xlu0 %v540, 33
        %v791 = vpop.permute.xlu0 %790
        %792 = vrot.lane.b32.xlu0 %v609, 33
        %v793 = vpop.permute.xlu0 %792
        %794 = vrot.lane.b32.xlu0 %v611, 33
        %v795 = vpop.permute.xlu0 %794
        %796 = vrot.lane.b32.xlu0 %v680, 33
        %v797 = vpop.permute.xlu0 %796
        %798 = vrot.lane.b32.xlu0 %v682, 33
        %v799 = vpop.permute.xlu0 %798
        %800 = vrot.lane.b32.xlu0 %v751, 33
        %v801 = vpop.permute.xlu0 %800
        %802 = vrot.lane.b32.xlu0 %v753, 33
        %v803 = vpop.permute.xlu0 %802
        %vm804 = vcmask 269312
        %v805 = vsel %vm804, %v789, %v791
        %v806 = vsel %vm804, %v791, %v793
        %v807 = vsel %vm804, %v793, %v795
        %v808 = vsel %vm804, %v795, %v797
        %v809 = vsel %vm804, %v797, %v799
        %v810 = vsel %vm804, %v799, %v801
        %v811 = vsel %vm804, %v801, %v803
        %v820 = vsel %vm804, 0.0, %v789
        %v821 = vadd.s32 %v772, 4294967295
        %v822 = vadd.s32 %v773, 4294967295
        %v823 = vadd.s32 %v774, 4294967295
        %v824 = vadd.s32 %v775, 4294967295
        %v825 = vadd.s32 %v776, 4294967295
        %v826 = vadd.s32 %v777, 4294967295
        %v827 = vadd.s32 %v778, 4294967295
        %v828 = vadd.s32 %v779, 4294967295
        %vm829 = vcmp.ge.s32.totalorder %v821, 0
        %vm830 = vcmp.ge.s32.totalorder %v822, 0
        %vm831 = vcmp.ge.s32.totalorder %v823, 0
        %vm832 = vcmp.ge.s32.totalorder %v824, 0
        %vm833 = vcmp.ge.s32.totalorder %v825, 0
        %vm834 = vcmp.ge.s32.totalorder %v826, 0
        %vm835 = vcmp.ge.s32.totalorder %v827, 0
        %vm836 = vcmp.ge.s32.totalorder %v828, 0
        %vm837 = vcmp.lt.s32.totalorder %v821, 32
        %vm838 = vcmp.lt.s32.totalorder %v822, 32
        %vm839 = vcmp.lt.s32.totalorder %v823, 32
        %vm840 = vcmp.lt.s32.totalorder %v824, 32
        %vm841 = vcmp.lt.s32.totalorder %v825, 32
        %vm842 = vcmp.lt.s32.totalorder %v826, 32
        %vm843 = vcmp.lt.s32.totalorder %v827, 32
        %vm844 = vcmp.lt.s32.totalorder %v828, 32
        %vm845 = vmand %vm829, %vm837
        %vm846 = vmand %vm830, %vm838
        %vm847 = vmand %vm831, %vm839
        %vm848 = vmand %vm832, %vm840
        %vm849 = vmand %vm833, %vm841
        %vm850 = vmand %vm834, %vm842
        %vm851 = vmand %vm835, %vm843
        %vm852 = vmand %vm836, %vm844
        %v853 = vadd.s32 %v764, 4294967295
        %v854 = vadd.s32 %v765, 4294967295
        %v855 = vadd.s32 %v766, 4294967295
        %v856 = vadd.s32 %v767, 4294967295
        %v857 = vadd.s32 %v768, 4294967295
        %v858 = vadd.s32 %v769, 4294967295
        %v859 = vadd.s32 %v770, 4294967295
        %v860 = vadd.s32 %v771, 4294967295
        %vm861 = vcmp.ge.s32.totalorder %v853, 0
        %vm862 = vcmp.ge.s32.totalorder %v854, 0
        %vm863 = vcmp.ge.s32.totalorder %v855, 0
        %vm864 = vcmp.ge.s32.totalorder %v856, 0
        %vm865 = vcmp.ge.s32.totalorder %v857, 0
        %vm866 = vcmp.ge.s32.totalorder %v858, 0
        %vm867 = vcmp.ge.s32.totalorder %v859, 0
        %vm868 = vcmp.ge.s32.totalorder %v860, 0
        %vm869 = vmand %vm845, %vm861
        %vm870 = vmand %vm846, %vm862
        %vm871 = vmand %vm847, %vm863
        %vm872 = vmand %vm848, %vm864
        %vm873 = vmand %vm849, %vm865
        %vm874 = vmand %vm850, %vm866
        %vm875 = vmand %vm851, %vm867
        %vm876 = vmand %vm852, %vm868
        %vm877 = vcmp.lt.s32.totalorder %v853, 32
        %vm878 = vcmp.lt.s32.totalorder %v854, 32
        %vm879 = vcmp.lt.s32.totalorder %v855, 32
        %vm880 = vcmp.lt.s32.totalorder %v856, 32
        %vm881 = vcmp.lt.s32.totalorder %v857, 32
        %vm882 = vcmp.lt.s32.totalorder %v858, 32
        %vm883 = vcmp.lt.s32.totalorder %v859, 32
        %vm884 = vcmp.lt.s32.totalorder %v860, 32
        %vm885 = vmand %vm869, %vm877
        %vm886 = vmand %vm870, %vm878
        %vm887 = vmand %vm871, %vm879
        %vm888 = vmand %vm872, %vm880
        %vm889 = vmand %vm873, %vm881
        %vm890 = vmand %vm874, %vm882
        %vm891 = vmand %vm875, %vm883
        %vm892 = vmand %vm876, %vm884
        %v893 = vsel %vm885, 1, 0
        %v894 = vsel %vm886, 1, 0
        %v895 = vsel %vm887, 1, 0
        %v896 = vsel %vm888, 1, 0
        %v897 = vsel %vm889, 1, 0
        %v898 = vsel %vm890, 1, 0
        %v899 = vsel %vm891, 1, 0
        %v900 = vsel %vm892, 1, 0
        %vm901 = vcmp.eq.s32.totalorder %v893, 1
        %vm902 = vcmp.eq.s32.totalorder %v894, 1
        %vm903 = vcmp.eq.s32.totalorder %v895, 1
        %vm904 = vcmp.eq.s32.totalorder %v896, 1
        %vm905 = vcmp.eq.s32.totalorder %v897, 1
        %vm906 = vcmp.eq.s32.totalorder %v898, 1
        %vm907 = vcmp.eq.s32.totalorder %v899, 1
        %vm908 = vcmp.eq.s32.totalorder %v900, 1
        %v909 = vsel %vm901, %v820, 0.0
        %v910 = vsel %vm902, %v805, 0.0
        %v911 = vsel %vm903, %v806, 0.0
        %v912 = vsel %vm904, %v807, 0.0
        %v913 = vsel %vm905, %v808, 0.0
        %v914 = vsel %vm906, %v809, 0.0
        %v915 = vsel %vm907, %v810, 0.0
        %v916 = vsel %vm908, %v811, 0.0
        %v917 = vld [vmem:[%s2] sm:$0xff]
        %918 = vrot.lane.b32.xlu0 %v538, 32
        %v919 = vpop.permute.xlu0 %918
        %920 = vrot.lane.b32.xlu0 %v540, 32
        %v921 = vpop.permute.xlu0 %920
        %922 = vrot.lane.b32.xlu0 %v609, 32
        %v923 = vpop.permute.xlu0 %922
        %924 = vrot.lane.b32.xlu0 %v611, 32
        %v925 = vpop.permute.xlu0 %924
        %926 = vrot.lane.b32.xlu0 %v680, 32
        %v927 = vpop.permute.xlu0 %926
        %928 = vrot.lane.b32.xlu0 %v682, 32
        %v929 = vpop.permute.xlu0 %928
        %930 = vrot.lane.b32.xlu0 %v751, 32
        %v931 = vpop.permute.xlu0 %930
        %932 = vrot.lane.b32.xlu0 %v753, 32
        %v933 = vpop.permute.xlu0 %932
        %vm934 = vcmask 261120
        %v935 = vsel %vm934, %v919, %v921
        %v936 = vsel %vm934, %v921, %v923
        %v937 = vsel %vm934, %v923, %v925
        %v938 = vsel %vm934, %v925, %v927
        %v939 = vsel %vm934, %v927, %v929
        %v940 = vsel %vm934, %v929, %v931
        %v941 = vsel %vm934, %v931, %v933
        %v950 = vsel %vm934, 0.0, %v919
        %vm951 = vcmp.ge.s32.totalorder %v772, 0
        %vm952 = vcmp.ge.s32.totalorder %v773, 0
        %vm953 = vcmp.ge.s32.totalorder %v774, 0
        %vm954 = vcmp.ge.s32.totalorder %v775, 0
        %vm955 = vcmp.ge.s32.totalorder %v776, 0
        %vm956 = vcmp.ge.s32.totalorder %v777, 0
        %vm957 = vcmp.ge.s32.totalorder %v778, 0
        %vm958 = vcmp.ge.s32.totalorder %v779, 0
        %vm959 = vcmp.lt.s32.totalorder %v772, 32
        %vm960 = vcmp.lt.s32.totalorder %v773, 32
        %vm961 = vcmp.lt.s32.totalorder %v774, 32
        %vm962 = vcmp.lt.s32.totalorder %v775, 32
        %vm963 = vcmp.lt.s32.totalorder %v776, 32
        %vm964 = vcmp.lt.s32.totalorder %v777, 32
        %vm965 = vcmp.lt.s32.totalorder %v778, 32
        %vm966 = vcmp.lt.s32.totalorder %v779, 32
        %vm967 = vmand %vm951, %vm959
        %vm968 = vmand %vm952, %vm960
        %vm969 = vmand %vm953, %vm961
        %vm970 = vmand %vm954, %vm962
        %vm971 = vmand %vm955, %vm963
        %vm972 = vmand %vm956, %vm964
        %vm973 = vmand %vm957, %vm965
        %vm974 = vmand %vm958, %vm966
        %vm975 = vmand %vm967, %vm861
        %vm976 = vmand %vm968, %vm862
        %vm977 = vmand %vm969, %vm863
        %vm978 = vmand %vm970, %vm864
        %vm979 = vmand %vm971, %vm865
        %vm980 = vmand %vm972, %vm866
        %vm981 = vmand %vm973, %vm867
        %vm982 = vmand %vm974, %vm868
        %vm983 = vmand %vm975, %vm877
        %vm984 = vmand %vm976, %vm878
        %vm985 = vmand %vm977, %vm879
        %vm986 = vmand %vm978, %vm880
        %vm987 = vmand %vm979, %vm881
        %vm988 = vmand %vm980, %vm882
        %vm989 = vmand %vm981, %vm883
        %vm990 = vmand %vm982, %vm884
        %v991 = vsel %vm983, 1, 0
        %v992 = vsel %vm984, 1, 0
        %v993 = vsel %vm985, 1, 0
        %v994 = vsel %vm986, 1, 0
        %v995 = vsel %vm987, 1, 0
        %v996 = vsel %vm988, 1, 0
        %v997 = vsel %vm989, 1, 0
        %v998 = vsel %vm990, 1, 0
        %vm999 = vcmp.eq.s32.totalorder %v991, 1
        %vm1000 = vcmp.eq.s32.totalorder %v992, 1
        %vm1001 = vcmp.eq.s32.totalorder %v993, 1
        %vm1002 = vcmp.eq.s32.totalorder %v994, 1
        %vm1003 = vcmp.eq.s32.totalorder %v995, 1
        %vm1004 = vcmp.eq.s32.totalorder %v996, 1
        %vm1005 = vcmp.eq.s32.totalorder %v997, 1
        %vm1006 = vcmp.eq.s32.totalorder %v998, 1
        %v1007 = vsel %vm999, %v950, 0.0
        %v1008 = vsel %vm1000, %v935, 0.0
        %v1009 = vsel %vm1001, %v936, 0.0
        %v1010 = vsel %vm1002, %v937, 0.0
        %v1011 = vsel %vm1003, %v938, 0.0
        %v1012 = vsel %vm1004, %v939, 0.0
        %v1013 = vsel %vm1005, %v940, 0.0
        %v1014 = vsel %vm1006, %v941, 0.0
        %s1015 = scalar_lea.vmem %s2, 8
        %v1016 = vld [vmem:[%s1015] sm:$0xff]
        %vm1017 = vcmask 64512
        %v1019 = vsel %vm1017, %v1016, 0
        %1021 = vmatprep.subr.mxu0 0.0
        %1022 = vmatpush1.msra.mxu0 0.0
        %1023 = vmatprep.subr.mxu0 0.0
        %1024 = vmatpush1.msra.mxu0 0.0
        %1025 = vmatprep.subr.mxu0 0.0
        %1026 = vmatpush1.msra.mxu0 0.0
        %1027 = vmatprep.subr.mxu0 0.0
        %1028 = vmatpush1.msra.mxu0 0.0
        %1029 = vmatprep.subr.mxu0 0.0
        %1030 = vmatpush1.msra.mxu0 0.0
        %1031 = vmatprep.subr.mxu0 0.0
        %1032 = vmatpush1.msra.mxu0 0.0
        %1033 = vmatprep.subr.mxu0 0.0
        %1034 = vmatpush1.msra.mxu0 0.0
        %1035 = vmatprep.subr.mxu0 0.0
        %1036 = vmatpush1.msra.mxu0 0.0
        %1037 = vmatprep.subr.mxu0 0.0
        %1038 = vmatpush1.msra.mxu0 0.0
        %1039 = vmatprep.subr.mxu0 0.0
        %1040 = vmatpush1.msra.mxu0 0.0
        %1041 = vmatprep.subr.mxu0 0.0
        %1042 = vmatpush1.msra.mxu0 0.0
        %1043 = vmatprep.subr.mxu0 0.0
        %1044 = vmatpush1.msra.mxu0 0.0
        %1045 = vmatprep.subr.mxu0 0.0
        %1046 = vmatpush1.msra.mxu0 0.0
        %1047 = vmatprep.subr.mxu0 0.0
        %1048 = vmatpush1.msra.mxu0 0.0
        %1049 = vmatprep.subr.mxu0 0.0
        %1050 = vmatpush1.msra.mxu0 0.0
        %1051 = vmatprep.subr.mxu0 %v1008
        %1052 = vmatpush1.msra.mxu0 %v1007
        %1053 = vmatprep.subr.mxu0 0.0
        %1054 = vmatpush2.msra.mxu0 0.0
        %1055 = vmatprep.subr.mxu0 0.0
        %1056 = vmatpush2.msra.mxu0 0.0
        %1057 = vmatprep.subr.mxu0 0.0
        %1058 = vmatpush2.msra.mxu0 0.0
        %1059 = vmatprep.subr.mxu0 0.0
        %1060 = vmatpush2.msra.mxu0 0.0
        %1061 = vmatprep.subr.mxu0 0.0
        %1062 = vmatpush2.msra.mxu0 0.0
        %1063 = vmatprep.subr.mxu0 0.0
        %1064 = vmatpush2.msra.mxu0 0.0
        %1065 = vmatprep.subr.mxu0 0.0
        %1066 = vmatpush2.msra.mxu0 0.0
        %1067 = vmatprep.subr.mxu0 0.0
        %1068 = vmatpush2.msra.mxu0 0.0
        %1069 = vmatprep.subr.mxu0 0.0
        %1070 = vmatpush2.msra.mxu0 0.0
        %1071 = vmatprep.subr.mxu0 0.0
        %1072 = vmatpush2.msra.mxu0 0.0
        %1073 = vmatprep.subr.mxu0 0.0
        %1074 = vmatpush2.msra.mxu0 0.0
        %1075 = vmatprep.subr.mxu0 0.0
        %1076 = vmatpush2.msra.mxu0 0.0
        %1077 = vmatprep.subr.mxu0 0.0
        %1078 = vmatpush2.msra.mxu0 0.0
        %1079 = vmatprep.subr.mxu0 0.0
        %1080 = vmatpush2.msra.mxu0 0.0
        %1081 = vmatprep.subr.mxu0 0.0
        %1082 = vmatpush2.msra.mxu0 0.0
        %1083 = vmatprep.subr.mxu0 0.0
        %1084 = vmatpush2.msra.mxu0 0.0
        %1085 = vmatprep.mubr.f32.mxu0 0.0
        %1086 = vmatmul.mubr.f32.gmra.mxu0 %v1019
        %v1087 = vpop.f32.mrf.mxu0
        %v1088 = vadd.f32 0.0, %v1087
        %v1089 = vpop.f32.mrf.mxu0
        %v1090 = vadd.f32 0.0, %v1089
        %1091 = vdwg.mxu0
        %1092 = vmatprep.subr.mxu0 0.0
        %1093 = vmatpush1.msra.mxu0 0.0
        %1094 = vmatprep.subr.mxu0 0.0
        %1095 = vmatpush1.msra.mxu0 0.0
        %1096 = vmatprep.subr.mxu0 0.0
        %1097 = vmatpush1.msra.mxu0 0.0
        %1098 = vmatprep.subr.mxu0 0.0
        %1099 = vmatpush1.msra.mxu0 0.0
        %1100 = vmatprep.subr.mxu0 0.0
        %1101 = vmatpush1.msra.mxu0 0.0
        %1102 = vmatprep.subr.mxu0 0.0
        %1103 = vmatpush1.msra.mxu0 0.0
        %1104 = vmatprep.subr.mxu0 0.0
        %1105 = vmatpush1.msra.mxu0 0.0
        %1106 = vmatprep.subr.mxu0 0.0
        %1107 = vmatpush1.msra.mxu0 0.0
        %1108 = vmatprep.subr.mxu0 0.0
        %1109 = vmatpush1.msra.mxu0 0.0
        %1110 = vmatprep.subr.mxu0 0.0
        %1111 = vmatpush1.msra.mxu0 0.0
        %1112 = vmatprep.subr.mxu0 0.0
        %1113 = vmatpush1.msra.mxu0 0.0
        %1114 = vmatprep.subr.mxu0 0.0
        %1115 = vmatpush1.msra.mxu0 0.0
        %1116 = vmatprep.subr.mxu0 0.0
        %1117 = vmatpush1.msra.mxu0 0.0
        %1118 = vmatprep.subr.mxu0 0.0
        %1119 = vmatpush1.msra.mxu0 0.0
        %1120 = vmatprep.subr.mxu0 0.0
        %1121 = vmatpush1.msra.mxu0 0.0
        %1122 = vmatprep.subr.mxu0 %v1010
        %1123 = vmatpush1.msra.mxu0 %v1009
        %1124 = vmatprep.subr.mxu0 0.0
        %1125 = vmatpush2.msra.mxu0 0.0
        %1126 = vmatprep.subr.mxu0 0.0
        %1127 = vmatpush2.msra.mxu0 0.0
        %1128 = vmatprep.subr.mxu0 0.0
        %1129 = vmatpush2.msra.mxu0 0.0
        %1130 = vmatprep.subr.mxu0 0.0
        %1131 = vmatpush2.msra.mxu0 0.0
        %1132 = vmatprep.subr.mxu0 0.0
        %1133 = vmatpush2.msra.mxu0 0.0
        %1134 = vmatprep.subr.mxu0 0.0
        %1135 = vmatpush2.msra.mxu0 0.0
        %1136 = vmatprep.subr.mxu0 0.0
        %1137 = vmatpush2.msra.mxu0 0.0
        %1138 = vmatprep.subr.mxu0 0.0
        %1139 = vmatpush2.msra.mxu0 0.0
        %1140 = vmatprep.subr.mxu0 0.0
        %1141 = vmatpush2.msra.mxu0 0.0
        %1142 = vmatprep.subr.mxu0 0.0
        %1143 = vmatpush2.msra.mxu0 0.0
        %1144 = vmatprep.subr.mxu0 0.0
        %1145 = vmatpush2.msra.mxu0 0.0
        %1146 = vmatprep.subr.mxu0 0.0
        %1147 = vmatpush2.msra.mxu0 0.0
        %1148 = vmatprep.subr.mxu0 0.0
        %1149 = vmatpush2.msra.mxu0 0.0
        %1150 = vmatprep.subr.mxu0 0.0
        %1151 = vmatpush2.msra.mxu0 0.0
        %1152 = vmatprep.subr.mxu0 0.0
        %1153 = vmatpush2.msra.mxu0 0.0
        %1154 = vmatprep.subr.mxu0 0.0
        %1155 = vmatpush2.msra.mxu0 0.0
        %1156 = vmatprep.mubr.f32.mxu0 0.0
        %1157 = vmatmul.mubr.f32.gmra.mxu0 %v1019
        %v1158 = vpop.f32.mrf.mxu0
        %v1159 = vadd.f32 0.0, %v1158
        %v1160 = vpop.f32.mrf.mxu0
        %v1161 = vadd.f32 0.0, %v1160
        %1162 = vdwg.mxu0
        %1163 = vmatprep.subr.mxu0 0.0
        %1164 = vmatpush1.msra.mxu0 0.0
        %1165 = vmatprep.subr.mxu0 0.0
        %1166 = vmatpush1.msra.mxu0 0.0
        %1167 = vmatprep.subr.mxu0 0.0
        %1168 = vmatpush1.msra.mxu0 0.0
        %1169 = vmatprep.subr.mxu0 0.0
        %1170 = vmatpush1.msra.mxu0 0.0
        %1171 = vmatprep.subr.mxu0 0.0
        %1172 = vmatpush1.msra.mxu0 0.0
        %1173 = vmatprep.subr.mxu0 0.0
        %1174 = vmatpush1.msra.mxu0 0.0
        %1175 = vmatprep.subr.mxu0 0.0
        %1176 = vmatpush1.msra.mxu0 0.0
        %1177 = vmatprep.subr.mxu0 0.0
        %1178 = vmatpush1.msra.mxu0 0.0
        %1179 = vmatprep.subr.mxu0 0.0
        %1180 = vmatpush1.msra.mxu0 0.0
        %1181 = vmatprep.subr.mxu0 0.0
        %1182 = vmatpush1.msra.mxu0 0.0
        %1183 = vmatprep.subr.mxu0 0.0
        %1184 = vmatpush1.msra.mxu0 0.0
        %1185 = vmatprep.subr.mxu0 0.0
        %1186 = vmatpush1.msra.mxu0 0.0
        %1187 = vmatprep.subr.mxu0 0.0
        %1188 = vmatpush1.msra.mxu0 0.0
        %1189 = vmatprep.subr.mxu0 0.0
        %1190 = vmatpush1.msra.mxu0 0.0
        %1191 = vmatprep.subr.mxu0 0.0
        %1192 = vmatpush1.msra.mxu0 0.0
        %1193 = vmatprep.subr.mxu0 %v1012
        %1194 = vmatpush1.msra.mxu0 %v1011
        %1195 = vmatprep.subr.mxu0 0.0
        %1196 = vmatpush2.msra.mxu0 0.0
        %1197 = vmatprep.subr.mxu0 0.0
        %1198 = vmatpush2.msra.mxu0 0.0
        %1199 = vmatprep.subr.mxu0 0.0
        %1200 = vmatpush2.msra.mxu0 0.0
        %1201 = vmatprep.subr.mxu0 0.0
        %1202 = vmatpush2.msra.mxu0 0.0
        %1203 = vmatprep.subr.mxu0 0.0
        %1204 = vmatpush2.msra.mxu0 0.0
        %1205 = vmatprep.subr.mxu0 0.0
        %1206 = vmatpush2.msra.mxu0 0.0
        %1207 = vmatprep.subr.mxu0 0.0
        %1208 = vmatpush2.msra.mxu0 0.0
        %1209 = vmatprep.subr.mxu0 0.0
        %1210 = vmatpush2.msra.mxu0 0.0
        %1211 = vmatprep.subr.mxu0 0.0
        %1212 = vmatpush2.msra.mxu0 0.0
        %1213 = vmatprep.subr.mxu0 0.0
        %1214 = vmatpush2.msra.mxu0 0.0
        %1215 = vmatprep.subr.mxu0 0.0
        %1216 = vmatpush2.msra.mxu0 0.0
        %1217 = vmatprep.subr.mxu0 0.0
        %1218 = vmatpush2.msra.mxu0 0.0
        %1219 = vmatprep.subr.mxu0 0.0
        %1220 = vmatpush2.msra.mxu0 0.0
        %1221 = vmatprep.subr.mxu0 0.0
        %1222 = vmatpush2.msra.mxu0 0.0
        %1223 = vmatprep.subr.mxu0 0.0
        %1224 = vmatpush2.msra.mxu0 0.0
        %1225 = vmatprep.subr.mxu0 0.0
        %1226 = vmatpush2.msra.mxu0 0.0
        %1227 = vmatprep.mubr.f32.mxu0 0.0
        %1228 = vmatmul.mubr.f32.gmra.mxu0 %v1019
        %v1229 = vpop.f32.mrf.mxu0
        %v1230 = vadd.f32 0.0, %v1229
        %v1231 = vpop.f32.mrf.mxu0
        %v1232 = vadd.f32 0.0, %v1231
        %1233 = vdwg.mxu0
        %1234 = vmatprep.subr.mxu0 0.0
        %1235 = vmatpush1.msra.mxu0 0.0
        %1236 = vmatprep.subr.mxu0 0.0
        %1237 = vmatpush1.msra.mxu0 0.0
        %1238 = vmatprep.subr.mxu0 0.0
        %1239 = vmatpush1.msra.mxu0 0.0
        %1240 = vmatprep.subr.mxu0 0.0
        %1241 = vmatpush1.msra.mxu0 0.0
        %1242 = vmatprep.subr.mxu0 0.0
        %1243 = vmatpush1.msra.mxu0 0.0
        %1244 = vmatprep.subr.mxu0 0.0
        %1245 = vmatpush1.msra.mxu0 0.0
        %1246 = vmatprep.subr.mxu0 0.0
        %1247 = vmatpush1.msra.mxu0 0.0
        %1248 = vmatprep.subr.mxu0 0.0
        %1249 = vmatpush1.msra.mxu0 0.0
        %1250 = vmatprep.subr.mxu0 0.0
        %1251 = vmatpush1.msra.mxu0 0.0
        %1252 = vmatprep.subr.mxu0 0.0
        %1253 = vmatpush1.msra.mxu0 0.0
        %1254 = vmatprep.subr.mxu0 0.0
        %1255 = vmatpush1.msra.mxu0 0.0
        %1256 = vmatprep.subr.mxu0 0.0
        %1257 = vmatpush1.msra.mxu0 0.0
        %1258 = vmatprep.subr.mxu0 0.0
        %1259 = vmatpush1.msra.mxu0 0.0
        %1260 = vmatprep.subr.mxu0 0.0
        %1261 = vmatpush1.msra.mxu0 0.0
        %1262 = vmatprep.subr.mxu0 0.0
        %1263 = vmatpush1.msra.mxu0 0.0
        %1264 = vmatprep.subr.mxu0 %v1014
        %1265 = vmatpush1.msra.mxu0 %v1013
        %1266 = vmatprep.subr.mxu0 0.0
        %1267 = vmatpush2.msra.mxu0 0.0
        %1268 = vmatprep.subr.mxu0 0.0
        %1269 = vmatpush2.msra.mxu0 0.0
        %1270 = vmatprep.subr.mxu0 0.0
        %1271 = vmatpush2.msra.mxu0 0.0
        %1272 = vmatprep.subr.mxu0 0.0
        %1273 = vmatpush2.msra.mxu0 0.0
        %1274 = vmatprep.subr.mxu0 0.0
        %1275 = vmatpush2.msra.mxu0 0.0
        %1276 = vmatprep.subr.mxu0 0.0
        %1277 = vmatpush2.msra.mxu0 0.0
        %1278 = vmatprep.subr.mxu0 0.0
        %1279 = vmatpush2.msra.mxu0 0.0
        %1280 = vmatprep.subr.mxu0 0.0
        %1281 = vmatpush2.msra.mxu0 0.0
        %1282 = vmatprep.subr.mxu0 0.0
        %1283 = vmatpush2.msra.mxu0 0.0
        %1284 = vmatprep.subr.mxu0 0.0
        %1285 = vmatpush2.msra.mxu0 0.0
        %1286 = vmatprep.subr.mxu0 0.0
        %1287 = vmatpush2.msra.mxu0 0.0
        %1288 = vmatprep.subr.mxu0 0.0
        %1289 = vmatpush2.msra.mxu0 0.0
        %1290 = vmatprep.subr.mxu0 0.0
        %1291 = vmatpush2.msra.mxu0 0.0
        %1292 = vmatprep.subr.mxu0 0.0
        %1293 = vmatpush2.msra.mxu0 0.0
        %1294 = vmatprep.subr.mxu0 0.0
        %1295 = vmatpush2.msra.mxu0 0.0
        %1296 = vmatprep.subr.mxu0 0.0
        %1297 = vmatpush2.msra.mxu0 0.0
        %1298 = vmatprep.mubr.f32.mxu0 0.0
        %1299 = vmatmul.mubr.f32.gmra.mxu0 %v1019
        %v1300 = vpop.f32.mrf.mxu0
        %v1301 = vadd.f32 0.0, %v1300
        %v1302 = vpop.f32.mrf.mxu0
        %v1303 = vadd.f32 0.0, %v1302
        %1304 = vdwg.mxu0
        %v1306 = vsel %vm1017, %v917, 0
        %1308 = vmatprep.subr.mxu0 0.0
        %1309 = vmatpush1.msra.mxu0 0.0
        %1310 = vmatprep.subr.mxu0 0.0
        %1311 = vmatpush1.msra.mxu0 0.0
        %1312 = vmatprep.subr.mxu0 0.0
        %1313 = vmatpush1.msra.mxu0 0.0
        %1314 = vmatprep.subr.mxu0 0.0
        %1315 = vmatpush1.msra.mxu0 0.0
        %1316 = vmatprep.subr.mxu0 0.0
        %1317 = vmatpush1.msra.mxu0 0.0
        %1318 = vmatprep.subr.mxu0 0.0
        %1319 = vmatpush1.msra.mxu0 0.0
        %1320 = vmatprep.subr.mxu0 0.0
        %1321 = vmatpush1.msra.mxu0 0.0
        %1322 = vmatprep.subr.mxu0 0.0
        %1323 = vmatpush1.msra.mxu0 0.0
        %1324 = vmatprep.subr.mxu0 0.0
        %1325 = vmatpush1.msra.mxu0 0.0
        %1326 = vmatprep.subr.mxu0 0.0
        %1327 = vmatpush1.msra.mxu0 0.0
        %1328 = vmatprep.subr.mxu0 0.0
        %1329 = vmatpush1.msra.mxu0 0.0
        %1330 = vmatprep.subr.mxu0 0.0
        %1331 = vmatpush1.msra.mxu0 0.0
        %1332 = vmatprep.subr.mxu0 0.0
        %1333 = vmatpush1.msra.mxu0 0.0
        %1334 = vmatprep.subr.mxu0 0.0
        %1335 = vmatpush1.msra.mxu0 0.0
        %1336 = vmatprep.subr.mxu0 0.0
        %1337 = vmatpush1.msra.mxu0 0.0
        %1338 = vmatprep.subr.mxu0 %v910
        %1339 = vmatpush1.msra.mxu0 %v909
        %1340 = vmatprep.subr.mxu0 0.0
        %1341 = vmatpush2.msra.mxu0 0.0
        %1342 = vmatprep.subr.mxu0 0.0
        %1343 = vmatpush2.msra.mxu0 0.0
        %1344 = vmatprep.subr.mxu0 0.0
        %1345 = vmatpush2.msra.mxu0 0.0
        %1346 = vmatprep.subr.mxu0 0.0
        %1347 = vmatpush2.msra.mxu0 0.0
        %1348 = vmatprep.subr.mxu0 0.0
        %1349 = vmatpush2.msra.mxu0 0.0
        %1350 = vmatprep.subr.mxu0 0.0
        %1351 = vmatpush2.msra.mxu0 0.0
        %1352 = vmatprep.subr.mxu0 0.0
        %1353 = vmatpush2.msra.mxu0 0.0
        %1354 = vmatprep.subr.mxu0 0.0
        %1355 = vmatpush2.msra.mxu0 0.0
        %1356 = vmatprep.subr.mxu0 0.0
        %1357 = vmatpush2.msra.mxu0 0.0
        %1358 = vmatprep.subr.mxu0 0.0
        %1359 = vmatpush2.msra.mxu0 0.0
        %1360 = vmatprep.subr.mxu0 0.0
        %1361 = vmatpush2.msra.mxu0 0.0
        %1362 = vmatprep.subr.mxu0 0.0
        %1363 = vmatpush2.msra.mxu0 0.0
        %1364 = vmatprep.subr.mxu0 0.0
        %1365 = vmatpush2.msra.mxu0 0.0
        %1366 = vmatprep.subr.mxu0 0.0
        %1367 = vmatpush2.msra.mxu0 0.0
        %1368 = vmatprep.subr.mxu0 0.0
        %1369 = vmatpush2.msra.mxu0 0.0
        %1370 = vmatprep.subr.mxu0 0.0
        %1371 = vmatpush2.msra.mxu0 0.0
        %1372 = vmatprep.mubr.f32.mxu0 0.0
        %1373 = vmatmul.mubr.f32.gmra.mxu0 %v1306
        %v1374 = vpop.f32.mrf.mxu0
        %v1375 = vadd.f32 %v1088, %v1374
        %v1376 = vpop.f32.mrf.mxu0
        %v1377 = vadd.f32 %v1090, %v1376
        %1378 = vdwg.mxu0
        %1379 = vmatprep.subr.mxu0 0.0
        %1380 = vmatpush1.msra.mxu0 0.0
        %1381 = vmatprep.subr.mxu0 0.0
        %1382 = vmatpush1.msra.mxu0 0.0
        %1383 = vmatprep.subr.mxu0 0.0
        %1384 = vmatpush1.msra.mxu0 0.0
        %1385 = vmatprep.subr.mxu0 0.0
        %1386 = vmatpush1.msra.mxu0 0.0
        %1387 = vmatprep.subr.mxu0 0.0
        %1388 = vmatpush1.msra.mxu0 0.0
        %1389 = vmatprep.subr.mxu0 0.0
        %1390 = vmatpush1.msra.mxu0 0.0
        %1391 = vmatprep.subr.mxu0 0.0
        %1392 = vmatpush1.msra.mxu0 0.0
        %1393 = vmatprep.subr.mxu0 0.0
        %1394 = vmatpush1.msra.mxu0 0.0
        %1395 = vmatprep.subr.mxu0 0.0
        %1396 = vmatpush1.msra.mxu0 0.0
        %1397 = vmatprep.subr.mxu0 0.0
        %1398 = vmatpush1.msra.mxu0 0.0
        %1399 = vmatprep.subr.mxu0 0.0
        %1400 = vmatpush1.msra.mxu0 0.0
        %1401 = vmatprep.subr.mxu0 0.0
        %1402 = vmatpush1.msra.mxu0 0.0
        %1403 = vmatprep.subr.mxu0 0.0
        %1404 = vmatpush1.msra.mxu0 0.0
        %1405 = vmatprep.subr.mxu0 0.0
        %1406 = vmatpush1.msra.mxu0 0.0
        %1407 = vmatprep.subr.mxu0 0.0
        %1408 = vmatpush1.msra.mxu0 0.0
        %1409 = vmatprep.subr.mxu0 %v912
        %1410 = vmatpush1.msra.mxu0 %v911
        %1411 = vmatprep.subr.mxu0 0.0
        %1412 = vmatpush2.msra.mxu0 0.0
        %1413 = vmatprep.subr.mxu0 0.0
        %1414 = vmatpush2.msra.mxu0 0.0
        %1415 = vmatprep.subr.mxu0 0.0
        %1416 = vmatpush2.msra.mxu0 0.0
        %1417 = vmatprep.subr.mxu0 0.0
        %1418 = vmatpush2.msra.mxu0 0.0
        %1419 = vmatprep.subr.mxu0 0.0
        %1420 = vmatpush2.msra.mxu0 0.0
        %1421 = vmatprep.subr.mxu0 0.0
        %1422 = vmatpush2.msra.mxu0 0.0
        %1423 = vmatprep.subr.mxu0 0.0
        %1424 = vmatpush2.msra.mxu0 0.0
        %1425 = vmatprep.subr.mxu0 0.0
        %1426 = vmatpush2.msra.mxu0 0.0
        %1427 = vmatprep.subr.mxu0 0.0
        %1428 = vmatpush2.msra.mxu0 0.0
        %1429 = vmatprep.subr.mxu0 0.0
        %1430 = vmatpush2.msra.mxu0 0.0
        %1431 = vmatprep.subr.mxu0 0.0
        %1432 = vmatpush2.msra.mxu0 0.0
        %1433 = vmatprep.subr.mxu0 0.0
        %1434 = vmatpush2.msra.mxu0 0.0
        %1435 = vmatprep.subr.mxu0 0.0
        %1436 = vmatpush2.msra.mxu0 0.0
        %1437 = vmatprep.subr.mxu0 0.0
        %1438 = vmatpush2.msra.mxu0 0.0
        %1439 = vmatprep.subr.mxu0 0.0
        %1440 = vmatpush2.msra.mxu0 0.0
        %1441 = vmatprep.subr.mxu0 0.0
        %1442 = vmatpush2.msra.mxu0 0.0
        %1443 = vmatprep.mubr.f32.mxu0 0.0
        %1444 = vmatmul.mubr.f32.gmra.mxu0 %v1306
        %v1445 = vpop.f32.mrf.mxu0
        %v1446 = vadd.f32 %v1159, %v1445
        %v1447 = vpop.f32.mrf.mxu0
        %v1448 = vadd.f32 %v1161, %v1447
        %1449 = vdwg.mxu0
        %1450 = vmatprep.subr.mxu0 0.0
        %1451 = vmatpush1.msra.mxu0 0.0
        %1452 = vmatprep.subr.mxu0 0.0
        %1453 = vmatpush1.msra.mxu0 0.0
        %1454 = vmatprep.subr.mxu0 0.0
        %1455 = vmatpush1.msra.mxu0 0.0
        %1456 = vmatprep.subr.mxu0 0.0
        %1457 = vmatpush1.msra.mxu0 0.0
        %1458 = vmatprep.subr.mxu0 0.0
        %1459 = vmatpush1.msra.mxu0 0.0
        %1460 = vmatprep.subr.mxu0 0.0
        %1461 = vmatpush1.msra.mxu0 0.0
        %1462 = vmatprep.subr.mxu0 0.0
        %1463 = vmatpush1.msra.mxu0 0.0
        %1464 = vmatprep.subr.mxu0 0.0
        %1465 = vmatpush1.msra.mxu0 0.0
        %1466 = vmatprep.subr.mxu0 0.0
        %1467 = vmatpush1.msra.mxu0 0.0
        %1468 = vmatprep.subr.mxu0 0.0
        %1469 = vmatpush1.msra.mxu0 0.0
        %1470 = vmatprep.subr.mxu0 0.0
        %1471 = vmatpush1.msra.mxu0 0.0
        %1472 = vmatprep.subr.mxu0 0.0
        %1473 = vmatpush1.msra.mxu0 0.0
        %1474 = vmatprep.subr.mxu0 0.0
        %1475 = vmatpush1.msra.mxu0 0.0
        %1476 = vmatprep.subr.mxu0 0.0
        %1477 = vmatpush1.msra.mxu0 0.0
        %1478 = vmatprep.subr.mxu0 0.0
        %1479 = vmatpush1.msra.mxu0 0.0
        %1480 = vmatprep.subr.mxu0 %v914
        %1481 = vmatpush1.msra.mxu0 %v913
        %1482 = vmatprep.subr.mxu0 0.0
        %1483 = vmatpush2.msra.mxu0 0.0
        %1484 = vmatprep.subr.mxu0 0.0
        %1485 = vmatpush2.msra.mxu0 0.0
        %1486 = vmatprep.subr.mxu0 0.0
        %1487 = vmatpush2.msra.mxu0 0.0
        %1488 = vmatprep.subr.mxu0 0.0
        %1489 = vmatpush2.msra.mxu0 0.0
        %1490 = vmatprep.subr.mxu0 0.0
        %1491 = vmatpush2.msra.mxu0 0.0
        %1492 = vmatprep.subr.mxu0 0.0
        %1493 = vmatpush2.msra.mxu0 0.0
        %1494 = vmatprep.subr.mxu0 0.0
        %1495 = vmatpush2.msra.mxu0 0.0
        %1496 = vmatprep.subr.mxu0 0.0
        %1497 = vmatpush2.msra.mxu0 0.0
        %1498 = vmatprep.subr.mxu0 0.0
        %1499 = vmatpush2.msra.mxu0 0.0
        %1500 = vmatprep.subr.mxu0 0.0
        %1501 = vmatpush2.msra.mxu0 0.0
        %1502 = vmatprep.subr.mxu0 0.0
        %1503 = vmatpush2.msra.mxu0 0.0
        %1504 = vmatprep.subr.mxu0 0.0
        %1505 = vmatpush2.msra.mxu0 0.0
        %1506 = vmatprep.subr.mxu0 0.0
        %1507 = vmatpush2.msra.mxu0 0.0
        %1508 = vmatprep.subr.mxu0 0.0
        %1509 = vmatpush2.msra.mxu0 0.0
        %1510 = vmatprep.subr.mxu0 0.0
        %1511 = vmatpush2.msra.mxu0 0.0
        %1512 = vmatprep.subr.mxu0 0.0
        %1513 = vmatpush2.msra.mxu0 0.0
        %1514 = vmatprep.mubr.f32.mxu0 0.0
        %1515 = vmatmul.mubr.f32.gmra.mxu0 %v1306
        %v1516 = vpop.f32.mrf.mxu0
        %v1517 = vadd.f32 %v1230, %v1516
        %v1518 = vpop.f32.mrf.mxu0
        %v1519 = vadd.f32 %v1232, %v1518
        %1520 = vdwg.mxu0
        %1521 = vmatprep.subr.mxu0 0.0
        %1522 = vmatpush1.msra.mxu0 0.0
        %1523 = vmatprep.subr.mxu0 0.0
        %1524 = vmatpush1.msra.mxu0 0.0
        %1525 = vmatprep.subr.mxu0 0.0
        %1526 = vmatpush1.msra.mxu0 0.0
        %1527 = vmatprep.subr.mxu0 0.0
        %1528 = vmatpush1.msra.mxu0 0.0
        %1529 = vmatprep.subr.mxu0 0.0
        %1530 = vmatpush1.msra.mxu0 0.0
        %1531 = vmatprep.subr.mxu0 0.0
        %1532 = vmatpush1.msra.mxu0 0.0
        %1533 = vmatprep.subr.mxu0 0.0
        %1534 = vmatpush1.msra.mxu0 0.0
        %1535 = vmatprep.subr.mxu0 0.0
        %1536 = vmatpush1.msra.mxu0 0.0
        %1537 = vmatprep.subr.mxu0 0.0
        %1538 = vmatpush1.msra.mxu0 0.0
        %1539 = vmatprep.subr.mxu0 0.0
        %1540 = vmatpush1.msra.mxu0 0.0
        %1541 = vmatprep.subr.mxu0 0.0
        %1542 = vmatpush1.msra.mxu0 0.0
        %1543 = vmatprep.subr.mxu0 0.0
        %1544 = vmatpush1.msra.mxu0 0.0
        %1545 = vmatprep.subr.mxu0 0.0
        %1546 = vmatpush1.msra.mxu0 0.0
        %1547 = vmatprep.subr.mxu0 0.0
        %1548 = vmatpush1.msra.mxu0 0.0
        %1549 = vmatprep.subr.mxu0 0.0
        %1550 = vmatpush1.msra.mxu0 0.0
        %1551 = vmatprep.subr.mxu0 %v916
        %1552 = vmatpush1.msra.mxu0 %v915
        %1553 = vmatprep.subr.mxu0 0.0
        %1554 = vmatpush2.msra.mxu0 0.0
        %1555 = vmatprep.subr.mxu0 0.0
        %1556 = vmatpush2.msra.mxu0 0.0
        %1557 = vmatprep.subr.mxu0 0.0
        %1558 = vmatpush2.msra.mxu0 0.0
        %1559 = vmatprep.subr.mxu0 0.0
        %1560 = vmatpush2.msra.mxu0 0.0
        %1561 = vmatprep.subr.mxu0 0.0
        %1562 = vmatpush2.msra.mxu0 0.0
        %1563 = vmatprep.subr.mxu0 0.0
        %1564 = vmatpush2.msra.mxu0 0.0
        %1565 = vmatprep.subr.mxu0 0.0
        %1566 = vmatpush2.msra.mxu0 0.0
        %1567 = vmatprep.subr.mxu0 0.0
        %1568 = vmatpush2.msra.mxu0 0.0
        %1569 = vmatprep.subr.mxu0 0.0
        %1570 = vmatpush2.msra.mxu0 0.0
        %1571 = vmatprep.subr.mxu0 0.0
        %1572 = vmatpush2.msra.mxu0 0.0
        %1573 = vmatprep.subr.mxu0 0.0
        %1574 = vmatpush2.msra.mxu0 0.0
        %1575 = vmatprep.subr.mxu0 0.0
        %1576 = vmatpush2.msra.mxu0 0.0
        %1577 = vmatprep.subr.mxu0 0.0
        %1578 = vmatpush2.msra.mxu0 0.0
        %1579 = vmatprep.subr.mxu0 0.0
        %1580 = vmatpush2.msra.mxu0 0.0
        %1581 = vmatprep.subr.mxu0 0.0
        %1582 = vmatpush2.msra.mxu0 0.0
        %1583 = vmatprep.subr.mxu0 0.0
        %1584 = vmatpush2.msra.mxu0 0.0
        %1585 = vmatprep.mubr.f32.mxu0 0.0
        %1586 = vmatmul.mubr.f32.gmra.mxu0 %v1306
        %v1587 = vpop.f32.mrf.mxu0
        %v1588 = vadd.f32 %v1301, %v1587
        %v1589 = vpop.f32.mrf.mxu0
        %v1590 = vadd.f32 %v1303, %v1589
        %1591 = vdwg.mxu0
        %1592 = vrot.lane.b32.xlu0 %v538, 31
        %v1593 = vpop.permute.xlu0 %1592
        %1594 = vrot.lane.b32.xlu0 %v540, 31
        %v1595 = vpop.permute.xlu0 %1594
        %1596 = vrot.lane.b32.xlu0 %v609, 31
        %v1597 = vpop.permute.xlu0 %1596
        %1598 = vrot.lane.b32.xlu0 %v611, 31
        %v1599 = vpop.permute.xlu0 %1598
        %1600 = vrot.lane.b32.xlu0 %v680, 31
        %v1601 = vpop.permute.xlu0 %1600
        %1602 = vrot.lane.b32.xlu0 %v682, 31
        %v1603 = vpop.permute.xlu0 %1602
        %1604 = vrot.lane.b32.xlu0 %v751, 31
        %v1605 = vpop.permute.xlu0 %1604
        %1606 = vrot.lane.b32.xlu0 %v753, 31
        %v1607 = vpop.permute.xlu0 %1606
        %vm1608 = vcmask 252928
        %v1609 = vsel %vm1608, %v1593, %v1595
        %v1610 = vsel %vm1608, %v1595, %v1597
        %v1611 = vsel %vm1608, %v1597, %v1599
        %v1612 = vsel %vm1608, %v1599, %v1601
        %v1613 = vsel %vm1608, %v1601, %v1603
        %v1614 = vsel %vm1608, %v1603, %v1605
        %v1615 = vsel %vm1608, %v1605, %v1607
        %v1624 = vsel %vm1608, 0.0, %v1593
        %v1625 = vadd.s32 %v772, 1
        %v1626 = vadd.s32 %v773, 1
        %v1627 = vadd.s32 %v774, 1
        %v1628 = vadd.s32 %v775, 1
        %v1629 = vadd.s32 %v776, 1
        %v1630 = vadd.s32 %v777, 1
        %v1631 = vadd.s32 %v778, 1
        %v1632 = vadd.s32 %v779, 1
        %vm1633 = vcmp.ge.s32.totalorder %v1625, 0
        %vm1634 = vcmp.ge.s32.totalorder %v1626, 0
        %vm1635 = vcmp.ge.s32.totalorder %v1627, 0
        %vm1636 = vcmp.ge.s32.totalorder %v1628, 0
        %vm1637 = vcmp.ge.s32.totalorder %v1629, 0
        %vm1638 = vcmp.ge.s32.totalorder %v1630, 0
        %vm1639 = vcmp.ge.s32.totalorder %v1631, 0
        %vm1640 = vcmp.ge.s32.totalorder %v1632, 0
        %vm1641 = vcmp.lt.s32.totalorder %v1625, 32
        %vm1642 = vcmp.lt.s32.totalorder %v1626, 32
        %vm1643 = vcmp.lt.s32.totalorder %v1627, 32
        %vm1644 = vcmp.lt.s32.totalorder %v1628, 32
        %vm1645 = vcmp.lt.s32.totalorder %v1629, 32
        %vm1646 = vcmp.lt.s32.totalorder %v1630, 32
        %vm1647 = vcmp.lt.s32.totalorder %v1631, 32
        %vm1648 = vcmp.lt.s32.totalorder %v1632, 32
        %vm1649 = vmand %vm1633, %vm1641
        %vm1650 = vmand %vm1634, %vm1642
        %vm1651 = vmand %vm1635, %vm1643
        %vm1652 = vmand %vm1636, %vm1644
        %vm1653 = vmand %vm1637, %vm1645
        %vm1654 = vmand %vm1638, %vm1646
        %vm1655 = vmand %vm1639, %vm1647
        %vm1656 = vmand %vm1640, %vm1648
        %vm1657 = vmand %vm1649, %vm861
        %vm1658 = vmand %vm1650, %vm862
        %vm1659 = vmand %vm1651, %vm863
        %vm1660 = vmand %vm1652, %vm864
        %vm1661 = vmand %vm1653, %vm865
        %vm1662 = vmand %vm1654, %vm866
        %vm1663 = vmand %vm1655, %vm867
        %vm1664 = vmand %vm1656, %vm868
        %vm1665 = vmand %vm1657, %vm877
        %vm1666 = vmand %vm1658, %vm878
        %vm1667 = vmand %vm1659, %vm879
        %vm1668 = vmand %vm1660, %vm880
        %vm1669 = vmand %vm1661, %vm881
        %vm1670 = vmand %vm1662, %vm882
        %vm1671 = vmand %vm1663, %vm883
        %vm1672 = vmand %vm1664, %vm884
        %v1673 = vsel %vm1665, 1, 0
        %v1674 = vsel %vm1666, 1, 0
        %v1675 = vsel %vm1667, 1, 0
        %v1676 = vsel %vm1668, 1, 0
        %v1677 = vsel %vm1669, 1, 0
        %v1678 = vsel %vm1670, 1, 0
        %v1679 = vsel %vm1671, 1, 0
        %v1680 = vsel %vm1672, 1, 0
        %vm1681 = vcmp.eq.s32.totalorder %v1673, 1
        %vm1682 = vcmp.eq.s32.totalorder %v1674, 1
        %vm1683 = vcmp.eq.s32.totalorder %v1675, 1
        %vm1684 = vcmp.eq.s32.totalorder %v1676, 1
        %vm1685 = vcmp.eq.s32.totalorder %v1677, 1
        %vm1686 = vcmp.eq.s32.totalorder %v1678, 1
        %vm1687 = vcmp.eq.s32.totalorder %v1679, 1
        %vm1688 = vcmp.eq.s32.totalorder %v1680, 1
        %v1689 = vsel %vm1681, %v1624, 0.0
        %v1690 = vsel %vm1682, %v1609, 0.0
        %v1691 = vsel %vm1683, %v1610, 0.0
        %v1692 = vsel %vm1684, %v1611, 0.0
        %v1693 = vsel %vm1685, %v1612, 0.0
        %v1694 = vsel %vm1686, %v1613, 0.0
        %v1695 = vsel %vm1687, %v1614, 0.0
        %v1696 = vsel %vm1688, %v1615, 0.0
        %s1697 = scalar_lea.vmem %s2, 16
        %v1698 = vld [vmem:[%s1697] sm:$0xff]
        %v1700 = vsel %vm1017, %v1698, 0
        %1702 = vmatprep.subr.mxu0 0.0
        %1703 = vmatpush1.msra.mxu0 0.0
        %1704 = vmatprep.subr.mxu0 0.0
        %1705 = vmatpush1.msra.mxu0 0.0
        %1706 = vmatprep.subr.mxu0 0.0
        %1707 = vmatpush1.msra.mxu0 0.0
        %1708 = vmatprep.subr.mxu0 0.0
        %1709 = vmatpush1.msra.mxu0 0.0
        %1710 = vmatprep.subr.mxu0 0.0
        %1711 = vmatpush1.msra.mxu0 0.0
        %1712 = vmatprep.subr.mxu0 0.0
        %1713 = vmatpush1.msra.mxu0 0.0
        %1714 = vmatprep.subr.mxu0 0.0
        %1715 = vmatpush1.msra.mxu0 0.0
        %1716 = vmatprep.subr.mxu0 0.0
        %1717 = vmatpush1.msra.mxu0 0.0
        %1718 = vmatprep.subr.mxu0 0.0
        %1719 = vmatpush1.msra.mxu0 0.0
        %1720 = vmatprep.subr.mxu0 0.0
        %1721 = vmatpush1.msra.mxu0 0.0
        %1722 = vmatprep.subr.mxu0 0.0
        %1723 = vmatpush1.msra.mxu0 0.0
        %1724 = vmatprep.subr.mxu0 0.0
        %1725 = vmatpush1.msra.mxu0 0.0
        %1726 = vmatprep.subr.mxu0 0.0
        %1727 = vmatpush1.msra.mxu0 0.0
        %1728 = vmatprep.subr.mxu0 0.0
        %1729 = vmatpush1.msra.mxu0 0.0
        %1730 = vmatprep.subr.mxu0 0.0
        %1731 = vmatpush1.msra.mxu0 0.0
        %1732 = vmatprep.subr.mxu0 %v1690
        %1733 = vmatpush1.msra.mxu0 %v1689
        %1734 = vmatprep.subr.mxu0 0.0
        %1735 = vmatpush2.msra.mxu0 0.0
        %1736 = vmatprep.subr.mxu0 0.0
        %1737 = vmatpush2.msra.mxu0 0.0
        %1738 = vmatprep.subr.mxu0 0.0
        %1739 = vmatpush2.msra.mxu0 0.0
        %1740 = vmatprep.subr.mxu0 0.0
        %1741 = vmatpush2.msra.mxu0 0.0
        %1742 = vmatprep.subr.mxu0 0.0
        %1743 = vmatpush2.msra.mxu0 0.0
        %1744 = vmatprep.subr.mxu0 0.0
        %1745 = vmatpush2.msra.mxu0 0.0
        %1746 = vmatprep.subr.mxu0 0.0
        %1747 = vmatpush2.msra.mxu0 0.0
        %1748 = vmatprep.subr.mxu0 0.0
        %1749 = vmatpush2.msra.mxu0 0.0
        %1750 = vmatprep.subr.mxu0 0.0
        %1751 = vmatpush2.msra.mxu0 0.0
        %1752 = vmatprep.subr.mxu0 0.0
        %1753 = vmatpush2.msra.mxu0 0.0
        %1754 = vmatprep.subr.mxu0 0.0
        %1755 = vmatpush2.msra.mxu0 0.0
        %1756 = vmatprep.subr.mxu0 0.0
        %1757 = vmatpush2.msra.mxu0 0.0
        %1758 = vmatprep.subr.mxu0 0.0
        %1759 = vmatpush2.msra.mxu0 0.0
        %1760 = vmatprep.subr.mxu0 0.0
        %1761 = vmatpush2.msra.mxu0 0.0
        %1762 = vmatprep.subr.mxu0 0.0
        %1763 = vmatpush2.msra.mxu0 0.0
        %1764 = vmatprep.subr.mxu0 0.0
        %1765 = vmatpush2.msra.mxu0 0.0
        %1766 = vmatprep.mubr.f32.mxu0 0.0
        %1767 = vmatmul.mubr.f32.gmra.mxu0 %v1700
        %v1768 = vpop.f32.mrf.mxu0
        %v1769 = vadd.f32 0.0, %v1768
        %v1770 = vpop.f32.mrf.mxu0
        %v1771 = vadd.f32 0.0, %v1770
        %1772 = vdwg.mxu0
        %1773 = vmatprep.subr.mxu0 0.0
        %1774 = vmatpush1.msra.mxu0 0.0
        %1775 = vmatprep.subr.mxu0 0.0
        %1776 = vmatpush1.msra.mxu0 0.0
        %1777 = vmatprep.subr.mxu0 0.0
        %1778 = vmatpush1.msra.mxu0 0.0
        %1779 = vmatprep.subr.mxu0 0.0
        %1780 = vmatpush1.msra.mxu0 0.0
        %1781 = vmatprep.subr.mxu0 0.0
        %1782 = vmatpush1.msra.mxu0 0.0
        %1783 = vmatprep.subr.mxu0 0.0
        %1784 = vmatpush1.msra.mxu0 0.0
        %1785 = vmatprep.subr.mxu0 0.0
        %1786 = vmatpush1.msra.mxu0 0.0
        %1787 = vmatprep.subr.mxu0 0.0
        %1788 = vmatpush1.msra.mxu0 0.0
        %1789 = vmatprep.subr.mxu0 0.0
        %1790 = vmatpush1.msra.mxu0 0.0
        %1791 = vmatprep.subr.mxu0 0.0
        %1792 = vmatpush1.msra.mxu0 0.0
        %1793 = vmatprep.subr.mxu0 0.0
        %1794 = vmatpush1.msra.mxu0 0.0
        %1795 = vmatprep.subr.mxu0 0.0
        %1796 = vmatpush1.msra.mxu0 0.0
        %1797 = vmatprep.subr.mxu0 0.0
        %1798 = vmatpush1.msra.mxu0 0.0
        %1799 = vmatprep.subr.mxu0 0.0
        %1800 = vmatpush1.msra.mxu0 0.0
        %1801 = vmatprep.subr.mxu0 0.0
        %1802 = vmatpush1.msra.mxu0 0.0
        %1803 = vmatprep.subr.mxu0 %v1692
        %1804 = vmatpush1.msra.mxu0 %v1691
        %1805 = vmatprep.subr.mxu0 0.0
        %1806 = vmatpush2.msra.mxu0 0.0
        %1807 = vmatprep.subr.mxu0 0.0
        %1808 = vmatpush2.msra.mxu0 0.0
        %1809 = vmatprep.subr.mxu0 0.0
        %1810 = vmatpush2.msra.mxu0 0.0
        %1811 = vmatprep.subr.mxu0 0.0
        %1812 = vmatpush2.msra.mxu0 0.0
        %1813 = vmatprep.subr.mxu0 0.0
        %1814 = vmatpush2.msra.mxu0 0.0
        %1815 = vmatprep.subr.mxu0 0.0
        %1816 = vmatpush2.msra.mxu0 0.0
        %1817 = vmatprep.subr.mxu0 0.0
        %1818 = vmatpush2.msra.mxu0 0.0
        %1819 = vmatprep.subr.mxu0 0.0
        %1820 = vmatpush2.msra.mxu0 0.0
        %1821 = vmatprep.subr.mxu0 0.0
        %1822 = vmatpush2.msra.mxu0 0.0
        %1823 = vmatprep.subr.mxu0 0.0
        %1824 = vmatpush2.msra.mxu0 0.0
        %1825 = vmatprep.subr.mxu0 0.0
        %1826 = vmatpush2.msra.mxu0 0.0
        %1827 = vmatprep.subr.mxu0 0.0
        %1828 = vmatpush2.msra.mxu0 0.0
        %1829 = vmatprep.subr.mxu0 0.0
        %1830 = vmatpush2.msra.mxu0 0.0
        %1831 = vmatprep.subr.mxu0 0.0
        %1832 = vmatpush2.msra.mxu0 0.0
        %1833 = vmatprep.subr.mxu0 0.0
        %1834 = vmatpush2.msra.mxu0 0.0
        %1835 = vmatprep.subr.mxu0 0.0
        %1836 = vmatpush2.msra.mxu0 0.0
        %1837 = vmatprep.mubr.f32.mxu0 0.0
        %1838 = vmatmul.mubr.f32.gmra.mxu0 %v1700
        %v1839 = vpop.f32.mrf.mxu0
        %v1840 = vadd.f32 0.0, %v1839
        %v1841 = vpop.f32.mrf.mxu0
        %v1842 = vadd.f32 0.0, %v1841
        %1843 = vdwg.mxu0
        %1844 = vmatprep.subr.mxu0 0.0
        %1845 = vmatpush1.msra.mxu0 0.0
        %1846 = vmatprep.subr.mxu0 0.0
        %1847 = vmatpush1.msra.mxu0 0.0
        %1848 = vmatprep.subr.mxu0 0.0
        %1849 = vmatpush1.msra.mxu0 0.0
        %1850 = vmatprep.subr.mxu0 0.0
        %1851 = vmatpush1.msra.mxu0 0.0
        %1852 = vmatprep.subr.mxu0 0.0
        %1853 = vmatpush1.msra.mxu0 0.0
        %1854 = vmatprep.subr.mxu0 0.0
        %1855 = vmatpush1.msra.mxu0 0.0
        %1856 = vmatprep.subr.mxu0 0.0
        %1857 = vmatpush1.msra.mxu0 0.0
        %1858 = vmatprep.subr.mxu0 0.0
        %1859 = vmatpush1.msra.mxu0 0.0
        %1860 = vmatprep.subr.mxu0 0.0
        %1861 = vmatpush1.msra.mxu0 0.0
        %1862 = vmatprep.subr.mxu0 0.0
        %1863 = vmatpush1.msra.mxu0 0.0
        %1864 = vmatprep.subr.mxu0 0.0
        %1865 = vmatpush1.msra.mxu0 0.0
        %1866 = vmatprep.subr.mxu0 0.0
        %1867 = vmatpush1.msra.mxu0 0.0
        %1868 = vmatprep.subr.mxu0 0.0
        %1869 = vmatpush1.msra.mxu0 0.0
        %1870 = vmatprep.subr.mxu0 0.0
        %1871 = vmatpush1.msra.mxu0 0.0
        %1872 = vmatprep.subr.mxu0 0.0
        %1873 = vmatpush1.msra.mxu0 0.0
        %1874 = vmatprep.subr.mxu0 %v1694
        %1875 = vmatpush1.msra.mxu0 %v1693
        %1876 = vmatprep.subr.mxu0 0.0
        %1877 = vmatpush2.msra.mxu0 0.0
        %1878 = vmatprep.subr.mxu0 0.0
        %1879 = vmatpush2.msra.mxu0 0.0
        %1880 = vmatprep.subr.mxu0 0.0
        %1881 = vmatpush2.msra.mxu0 0.0
        %1882 = vmatprep.subr.mxu0 0.0
        %1883 = vmatpush2.msra.mxu0 0.0
        %1884 = vmatprep.subr.mxu0 0.0
        %1885 = vmatpush2.msra.mxu0 0.0
        %1886 = vmatprep.subr.mxu0 0.0
        %1887 = vmatpush2.msra.mxu0 0.0
        %1888 = vmatprep.subr.mxu0 0.0
        %1889 = vmatpush2.msra.mxu0 0.0
        %1890 = vmatprep.subr.mxu0 0.0
        %1891 = vmatpush2.msra.mxu0 0.0
        %1892 = vmatprep.subr.mxu0 0.0
        %1893 = vmatpush2.msra.mxu0 0.0
        %1894 = vmatprep.subr.mxu0 0.0
        %1895 = vmatpush2.msra.mxu0 0.0
        %1896 = vmatprep.subr.mxu0 0.0
        %1897 = vmatpush2.msra.mxu0 0.0
        %1898 = vmatprep.subr.mxu0 0.0
        %1899 = vmatpush2.msra.mxu0 0.0
        %1900 = vmatprep.subr.mxu0 0.0
        %1901 = vmatpush2.msra.mxu0 0.0
        %1902 = vmatprep.subr.mxu0 0.0
        %1903 = vmatpush2.msra.mxu0 0.0
        %1904 = vmatprep.subr.mxu0 0.0
        %1905 = vmatpush2.msra.mxu0 0.0
        %1906 = vmatprep.subr.mxu0 0.0
        %1907 = vmatpush2.msra.mxu0 0.0
        %1908 = vmatprep.mubr.f32.mxu0 0.0
        %1909 = vmatmul.mubr.f32.gmra.mxu0 %v1700
        %v1910 = vpop.f32.mrf.mxu0
        %v1911 = vadd.f32 0.0, %v1910
        %v1912 = vpop.f32.mrf.mxu0
        %v1913 = vadd.f32 0.0, %v1912
        %1914 = vdwg.mxu0
        %1915 = vmatprep.subr.mxu0 0.0
        %1916 = vmatpush1.msra.mxu0 0.0
        %1917 = vmatprep.subr.mxu0 0.0
        %1918 = vmatpush1.msra.mxu0 0.0
        %1919 = vmatprep.subr.mxu0 0.0
        %1920 = vmatpush1.msra.mxu0 0.0
        %1921 = vmatprep.subr.mxu0 0.0
        %1922 = vmatpush1.msra.mxu0 0.0
        %1923 = vmatprep.subr.mxu0 0.0
        %1924 = vmatpush1.msra.mxu0 0.0
        %1925 = vmatprep.subr.mxu0 0.0
        %1926 = vmatpush1.msra.mxu0 0.0
        %1927 = vmatprep.subr.mxu0 0.0
        %1928 = vmatpush1.msra.mxu0 0.0
        %1929 = vmatprep.subr.mxu0 0.0
        %1930 = vmatpush1.msra.mxu0 0.0
        %1931 = vmatprep.subr.mxu0 0.0
        %1932 = vmatpush1.msra.mxu0 0.0
        %1933 = vmatprep.subr.mxu0 0.0
        %1934 = vmatpush1.msra.mxu0 0.0
        %1935 = vmatprep.subr.mxu0 0.0
        %1936 = vmatpush1.msra.mxu0 0.0
        %1937 = vmatprep.subr.mxu0 0.0
        %1938 = vmatpush1.msra.mxu0 0.0
        %1939 = vmatprep.subr.mxu0 0.0
        %1940 = vmatpush1.msra.mxu0 0.0
        %1941 = vmatprep.subr.mxu0 0.0
        %1942 = vmatpush1.msra.mxu0 0.0
        %1943 = vmatprep.subr.mxu0 0.0
        %1944 = vmatpush1.msra.mxu0 0.0
        %1945 = vmatprep.subr.mxu0 %v1696
        %1946 = vmatpush1.msra.mxu0 %v1695
        %1947 = vmatprep.subr.mxu0 0.0
        %1948 = vmatpush2.msra.mxu0 0.0
        %1949 = vmatprep.subr.mxu0 0.0
        %1950 = vmatpush2.msra.mxu0 0.0
        %1951 = vmatprep.subr.mxu0 0.0
        %1952 = vmatpush2.msra.mxu0 0.0
        %1953 = vmatprep.subr.mxu0 0.0
        %1954 = vmatpush2.msra.mxu0 0.0
        %1955 = vmatprep.subr.mxu0 0.0
        %1956 = vmatpush2.msra.mxu0 0.0
        %1957 = vmatprep.subr.mxu0 0.0
        %1958 = vmatpush2.msra.mxu0 0.0
        %1959 = vmatprep.subr.mxu0 0.0
        %1960 = vmatpush2.msra.mxu0 0.0
        %1961 = vmatprep.subr.mxu0 0.0
        %1962 = vmatpush2.msra.mxu0 0.0
        %1963 = vmatprep.subr.mxu0 0.0
        %1964 = vmatpush2.msra.mxu0 0.0
        %1965 = vmatprep.subr.mxu0 0.0
        %1966 = vmatpush2.msra.mxu0 0.0
        %1967 = vmatprep.subr.mxu0 0.0
        %1968 = vmatpush2.msra.mxu0 0.0
        %1969 = vmatprep.subr.mxu0 0.0
        %1970 = vmatpush2.msra.mxu0 0.0
        %1971 = vmatprep.subr.mxu0 0.0
        %1972 = vmatpush2.msra.mxu0 0.0
        %1973 = vmatprep.subr.mxu0 0.0
        %1974 = vmatpush2.msra.mxu0 0.0
        %1975 = vmatprep.subr.mxu0 0.0
        %1976 = vmatpush2.msra.mxu0 0.0
        %1977 = vmatprep.subr.mxu0 0.0
        %1978 = vmatpush2.msra.mxu0 0.0
        %1979 = vmatprep.mubr.f32.mxu0 0.0
        %1980 = vmatmul.mubr.f32.gmra.mxu0 %v1700
        %v1981 = vpop.f32.mrf.mxu0
        %v1982 = vadd.f32 0.0, %v1981
        %v1983 = vpop.f32.mrf.mxu0
        %v1984 = vadd.f32 0.0, %v1983
        %1985 = vdwg.mxu0
        %v1986 = vadd.f32 %v1375, %v1769
        %v1987 = vadd.f32 %v1377, %v1771
        %v1988 = vadd.f32 %v1446, %v1840
        %v1989 = vadd.f32 %v1448, %v1842
        %v1990 = vadd.f32 %v1517, %v1911
        %v1991 = vadd.f32 %v1519, %v1913
        %v1992 = vadd.f32 %v1588, %v1982
        %v1993 = vadd.f32 %v1590, %v1984
        %1994 = vrot.lane.b32.xlu0 %v538, 1
        %v1995 = vpop.permute.xlu0 %1994
        %1996 = vrot.lane.b32.xlu0 %v540, 1
        %v1997 = vpop.permute.xlu0 %1996
        %1998 = vrot.lane.b32.xlu0 %v609, 1
        %v1999 = vpop.permute.xlu0 %1998
        %2000 = vrot.lane.b32.xlu0 %v611, 1
        %v2001 = vpop.permute.xlu0 %2000
        %2002 = vrot.lane.b32.xlu0 %v680, 1
        %v2003 = vpop.permute.xlu0 %2002
        %2004 = vrot.lane.b32.xlu0 %v682, 1
        %v2005 = vpop.permute.xlu0 %2004
        %2006 = vrot.lane.b32.xlu0 %v751, 1
        %v2007 = vpop.permute.xlu0 %2006
        %2008 = vrot.lane.b32.xlu0 %v753, 1
        %v2009 = vpop.permute.xlu0 %2008
        %vm2010 = vcmask 7168
        %v2011 = vsel %vm2010, %v1995, %v1997
        %v2012 = vsel %vm2010, %v1997, %v1999
        %v2013 = vsel %vm2010, %v1999, %v2001
        %v2014 = vsel %vm2010, %v2001, %v2003
        %v2015 = vsel %vm2010, %v2003, %v2005
        %v2016 = vsel %vm2010, %v2005, %v2007
        %v2017 = vsel %vm2010, %v2007, %v2009
        %v2026 = vsel %vm2010, 0.0, %v1995
        %vm2027 = vcmp.ge.s32.totalorder %v764, 0
        %vm2028 = vcmp.ge.s32.totalorder %v765, 0
        %vm2029 = vcmp.ge.s32.totalorder %v766, 0
        %vm2030 = vcmp.ge.s32.totalorder %v767, 0
        %vm2031 = vcmp.ge.s32.totalorder %v768, 0
        %vm2032 = vcmp.ge.s32.totalorder %v769, 0
        %vm2033 = vcmp.ge.s32.totalorder %v770, 0
        %vm2034 = vcmp.ge.s32.totalorder %v771, 0
        %vm2035 = vmand %vm845, %vm2027
        %vm2036 = vmand %vm846, %vm2028
        %vm2037 = vmand %vm847, %vm2029
        %vm2038 = vmand %vm848, %vm2030
        %vm2039 = vmand %vm849, %vm2031
        %vm2040 = vmand %vm850, %vm2032
        %vm2041 = vmand %vm851, %vm2033
        %vm2042 = vmand %vm852, %vm2034
        %vm2043 = vcmp.lt.s32.totalorder %v764, 32
        %vm2044 = vcmp.lt.s32.totalorder %v765, 32
        %vm2045 = vcmp.lt.s32.totalorder %v766, 32
        %vm2046 = vcmp.lt.s32.totalorder %v767, 32
        %vm2047 = vcmp.lt.s32.totalorder %v768, 32
        %vm2048 = vcmp.lt.s32.totalorder %v769, 32
        %vm2049 = vcmp.lt.s32.totalorder %v770, 32
        %vm2050 = vcmp.lt.s32.totalorder %v771, 32
        %vm2051 = vmand %vm2035, %vm2043
        %vm2052 = vmand %vm2036, %vm2044
        %vm2053 = vmand %vm2037, %vm2045
        %vm2054 = vmand %vm2038, %vm2046
        %vm2055 = vmand %vm2039, %vm2047
        %vm2056 = vmand %vm2040, %vm2048
        %vm2057 = vmand %vm2041, %vm2049
        %vm2058 = vmand %vm2042, %vm2050
        %v2059 = vsel %vm2051, 1, 0
        %v2060 = vsel %vm2052, 1, 0
        %v2061 = vsel %vm2053, 1, 0
        %v2062 = vsel %vm2054, 1, 0
        %v2063 = vsel %vm2055, 1, 0
        %v2064 = vsel %vm2056, 1, 0
        %v2065 = vsel %vm2057, 1, 0
        %v2066 = vsel %vm2058, 1, 0
        %vm2067 = vcmp.eq.s32.totalorder %v2059, 1
        %vm2068 = vcmp.eq.s32.totalorder %v2060, 1
        %vm2069 = vcmp.eq.s32.totalorder %v2061, 1
        %vm2070 = vcmp.eq.s32.totalorder %v2062, 1
        %vm2071 = vcmp.eq.s32.totalorder %v2063, 1
        %vm2072 = vcmp.eq.s32.totalorder %v2064, 1
        %vm2073 = vcmp.eq.s32.totalorder %v2065, 1
        %vm2074 = vcmp.eq.s32.totalorder %v2066, 1
        %v2075 = vsel %vm2067, %v2026, 0.0
        %v2076 = vsel %vm2068, %v2011, 0.0
        %v2077 = vsel %vm2069, %v2012, 0.0
        %v2078 = vsel %vm2070, %v2013, 0.0
        %v2079 = vsel %vm2071, %v2014, 0.0
        %v2080 = vsel %vm2072, %v2015, 0.0
        %v2081 = vsel %vm2073, %v2016, 0.0
        %v2082 = vsel %vm2074, %v2017, 0.0
        %s2083 = scalar_lea.vmem %s2, 24
        %v2084 = vld [vmem:[%s2083] sm:$0xff]
        %v2086 = vsel %vm1017, %v2084, 0
        %2088 = vmatprep.subr.mxu0 0.0
        %2089 = vmatpush1.msra.mxu0 0.0
        %2090 = vmatprep.subr.mxu0 0.0
        %2091 = vmatpush1.msra.mxu0 0.0
        %2092 = vmatprep.subr.mxu0 0.0
        %2093 = vmatpush1.msra.mxu0 0.0
        %2094 = vmatprep.subr.mxu0 0.0
        %2095 = vmatpush1.msra.mxu0 0.0
        %2096 = vmatprep.subr.mxu0 0.0
        %2097 = vmatpush1.msra.mxu0 0.0
        %2098 = vmatprep.subr.mxu0 0.0
        %2099 = vmatpush1.msra.mxu0 0.0
        %2100 = vmatprep.subr.mxu0 0.0
        %2101 = vmatpush1.msra.mxu0 0.0
        %2102 = vmatprep.subr.mxu0 0.0
        %2103 = vmatpush1.msra.mxu0 0.0
        %2104 = vmatprep.subr.mxu0 0.0
        %2105 = vmatpush1.msra.mxu0 0.0
        %2106 = vmatprep.subr.mxu0 0.0
        %2107 = vmatpush1.msra.mxu0 0.0
        %2108 = vmatprep.subr.mxu0 0.0
        %2109 = vmatpush1.msra.mxu0 0.0
        %2110 = vmatprep.subr.mxu0 0.0
        %2111 = vmatpush1.msra.mxu0 0.0
        %2112 = vmatprep.subr.mxu0 0.0
        %2113 = vmatpush1.msra.mxu0 0.0
        %2114 = vmatprep.subr.mxu0 0.0
        %2115 = vmatpush1.msra.mxu0 0.0
        %2116 = vmatprep.subr.mxu0 0.0
        %2117 = vmatpush1.msra.mxu0 0.0
        %2118 = vmatprep.subr.mxu0 %v2076
        %2119 = vmatpush1.msra.mxu0 %v2075
        %2120 = vmatprep.subr.mxu0 0.0
        %2121 = vmatpush2.msra.mxu0 0.0
        %2122 = vmatprep.subr.mxu0 0.0
        %2123 = vmatpush2.msra.mxu0 0.0
        %2124 = vmatprep.subr.mxu0 0.0
        %2125 = vmatpush2.msra.mxu0 0.0
        %2126 = vmatprep.subr.mxu0 0.0
        %2127 = vmatpush2.msra.mxu0 0.0
        %2128 = vmatprep.subr.mxu0 0.0
        %2129 = vmatpush2.msra.mxu0 0.0
        %2130 = vmatprep.subr.mxu0 0.0
        %2131 = vmatpush2.msra.mxu0 0.0
        %2132 = vmatprep.subr.mxu0 0.0
        %2133 = vmatpush2.msra.mxu0 0.0
        %2134 = vmatprep.subr.mxu0 0.0
        %2135 = vmatpush2.msra.mxu0 0.0
        %2136 = vmatprep.subr.mxu0 0.0
        %2137 = vmatpush2.msra.mxu0 0.0
        %2138 = vmatprep.subr.mxu0 0.0
        %2139 = vmatpush2.msra.mxu0 0.0
        %2140 = vmatprep.subr.mxu0 0.0
        %2141 = vmatpush2.msra.mxu0 0.0
        %2142 = vmatprep.subr.mxu0 0.0
        %2143 = vmatpush2.msra.mxu0 0.0
        %2144 = vmatprep.subr.mxu0 0.0
        %2145 = vmatpush2.msra.mxu0 0.0
        %2146 = vmatprep.subr.mxu0 0.0
        %2147 = vmatpush2.msra.mxu0 0.0
        %2148 = vmatprep.subr.mxu0 0.0
        %2149 = vmatpush2.msra.mxu0 0.0
        %2150 = vmatprep.subr.mxu0 0.0
        %2151 = vmatpush2.msra.mxu0 0.0
        %2152 = vmatprep.mubr.f32.mxu0 0.0
        %2153 = vmatmul.mubr.f32.gmra.mxu0 %v2086
        %v2154 = vpop.f32.mrf.mxu0
        %v2155 = vadd.f32 0.0, %v2154
        %v2156 = vpop.f32.mrf.mxu0
        %v2157 = vadd.f32 0.0, %v2156
        %2158 = vdwg.mxu0
        %2159 = vmatprep.subr.mxu0 0.0
        %2160 = vmatpush1.msra.mxu0 0.0
        %2161 = vmatprep.subr.mxu0 0.0
        %2162 = vmatpush1.msra.mxu0 0.0
        %2163 = vmatprep.subr.mxu0 0.0
        %2164 = vmatpush1.msra.mxu0 0.0
        %2165 = vmatprep.subr.mxu0 0.0
        %2166 = vmatpush1.msra.mxu0 0.0
        %2167 = vmatprep.subr.mxu0 0.0
        %2168 = vmatpush1.msra.mxu0 0.0
        %2169 = vmatprep.subr.mxu0 0.0
        %2170 = vmatpush1.msra.mxu0 0.0
        %2171 = vmatprep.subr.mxu0 0.0
        %2172 = vmatpush1.msra.mxu0 0.0
        %2173 = vmatprep.subr.mxu0 0.0
        %2174 = vmatpush1.msra.mxu0 0.0
        %2175 = vmatprep.subr.mxu0 0.0
        %2176 = vmatpush1.msra.mxu0 0.0
        %2177 = vmatprep.subr.mxu0 0.0
        %2178 = vmatpush1.msra.mxu0 0.0
        %2179 = vmatprep.subr.mxu0 0.0
        %2180 = vmatpush1.msra.mxu0 0.0
        %2181 = vmatprep.subr.mxu0 0.0
        %2182 = vmatpush1.msra.mxu0 0.0
        %2183 = vmatprep.subr.mxu0 0.0
        %2184 = vmatpush1.msra.mxu0 0.0
        %2185 = vmatprep.subr.mxu0 0.0
        %2186 = vmatpush1.msra.mxu0 0.0
        %2187 = vmatprep.subr.mxu0 0.0
        %2188 = vmatpush1.msra.mxu0 0.0
        %2189 = vmatprep.subr.mxu0 %v2078
        %2190 = vmatpush1.msra.mxu0 %v2077
        %2191 = vmatprep.subr.mxu0 0.0
        %2192 = vmatpush2.msra.mxu0 0.0
        %2193 = vmatprep.subr.mxu0 0.0
        %2194 = vmatpush2.msra.mxu0 0.0
        %2195 = vmatprep.subr.mxu0 0.0
        %2196 = vmatpush2.msra.mxu0 0.0
        %2197 = vmatprep.subr.mxu0 0.0
        %2198 = vmatpush2.msra.mxu0 0.0
        %2199 = vmatprep.subr.mxu0 0.0
        %2200 = vmatpush2.msra.mxu0 0.0
        %2201 = vmatprep.subr.mxu0 0.0
        %2202 = vmatpush2.msra.mxu0 0.0
        %2203 = vmatprep.subr.mxu0 0.0
        %2204 = vmatpush2.msra.mxu0 0.0
        %2205 = vmatprep.subr.mxu0 0.0
        %2206 = vmatpush2.msra.mxu0 0.0
        %2207 = vmatprep.subr.mxu0 0.0
        %2208 = vmatpush2.msra.mxu0 0.0
        %2209 = vmatprep.subr.mxu0 0.0
        %2210 = vmatpush2.msra.mxu0 0.0
        %2211 = vmatprep.subr.mxu0 0.0
        %2212 = vmatpush2.msra.mxu0 0.0
        %2213 = vmatprep.subr.mxu0 0.0
        %2214 = vmatpush2.msra.mxu0 0.0
        %2215 = vmatprep.subr.mxu0 0.0
        %2216 = vmatpush2.msra.mxu0 0.0
        %2217 = vmatprep.subr.mxu0 0.0
        %2218 = vmatpush2.msra.mxu0 0.0
        %2219 = vmatprep.subr.mxu0 0.0
        %2220 = vmatpush2.msra.mxu0 0.0
        %2221 = vmatprep.subr.mxu0 0.0
        %2222 = vmatpush2.msra.mxu0 0.0
        %2223 = vmatprep.mubr.f32.mxu0 0.0
        %2224 = vmatmul.mubr.f32.gmra.mxu0 %v2086
        %v2225 = vpop.f32.mrf.mxu0
        %v2226 = vadd.f32 0.0, %v2225
        %v2227 = vpop.f32.mrf.mxu0
        %v2228 = vadd.f32 0.0, %v2227
        %2229 = vdwg.mxu0
        %2230 = vmatprep.subr.mxu0 0.0
        %2231 = vmatpush1.msra.mxu0 0.0
        %2232 = vmatprep.subr.mxu0 0.0
        %2233 = vmatpush1.msra.mxu0 0.0
        %2234 = vmatprep.subr.mxu0 0.0
        %2235 = vmatpush1.msra.mxu0 0.0
        %2236 = vmatprep.subr.mxu0 0.0
        %2237 = vmatpush1.msra.mxu0 0.0
        %2238 = vmatprep.subr.mxu0 0.0
        %2239 = vmatpush1.msra.mxu0 0.0
        %2240 = vmatprep.subr.mxu0 0.0
        %2241 = vmatpush1.msra.mxu0 0.0
        %2242 = vmatprep.subr.mxu0 0.0
        %2243 = vmatpush1.msra.mxu0 0.0
        %2244 = vmatprep.subr.mxu0 0.0
        %2245 = vmatpush1.msra.mxu0 0.0
        %2246 = vmatprep.subr.mxu0 0.0
        %2247 = vmatpush1.msra.mxu0 0.0
        %2248 = vmatprep.subr.mxu0 0.0
        %2249 = vmatpush1.msra.mxu0 0.0
        %2250 = vmatprep.subr.mxu0 0.0
        %2251 = vmatpush1.msra.mxu0 0.0
        %2252 = vmatprep.subr.mxu0 0.0
        %2253 = vmatpush1.msra.mxu0 0.0
        %2254 = vmatprep.subr.mxu0 0.0
        %2255 = vmatpush1.msra.mxu0 0.0
        %2256 = vmatprep.subr.mxu0 0.0
        %2257 = vmatpush1.msra.mxu0 0.0
        %2258 = vmatprep.subr.mxu0 0.0
        %2259 = vmatpush1.msra.mxu0 0.0
        %2260 = vmatprep.subr.mxu0 %v2080
        %2261 = vmatpush1.msra.mxu0 %v2079
        %2262 = vmatprep.subr.mxu0 0.0
        %2263 = vmatpush2.msra.mxu0 0.0
        %2264 = vmatprep.subr.mxu0 0.0
        %2265 = vmatpush2.msra.mxu0 0.0
        %2266 = vmatprep.subr.mxu0 0.0
        %2267 = vmatpush2.msra.mxu0 0.0
        %2268 = vmatprep.subr.mxu0 0.0
        %2269 = vmatpush2.msra.mxu0 0.0
        %2270 = vmatprep.subr.mxu0 0.0
        %2271 = vmatpush2.msra.mxu0 0.0
        %2272 = vmatprep.subr.mxu0 0.0
        %2273 = vmatpush2.msra.mxu0 0.0
        %2274 = vmatprep.subr.mxu0 0.0
        %2275 = vmatpush2.msra.mxu0 0.0
        %2276 = vmatprep.subr.mxu0 0.0
        %2277 = vmatpush2.msra.mxu0 0.0
        %2278 = vmatprep.subr.mxu0 0.0
        %2279 = vmatpush2.msra.mxu0 0.0
        %2280 = vmatprep.subr.mxu0 0.0
        %2281 = vmatpush2.msra.mxu0 0.0
        %2282 = vmatprep.subr.mxu0 0.0
        %2283 = vmatpush2.msra.mxu0 0.0
        %2284 = vmatprep.subr.mxu0 0.0
        %2285 = vmatpush2.msra.mxu0 0.0
        %2286 = vmatprep.subr.mxu0 0.0
        %2287 = vmatpush2.msra.mxu0 0.0
        %2288 = vmatprep.subr.mxu0 0.0
        %2289 = vmatpush2.msra.mxu0 0.0
        %2290 = vmatprep.subr.mxu0 0.0
        %2291 = vmatpush2.msra.mxu0 0.0
        %2292 = vmatprep.subr.mxu0 0.0
        %2293 = vmatpush2.msra.mxu0 0.0
        %2294 = vmatprep.mubr.f32.mxu0 0.0
        %2295 = vmatmul.mubr.f32.gmra.mxu0 %v2086
        %v2296 = vpop.f32.mrf.mxu0
        %v2297 = vadd.f32 0.0, %v2296
        %v2298 = vpop.f32.mrf.mxu0
        %v2299 = vadd.f32 0.0, %v2298
        %2300 = vdwg.mxu0
        %2301 = vmatprep.subr.mxu0 0.0
        %2302 = vmatpush1.msra.mxu0 0.0
        %2303 = vmatprep.subr.mxu0 0.0
        %2304 = vmatpush1.msra.mxu0 0.0
        %2305 = vmatprep.subr.mxu0 0.0
        %2306 = vmatpush1.msra.mxu0 0.0
        %2307 = vmatprep.subr.mxu0 0.0
        %2308 = vmatpush1.msra.mxu0 0.0
        %2309 = vmatprep.subr.mxu0 0.0
        %2310 = vmatpush1.msra.mxu0 0.0
        %2311 = vmatprep.subr.mxu0 0.0
        %2312 = vmatpush1.msra.mxu0 0.0
        %2313 = vmatprep.subr.mxu0 0.0
        %2314 = vmatpush1.msra.mxu0 0.0
        %2315 = vmatprep.subr.mxu0 0.0
        %2316 = vmatpush1.msra.mxu0 0.0
        %2317 = vmatprep.subr.mxu0 0.0
        %2318 = vmatpush1.msra.mxu0 0.0
        %2319 = vmatprep.subr.mxu0 0.0
        %2320 = vmatpush1.msra.mxu0 0.0
        %2321 = vmatprep.subr.mxu0 0.0
        %2322 = vmatpush1.msra.mxu0 0.0
        %2323 = vmatprep.subr.mxu0 0.0
        %2324 = vmatpush1.msra.mxu0 0.0
        %2325 = vmatprep.subr.mxu0 0.0
        %2326 = vmatpush1.msra.mxu0 0.0
        %2327 = vmatprep.subr.mxu0 0.0
        %2328 = vmatpush1.msra.mxu0 0.0
        %2329 = vmatprep.subr.mxu0 0.0
        %2330 = vmatpush1.msra.mxu0 0.0
        %2331 = vmatprep.subr.mxu0 %v2082
        %2332 = vmatpush1.msra.mxu0 %v2081
        %2333 = vmatprep.subr.mxu0 0.0
        %2334 = vmatpush2.msra.mxu0 0.0
        %2335 = vmatprep.subr.mxu0 0.0
        %2336 = vmatpush2.msra.mxu0 0.0
        %2337 = vmatprep.subr.mxu0 0.0
        %2338 = vmatpush2.msra.mxu0 0.0
        %2339 = vmatprep.subr.mxu0 0.0
        %2340 = vmatpush2.msra.mxu0 0.0
        %2341 = vmatprep.subr.mxu0 0.0
        %2342 = vmatpush2.msra.mxu0 0.0
        %2343 = vmatprep.subr.mxu0 0.0
        %2344 = vmatpush2.msra.mxu0 0.0
        %2345 = vmatprep.subr.mxu0 0.0
        %2346 = vmatpush2.msra.mxu0 0.0
        %2347 = vmatprep.subr.mxu0 0.0
        %2348 = vmatpush2.msra.mxu0 0.0
        %2349 = vmatprep.subr.mxu0 0.0
        %2350 = vmatpush2.msra.mxu0 0.0
        %2351 = vmatprep.subr.mxu0 0.0
        %2352 = vmatpush2.msra.mxu0 0.0
        %2353 = vmatprep.subr.mxu0 0.0
        %2354 = vmatpush2.msra.mxu0 0.0
        %2355 = vmatprep.subr.mxu0 0.0
        %2356 = vmatpush2.msra.mxu0 0.0
        %2357 = vmatprep.subr.mxu0 0.0
        %2358 = vmatpush2.msra.mxu0 0.0
        %2359 = vmatprep.subr.mxu0 0.0
        %2360 = vmatpush2.msra.mxu0 0.0
        %2361 = vmatprep.subr.mxu0 0.0
        %2362 = vmatpush2.msra.mxu0 0.0
        %2363 = vmatprep.subr.mxu0 0.0
        %2364 = vmatpush2.msra.mxu0 0.0
        %2365 = vmatprep.mubr.f32.mxu0 0.0
        %2366 = vmatmul.mubr.f32.gmra.mxu0 %v2086
        %v2367 = vpop.f32.mrf.mxu0
        %v2368 = vadd.f32 0.0, %v2367
        %v2369 = vpop.f32.mrf.mxu0
        %v2370 = vadd.f32 0.0, %v2369
        %2371 = vdwg.mxu0
        %v2372 = vadd.f32 %v1986, %v2155
        %v2373 = vadd.f32 %v1987, %v2157
        %v2374 = vadd.f32 %v1988, %v2226
        %v2375 = vadd.f32 %v1989, %v2228
        %v2376 = vadd.f32 %v1990, %v2297
        %v2377 = vadd.f32 %v1991, %v2299
        %v2378 = vadd.f32 %v1992, %v2368
        %v2379 = vadd.f32 %v1993, %v2370
        %s2380 = scalar_lea.vmem %s2, 32
        %v2381 = vld [vmem:[%s2380] sm:$0xff]
        %v2383 = vsel %vm1017, %v2381, 0
        %2385 = vmatprep.subr.mxu0 0.0
        %2386 = vmatpush1.msra.mxu0 0.0
        %2387 = vmatprep.subr.mxu0 0.0
        %2388 = vmatpush1.msra.mxu0 0.0
        %2389 = vmatprep.subr.mxu0 0.0
        %2390 = vmatpush1.msra.mxu0 0.0
        %2391 = vmatprep.subr.mxu0 0.0
        %2392 = vmatpush1.msra.mxu0 0.0
        %2393 = vmatprep.subr.mxu0 0.0
        %2394 = vmatpush1.msra.mxu0 0.0
        %2395 = vmatprep.subr.mxu0 0.0
        %2396 = vmatpush1.msra.mxu0 0.0
        %2397 = vmatprep.subr.mxu0 0.0
        %2398 = vmatpush1.msra.mxu0 0.0
        %2399 = vmatprep.subr.mxu0 0.0
        %2400 = vmatpush1.msra.mxu0 0.0
        %2401 = vmatprep.subr.mxu0 0.0
        %2402 = vmatpush1.msra.mxu0 0.0
        %2403 = vmatprep.subr.mxu0 0.0
        %2404 = vmatpush1.msra.mxu0 0.0
        %2405 = vmatprep.subr.mxu0 0.0
        %2406 = vmatpush1.msra.mxu0 0.0
        %2407 = vmatprep.subr.mxu0 0.0
        %2408 = vmatpush1.msra.mxu0 0.0
        %2409 = vmatprep.subr.mxu0 0.0
        %2410 = vmatpush1.msra.mxu0 0.0
        %2411 = vmatprep.subr.mxu0 0.0
        %2412 = vmatpush1.msra.mxu0 0.0
        %2413 = vmatprep.subr.mxu0 0.0
        %2414 = vmatpush1.msra.mxu0 0.0
        %2415 = vmatprep.subr.mxu0 %v540
        %2416 = vmatpush1.msra.mxu0 %v538
        %2417 = vmatprep.subr.mxu0 0.0
        %2418 = vmatpush2.msra.mxu0 0.0
        %2419 = vmatprep.subr.mxu0 0.0
        %2420 = vmatpush2.msra.mxu0 0.0
        %2421 = vmatprep.subr.mxu0 0.0
        %2422 = vmatpush2.msra.mxu0 0.0
        %2423 = vmatprep.subr.mxu0 0.0
        %2424 = vmatpush2.msra.mxu0 0.0
        %2425 = vmatprep.subr.mxu0 0.0
        %2426 = vmatpush2.msra.mxu0 0.0
        %2427 = vmatprep.subr.mxu0 0.0
        %2428 = vmatpush2.msra.mxu0 0.0
        %2429 = vmatprep.subr.mxu0 0.0
        %2430 = vmatpush2.msra.mxu0 0.0
        %2431 = vmatprep.subr.mxu0 0.0
        %2432 = vmatpush2.msra.mxu0 0.0
        %2433 = vmatprep.subr.mxu0 0.0
        %2434 = vmatpush2.msra.mxu0 0.0
        %2435 = vmatprep.subr.mxu0 0.0
        %2436 = vmatpush2.msra.mxu0 0.0
        %2437 = vmatprep.subr.mxu0 0.0
        %2438 = vmatpush2.msra.mxu0 0.0
        %2439 = vmatprep.subr.mxu0 0.0
        %2440 = vmatpush2.msra.mxu0 0.0
        %2441 = vmatprep.subr.mxu0 0.0
        %2442 = vmatpush2.msra.mxu0 0.0
        %2443 = vmatprep.subr.mxu0 0.0
        %2444 = vmatpush2.msra.mxu0 0.0
        %2445 = vmatprep.subr.mxu0 0.0
        %2446 = vmatpush2.msra.mxu0 0.0
        %2447 = vmatprep.subr.mxu0 0.0
        %2448 = vmatpush2.msra.mxu0 0.0
        %2449 = vmatprep.mubr.f32.mxu0 0.0
        %2450 = vmatmul.mubr.f32.gmra.mxu0 %v2383
        %v2451 = vpop.f32.mrf.mxu0
        %v2452 = vadd.f32 0.0, %v2451
        %v2453 = vpop.f32.mrf.mxu0
        %v2454 = vadd.f32 0.0, %v2453
        %2455 = vdwg.mxu0
        %2456 = vmatprep.subr.mxu0 0.0
        %2457 = vmatpush1.msra.mxu0 0.0
        %2458 = vmatprep.subr.mxu0 0.0
        %2459 = vmatpush1.msra.mxu0 0.0
        %2460 = vmatprep.subr.mxu0 0.0
        %2461 = vmatpush1.msra.mxu0 0.0
        %2462 = vmatprep.subr.mxu0 0.0
        %2463 = vmatpush1.msra.mxu0 0.0
        %2464 = vmatprep.subr.mxu0 0.0
        %2465 = vmatpush1.msra.mxu0 0.0
        %2466 = vmatprep.subr.mxu0 0.0
        %2467 = vmatpush1.msra.mxu0 0.0
        %2468 = vmatprep.subr.mxu0 0.0
        %2469 = vmatpush1.msra.mxu0 0.0
        %2470 = vmatprep.subr.mxu0 0.0
        %2471 = vmatpush1.msra.mxu0 0.0
        %2472 = vmatprep.subr.mxu0 0.0
        %2473 = vmatpush1.msra.mxu0 0.0
        %2474 = vmatprep.subr.mxu0 0.0
        %2475 = vmatpush1.msra.mxu0 0.0
        %2476 = vmatprep.subr.mxu0 0.0
        %2477 = vmatpush1.msra.mxu0 0.0
        %2478 = vmatprep.subr.mxu0 0.0
        %2479 = vmatpush1.msra.mxu0 0.0
        %2480 = vmatprep.subr.mxu0 0.0
        %2481 = vmatpush1.msra.mxu0 0.0
        %2482 = vmatprep.subr.mxu0 0.0
        %2483 = vmatpush1.msra.mxu0 0.0
        %2484 = vmatprep.subr.mxu0 0.0
        %2485 = vmatpush1.msra.mxu0 0.0
        %2486 = vmatprep.subr.mxu0 %v611
        %2487 = vmatpush1.msra.mxu0 %v609
        %2488 = vmatprep.subr.mxu0 0.0
        %2489 = vmatpush2.msra.mxu0 0.0
        %2490 = vmatprep.subr.mxu0 0.0
        %2491 = vmatpush2.msra.mxu0 0.0
        %2492 = vmatprep.subr.mxu0 0.0
        %2493 = vmatpush2.msra.mxu0 0.0
        %2494 = vmatprep.subr.mxu0 0.0
        %2495 = vmatpush2.msra.mxu0 0.0
        %2496 = vmatprep.subr.mxu0 0.0
        %2497 = vmatpush2.msra.mxu0 0.0
        %2498 = vmatprep.subr.mxu0 0.0
        %2499 = vmatpush2.msra.mxu0 0.0
        %2500 = vmatprep.subr.mxu0 0.0
        %2501 = vmatpush2.msra.mxu0 0.0
        %2502 = vmatprep.subr.mxu0 0.0
        %2503 = vmatpush2.msra.mxu0 0.0
        %2504 = vmatprep.subr.mxu0 0.0
        %2505 = vmatpush2.msra.mxu0 0.0
        %2506 = vmatprep.subr.mxu0 0.0
        %2507 = vmatpush2.msra.mxu0 0.0
        %2508 = vmatprep.subr.mxu0 0.0
        %2509 = vmatpush2.msra.mxu0 0.0
        %2510 = vmatprep.subr.mxu0 0.0
        %2511 = vmatpush2.msra.mxu0 0.0
        %2512 = vmatprep.subr.mxu0 0.0
        %2513 = vmatpush2.msra.mxu0 0.0
        %2514 = vmatprep.subr.mxu0 0.0
        %2515 = vmatpush2.msra.mxu0 0.0
        %2516 = vmatprep.subr.mxu0 0.0
        %2517 = vmatpush2.msra.mxu0 0.0
        %2518 = vmatprep.subr.mxu0 0.0
        %2519 = vmatpush2.msra.mxu0 0.0
        %2520 = vmatprep.mubr.f32.mxu0 0.0
        %2521 = vmatmul.mubr.f32.gmra.mxu0 %v2383
        %v2522 = vpop.f32.mrf.mxu0
        %v2523 = vadd.f32 0.0, %v2522
        %v2524 = vpop.f32.mrf.mxu0
        %v2525 = vadd.f32 0.0, %v2524
        %2526 = vdwg.mxu0
        %2527 = vmatprep.subr.mxu0 0.0
        %2528 = vmatpush1.msra.mxu0 0.0
        %2529 = vmatprep.subr.mxu0 0.0
        %2530 = vmatpush1.msra.mxu0 0.0
        %2531 = vmatprep.subr.mxu0 0.0
        %2532 = vmatpush1.msra.mxu0 0.0
        %2533 = vmatprep.subr.mxu0 0.0
        %2534 = vmatpush1.msra.mxu0 0.0
        %2535 = vmatprep.subr.mxu0 0.0
        %2536 = vmatpush1.msra.mxu0 0.0
        %2537 = vmatprep.subr.mxu0 0.0
        %2538 = vmatpush1.msra.mxu0 0.0
        %2539 = vmatprep.subr.mxu0 0.0
        %2540 = vmatpush1.msra.mxu0 0.0
        %2541 = vmatprep.subr.mxu0 0.0
        %2542 = vmatpush1.msra.mxu0 0.0
        %2543 = vmatprep.subr.mxu0 0.0
        %2544 = vmatpush1.msra.mxu0 0.0
        %2545 = vmatprep.subr.mxu0 0.0
        %2546 = vmatpush1.msra.mxu0 0.0
        %2547 = vmatprep.subr.mxu0 0.0
        %2548 = vmatpush1.msra.mxu0 0.0
        %2549 = vmatprep.subr.mxu0 0.0
        %2550 = vmatpush1.msra.mxu0 0.0
        %2551 = vmatprep.subr.mxu0 0.0
        %2552 = vmatpush1.msra.mxu0 0.0
        %2553 = vmatprep.subr.mxu0 0.0
        %2554 = vmatpush1.msra.mxu0 0.0
        %2555 = vmatprep.subr.mxu0 0.0
        %2556 = vmatpush1.msra.mxu0 0.0
        %2557 = vmatprep.subr.mxu0 %v682
        %2558 = vmatpush1.msra.mxu0 %v680
        %2559 = vmatprep.subr.mxu0 0.0
        %2560 = vmatpush2.msra.mxu0 0.0
        %2561 = vmatprep.subr.mxu0 0.0
        %2562 = vmatpush2.msra.mxu0 0.0
        %2563 = vmatprep.subr.mxu0 0.0
        %2564 = vmatpush2.msra.mxu0 0.0
        %2565 = vmatprep.subr.mxu0 0.0
        %2566 = vmatpush2.msra.mxu0 0.0
        %2567 = vmatprep.subr.mxu0 0.0
        %2568 = vmatpush2.msra.mxu0 0.0
        %2569 = vmatprep.subr.mxu0 0.0
        %2570 = vmatpush2.msra.mxu0 0.0
        %2571 = vmatprep.subr.mxu0 0.0
        %2572 = vmatpush2.msra.mxu0 0.0
        %2573 = vmatprep.subr.mxu0 0.0
        %2574 = vmatpush2.msra.mxu0 0.0
        %2575 = vmatprep.subr.mxu0 0.0
        %2576 = vmatpush2.msra.mxu0 0.0
        %2577 = vmatprep.subr.mxu0 0.0
        %2578 = vmatpush2.msra.mxu0 0.0
        %2579 = vmatprep.subr.mxu0 0.0
        %2580 = vmatpush2.msra.mxu0 0.0
        %2581 = vmatprep.subr.mxu0 0.0
        %2582 = vmatpush2.msra.mxu0 0.0
        %2583 = vmatprep.subr.mxu0 0.0
        %2584 = vmatpush2.msra.mxu0 0.0
        %2585 = vmatprep.subr.mxu0 0.0
        %2586 = vmatpush2.msra.mxu0 0.0
        %2587 = vmatprep.subr.mxu0 0.0
        %2588 = vmatpush2.msra.mxu0 0.0
        %2589 = vmatprep.subr.mxu0 0.0
        %2590 = vmatpush2.msra.mxu0 0.0
        %2591 = vmatprep.mubr.f32.mxu0 0.0
        %2592 = vmatmul.mubr.f32.gmra.mxu0 %v2383
        %v2593 = vpop.f32.mrf.mxu0
        %v2594 = vadd.f32 0.0, %v2593
        %v2595 = vpop.f32.mrf.mxu0
        %v2596 = vadd.f32 0.0, %v2595
        %2597 = vdwg.mxu0
        %2598 = vmatprep.subr.mxu0 0.0
        %2599 = vmatpush1.msra.mxu0 0.0
        %2600 = vmatprep.subr.mxu0 0.0
        %2601 = vmatpush1.msra.mxu0 0.0
        %2602 = vmatprep.subr.mxu0 0.0
        %2603 = vmatpush1.msra.mxu0 0.0
        %2604 = vmatprep.subr.mxu0 0.0
        %2605 = vmatpush1.msra.mxu0 0.0
        %2606 = vmatprep.subr.mxu0 0.0
        %2607 = vmatpush1.msra.mxu0 0.0
        %2608 = vmatprep.subr.mxu0 0.0
        %2609 = vmatpush1.msra.mxu0 0.0
        %2610 = vmatprep.subr.mxu0 0.0
        %2611 = vmatpush1.msra.mxu0 0.0
        %2612 = vmatprep.subr.mxu0 0.0
        %2613 = vmatpush1.msra.mxu0 0.0
        %2614 = vmatprep.subr.mxu0 0.0
        %2615 = vmatpush1.msra.mxu0 0.0
        %2616 = vmatprep.subr.mxu0 0.0
        %2617 = vmatpush1.msra.mxu0 0.0
        %2618 = vmatprep.subr.mxu0 0.0
        %2619 = vmatpush1.msra.mxu0 0.0
        %2620 = vmatprep.subr.mxu0 0.0
        %2621 = vmatpush1.msra.mxu0 0.0
        %2622 = vmatprep.subr.mxu0 0.0
        %2623 = vmatpush1.msra.mxu0 0.0
        %2624 = vmatprep.subr.mxu0 0.0
        %2625 = vmatpush1.msra.mxu0 0.0
        %2626 = vmatprep.subr.mxu0 0.0
        %2627 = vmatpush1.msra.mxu0 0.0
        %2628 = vmatprep.subr.mxu0 %v753
        %2629 = vmatpush1.msra.mxu0 %v751
        %2630 = vmatprep.subr.mxu0 0.0
        %2631 = vmatpush2.msra.mxu0 0.0
        %2632 = vmatprep.subr.mxu0 0.0
        %2633 = vmatpush2.msra.mxu0 0.0
        %2634 = vmatprep.subr.mxu0 0.0
        %2635 = vmatpush2.msra.mxu0 0.0
        %2636 = vmatprep.subr.mxu0 0.0
        %2637 = vmatpush2.msra.mxu0 0.0
        %2638 = vmatprep.subr.mxu0 0.0
        %2639 = vmatpush2.msra.mxu0 0.0
        %2640 = vmatprep.subr.mxu0 0.0
        %2641 = vmatpush2.msra.mxu0 0.0
        %2642 = vmatprep.subr.mxu0 0.0
        %2643 = vmatpush2.msra.mxu0 0.0
        %2644 = vmatprep.subr.mxu0 0.0
        %2645 = vmatpush2.msra.mxu0 0.0
        %2646 = vmatprep.subr.mxu0 0.0
        %2647 = vmatpush2.msra.mxu0 0.0
        %2648 = vmatprep.subr.mxu0 0.0
        %2649 = vmatpush2.msra.mxu0 0.0
        %2650 = vmatprep.subr.mxu0 0.0
        %2651 = vmatpush2.msra.mxu0 0.0
        %2652 = vmatprep.subr.mxu0 0.0
        %2653 = vmatpush2.msra.mxu0 0.0
        %2654 = vmatprep.subr.mxu0 0.0
        %2655 = vmatpush2.msra.mxu0 0.0
        %2656 = vmatprep.subr.mxu0 0.0
        %2657 = vmatpush2.msra.mxu0 0.0
        %2658 = vmatprep.subr.mxu0 0.0
        %2659 = vmatpush2.msra.mxu0 0.0
        %2660 = vmatprep.subr.mxu0 0.0
        %2661 = vmatpush2.msra.mxu0 0.0
        %2662 = vmatprep.mubr.f32.mxu0 0.0
        %2663 = vmatmul.mubr.f32.gmra.mxu0 %v2383
        %v2664 = vpop.f32.mrf.mxu0
        %v2665 = vadd.f32 0.0, %v2664
        %v2666 = vpop.f32.mrf.mxu0
        %v2667 = vadd.f32 0.0, %v2666
        %2668 = vdwg.mxu0
        %v2669 = vadd.f32 %v2372, %v2452
        %v2670 = vadd.f32 %v2373, %v2454
        %v2671 = vadd.f32 %v2374, %v2523
        %v2672 = vadd.f32 %v2375, %v2525
        %v2673 = vadd.f32 %v2376, %v2594
        %v2674 = vadd.f32 %v2377, %v2596
        %v2675 = vadd.f32 %v2378, %v2665
        %v2676 = vadd.f32 %v2379, %v2667
        %2677 = vrot.lane.b32.xlu0 %v538, 127
        %v2678 = vpop.permute.xlu0 %2677
        %2679 = vrot.lane.b32.xlu0 %v540, 127
        %v2680 = vpop.permute.xlu0 %2679
        %2681 = vrot.lane.b32.xlu0 %v609, 127
        %v2682 = vpop.permute.xlu0 %2681
        %2683 = vrot.lane.b32.xlu0 %v611, 127
        %v2684 = vpop.permute.xlu0 %2683
        %2685 = vrot.lane.b32.xlu0 %v680, 127
        %v2686 = vpop.permute.xlu0 %2685
        %2687 = vrot.lane.b32.xlu0 %v682, 127
        %v2688 = vpop.permute.xlu0 %2687
        %2689 = vrot.lane.b32.xlu0 %v751, 127
        %v2690 = vpop.permute.xlu0 %2689
        %2691 = vrot.lane.b32.xlu0 %v753, 127
        %v2692 = vpop.permute.xlu0 %2691
        %vm2693 = vcmask 1039360
        %v2694 = vsel %vm2693, %v2678, %v2680
        %v2695 = vsel %vm2693, %v2680, %v2682
        %v2696 = vsel %vm2693, %v2682, %v2684
        %v2697 = vsel %vm2693, %v2684, %v2686
        %v2698 = vsel %vm2693, %v2686, %v2688
        %v2699 = vsel %vm2693, %v2688, %v2690
        %v2700 = vsel %vm2693, %v2690, %v2692
        %v2709 = vsel %vm2693, %v2692, 0.0
        %vm2710 = vmand %vm1649, %vm2027
        %vm2711 = vmand %vm1650, %vm2028
        %vm2712 = vmand %vm1651, %vm2029
        %vm2713 = vmand %vm1652, %vm2030
        %vm2714 = vmand %vm1653, %vm2031
        %vm2715 = vmand %vm1654, %vm2032
        %vm2716 = vmand %vm1655, %vm2033
        %vm2717 = vmand %vm1656, %vm2034
        %vm2718 = vmand %vm2710, %vm2043
        %vm2719 = vmand %vm2711, %vm2044
        %vm2720 = vmand %vm2712, %vm2045
        %vm2721 = vmand %vm2713, %vm2046
        %vm2722 = vmand %vm2714, %vm2047
        %vm2723 = vmand %vm2715, %vm2048
        %vm2724 = vmand %vm2716, %vm2049
        %vm2725 = vmand %vm2717, %vm2050
        %v2726 = vsel %vm2718, 1, 0
        %v2727 = vsel %vm2719, 1, 0
        %v2728 = vsel %vm2720, 1, 0
        %v2729 = vsel %vm2721, 1, 0
        %v2730 = vsel %vm2722, 1, 0
        %v2731 = vsel %vm2723, 1, 0
        %v2732 = vsel %vm2724, 1, 0
        %v2733 = vsel %vm2725, 1, 0
        %vm2734 = vcmp.eq.s32.totalorder %v2726, 1
        %vm2735 = vcmp.eq.s32.totalorder %v2727, 1
        %vm2736 = vcmp.eq.s32.totalorder %v2728, 1
        %vm2737 = vcmp.eq.s32.totalorder %v2729, 1
        %vm2738 = vcmp.eq.s32.totalorder %v2730, 1
        %vm2739 = vcmp.eq.s32.totalorder %v2731, 1
        %vm2740 = vcmp.eq.s32.totalorder %v2732, 1
        %vm2741 = vcmp.eq.s32.totalorder %v2733, 1
        %v2742 = vsel %vm2734, %v2694, 0.0
        %v2743 = vsel %vm2735, %v2695, 0.0
        %v2744 = vsel %vm2736, %v2696, 0.0
        %v2745 = vsel %vm2737, %v2697, 0.0
        %v2746 = vsel %vm2738, %v2698, 0.0
        %v2747 = vsel %vm2739, %v2699, 0.0
        %v2748 = vsel %vm2740, %v2700, 0.0
        %v2749 = vsel %vm2741, %v2709, 0.0
        %s2750 = scalar_lea.vmem %s2, 40
        %v2751 = vld [vmem:[%s2750] sm:$0xff]
        %v2753 = vsel %vm1017, %v2751, 0
        %2755 = vmatprep.subr.mxu0 0.0
        %2756 = vmatpush1.msra.mxu0 0.0
        %2757 = vmatprep.subr.mxu0 0.0
        %2758 = vmatpush1.msra.mxu0 0.0
        %2759 = vmatprep.subr.mxu0 0.0
        %2760 = vmatpush1.msra.mxu0 0.0
        %2761 = vmatprep.subr.mxu0 0.0
        %2762 = vmatpush1.msra.mxu0 0.0
        %2763 = vmatprep.subr.mxu0 0.0
        %2764 = vmatpush1.msra.mxu0 0.0
        %2765 = vmatprep.subr.mxu0 0.0
        %2766 = vmatpush1.msra.mxu0 0.0
        %2767 = vmatprep.subr.mxu0 0.0
        %2768 = vmatpush1.msra.mxu0 0.0
        %2769 = vmatprep.subr.mxu0 0.0
        %2770 = vmatpush1.msra.mxu0 0.0
        %2771 = vmatprep.subr.mxu0 0.0
        %2772 = vmatpush1.msra.mxu0 0.0
        %2773 = vmatprep.subr.mxu0 0.0
        %2774 = vmatpush1.msra.mxu0 0.0
        %2775 = vmatprep.subr.mxu0 0.0
        %2776 = vmatpush1.msra.mxu0 0.0
        %2777 = vmatprep.subr.mxu0 0.0
        %2778 = vmatpush1.msra.mxu0 0.0
        %2779 = vmatprep.subr.mxu0 0.0
        %2780 = vmatpush1.msra.mxu0 0.0
        %2781 = vmatprep.subr.mxu0 0.0
        %2782 = vmatpush1.msra.mxu0 0.0
        %2783 = vmatprep.subr.mxu0 0.0
        %2784 = vmatpush1.msra.mxu0 0.0
        %2785 = vmatprep.subr.mxu0 %v2743
        %2786 = vmatpush1.msra.mxu0 %v2742
        %2787 = vmatprep.subr.mxu0 0.0
        %2788 = vmatpush2.msra.mxu0 0.0
        %2789 = vmatprep.subr.mxu0 0.0
        %2790 = vmatpush2.msra.mxu0 0.0
        %2791 = vmatprep.subr.mxu0 0.0
        %2792 = vmatpush2.msra.mxu0 0.0
        %2793 = vmatprep.subr.mxu0 0.0
        %2794 = vmatpush2.msra.mxu0 0.0
        %2795 = vmatprep.subr.mxu0 0.0
        %2796 = vmatpush2.msra.mxu0 0.0
        %2797 = vmatprep.subr.mxu0 0.0
        %2798 = vmatpush2.msra.mxu0 0.0
        %2799 = vmatprep.subr.mxu0 0.0
        %2800 = vmatpush2.msra.mxu0 0.0
        %2801 = vmatprep.subr.mxu0 0.0
        %2802 = vmatpush2.msra.mxu0 0.0
        %2803 = vmatprep.subr.mxu0 0.0
        %2804 = vmatpush2.msra.mxu0 0.0
        %2805 = vmatprep.subr.mxu0 0.0
        %2806 = vmatpush2.msra.mxu0 0.0
        %2807 = vmatprep.subr.mxu0 0.0
        %2808 = vmatpush2.msra.mxu0 0.0
        %2809 = vmatprep.subr.mxu0 0.0
        %2810 = vmatpush2.msra.mxu0 0.0
        %2811 = vmatprep.subr.mxu0 0.0
        %2812 = vmatpush2.msra.mxu0 0.0
        %2813 = vmatprep.subr.mxu0 0.0
        %2814 = vmatpush2.msra.mxu0 0.0
        %2815 = vmatprep.subr.mxu0 0.0
        %2816 = vmatpush2.msra.mxu0 0.0
        %2817 = vmatprep.subr.mxu0 0.0
        %2818 = vmatpush2.msra.mxu0 0.0
        %2819 = vmatprep.mubr.f32.mxu0 0.0
        %2820 = vmatmul.mubr.f32.gmra.mxu0 %v2753
        %v2821 = vpop.f32.mrf.mxu0
        %v2822 = vadd.f32 0.0, %v2821
        %v2823 = vpop.f32.mrf.mxu0
        %v2824 = vadd.f32 0.0, %v2823
        %2825 = vdwg.mxu0
        %2826 = vmatprep.subr.mxu0 0.0
        %2827 = vmatpush1.msra.mxu0 0.0
        %2828 = vmatprep.subr.mxu0 0.0
        %2829 = vmatpush1.msra.mxu0 0.0
        %2830 = vmatprep.subr.mxu0 0.0
        %2831 = vmatpush1.msra.mxu0 0.0
        %2832 = vmatprep.subr.mxu0 0.0
        %2833 = vmatpush1.msra.mxu0 0.0
        %2834 = vmatprep.subr.mxu0 0.0
        %2835 = vmatpush1.msra.mxu0 0.0
        %2836 = vmatprep.subr.mxu0 0.0
        %2837 = vmatpush1.msra.mxu0 0.0
        %2838 = vmatprep.subr.mxu0 0.0
        %2839 = vmatpush1.msra.mxu0 0.0
        %2840 = vmatprep.subr.mxu0 0.0
        %2841 = vmatpush1.msra.mxu0 0.0
        %2842 = vmatprep.subr.mxu0 0.0
        %2843 = vmatpush1.msra.mxu0 0.0
        %2844 = vmatprep.subr.mxu0 0.0
        %2845 = vmatpush1.msra.mxu0 0.0
        %2846 = vmatprep.subr.mxu0 0.0
        %2847 = vmatpush1.msra.mxu0 0.0
        %2848 = vmatprep.subr.mxu0 0.0
        %2849 = vmatpush1.msra.mxu0 0.0
        %2850 = vmatprep.subr.mxu0 0.0
        %2851 = vmatpush1.msra.mxu0 0.0
        %2852 = vmatprep.subr.mxu0 0.0
        %2853 = vmatpush1.msra.mxu0 0.0
        %2854 = vmatprep.subr.mxu0 0.0
        %2855 = vmatpush1.msra.mxu0 0.0
        %2856 = vmatprep.subr.mxu0 %v2745
        %2857 = vmatpush1.msra.mxu0 %v2744
        %2858 = vmatprep.subr.mxu0 0.0
        %2859 = vmatpush2.msra.mxu0 0.0
        %2860 = vmatprep.subr.mxu0 0.0
        %2861 = vmatpush2.msra.mxu0 0.0
        %2862 = vmatprep.subr.mxu0 0.0
        %2863 = vmatpush2.msra.mxu0 0.0
        %2864 = vmatprep.subr.mxu0 0.0
        %2865 = vmatpush2.msra.mxu0 0.0
        %2866 = vmatprep.subr.mxu0 0.0
        %2867 = vmatpush2.msra.mxu0 0.0
        %2868 = vmatprep.subr.mxu0 0.0
        %2869 = vmatpush2.msra.mxu0 0.0
        %2870 = vmatprep.subr.mxu0 0.0
        %2871 = vmatpush2.msra.mxu0 0.0
        %2872 = vmatprep.subr.mxu0 0.0
        %2873 = vmatpush2.msra.mxu0 0.0
        %2874 = vmatprep.subr.mxu0 0.0
        %2875 = vmatpush2.msra.mxu0 0.0
        %2876 = vmatprep.subr.mxu0 0.0
        %2877 = vmatpush2.msra.mxu0 0.0
        %2878 = vmatprep.subr.mxu0 0.0
        %2879 = vmatpush2.msra.mxu0 0.0
        %2880 = vmatprep.subr.mxu0 0.0
        %2881 = vmatpush2.msra.mxu0 0.0
        %2882 = vmatprep.subr.mxu0 0.0
        %2883 = vmatpush2.msra.mxu0 0.0
        %2884 = vmatprep.subr.mxu0 0.0
        %2885 = vmatpush2.msra.mxu0 0.0
        %2886 = vmatprep.subr.mxu0 0.0
        %2887 = vmatpush2.msra.mxu0 0.0
        %2888 = vmatprep.subr.mxu0 0.0
        %2889 = vmatpush2.msra.mxu0 0.0
        %2890 = vmatprep.mubr.f32.mxu0 0.0
        %2891 = vmatmul.mubr.f32.gmra.mxu0 %v2753
        %v2892 = vpop.f32.mrf.mxu0
        %v2893 = vadd.f32 0.0, %v2892
        %v2894 = vpop.f32.mrf.mxu0
        %v2895 = vadd.f32 0.0, %v2894
        %2896 = vdwg.mxu0
        %2897 = vmatprep.subr.mxu0 0.0
        %2898 = vmatpush1.msra.mxu0 0.0
        %2899 = vmatprep.subr.mxu0 0.0
        %2900 = vmatpush1.msra.mxu0 0.0
        %2901 = vmatprep.subr.mxu0 0.0
        %2902 = vmatpush1.msra.mxu0 0.0
        %2903 = vmatprep.subr.mxu0 0.0
        %2904 = vmatpush1.msra.mxu0 0.0
        %2905 = vmatprep.subr.mxu0 0.0
        %2906 = vmatpush1.msra.mxu0 0.0
        %2907 = vmatprep.subr.mxu0 0.0
        %2908 = vmatpush1.msra.mxu0 0.0
        %2909 = vmatprep.subr.mxu0 0.0
        %2910 = vmatpush1.msra.mxu0 0.0
        %2911 = vmatprep.subr.mxu0 0.0
        %2912 = vmatpush1.msra.mxu0 0.0
        %2913 = vmatprep.subr.mxu0 0.0
        %2914 = vmatpush1.msra.mxu0 0.0
        %2915 = vmatprep.subr.mxu0 0.0
        %2916 = vmatpush1.msra.mxu0 0.0
        %2917 = vmatprep.subr.mxu0 0.0
        %2918 = vmatpush1.msra.mxu0 0.0
        %2919 = vmatprep.subr.mxu0 0.0
        %2920 = vmatpush1.msra.mxu0 0.0
        %2921 = vmatprep.subr.mxu0 0.0
        %2922 = vmatpush1.msra.mxu0 0.0
        %2923 = vmatprep.subr.mxu0 0.0
        %2924 = vmatpush1.msra.mxu0 0.0
        %2925 = vmatprep.subr.mxu0 0.0
        %2926 = vmatpush1.msra.mxu0 0.0
        %2927 = vmatprep.subr.mxu0 %v2747
        %2928 = vmatpush1.msra.mxu0 %v2746
        %2929 = vmatprep.subr.mxu0 0.0
        %2930 = vmatpush2.msra.mxu0 0.0
        %2931 = vmatprep.subr.mxu0 0.0
        %2932 = vmatpush2.msra.mxu0 0.0
        %2933 = vmatprep.subr.mxu0 0.0
        %2934 = vmatpush2.msra.mxu0 0.0
        %2935 = vmatprep.subr.mxu0 0.0
        %2936 = vmatpush2.msra.mxu0 0.0
        %2937 = vmatprep.subr.mxu0 0.0
        %2938 = vmatpush2.msra.mxu0 0.0
        %2939 = vmatprep.subr.mxu0 0.0
        %2940 = vmatpush2.msra.mxu0 0.0
        %2941 = vmatprep.subr.mxu0 0.0
        %2942 = vmatpush2.msra.mxu0 0.0
        %2943 = vmatprep.subr.mxu0 0.0
        %2944 = vmatpush2.msra.mxu0 0.0
        %2945 = vmatprep.subr.mxu0 0.0
        %2946 = vmatpush2.msra.mxu0 0.0
        %2947 = vmatprep.subr.mxu0 0.0
        %2948 = vmatpush2.msra.mxu0 0.0
        %2949 = vmatprep.subr.mxu0 0.0
        %2950 = vmatpush2.msra.mxu0 0.0
        %2951 = vmatprep.subr.mxu0 0.0
        %2952 = vmatpush2.msra.mxu0 0.0
        %2953 = vmatprep.subr.mxu0 0.0
        %2954 = vmatpush2.msra.mxu0 0.0
        %2955 = vmatprep.subr.mxu0 0.0
        %2956 = vmatpush2.msra.mxu0 0.0
        %2957 = vmatprep.subr.mxu0 0.0
        %2958 = vmatpush2.msra.mxu0 0.0
        %2959 = vmatprep.subr.mxu0 0.0
        %2960 = vmatpush2.msra.mxu0 0.0
        %2961 = vmatprep.mubr.f32.mxu0 0.0
        %2962 = vmatmul.mubr.f32.gmra.mxu0 %v2753
        %v2963 = vpop.f32.mrf.mxu0
        %v2964 = vadd.f32 0.0, %v2963
        %v2965 = vpop.f32.mrf.mxu0
        %v2966 = vadd.f32 0.0, %v2965
        %2967 = vdwg.mxu0
        %2968 = vmatprep.subr.mxu0 0.0
        %2969 = vmatpush1.msra.mxu0 0.0
        %2970 = vmatprep.subr.mxu0 0.0
        %2971 = vmatpush1.msra.mxu0 0.0
        %2972 = vmatprep.subr.mxu0 0.0
        %2973 = vmatpush1.msra.mxu0 0.0
        %2974 = vmatprep.subr.mxu0 0.0
        %2975 = vmatpush1.msra.mxu0 0.0
        %2976 = vmatprep.subr.mxu0 0.0
        %2977 = vmatpush1.msra.mxu0 0.0
        %2978 = vmatprep.subr.mxu0 0.0
        %2979 = vmatpush1.msra.mxu0 0.0
        %2980 = vmatprep.subr.mxu0 0.0
        %2981 = vmatpush1.msra.mxu0 0.0
        %2982 = vmatprep.subr.mxu0 0.0
        %2983 = vmatpush1.msra.mxu0 0.0
        %2984 = vmatprep.subr.mxu0 0.0
        %2985 = vmatpush1.msra.mxu0 0.0
        %2986 = vmatprep.subr.mxu0 0.0
        %2987 = vmatpush1.msra.mxu0 0.0
        %2988 = vmatprep.subr.mxu0 0.0
        %2989 = vmatpush1.msra.mxu0 0.0
        %2990 = vmatprep.subr.mxu0 0.0
        %2991 = vmatpush1.msra.mxu0 0.0
        %2992 = vmatprep.subr.mxu0 0.0
        %2993 = vmatpush1.msra.mxu0 0.0
        %2994 = vmatprep.subr.mxu0 0.0
        %2995 = vmatpush1.msra.mxu0 0.0
        %2996 = vmatprep.subr.mxu0 0.0
        %2997 = vmatpush1.msra.mxu0 0.0
        %2998 = vmatprep.subr.mxu0 %v2749
        %2999 = vmatpush1.msra.mxu0 %v2748
        %3000 = vmatprep.subr.mxu0 0.0
        %3001 = vmatpush2.msra.mxu0 0.0
        %3002 = vmatprep.subr.mxu0 0.0
        %3003 = vmatpush2.msra.mxu0 0.0
        %3004 = vmatprep.subr.mxu0 0.0
        %3005 = vmatpush2.msra.mxu0 0.0
        %3006 = vmatprep.subr.mxu0 0.0
        %3007 = vmatpush2.msra.mxu0 0.0
        %3008 = vmatprep.subr.mxu0 0.0
        %3009 = vmatpush2.msra.mxu0 0.0
        %3010 = vmatprep.subr.mxu0 0.0
        %3011 = vmatpush2.msra.mxu0 0.0
        %3012 = vmatprep.subr.mxu0 0.0
        %3013 = vmatpush2.msra.mxu0 0.0
        %3014 = vmatprep.subr.mxu0 0.0
        %3015 = vmatpush2.msra.mxu0 0.0
        %3016 = vmatprep.subr.mxu0 0.0
        %3017 = vmatpush2.msra.mxu0 0.0
        %3018 = vmatprep.subr.mxu0 0.0
        %3019 = vmatpush2.msra.mxu0 0.0
        %3020 = vmatprep.subr.mxu0 0.0
        %3021 = vmatpush2.msra.mxu0 0.0
        %3022 = vmatprep.subr.mxu0 0.0
        %3023 = vmatpush2.msra.mxu0 0.0
        %3024 = vmatprep.subr.mxu0 0.0
        %3025 = vmatpush2.msra.mxu0 0.0
        %3026 = vmatprep.subr.mxu0 0.0
        %3027 = vmatpush2.msra.mxu0 0.0
        %3028 = vmatprep.subr.mxu0 0.0
        %3029 = vmatpush2.msra.mxu0 0.0
        %3030 = vmatprep.subr.mxu0 0.0
        %3031 = vmatpush2.msra.mxu0 0.0
        %3032 = vmatprep.mubr.f32.mxu0 0.0
        %3033 = vmatmul.mubr.f32.gmra.mxu0 %v2753
        %v3034 = vpop.f32.mrf.mxu0
        %v3035 = vadd.f32 0.0, %v3034
        %v3036 = vpop.f32.mrf.mxu0
        %v3037 = vadd.f32 0.0, %v3036
        %3038 = vdwg.mxu0
        %v3039 = vadd.f32 %v2669, %v2822
        %v3040 = vadd.f32 %v2670, %v2824
        %v3041 = vadd.f32 %v2671, %v2893
        %v3042 = vadd.f32 %v2672, %v2895
        %v3043 = vadd.f32 %v2673, %v2964
        %v3044 = vadd.f32 %v2674, %v2966
        %v3045 = vadd.f32 %v2675, %v3035
        %v3046 = vadd.f32 %v2676, %v3037
        %3047 = vrot.lane.b32.xlu0 %v538, 97
        %v3048 = vpop.permute.xlu0 %3047
        %3049 = vrot.lane.b32.xlu0 %v540, 97
        %v3050 = vpop.permute.xlu0 %3049
        %3051 = vrot.lane.b32.xlu0 %v609, 97
        %v3052 = vpop.permute.xlu0 %3051
        %3053 = vrot.lane.b32.xlu0 %v611, 97
        %v3054 = vpop.permute.xlu0 %3053
        %3055 = vrot.lane.b32.xlu0 %v680, 97
        %v3056 = vpop.permute.xlu0 %3055
        %3057 = vrot.lane.b32.xlu0 %v682, 97
        %v3058 = vpop.permute.xlu0 %3057
        %3059 = vrot.lane.b32.xlu0 %v751, 97
        %v3060 = vpop.permute.xlu0 %3059
        %3061 = vrot.lane.b32.xlu0 %v753, 97
        %v3062 = vpop.permute.xlu0 %3061
        %vm3063 = vcmask 793600
        %v3064 = vsel %vm3063, %v3048, %v3050
        %v3065 = vsel %vm3063, %v3050, %v3052
        %v3066 = vsel %vm3063, %v3052, %v3054
        %v3067 = vsel %vm3063, %v3054, %v3056
        %v3068 = vsel %vm3063, %v3056, %v3058
        %v3069 = vsel %vm3063, %v3058, %v3060
        %v3070 = vsel %vm3063, %v3060, %v3062
        %v3079 = vsel %vm3063, %v3062, 0.0
        %v3080 = vadd.s32 %v764, 1
        %v3081 = vadd.s32 %v765, 1
        %v3082 = vadd.s32 %v766, 1
        %v3083 = vadd.s32 %v767, 1
        %v3084 = vadd.s32 %v768, 1
        %v3085 = vadd.s32 %v769, 1
        %v3086 = vadd.s32 %v770, 1
        %v3087 = vadd.s32 %v771, 1
        %vm3088 = vcmp.ge.s32.totalorder %v3080, 0
        %vm3089 = vcmp.ge.s32.totalorder %v3081, 0
        %vm3090 = vcmp.ge.s32.totalorder %v3082, 0
        %vm3091 = vcmp.ge.s32.totalorder %v3083, 0
        %vm3092 = vcmp.ge.s32.totalorder %v3084, 0
        %vm3093 = vcmp.ge.s32.totalorder %v3085, 0
        %vm3094 = vcmp.ge.s32.totalorder %v3086, 0
        %vm3095 = vcmp.ge.s32.totalorder %v3087, 0
        %vm3096 = vmand %vm845, %vm3088
        %vm3097 = vmand %vm846, %vm3089
        %vm3098 = vmand %vm847, %vm3090
        %vm3099 = vmand %vm848, %vm3091
        %vm3100 = vmand %vm849, %vm3092
        %vm3101 = vmand %vm850, %vm3093
        %vm3102 = vmand %vm851, %vm3094
        %vm3103 = vmand %vm852, %vm3095
        %vm3104 = vcmp.lt.s32.totalorder %v3080, 32
        %vm3105 = vcmp.lt.s32.totalorder %v3081, 32
        %vm3106 = vcmp.lt.s32.totalorder %v3082, 32
        %vm3107 = vcmp.lt.s32.totalorder %v3083, 32
        %vm3108 = vcmp.lt.s32.totalorder %v3084, 32
        %vm3109 = vcmp.lt.s32.totalorder %v3085, 32
        %vm3110 = vcmp.lt.s32.totalorder %v3086, 32
        %vm3111 = vcmp.lt.s32.totalorder %v3087, 32
        %vm3112 = vmand %vm3096, %vm3104
        %vm3113 = vmand %vm3097, %vm3105
        %vm3114 = vmand %vm3098, %vm3106
        %vm3115 = vmand %vm3099, %vm3107
        %vm3116 = vmand %vm3100, %vm3108
        %vm3117 = vmand %vm3101, %vm3109
        %vm3118 = vmand %vm3102, %vm3110
        %vm3119 = vmand %vm3103, %vm3111
        %v3120 = vsel %vm3112, 1, 0
        %v3121 = vsel %vm3113, 1, 0
        %v3122 = vsel %vm3114, 1, 0
        %v3123 = vsel %vm3115, 1, 0
        %v3124 = vsel %vm3116, 1, 0
        %v3125 = vsel %vm3117, 1, 0
        %v3126 = vsel %vm3118, 1, 0
        %v3127 = vsel %vm3119, 1, 0
        %vm3128 = vcmp.eq.s32.totalorder %v3120, 1
        %vm3129 = vcmp.eq.s32.totalorder %v3121, 1
        %vm3130 = vcmp.eq.s32.totalorder %v3122, 1
        %vm3131 = vcmp.eq.s32.totalorder %v3123, 1
        %vm3132 = vcmp.eq.s32.totalorder %v3124, 1
        %vm3133 = vcmp.eq.s32.totalorder %v3125, 1
        %vm3134 = vcmp.eq.s32.totalorder %v3126, 1
        %vm3135 = vcmp.eq.s32.totalorder %v3127, 1
        %v3136 = vsel %vm3128, %v3064, 0.0
        %v3137 = vsel %vm3129, %v3065, 0.0
        %v3138 = vsel %vm3130, %v3066, 0.0
        %v3139 = vsel %vm3131, %v3067, 0.0
        %v3140 = vsel %vm3132, %v3068, 0.0
        %v3141 = vsel %vm3133, %v3069, 0.0
        %v3142 = vsel %vm3134, %v3070, 0.0
        %v3143 = vsel %vm3135, %v3079, 0.0
        %s3144 = scalar_lea.vmem %s2, 48
        %v3145 = vld [vmem:[%s3144] sm:$0xff]
        %v3147 = vsel %vm1017, %v3145, 0
        %3149 = vmatprep.subr.mxu0 0.0
        %3150 = vmatpush1.msra.mxu0 0.0
        %3151 = vmatprep.subr.mxu0 0.0
        %3152 = vmatpush1.msra.mxu0 0.0
        %3153 = vmatprep.subr.mxu0 0.0
        %3154 = vmatpush1.msra.mxu0 0.0
        %3155 = vmatprep.subr.mxu0 0.0
        %3156 = vmatpush1.msra.mxu0 0.0
        %3157 = vmatprep.subr.mxu0 0.0
        %3158 = vmatpush1.msra.mxu0 0.0
        %3159 = vmatprep.subr.mxu0 0.0
        %3160 = vmatpush1.msra.mxu0 0.0
        %3161 = vmatprep.subr.mxu0 0.0
        %3162 = vmatpush1.msra.mxu0 0.0
        %3163 = vmatprep.subr.mxu0 0.0
        %3164 = vmatpush1.msra.mxu0 0.0
        %3165 = vmatprep.subr.mxu0 0.0
        %3166 = vmatpush1.msra.mxu0 0.0
        %3167 = vmatprep.subr.mxu0 0.0
        %3168 = vmatpush1.msra.mxu0 0.0
        %3169 = vmatprep.subr.mxu0 0.0
        %3170 = vmatpush1.msra.mxu0 0.0
        %3171 = vmatprep.subr.mxu0 0.0
        %3172 = vmatpush1.msra.mxu0 0.0
        %3173 = vmatprep.subr.mxu0 0.0
        %3174 = vmatpush1.msra.mxu0 0.0
        %3175 = vmatprep.subr.mxu0 0.0
        %3176 = vmatpush1.msra.mxu0 0.0
        %3177 = vmatprep.subr.mxu0 0.0
        %3178 = vmatpush1.msra.mxu0 0.0
        %3179 = vmatprep.subr.mxu0 %v3137
        %3180 = vmatpush1.msra.mxu0 %v3136
        %3181 = vmatprep.subr.mxu0 0.0
        %3182 = vmatpush2.msra.mxu0 0.0
        %3183 = vmatprep.subr.mxu0 0.0
        %3184 = vmatpush2.msra.mxu0 0.0
        %3185 = vmatprep.subr.mxu0 0.0
        %3186 = vmatpush2.msra.mxu0 0.0
        %3187 = vmatprep.subr.mxu0 0.0
        %3188 = vmatpush2.msra.mxu0 0.0
        %3189 = vmatprep.subr.mxu0 0.0
        %3190 = vmatpush2.msra.mxu0 0.0
        %3191 = vmatprep.subr.mxu0 0.0
        %3192 = vmatpush2.msra.mxu0 0.0
        %3193 = vmatprep.subr.mxu0 0.0
        %3194 = vmatpush2.msra.mxu0 0.0
        %3195 = vmatprep.subr.mxu0 0.0
        %3196 = vmatpush2.msra.mxu0 0.0
        %3197 = vmatprep.subr.mxu0 0.0
        %3198 = vmatpush2.msra.mxu0 0.0
        %3199 = vmatprep.subr.mxu0 0.0
        %3200 = vmatpush2.msra.mxu0 0.0
        %3201 = vmatprep.subr.mxu0 0.0
        %3202 = vmatpush2.msra.mxu0 0.0
        %3203 = vmatprep.subr.mxu0 0.0
        %3204 = vmatpush2.msra.mxu0 0.0
        %3205 = vmatprep.subr.mxu0 0.0
        %3206 = vmatpush2.msra.mxu0 0.0
        %3207 = vmatprep.subr.mxu0 0.0
        %3208 = vmatpush2.msra.mxu0 0.0
        %3209 = vmatprep.subr.mxu0 0.0
        %3210 = vmatpush2.msra.mxu0 0.0
        %3211 = vmatprep.subr.mxu0 0.0
        %3212 = vmatpush2.msra.mxu0 0.0
        %3213 = vmatprep.mubr.f32.mxu0 0.0
        %3214 = vmatmul.mubr.f32.gmra.mxu0 %v3147
        %v3215 = vpop.f32.mrf.mxu0
        %v3216 = vadd.f32 0.0, %v3215
        %v3217 = vpop.f32.mrf.mxu0
        %v3218 = vadd.f32 0.0, %v3217
        %3219 = vdwg.mxu0
        %3220 = vmatprep.subr.mxu0 0.0
        %3221 = vmatpush1.msra.mxu0 0.0
        %3222 = vmatprep.subr.mxu0 0.0
        %3223 = vmatpush1.msra.mxu0 0.0
        %3224 = vmatprep.subr.mxu0 0.0
        %3225 = vmatpush1.msra.mxu0 0.0
        %3226 = vmatprep.subr.mxu0 0.0
        %3227 = vmatpush1.msra.mxu0 0.0
        %3228 = vmatprep.subr.mxu0 0.0
        %3229 = vmatpush1.msra.mxu0 0.0
        %3230 = vmatprep.subr.mxu0 0.0
        %3231 = vmatpush1.msra.mxu0 0.0
        %3232 = vmatprep.subr.mxu0 0.0
        %3233 = vmatpush1.msra.mxu0 0.0
        %3234 = vmatprep.subr.mxu0 0.0
        %3235 = vmatpush1.msra.mxu0 0.0
        %3236 = vmatprep.subr.mxu0 0.0
        %3237 = vmatpush1.msra.mxu0 0.0
        %3238 = vmatprep.subr.mxu0 0.0
        %3239 = vmatpush1.msra.mxu0 0.0
        %3240 = vmatprep.subr.mxu0 0.0
        %3241 = vmatpush1.msra.mxu0 0.0
        %3242 = vmatprep.subr.mxu0 0.0
        %3243 = vmatpush1.msra.mxu0 0.0
        %3244 = vmatprep.subr.mxu0 0.0
        %3245 = vmatpush1.msra.mxu0 0.0
        %3246 = vmatprep.subr.mxu0 0.0
        %3247 = vmatpush1.msra.mxu0 0.0
        %3248 = vmatprep.subr.mxu0 0.0
        %3249 = vmatpush1.msra.mxu0 0.0
        %3250 = vmatprep.subr.mxu0 %v3139
        %3251 = vmatpush1.msra.mxu0 %v3138
        %3252 = vmatprep.subr.mxu0 0.0
        %3253 = vmatpush2.msra.mxu0 0.0
        %3254 = vmatprep.subr.mxu0 0.0
        %3255 = vmatpush2.msra.mxu0 0.0
        %3256 = vmatprep.subr.mxu0 0.0
        %3257 = vmatpush2.msra.mxu0 0.0
        %3258 = vmatprep.subr.mxu0 0.0
        %3259 = vmatpush2.msra.mxu0 0.0
        %3260 = vmatprep.subr.mxu0 0.0
        %3261 = vmatpush2.msra.mxu0 0.0
        %3262 = vmatprep.subr.mxu0 0.0
        %3263 = vmatpush2.msra.mxu0 0.0
        %3264 = vmatprep.subr.mxu0 0.0
        %3265 = vmatpush2.msra.mxu0 0.0
        %3266 = vmatprep.subr.mxu0 0.0
        %3267 = vmatpush2.msra.mxu0 0.0
        %3268 = vmatprep.subr.mxu0 0.0
        %3269 = vmatpush2.msra.mxu0 0.0
        %3270 = vmatprep.subr.mxu0 0.0
        %3271 = vmatpush2.msra.mxu0 0.0
        %3272 = vmatprep.subr.mxu0 0.0
        %3273 = vmatpush2.msra.mxu0 0.0
        %3274 = vmatprep.subr.mxu0 0.0
        %3275 = vmatpush2.msra.mxu0 0.0
        %3276 = vmatprep.subr.mxu0 0.0
        %3277 = vmatpush2.msra.mxu0 0.0
        %3278 = vmatprep.subr.mxu0 0.0
        %3279 = vmatpush2.msra.mxu0 0.0
        %3280 = vmatprep.subr.mxu0 0.0
        %3281 = vmatpush2.msra.mxu0 0.0
        %3282 = vmatprep.subr.mxu0 0.0
        %3283 = vmatpush2.msra.mxu0 0.0
        %3284 = vmatprep.mubr.f32.mxu0 0.0
        %3285 = vmatmul.mubr.f32.gmra.mxu0 %v3147
        %v3286 = vpop.f32.mrf.mxu0
        %v3287 = vadd.f32 0.0, %v3286
        %v3288 = vpop.f32.mrf.mxu0
        %v3289 = vadd.f32 0.0, %v3288
        %3290 = vdwg.mxu0
        %3291 = vmatprep.subr.mxu0 0.0
        %3292 = vmatpush1.msra.mxu0 0.0
        %3293 = vmatprep.subr.mxu0 0.0
        %3294 = vmatpush1.msra.mxu0 0.0
        %3295 = vmatprep.subr.mxu0 0.0
        %3296 = vmatpush1.msra.mxu0 0.0
        %3297 = vmatprep.subr.mxu0 0.0
        %3298 = vmatpush1.msra.mxu0 0.0
        %3299 = vmatprep.subr.mxu0 0.0
        %3300 = vmatpush1.msra.mxu0 0.0
        %3301 = vmatprep.subr.mxu0 0.0
        %3302 = vmatpush1.msra.mxu0 0.0
        %3303 = vmatprep.subr.mxu0 0.0
        %3304 = vmatpush1.msra.mxu0 0.0
        %3305 = vmatprep.subr.mxu0 0.0
        %3306 = vmatpush1.msra.mxu0 0.0
        %3307 = vmatprep.subr.mxu0 0.0
        %3308 = vmatpush1.msra.mxu0 0.0
        %3309 = vmatprep.subr.mxu0 0.0
        %3310 = vmatpush1.msra.mxu0 0.0
        %3311 = vmatprep.subr.mxu0 0.0
        %3312 = vmatpush1.msra.mxu0 0.0
        %3313 = vmatprep.subr.mxu0 0.0
        %3314 = vmatpush1.msra.mxu0 0.0
        %3315 = vmatprep.subr.mxu0 0.0
        %3316 = vmatpush1.msra.mxu0 0.0
        %3317 = vmatprep.subr.mxu0 0.0
        %3318 = vmatpush1.msra.mxu0 0.0
        %3319 = vmatprep.subr.mxu0 0.0
        %3320 = vmatpush1.msra.mxu0 0.0
        %3321 = vmatprep.subr.mxu0 %v3141
        %3322 = vmatpush1.msra.mxu0 %v3140
        %3323 = vmatprep.subr.mxu0 0.0
        %3324 = vmatpush2.msra.mxu0 0.0
        %3325 = vmatprep.subr.mxu0 0.0
        %3326 = vmatpush2.msra.mxu0 0.0
        %3327 = vmatprep.subr.mxu0 0.0
        %3328 = vmatpush2.msra.mxu0 0.0
        %3329 = vmatprep.subr.mxu0 0.0
        %3330 = vmatpush2.msra.mxu0 0.0
        %3331 = vmatprep.subr.mxu0 0.0
        %3332 = vmatpush2.msra.mxu0 0.0
        %3333 = vmatprep.subr.mxu0 0.0
        %3334 = vmatpush2.msra.mxu0 0.0
        %3335 = vmatprep.subr.mxu0 0.0
        %3336 = vmatpush2.msra.mxu0 0.0
        %3337 = vmatprep.subr.mxu0 0.0
        %3338 = vmatpush2.msra.mxu0 0.0
        %3339 = vmatprep.subr.mxu0 0.0
        %3340 = vmatpush2.msra.mxu0 0.0
        %3341 = vmatprep.subr.mxu0 0.0
        %3342 = vmatpush2.msra.mxu0 0.0
        %3343 = vmatprep.subr.mxu0 0.0
        %3344 = vmatpush2.msra.mxu0 0.0
        %3345 = vmatprep.subr.mxu0 0.0
        %3346 = vmatpush2.msra.mxu0 0.0
        %3347 = vmatprep.subr.mxu0 0.0
        %3348 = vmatpush2.msra.mxu0 0.0
        %3349 = vmatprep.subr.mxu0 0.0
        %3350 = vmatpush2.msra.mxu0 0.0
        %3351 = vmatprep.subr.mxu0 0.0
        %3352 = vmatpush2.msra.mxu0 0.0
        %3353 = vmatprep.subr.mxu0 0.0
        %3354 = vmatpush2.msra.mxu0 0.0
        %3355 = vmatprep.mubr.f32.mxu0 0.0
        %3356 = vmatmul.mubr.f32.gmra.mxu0 %v3147
        %v3357 = vpop.f32.mrf.mxu0
        %v3358 = vadd.f32 0.0, %v3357
        %v3359 = vpop.f32.mrf.mxu0
        %v3360 = vadd.f32 0.0, %v3359
        %3361 = vdwg.mxu0
        %3362 = vmatprep.subr.mxu0 0.0
        %3363 = vmatpush1.msra.mxu0 0.0
        %3364 = vmatprep.subr.mxu0 0.0
        %3365 = vmatpush1.msra.mxu0 0.0
        %3366 = vmatprep.subr.mxu0 0.0
        %3367 = vmatpush1.msra.mxu0 0.0
        %3368 = vmatprep.subr.mxu0 0.0
        %3369 = vmatpush1.msra.mxu0 0.0
        %3370 = vmatprep.subr.mxu0 0.0
        %3371 = vmatpush1.msra.mxu0 0.0
        %3372 = vmatprep.subr.mxu0 0.0
        %3373 = vmatpush1.msra.mxu0 0.0
        %3374 = vmatprep.subr.mxu0 0.0
        %3375 = vmatpush1.msra.mxu0 0.0
        %3376 = vmatprep.subr.mxu0 0.0
        %3377 = vmatpush1.msra.mxu0 0.0
        %3378 = vmatprep.subr.mxu0 0.0
        %3379 = vmatpush1.msra.mxu0 0.0
        %3380 = vmatprep.subr.mxu0 0.0
        %3381 = vmatpush1.msra.mxu0 0.0
        %3382 = vmatprep.subr.mxu0 0.0
        %3383 = vmatpush1.msra.mxu0 0.0
        %3384 = vmatprep.subr.mxu0 0.0
        %3385 = vmatpush1.msra.mxu0 0.0
        %3386 = vmatprep.subr.mxu0 0.0
        %3387 = vmatpush1.msra.mxu0 0.0
        %3388 = vmatprep.subr.mxu0 0.0
        %3389 = vmatpush1.msra.mxu0 0.0
        %3390 = vmatprep.subr.mxu0 0.0
        %3391 = vmatpush1.msra.mxu0 0.0
        %3392 = vmatprep.subr.mxu0 %v3143
        %3393 = vmatpush1.msra.mxu0 %v3142
        %3394 = vmatprep.subr.mxu0 0.0
        %3395 = vmatpush2.msra.mxu0 0.0
        %3396 = vmatprep.subr.mxu0 0.0
        %3397 = vmatpush2.msra.mxu0 0.0
        %3398 = vmatprep.subr.mxu0 0.0
        %3399 = vmatpush2.msra.mxu0 0.0
        %3400 = vmatprep.subr.mxu0 0.0
        %3401 = vmatpush2.msra.mxu0 0.0
        %3402 = vmatprep.subr.mxu0 0.0
        %3403 = vmatpush2.msra.mxu0 0.0
        %3404 = vmatprep.subr.mxu0 0.0
        %3405 = vmatpush2.msra.mxu0 0.0
        %3406 = vmatprep.subr.mxu0 0.0
        %3407 = vmatpush2.msra.mxu0 0.0
        %3408 = vmatprep.subr.mxu0 0.0
        %3409 = vmatpush2.msra.mxu0 0.0
        %3410 = vmatprep.subr.mxu0 0.0
        %3411 = vmatpush2.msra.mxu0 0.0
        %3412 = vmatprep.subr.mxu0 0.0
        %3413 = vmatpush2.msra.mxu0 0.0
        %3414 = vmatprep.subr.mxu0 0.0
        %3415 = vmatpush2.msra.mxu0 0.0
        %3416 = vmatprep.subr.mxu0 0.0
        %3417 = vmatpush2.msra.mxu0 0.0
        %3418 = vmatprep.subr.mxu0 0.0
        %3419 = vmatpush2.msra.mxu0 0.0
        %3420 = vmatprep.subr.mxu0 0.0
        %3421 = vmatpush2.msra.mxu0 0.0
        %3422 = vmatprep.subr.mxu0 0.0
        %3423 = vmatpush2.msra.mxu0 0.0
        %3424 = vmatprep.subr.mxu0 0.0
        %3425 = vmatpush2.msra.mxu0 0.0
        %3426 = vmatprep.mubr.f32.mxu0 0.0
        %3427 = vmatmul.mubr.f32.gmra.mxu0 %v3147
        %v3428 = vpop.f32.mrf.mxu0
        %v3429 = vadd.f32 0.0, %v3428
        %v3430 = vpop.f32.mrf.mxu0
        %v3431 = vadd.f32 0.0, %v3430
        %3432 = vdwg.mxu0
        %v3433 = vadd.f32 %v3039, %v3216
        %v3434 = vadd.f32 %v3040, %v3218
        %v3435 = vadd.f32 %v3041, %v3287
        %v3436 = vadd.f32 %v3042, %v3289
        %v3437 = vadd.f32 %v3043, %v3358
        %v3438 = vadd.f32 %v3044, %v3360
        %v3439 = vadd.f32 %v3045, %v3429
        %v3440 = vadd.f32 %v3046, %v3431
        %3441 = vrot.lane.b32.xlu0 %v538, 96
        %v3442 = vpop.permute.xlu0 %3441
        %3443 = vrot.lane.b32.xlu0 %v540, 96
        %v3444 = vpop.permute.xlu0 %3443
        %3445 = vrot.lane.b32.xlu0 %v609, 96
        %v3446 = vpop.permute.xlu0 %3445
        %3447 = vrot.lane.b32.xlu0 %v611, 96
        %v3448 = vpop.permute.xlu0 %3447
        %3449 = vrot.lane.b32.xlu0 %v680, 96
        %v3450 = vpop.permute.xlu0 %3449
        %3451 = vrot.lane.b32.xlu0 %v682, 96
        %v3452 = vpop.permute.xlu0 %3451
        %3453 = vrot.lane.b32.xlu0 %v751, 96
        %v3454 = vpop.permute.xlu0 %3453
        %3455 = vrot.lane.b32.xlu0 %v753, 96
        %v3456 = vpop.permute.xlu0 %3455
        %vm3457 = vcmask 785408
        %v3458 = vsel %vm3457, %v3442, %v3444
        %v3459 = vsel %vm3457, %v3444, %v3446
        %v3460 = vsel %vm3457, %v3446, %v3448
        %v3461 = vsel %vm3457, %v3448, %v3450
        %v3462 = vsel %vm3457, %v3450, %v3452
        %v3463 = vsel %vm3457, %v3452, %v3454
        %v3464 = vsel %vm3457, %v3454, %v3456
        %v3473 = vsel %vm3457, %v3456, 0.0
        %vm3474 = vmand %vm967, %vm3088
        %vm3475 = vmand %vm968, %vm3089
        %vm3476 = vmand %vm969, %vm3090
        %vm3477 = vmand %vm970, %vm3091
        %vm3478 = vmand %vm971, %vm3092
        %vm3479 = vmand %vm972, %vm3093
        %vm3480 = vmand %vm973, %vm3094
        %vm3481 = vmand %vm974, %vm3095
        %vm3482 = vmand %vm3474, %vm3104
        %vm3483 = vmand %vm3475, %vm3105
        %vm3484 = vmand %vm3476, %vm3106
        %vm3485 = vmand %vm3477, %vm3107
        %vm3486 = vmand %vm3478, %vm3108
        %vm3487 = vmand %vm3479, %vm3109
        %vm3488 = vmand %vm3480, %vm3110
        %vm3489 = vmand %vm3481, %vm3111
        %v3490 = vsel %vm3482, 1, 0
        %v3491 = vsel %vm3483, 1, 0
        %v3492 = vsel %vm3484, 1, 0
        %v3493 = vsel %vm3485, 1, 0
        %v3494 = vsel %vm3486, 1, 0
        %v3495 = vsel %vm3487, 1, 0
        %v3496 = vsel %vm3488, 1, 0
        %v3497 = vsel %vm3489, 1, 0
        %vm3498 = vcmp.eq.s32.totalorder %v3490, 1
        %vm3499 = vcmp.eq.s32.totalorder %v3491, 1
        %vm3500 = vcmp.eq.s32.totalorder %v3492, 1
        %vm3501 = vcmp.eq.s32.totalorder %v3493, 1
        %vm3502 = vcmp.eq.s32.totalorder %v3494, 1
        %vm3503 = vcmp.eq.s32.totalorder %v3495, 1
        %vm3504 = vcmp.eq.s32.totalorder %v3496, 1
        %vm3505 = vcmp.eq.s32.totalorder %v3497, 1
        %v3506 = vsel %vm3498, %v3458, 0.0
        %v3507 = vsel %vm3499, %v3459, 0.0
        %v3508 = vsel %vm3500, %v3460, 0.0
        %v3509 = vsel %vm3501, %v3461, 0.0
        %v3510 = vsel %vm3502, %v3462, 0.0
        %v3511 = vsel %vm3503, %v3463, 0.0
        %v3512 = vsel %vm3504, %v3464, 0.0
        %v3513 = vsel %vm3505, %v3473, 0.0
        %s3514 = scalar_lea.vmem %s2, 56
        %v3515 = vld [vmem:[%s3514] sm:$0xff]
        %v3517 = vsel %vm1017, %v3515, 0
        %3519 = vmatprep.subr.mxu0 0.0
        %3520 = vmatpush1.msra.mxu0 0.0
        %3521 = vmatprep.subr.mxu0 0.0
        %3522 = vmatpush1.msra.mxu0 0.0
        %3523 = vmatprep.subr.mxu0 0.0
        %3524 = vmatpush1.msra.mxu0 0.0
        %3525 = vmatprep.subr.mxu0 0.0
        %3526 = vmatpush1.msra.mxu0 0.0
        %3527 = vmatprep.subr.mxu0 0.0
        %3528 = vmatpush1.msra.mxu0 0.0
        %3529 = vmatprep.subr.mxu0 0.0
        %3530 = vmatpush1.msra.mxu0 0.0
        %3531 = vmatprep.subr.mxu0 0.0
        %3532 = vmatpush1.msra.mxu0 0.0
        %3533 = vmatprep.subr.mxu0 0.0
        %3534 = vmatpush1.msra.mxu0 0.0
        %3535 = vmatprep.subr.mxu0 0.0
        %3536 = vmatpush1.msra.mxu0 0.0
        %3537 = vmatprep.subr.mxu0 0.0
        %3538 = vmatpush1.msra.mxu0 0.0
        %3539 = vmatprep.subr.mxu0 0.0
        %3540 = vmatpush1.msra.mxu0 0.0
        %3541 = vmatprep.subr.mxu0 0.0
        %3542 = vmatpush1.msra.mxu0 0.0
        %3543 = vmatprep.subr.mxu0 0.0
        %3544 = vmatpush1.msra.mxu0 0.0
        %3545 = vmatprep.subr.mxu0 0.0
        %3546 = vmatpush1.msra.mxu0 0.0
        %3547 = vmatprep.subr.mxu0 0.0
        %3548 = vmatpush1.msra.mxu0 0.0
        %3549 = vmatprep.subr.mxu0 %v3507
        %3550 = vmatpush1.msra.mxu0 %v3506
        %3551 = vmatprep.subr.mxu0 0.0
        %3552 = vmatpush2.msra.mxu0 0.0
        %3553 = vmatprep.subr.mxu0 0.0
        %3554 = vmatpush2.msra.mxu0 0.0
        %3555 = vmatprep.subr.mxu0 0.0
        %3556 = vmatpush2.msra.mxu0 0.0
        %3557 = vmatprep.subr.mxu0 0.0
        %3558 = vmatpush2.msra.mxu0 0.0
        %3559 = vmatprep.subr.mxu0 0.0
        %3560 = vmatpush2.msra.mxu0 0.0
        %3561 = vmatprep.subr.mxu0 0.0
        %3562 = vmatpush2.msra.mxu0 0.0
        %3563 = vmatprep.subr.mxu0 0.0
        %3564 = vmatpush2.msra.mxu0 0.0
        %3565 = vmatprep.subr.mxu0 0.0
        %3566 = vmatpush2.msra.mxu0 0.0
        %3567 = vmatprep.subr.mxu0 0.0
        %3568 = vmatpush2.msra.mxu0 0.0
        %3569 = vmatprep.subr.mxu0 0.0
        %3570 = vmatpush2.msra.mxu0 0.0
        %3571 = vmatprep.subr.mxu0 0.0
        %3572 = vmatpush2.msra.mxu0 0.0
        %3573 = vmatprep.subr.mxu0 0.0
        %3574 = vmatpush2.msra.mxu0 0.0
        %3575 = vmatprep.subr.mxu0 0.0
        %3576 = vmatpush2.msra.mxu0 0.0
        %3577 = vmatprep.subr.mxu0 0.0
        %3578 = vmatpush2.msra.mxu0 0.0
        %3579 = vmatprep.subr.mxu0 0.0
        %3580 = vmatpush2.msra.mxu0 0.0
        %3581 = vmatprep.subr.mxu0 0.0
        %3582 = vmatpush2.msra.mxu0 0.0
        %3583 = vmatprep.mubr.f32.mxu0 0.0
        %3584 = vmatmul.mubr.f32.gmra.mxu0 %v3517
        %v3585 = vpop.f32.mrf.mxu0
        %v3586 = vadd.f32 0.0, %v3585
        %v3587 = vpop.f32.mrf.mxu0
        %v3588 = vadd.f32 0.0, %v3587
        %3589 = vdwg.mxu0
        %3590 = vmatprep.subr.mxu0 0.0
        %3591 = vmatpush1.msra.mxu0 0.0
        %3592 = vmatprep.subr.mxu0 0.0
        %3593 = vmatpush1.msra.mxu0 0.0
        %3594 = vmatprep.subr.mxu0 0.0
        %3595 = vmatpush1.msra.mxu0 0.0
        %3596 = vmatprep.subr.mxu0 0.0
        %3597 = vmatpush1.msra.mxu0 0.0
        %3598 = vmatprep.subr.mxu0 0.0
        %3599 = vmatpush1.msra.mxu0 0.0
        %3600 = vmatprep.subr.mxu0 0.0
        %3601 = vmatpush1.msra.mxu0 0.0
        %3602 = vmatprep.subr.mxu0 0.0
        %3603 = vmatpush1.msra.mxu0 0.0
        %3604 = vmatprep.subr.mxu0 0.0
        %3605 = vmatpush1.msra.mxu0 0.0
        %3606 = vmatprep.subr.mxu0 0.0
        %3607 = vmatpush1.msra.mxu0 0.0
        %3608 = vmatprep.subr.mxu0 0.0
        %3609 = vmatpush1.msra.mxu0 0.0
        %3610 = vmatprep.subr.mxu0 0.0
        %3611 = vmatpush1.msra.mxu0 0.0
        %3612 = vmatprep.subr.mxu0 0.0
        %3613 = vmatpush1.msra.mxu0 0.0
        %3614 = vmatprep.subr.mxu0 0.0
        %3615 = vmatpush1.msra.mxu0 0.0
        %3616 = vmatprep.subr.mxu0 0.0
        %3617 = vmatpush1.msra.mxu0 0.0
        %3618 = vmatprep.subr.mxu0 0.0
        %3619 = vmatpush1.msra.mxu0 0.0
        %3620 = vmatprep.subr.mxu0 %v3509
        %3621 = vmatpush1.msra.mxu0 %v3508
        %3622 = vmatprep.subr.mxu0 0.0
        %3623 = vmatpush2.msra.mxu0 0.0
        %3624 = vmatprep.subr.mxu0 0.0
        %3625 = vmatpush2.msra.mxu0 0.0
        %3626 = vmatprep.subr.mxu0 0.0
        %3627 = vmatpush2.msra.mxu0 0.0
        %3628 = vmatprep.subr.mxu0 0.0
        %3629 = vmatpush2.msra.mxu0 0.0
        %3630 = vmatprep.subr.mxu0 0.0
        %3631 = vmatpush2.msra.mxu0 0.0
        %3632 = vmatprep.subr.mxu0 0.0
        %3633 = vmatpush2.msra.mxu0 0.0
        %3634 = vmatprep.subr.mxu0 0.0
        %3635 = vmatpush2.msra.mxu0 0.0
        %3636 = vmatprep.subr.mxu0 0.0
        %3637 = vmatpush2.msra.mxu0 0.0
        %3638 = vmatprep.subr.mxu0 0.0
        %3639 = vmatpush2.msra.mxu0 0.0
        %3640 = vmatprep.subr.mxu0 0.0
        %3641 = vmatpush2.msra.mxu0 0.0
        %3642 = vmatprep.subr.mxu0 0.0
        %3643 = vmatpush2.msra.mxu0 0.0
        %3644 = vmatprep.subr.mxu0 0.0
        %3645 = vmatpush2.msra.mxu0 0.0
        %3646 = vmatprep.subr.mxu0 0.0
        %3647 = vmatpush2.msra.mxu0 0.0
        %3648 = vmatprep.subr.mxu0 0.0
        %3649 = vmatpush2.msra.mxu0 0.0
        %3650 = vmatprep.subr.mxu0 0.0
        %3651 = vmatpush2.msra.mxu0 0.0
        %3652 = vmatprep.subr.mxu0 0.0
        %3653 = vmatpush2.msra.mxu0 0.0
        %3654 = vmatprep.mubr.f32.mxu0 0.0
        %3655 = vmatmul.mubr.f32.gmra.mxu0 %v3517
        %v3656 = vpop.f32.mrf.mxu0
        %v3657 = vadd.f32 0.0, %v3656
        %v3658 = vpop.f32.mrf.mxu0
        %v3659 = vadd.f32 0.0, %v3658
        %3660 = vdwg.mxu0
        %3661 = vmatprep.subr.mxu0 0.0
        %3662 = vmatpush1.msra.mxu0 0.0
        %3663 = vmatprep.subr.mxu0 0.0
        %3664 = vmatpush1.msra.mxu0 0.0
        %3665 = vmatprep.subr.mxu0 0.0
        %3666 = vmatpush1.msra.mxu0 0.0
        %3667 = vmatprep.subr.mxu0 0.0
        %3668 = vmatpush1.msra.mxu0 0.0
        %3669 = vmatprep.subr.mxu0 0.0
        %3670 = vmatpush1.msra.mxu0 0.0
        %3671 = vmatprep.subr.mxu0 0.0
        %3672 = vmatpush1.msra.mxu0 0.0
        %3673 = vmatprep.subr.mxu0 0.0
        %3674 = vmatpush1.msra.mxu0 0.0
        %3675 = vmatprep.subr.mxu0 0.0
        %3676 = vmatpush1.msra.mxu0 0.0
        %3677 = vmatprep.subr.mxu0 0.0
        %3678 = vmatpush1.msra.mxu0 0.0
        %3679 = vmatprep.subr.mxu0 0.0
        %3680 = vmatpush1.msra.mxu0 0.0
        %3681 = vmatprep.subr.mxu0 0.0
        %3682 = vmatpush1.msra.mxu0 0.0
        %3683 = vmatprep.subr.mxu0 0.0
        %3684 = vmatpush1.msra.mxu0 0.0
        %3685 = vmatprep.subr.mxu0 0.0
        %3686 = vmatpush1.msra.mxu0 0.0
        %3687 = vmatprep.subr.mxu0 0.0
        %3688 = vmatpush1.msra.mxu0 0.0
        %3689 = vmatprep.subr.mxu0 0.0
        %3690 = vmatpush1.msra.mxu0 0.0
        %3691 = vmatprep.subr.mxu0 %v3511
        %3692 = vmatpush1.msra.mxu0 %v3510
        %3693 = vmatprep.subr.mxu0 0.0
        %3694 = vmatpush2.msra.mxu0 0.0
        %3695 = vmatprep.subr.mxu0 0.0
        %3696 = vmatpush2.msra.mxu0 0.0
        %3697 = vmatprep.subr.mxu0 0.0
        %3698 = vmatpush2.msra.mxu0 0.0
        %3699 = vmatprep.subr.mxu0 0.0
        %3700 = vmatpush2.msra.mxu0 0.0
        %3701 = vmatprep.subr.mxu0 0.0
        %3702 = vmatpush2.msra.mxu0 0.0
        %3703 = vmatprep.subr.mxu0 0.0
        %3704 = vmatpush2.msra.mxu0 0.0
        %3705 = vmatprep.subr.mxu0 0.0
        %3706 = vmatpush2.msra.mxu0 0.0
        %3707 = vmatprep.subr.mxu0 0.0
        %3708 = vmatpush2.msra.mxu0 0.0
        %3709 = vmatprep.subr.mxu0 0.0
        %3710 = vmatpush2.msra.mxu0 0.0
        %3711 = vmatprep.subr.mxu0 0.0
        %3712 = vmatpush2.msra.mxu0 0.0
        %3713 = vmatprep.subr.mxu0 0.0
        %3714 = vmatpush2.msra.mxu0 0.0
        %3715 = vmatprep.subr.mxu0 0.0
        %3716 = vmatpush2.msra.mxu0 0.0
        %3717 = vmatprep.subr.mxu0 0.0
        %3718 = vmatpush2.msra.mxu0 0.0
        %3719 = vmatprep.subr.mxu0 0.0
        %3720 = vmatpush2.msra.mxu0 0.0
        %3721 = vmatprep.subr.mxu0 0.0
        %3722 = vmatpush2.msra.mxu0 0.0
        %3723 = vmatprep.subr.mxu0 0.0
        %3724 = vmatpush2.msra.mxu0 0.0
        %3725 = vmatprep.mubr.f32.mxu0 0.0
        %3726 = vmatmul.mubr.f32.gmra.mxu0 %v3517
        %v3727 = vpop.f32.mrf.mxu0
        %v3728 = vadd.f32 0.0, %v3727
        %v3729 = vpop.f32.mrf.mxu0
        %v3730 = vadd.f32 0.0, %v3729
        %3731 = vdwg.mxu0
        %3732 = vmatprep.subr.mxu0 0.0
        %3733 = vmatpush1.msra.mxu0 0.0
        %3734 = vmatprep.subr.mxu0 0.0
        %3735 = vmatpush1.msra.mxu0 0.0
        %3736 = vmatprep.subr.mxu0 0.0
        %3737 = vmatpush1.msra.mxu0 0.0
        %3738 = vmatprep.subr.mxu0 0.0
        %3739 = vmatpush1.msra.mxu0 0.0
        %3740 = vmatprep.subr.mxu0 0.0
        %3741 = vmatpush1.msra.mxu0 0.0
        %3742 = vmatprep.subr.mxu0 0.0
        %3743 = vmatpush1.msra.mxu0 0.0
        %3744 = vmatprep.subr.mxu0 0.0
        %3745 = vmatpush1.msra.mxu0 0.0
        %3746 = vmatprep.subr.mxu0 0.0
        %3747 = vmatpush1.msra.mxu0 0.0
        %3748 = vmatprep.subr.mxu0 0.0
        %3749 = vmatpush1.msra.mxu0 0.0
        %3750 = vmatprep.subr.mxu0 0.0
        %3751 = vmatpush1.msra.mxu0 0.0
        %3752 = vmatprep.subr.mxu0 0.0
        %3753 = vmatpush1.msra.mxu0 0.0
        %3754 = vmatprep.subr.mxu0 0.0
        %3755 = vmatpush1.msra.mxu0 0.0
        %3756 = vmatprep.subr.mxu0 0.0
        %3757 = vmatpush1.msra.mxu0 0.0
        %3758 = vmatprep.subr.mxu0 0.0
        %3759 = vmatpush1.msra.mxu0 0.0
        %3760 = vmatprep.subr.mxu0 0.0
        %3761 = vmatpush1.msra.mxu0 0.0
        %3762 = vmatprep.subr.mxu0 %v3513
        %3763 = vmatpush1.msra.mxu0 %v3512
        %3764 = vmatprep.subr.mxu0 0.0
        %3765 = vmatpush2.msra.mxu0 0.0
        %3766 = vmatprep.subr.mxu0 0.0
        %3767 = vmatpush2.msra.mxu0 0.0
        %3768 = vmatprep.subr.mxu0 0.0
        %3769 = vmatpush2.msra.mxu0 0.0
        %3770 = vmatprep.subr.mxu0 0.0
        %3771 = vmatpush2.msra.mxu0 0.0
        %3772 = vmatprep.subr.mxu0 0.0
        %3773 = vmatpush2.msra.mxu0 0.0
        %3774 = vmatprep.subr.mxu0 0.0
        %3775 = vmatpush2.msra.mxu0 0.0
        %3776 = vmatprep.subr.mxu0 0.0
        %3777 = vmatpush2.msra.mxu0 0.0
        %3778 = vmatprep.subr.mxu0 0.0
        %3779 = vmatpush2.msra.mxu0 0.0
        %3780 = vmatprep.subr.mxu0 0.0
        %3781 = vmatpush2.msra.mxu0 0.0
        %3782 = vmatprep.subr.mxu0 0.0
        %3783 = vmatpush2.msra.mxu0 0.0
        %3784 = vmatprep.subr.mxu0 0.0
        %3785 = vmatpush2.msra.mxu0 0.0
        %3786 = vmatprep.subr.mxu0 0.0
        %3787 = vmatpush2.msra.mxu0 0.0
        %3788 = vmatprep.subr.mxu0 0.0
        %3789 = vmatpush2.msra.mxu0 0.0
        %3790 = vmatprep.subr.mxu0 0.0
        %3791 = vmatpush2.msra.mxu0 0.0
        %3792 = vmatprep.subr.mxu0 0.0
        %3793 = vmatpush2.msra.mxu0 0.0
        %3794 = vmatprep.subr.mxu0 0.0
        %3795 = vmatpush2.msra.mxu0 0.0
        %3796 = vmatprep.mubr.f32.mxu0 0.0
        %3797 = vmatmul.mubr.f32.gmra.mxu0 %v3517
        %v3798 = vpop.f32.mrf.mxu0
        %v3799 = vadd.f32 0.0, %v3798
        %v3800 = vpop.f32.mrf.mxu0
        %v3801 = vadd.f32 0.0, %v3800
        %3802 = vdwg.mxu0
        %v3803 = vadd.f32 %v3433, %v3586
        %v3804 = vadd.f32 %v3434, %v3588
        %v3805 = vadd.f32 %v3435, %v3657
        %v3806 = vadd.f32 %v3436, %v3659
        %v3807 = vadd.f32 %v3437, %v3728
        %v3808 = vadd.f32 %v3438, %v3730
        %v3809 = vadd.f32 %v3439, %v3799
        %v3810 = vadd.f32 %v3440, %v3801
        %3811 = vrot.lane.b32.xlu0 %v538, 95
        %v3812 = vpop.permute.xlu0 %3811
        %3813 = vrot.lane.b32.xlu0 %v540, 95
        %v3814 = vpop.permute.xlu0 %3813
        %3815 = vrot.lane.b32.xlu0 %v609, 95
        %v3816 = vpop.permute.xlu0 %3815
        %3817 = vrot.lane.b32.xlu0 %v611, 95
        %v3818 = vpop.permute.xlu0 %3817
        %3819 = vrot.lane.b32.xlu0 %v680, 95
        %v3820 = vpop.permute.xlu0 %3819
        %3821 = vrot.lane.b32.xlu0 %v682, 95
        %v3822 = vpop.permute.xlu0 %3821
        %3823 = vrot.lane.b32.xlu0 %v751, 95
        %v3824 = vpop.permute.xlu0 %3823
        %3825 = vrot.lane.b32.xlu0 %v753, 95
        %v3826 = vpop.permute.xlu0 %3825
        %vm3827 = vcmask 777216
        %v3828 = vsel %vm3827, %v3812, %v3814
        %v3829 = vsel %vm3827, %v3814, %v3816
        %v3830 = vsel %vm3827, %v3816, %v3818
        %v3831 = vsel %vm3827, %v3818, %v3820
        %v3832 = vsel %vm3827, %v3820, %v3822
        %v3833 = vsel %vm3827, %v3822, %v3824
        %v3834 = vsel %vm3827, %v3824, %v3826
        %v3843 = vsel %vm3827, %v3826, 0.0
        %vm3844 = vmand %vm1649, %vm3088
        %vm3845 = vmand %vm1650, %vm3089
        %vm3846 = vmand %vm1651, %vm3090
        %vm3847 = vmand %vm1652, %vm3091
        %vm3848 = vmand %vm1653, %vm3092
        %vm3849 = vmand %vm1654, %vm3093
        %vm3850 = vmand %vm1655, %vm3094
        %vm3851 = vmand %vm1656, %vm3095
        %vm3852 = vmand %vm3844, %vm3104
        %vm3853 = vmand %vm3845, %vm3105
        %vm3854 = vmand %vm3846, %vm3106
        %vm3855 = vmand %vm3847, %vm3107
        %vm3856 = vmand %vm3848, %vm3108
        %vm3857 = vmand %vm3849, %vm3109
        %vm3858 = vmand %vm3850, %vm3110
        %vm3859 = vmand %vm3851, %vm3111
        %v3860 = vsel %vm3852, 1, 0
        %v3861 = vsel %vm3853, 1, 0
        %v3862 = vsel %vm3854, 1, 0
        %v3863 = vsel %vm3855, 1, 0
        %v3864 = vsel %vm3856, 1, 0
        %v3865 = vsel %vm3857, 1, 0
        %v3866 = vsel %vm3858, 1, 0
        %v3867 = vsel %vm3859, 1, 0
        %vm3868 = vcmp.eq.s32.totalorder %v3860, 1
        %vm3869 = vcmp.eq.s32.totalorder %v3861, 1
        %vm3870 = vcmp.eq.s32.totalorder %v3862, 1
        %vm3871 = vcmp.eq.s32.totalorder %v3863, 1
        %vm3872 = vcmp.eq.s32.totalorder %v3864, 1
        %vm3873 = vcmp.eq.s32.totalorder %v3865, 1
        %vm3874 = vcmp.eq.s32.totalorder %v3866, 1
        %vm3875 = vcmp.eq.s32.totalorder %v3867, 1
        %v3876 = vsel %vm3868, %v3828, 0.0
        %v3877 = vsel %vm3869, %v3829, 0.0
        %v3878 = vsel %vm3870, %v3830, 0.0
        %v3879 = vsel %vm3871, %v3831, 0.0
        %v3880 = vsel %vm3872, %v3832, 0.0
        %v3881 = vsel %vm3873, %v3833, 0.0
        %v3882 = vsel %vm3874, %v3834, 0.0
        %v3883 = vsel %vm3875, %v3843, 0.0
        %s3884 = scalar_lea.vmem %s2, 64
        %v3885 = vld [vmem:[%s3884] sm:$0xff]
        %v3887 = vsel %vm1017, %v3885, 0
        %3889 = vmatprep.subr.mxu0 0.0
        %3890 = vmatpush1.msra.mxu0 0.0
        %3891 = vmatprep.subr.mxu0 0.0
        %3892 = vmatpush1.msra.mxu0 0.0
        %3893 = vmatprep.subr.mxu0 0.0
        %3894 = vmatpush1.msra.mxu0 0.0
        %3895 = vmatprep.subr.mxu0 0.0
        %3896 = vmatpush1.msra.mxu0 0.0
        %3897 = vmatprep.subr.mxu0 0.0
        %3898 = vmatpush1.msra.mxu0 0.0
        %3899 = vmatprep.subr.mxu0 0.0
        %3900 = vmatpush1.msra.mxu0 0.0
        %3901 = vmatprep.subr.mxu0 0.0
        %3902 = vmatpush1.msra.mxu0 0.0
        %3903 = vmatprep.subr.mxu0 0.0
        %3904 = vmatpush1.msra.mxu0 0.0
        %3905 = vmatprep.subr.mxu0 0.0
        %3906 = vmatpush1.msra.mxu0 0.0
        %3907 = vmatprep.subr.mxu0 0.0
        %3908 = vmatpush1.msra.mxu0 0.0
        %3909 = vmatprep.subr.mxu0 0.0
        %3910 = vmatpush1.msra.mxu0 0.0
        %3911 = vmatprep.subr.mxu0 0.0
        %3912 = vmatpush1.msra.mxu0 0.0
        %3913 = vmatprep.subr.mxu0 0.0
        %3914 = vmatpush1.msra.mxu0 0.0
        %3915 = vmatprep.subr.mxu0 0.0
        %3916 = vmatpush1.msra.mxu0 0.0
        %3917 = vmatprep.subr.mxu0 0.0
        %3918 = vmatpush1.msra.mxu0 0.0
        %3919 = vmatprep.subr.mxu0 %v3877
        %3920 = vmatpush1.msra.mxu0 %v3876
        %3921 = vmatprep.subr.mxu0 0.0
        %3922 = vmatpush2.msra.mxu0 0.0
        %3923 = vmatprep.subr.mxu0 0.0
        %3924 = vmatpush2.msra.mxu0 0.0
        %3925 = vmatprep.subr.mxu0 0.0
        %3926 = vmatpush2.msra.mxu0 0.0
        %3927 = vmatprep.subr.mxu0 0.0
        %3928 = vmatpush2.msra.mxu0 0.0
        %3929 = vmatprep.subr.mxu0 0.0
        %3930 = vmatpush2.msra.mxu0 0.0
        %3931 = vmatprep.subr.mxu0 0.0
        %3932 = vmatpush2.msra.mxu0 0.0
        %3933 = vmatprep.subr.mxu0 0.0
        %3934 = vmatpush2.msra.mxu0 0.0
        %3935 = vmatprep.subr.mxu0 0.0
        %3936 = vmatpush2.msra.mxu0 0.0
        %3937 = vmatprep.subr.mxu0 0.0
        %3938 = vmatpush2.msra.mxu0 0.0
        %3939 = vmatprep.subr.mxu0 0.0
        %3940 = vmatpush2.msra.mxu0 0.0
        %3941 = vmatprep.subr.mxu0 0.0
        %3942 = vmatpush2.msra.mxu0 0.0
        %3943 = vmatprep.subr.mxu0 0.0
        %3944 = vmatpush2.msra.mxu0 0.0
        %3945 = vmatprep.subr.mxu0 0.0
        %3946 = vmatpush2.msra.mxu0 0.0
        %3947 = vmatprep.subr.mxu0 0.0
        %3948 = vmatpush2.msra.mxu0 0.0
        %3949 = vmatprep.subr.mxu0 0.0
        %3950 = vmatpush2.msra.mxu0 0.0
        %3951 = vmatprep.subr.mxu0 0.0
        %3952 = vmatpush2.msra.mxu0 0.0
        %3953 = vmatprep.mubr.f32.mxu0 0.0
        %3954 = vmatmul.mubr.f32.gmra.mxu0 %v3887
        %v3955 = vpop.f32.mrf.mxu0
        %v3956 = vadd.f32 0.0, %v3955
        %v3957 = vpop.f32.mrf.mxu0
        %v3958 = vadd.f32 0.0, %v3957
        %3959 = vdwg.mxu0
        %3960 = vmatprep.subr.mxu0 0.0
        %3961 = vmatpush1.msra.mxu0 0.0
        %3962 = vmatprep.subr.mxu0 0.0
        %3963 = vmatpush1.msra.mxu0 0.0
        %3964 = vmatprep.subr.mxu0 0.0
        %3965 = vmatpush1.msra.mxu0 0.0
        %3966 = vmatprep.subr.mxu0 0.0
        %3967 = vmatpush1.msra.mxu0 0.0
        %3968 = vmatprep.subr.mxu0 0.0
        %3969 = vmatpush1.msra.mxu0 0.0
        %3970 = vmatprep.subr.mxu0 0.0
        %3971 = vmatpush1.msra.mxu0 0.0
        %3972 = vmatprep.subr.mxu0 0.0
        %3973 = vmatpush1.msra.mxu0 0.0
        %3974 = vmatprep.subr.mxu0 0.0
        %3975 = vmatpush1.msra.mxu0 0.0
        %3976 = vmatprep.subr.mxu0 0.0
        %3977 = vmatpush1.msra.mxu0 0.0
        %3978 = vmatprep.subr.mxu0 0.0
        %3979 = vmatpush1.msra.mxu0 0.0
        %3980 = vmatprep.subr.mxu0 0.0
        %3981 = vmatpush1.msra.mxu0 0.0
        %3982 = vmatprep.subr.mxu0 0.0
        %3983 = vmatpush1.msra.mxu0 0.0
        %3984 = vmatprep.subr.mxu0 0.0
        %3985 = vmatpush1.msra.mxu0 0.0
        %3986 = vmatprep.subr.mxu0 0.0
        %3987 = vmatpush1.msra.mxu0 0.0
        %3988 = vmatprep.subr.mxu0 0.0
        %3989 = vmatpush1.msra.mxu0 0.0
        %3990 = vmatprep.subr.mxu0 %v3879
        %3991 = vmatpush1.msra.mxu0 %v3878
        %3992 = vmatprep.subr.mxu0 0.0
        %3993 = vmatpush2.msra.mxu0 0.0
        %3994 = vmatprep.subr.mxu0 0.0
        %3995 = vmatpush2.msra.mxu0 0.0
        %3996 = vmatprep.subr.mxu0 0.0
        %3997 = vmatpush2.msra.mxu0 0.0
        %3998 = vmatprep.subr.mxu0 0.0
        %3999 = vmatpush2.msra.mxu0 0.0
        %4000 = vmatprep.subr.mxu0 0.0
        %4001 = vmatpush2.msra.mxu0 0.0
        %4002 = vmatprep.subr.mxu0 0.0
        %4003 = vmatpush2.msra.mxu0 0.0
        %4004 = vmatprep.subr.mxu0 0.0
        %4005 = vmatpush2.msra.mxu0 0.0
        %4006 = vmatprep.subr.mxu0 0.0
        %4007 = vmatpush2.msra.mxu0 0.0
        %4008 = vmatprep.subr.mxu0 0.0
        %4009 = vmatpush2.msra.mxu0 0.0
        %4010 = vmatprep.subr.mxu0 0.0
        %4011 = vmatpush2.msra.mxu0 0.0
        %4012 = vmatprep.subr.mxu0 0.0
        %4013 = vmatpush2.msra.mxu0 0.0
        %4014 = vmatprep.subr.mxu0 0.0
        %4015 = vmatpush2.msra.mxu0 0.0
        %4016 = vmatprep.subr.mxu0 0.0
        %4017 = vmatpush2.msra.mxu0 0.0
        %4018 = vmatprep.subr.mxu0 0.0
        %4019 = vmatpush2.msra.mxu0 0.0
        %4020 = vmatprep.subr.mxu0 0.0
        %4021 = vmatpush2.msra.mxu0 0.0
        %4022 = vmatprep.subr.mxu0 0.0
        %4023 = vmatpush2.msra.mxu0 0.0
        %4024 = vmatprep.mubr.f32.mxu0 0.0
        %4025 = vmatmul.mubr.f32.gmra.mxu0 %v3887
        %v4026 = vpop.f32.mrf.mxu0
        %v4027 = vadd.f32 0.0, %v4026
        %v4028 = vpop.f32.mrf.mxu0
        %v4029 = vadd.f32 0.0, %v4028
        %4030 = vdwg.mxu0
        %4031 = vmatprep.subr.mxu0 0.0
        %4032 = vmatpush1.msra.mxu0 0.0
        %4033 = vmatprep.subr.mxu0 0.0
        %4034 = vmatpush1.msra.mxu0 0.0
        %4035 = vmatprep.subr.mxu0 0.0
        %4036 = vmatpush1.msra.mxu0 0.0
        %4037 = vmatprep.subr.mxu0 0.0
        %4038 = vmatpush1.msra.mxu0 0.0
        %4039 = vmatprep.subr.mxu0 0.0
        %4040 = vmatpush1.msra.mxu0 0.0
        %4041 = vmatprep.subr.mxu0 0.0
        %4042 = vmatpush1.msra.mxu0 0.0
        %4043 = vmatprep.subr.mxu0 0.0
        %4044 = vmatpush1.msra.mxu0 0.0
        %4045 = vmatprep.subr.mxu0 0.0
        %4046 = vmatpush1.msra.mxu0 0.0
        %4047 = vmatprep.subr.mxu0 0.0
        %4048 = vmatpush1.msra.mxu0 0.0
        %4049 = vmatprep.subr.mxu0 0.0
        %4050 = vmatpush1.msra.mxu0 0.0
        %4051 = vmatprep.subr.mxu0 0.0
        %4052 = vmatpush1.msra.mxu0 0.0
        %4053 = vmatprep.subr.mxu0 0.0
        %4054 = vmatpush1.msra.mxu0 0.0
        %4055 = vmatprep.subr.mxu0 0.0
        %4056 = vmatpush1.msra.mxu0 0.0
        %4057 = vmatprep.subr.mxu0 0.0
        %4058 = vmatpush1.msra.mxu0 0.0
        %4059 = vmatprep.subr.mxu0 0.0
        %4060 = vmatpush1.msra.mxu0 0.0
        %4061 = vmatprep.subr.mxu0 %v3881
        %4062 = vmatpush1.msra.mxu0 %v3880
        %4063 = vmatprep.subr.mxu0 0.0
        %4064 = vmatpush2.msra.mxu0 0.0
        %4065 = vmatprep.subr.mxu0 0.0
        %4066 = vmatpush2.msra.mxu0 0.0
        %4067 = vmatprep.subr.mxu0 0.0
        %4068 = vmatpush2.msra.mxu0 0.0
        %4069 = vmatprep.subr.mxu0 0.0
        %4070 = vmatpush2.msra.mxu0 0.0
        %4071 = vmatprep.subr.mxu0 0.0
        %4072 = vmatpush2.msra.mxu0 0.0
        %4073 = vmatprep.subr.mxu0 0.0
        %4074 = vmatpush2.msra.mxu0 0.0
        %4075 = vmatprep.subr.mxu0 0.0
        %4076 = vmatpush2.msra.mxu0 0.0
        %4077 = vmatprep.subr.mxu0 0.0
        %4078 = vmatpush2.msra.mxu0 0.0
        %4079 = vmatprep.subr.mxu0 0.0
        %4080 = vmatpush2.msra.mxu0 0.0
        %4081 = vmatprep.subr.mxu0 0.0
        %4082 = vmatpush2.msra.mxu0 0.0
        %4083 = vmatprep.subr.mxu0 0.0
        %4084 = vmatpush2.msra.mxu0 0.0
        %4085 = vmatprep.subr.mxu0 0.0
        %4086 = vmatpush2.msra.mxu0 0.0
        %4087 = vmatprep.subr.mxu0 0.0
        %4088 = vmatpush2.msra.mxu0 0.0
        %4089 = vmatprep.subr.mxu0 0.0
        %4090 = vmatpush2.msra.mxu0 0.0
        %4091 = vmatprep.subr.mxu0 0.0
        %4092 = vmatpush2.msra.mxu0 0.0
        %4093 = vmatprep.subr.mxu0 0.0
        %4094 = vmatpush2.msra.mxu0 0.0
        %4095 = vmatprep.mubr.f32.mxu0 0.0
        %4096 = vmatmul.mubr.f32.gmra.mxu0 %v3887
        %v4097 = vpop.f32.mrf.mxu0
        %v4098 = vadd.f32 0.0, %v4097
        %v4099 = vpop.f32.mrf.mxu0
        %v4100 = vadd.f32 0.0, %v4099
        %4101 = vdwg.mxu0
        %4102 = vmatprep.subr.mxu0 0.0
        %4103 = vmatpush1.msra.mxu0 0.0
        %4104 = vmatprep.subr.mxu0 0.0
        %4105 = vmatpush1.msra.mxu0 0.0
        %4106 = vmatprep.subr.mxu0 0.0
        %4107 = vmatpush1.msra.mxu0 0.0
        %4108 = vmatprep.subr.mxu0 0.0
        %4109 = vmatpush1.msra.mxu0 0.0
        %4110 = vmatprep.subr.mxu0 0.0
        %4111 = vmatpush1.msra.mxu0 0.0
        %4112 = vmatprep.subr.mxu0 0.0
        %4113 = vmatpush1.msra.mxu0 0.0
        %4114 = vmatprep.subr.mxu0 0.0
        %4115 = vmatpush1.msra.mxu0 0.0
        %4116 = vmatprep.subr.mxu0 0.0
        %4117 = vmatpush1.msra.mxu0 0.0
        %4118 = vmatprep.subr.mxu0 0.0
        %4119 = vmatpush1.msra.mxu0 0.0
        %4120 = vmatprep.subr.mxu0 0.0
        %4121 = vmatpush1.msra.mxu0 0.0
        %4122 = vmatprep.subr.mxu0 0.0
        %4123 = vmatpush1.msra.mxu0 0.0
        %4124 = vmatprep.subr.mxu0 0.0
        %4125 = vmatpush1.msra.mxu0 0.0
        %4126 = vmatprep.subr.mxu0 0.0
        %4127 = vmatpush1.msra.mxu0 0.0
        %4128 = vmatprep.subr.mxu0 0.0
        %4129 = vmatpush1.msra.mxu0 0.0
        %4130 = vmatprep.subr.mxu0 0.0
        %4131 = vmatpush1.msra.mxu0 0.0
        %4132 = vmatprep.subr.mxu0 %v3883
        %4133 = vmatpush1.msra.mxu0 %v3882
        %4134 = vmatprep.subr.mxu0 0.0
        %4135 = vmatpush2.msra.mxu0 0.0
        %4136 = vmatprep.subr.mxu0 0.0
        %4137 = vmatpush2.msra.mxu0 0.0
        %4138 = vmatprep.subr.mxu0 0.0
        %4139 = vmatpush2.msra.mxu0 0.0
        %4140 = vmatprep.subr.mxu0 0.0
        %4141 = vmatpush2.msra.mxu0 0.0
        %4142 = vmatprep.subr.mxu0 0.0
        %4143 = vmatpush2.msra.mxu0 0.0
        %4144 = vmatprep.subr.mxu0 0.0
        %4145 = vmatpush2.msra.mxu0 0.0
        %4146 = vmatprep.subr.mxu0 0.0
        %4147 = vmatpush2.msra.mxu0 0.0
        %4148 = vmatprep.subr.mxu0 0.0
        %4149 = vmatpush2.msra.mxu0 0.0
        %4150 = vmatprep.subr.mxu0 0.0
        %4151 = vmatpush2.msra.mxu0 0.0
        %4152 = vmatprep.subr.mxu0 0.0
        %4153 = vmatpush2.msra.mxu0 0.0
        %4154 = vmatprep.subr.mxu0 0.0
        %4155 = vmatpush2.msra.mxu0 0.0
        %4156 = vmatprep.subr.mxu0 0.0
        %4157 = vmatpush2.msra.mxu0 0.0
        %4158 = vmatprep.subr.mxu0 0.0
        %4159 = vmatpush2.msra.mxu0 0.0
        %4160 = vmatprep.subr.mxu0 0.0
        %4161 = vmatpush2.msra.mxu0 0.0
        %4162 = vmatprep.subr.mxu0 0.0
        %4163 = vmatpush2.msra.mxu0 0.0
        %4164 = vmatprep.subr.mxu0 0.0
        %4165 = vmatpush2.msra.mxu0 0.0
        %4166 = vmatprep.mubr.f32.mxu0 0.0
        %4167 = vmatmul.mubr.f32.gmra.mxu0 %v3887
        %v4168 = vpop.f32.mrf.mxu0
        %v4169 = vadd.f32 0.0, %v4168
        %v4170 = vpop.f32.mrf.mxu0
        %v4171 = vadd.f32 0.0, %v4170
        %4172 = vdwg.mxu0
        %v4173 = vadd.f32 %v3803, %v3956
        %v4174 = vadd.f32 %v3804, %v3958
        %v4175 = vadd.f32 %v3805, %v4027
        %v4176 = vadd.f32 %v3806, %v4029
        %v4177 = vadd.f32 %v3807, %v4098
        %v4178 = vadd.f32 %v3808, %v4100
        %v4179 = vadd.f32 %v3809, %v4169
        %v4180 = vadd.f32 %v3810, %v4171
        %v4181 = vld [vmem:[%s3] sm:$0xff]
        %4183 = vset.pattern.permute.xlu0 0
        %4184 = vperm.xlu0 %4183, %v4181
        %v4185 = vpop.permute.xlu0 %4184
        %v4187 = vadd.f32 %v4173, %v4185
        %v4188 = vadd.f32 %v4174, %v4185
        %v4189 = vadd.f32 %v4175, %v4185
        %v4190 = vadd.f32 %v4176, %v4185
        %v4191 = vadd.f32 %v4177, %v4185
        %v4192 = vadd.f32 %v4178, %v4185
        %v4193 = vadd.f32 %v4179, %v4185
        %v4194 = vadd.f32 %v4180, %v4185
        %v4195 = vxor.u32 %v4187, 2147483648
        %v4196 = vxor.u32 %v4188, 2147483648
        %v4197 = vxor.u32 %v4189, 2147483648
        %v4198 = vxor.u32 %v4190, 2147483648
        %v4199 = vxor.u32 %v4191, 2147483648
        %v4200 = vxor.u32 %v4192, 2147483648
        %v4201 = vxor.u32 %v4193, 2147483648
        %v4202 = vxor.u32 %v4194, 2147483648
        %v4203 = vmul.f32 %v4195, 1.442695
        %v4204 = vpow.pop %v4203
        %v4205 = vmul.f32 %v4196, 1.442695
        %v4206 = vpow.pop %v4205
        %v4207 = vmul.f32 %v4197, 1.442695
        %v4208 = vpow.pop %v4207
        %v4209 = vmul.f32 %v4198, 1.442695
        %v4210 = vpow.pop %v4209
        %v4211 = vmul.f32 %v4199, 1.442695
        %v4212 = vpow.pop %v4211
        %v4213 = vmul.f32 %v4200, 1.442695
        %v4214 = vpow.pop %v4213
        %v4215 = vmul.f32 %v4201, 1.442695
        %v4216 = vpow.pop %v4215
        %v4217 = vmul.f32 %v4202, 1.442695
        %v4218 = vpow.pop %v4217
        %v4219 = vadd.f32 %v4204, 1.0
        %v4220 = vadd.f32 %v4206, 1.0
        %v4221 = vadd.f32 %v4208, 1.0
        %v4222 = vadd.f32 %v4210, 1.0
        %v4223 = vadd.f32 %v4212, 1.0
        %v4224 = vadd.f32 %v4214, 1.0
        %v4225 = vadd.f32 %v4216, 1.0
        %v4226 = vadd.f32 %v4218, 1.0
        %v4227 = vrcp.pop %v4219
        %v4228 = vmul.f32 1.0, %v4227
        %v4229 = vrcp.pop %v4220
        %v4230 = vmul.f32 1.0, %v4229
        %v4231 = vrcp.pop %v4221
        %v4232 = vmul.f32 1.0, %v4231
        %v4233 = vrcp.pop %v4222
        %v4234 = vmul.f32 1.0, %v4233
        %v4235 = vrcp.pop %v4223
        %v4236 = vmul.f32 1.0, %v4235
        %v4237 = vrcp.pop %v4224
        %v4238 = vmul.f32 1.0, %v4237
        %v4239 = vrcp.pop %v4225
        %v4240 = vmul.f32 1.0, %v4239
        %v4241 = vrcp.pop %v4226
        %v4242 = vmul.f32 1.0, %v4241
        %v4251 = vrot.slane %v4228, 4
        %v4252 = vrot.slane %v4230, 4
        %v4253 = vrot.slane %v4232, 4
        %v4254 = vrot.slane %v4234, 4
        %v4255 = vrot.slane %v4236, 4
        %v4256 = vrot.slane %v4238, 4
        %v4257 = vrot.slane %v4240, 4
        %v4258 = vrot.slane %v4242, 4
        %v4267 = vmul.f32 %v4187, %v4251
        %v4268 = vmul.f32 %v4188, %v4252
        %v4269 = vmul.f32 %v4189, %v4253
        %v4270 = vmul.f32 %v4190, %v4254
        %v4271 = vmul.f32 %v4191, %v4255
        %v4272 = vmul.f32 %v4192, %v4256
        %v4273 = vmul.f32 %v4193, %v4257
        %v4274 = vmul.f32 %v4194, %v4258
        %v4283 = vcombine.low %v4267, %v4268
        %v4284 = vcombine.low %v4269, %v4270
        %v4285 = vcombine.low %v4271, %v4272
        %v4286 = vcombine.low %v4273, %v4274
        %4291 = vst [vmem:[%s212] sm:$0xff] %v4283
        %4292 = vst [vmem:[%s212 + $0x8] sm:$0xff] %v4284
        %4293 = vst [vmem:[%s212 + $0x10] sm:$0xff] %v4285
        %4294 = vst [vmem:[%s212 + $0x18] sm:$0xff] %v4286
        %p4295 = scmp.lt.s32.totalorder %s16, 1
        %s4296 = scalar_select %p4295, %s16, 1
        %s4297 = smul.addr %s4296, 8
        %s4298 = smul.addr %s4297, 4
        %s4299 = scalar_lea.vmem %s4, %s4298
        // Predicated region
        $region41: #{get_init_code_forward.7} parent=35 // pred_check
          %p4300 = pneg %p123
        $region42: #{get_init_code_forward.7} parent=35 // pred_check_branch
          %4302 = sbr.rel (%p4300) target = $region44
        $region43: #{get_init_code_forward.7} parent=35 // pred_region
          _
        $region44: #{get_init_code_forward.7} parent=35 // pred_fallthru
          _
      $region36: #{get_init_code_forward.7} parent=5 // pred_fallthru
        _
      %p4303 = scmp.le.s32.totalorder 2, %s11
      // Predicated region
      $region45: #{get_init_code_forward.7} parent=5 // pred_check
        %p4304 = pneg %p4303
      $region46: #{get_init_code_forward.7} parent=5 // pred_check_branch
        %4306 = sbr.rel (%p4304) target = $region48
      $region47: #{get_init_code_forward.7} parent=5 // pred_region
        %s4307 = ssub.s32 %s11, 2
        // Predicated region
        $region49: #{get_init_code_forward.7} parent=47 // pred_check
          %p4308 = pneg %p129
        $region50: #{get_init_code_forward.7} parent=47 // pred_check_branch
          %4310 = sbr.rel (%p4308) target = $region52
        $region51: #{get_init_code_forward.7} parent=47 // pred_region
          %p4311 = scmp.lt.s32.totalorder %s17, 1
          %s4312 = scalar_select %p4311, %s17, 1
          %s4313 = smul.addr %s4312, 8
          %s4314 = smul.addr %s4313, 4
          %s4315 = scalar_lea.vmem %s4, %s4314
        $region52: #{get_init_code_forward.7} parent=47 // pred_fallthru
          _
      $region48: #{get_init_code_forward.7} parent=5 // pred_fallthru
        _
    $region6: #{get_init_code_forward.7} parent=1 // loop_footer
      %s15 = sadd.s32 1, %s11
    $region7: #{get_init_code_forward.7} parent=1 // loop_footer_branch
      %10 = sbr.rel target = $region3
    $region8: #{get_init_code_forward.7} parent=1 // loop_exit
      _
    %4316 = vsyncpa [#allocation3], 1
    %s4317 = scalar_lea.sflag [#allocation3], 1
    %4318 = vsyncpa %s4317, 1

</llo_original>
